<compile_context>
chip_gen: v5e
topology: v5e:2x2
jax: 0.10.0
libtpu: 0.0.40
codegen_flags: <defaults>
</compile_context>

<pallas_src>
import functools
import math

import numpy as np
import jax
import jax.numpy as jnp
from jax.experimental import pallas as pl
from jax.experimental.pallas import tpu as pltpu

# ----------------------------- configuration ------------------------------
PATCH = (8, 8)
IN_CH = 3
NUM_CLASSES = 1
HID = 32
NUM_LAYERS = 2
NH = 4
HD = HID // NH
INTER = 64
SAMPLE_RATE = 2
SAMPLE_V = int(math.pow(2, SAMPLE_RATE))      # 4
HH_S = PATCH[0] // SAMPLE_V                   # 2
WW_S = PATCH[1] // SAMPLE_V                   # 2
DECODE_FEATURES = [32, 16, 16, 8]
LN_EPS = 1e-12
BN_EPS = 1e-5
MAX_POS = 512


# ------------------------------ in-kernel math -----------------------------
def _erf(z):
    # TODO(synk): torch.erf replaced by Abramowitz-Stegun 7.1.26 rational
    #             approximation (|err| < 1.5e-7) so GELU fuses in-kernel.
    a = jnp.abs(z)
    t = 1.0 / (1.0 + 0.3275911 * a)
    poly = t * (0.254829592 + t * (-0.284496736 + t * (1.421413741
                + t * (-1.453152027 + t * 1.061405429))))
    e = 1.0 - poly * jnp.exp(-(a * a))
    return jnp.where(z < 0.0, -e, e)


def _gelu(x):
    return x * 0.5 * (1.0 + _erf(x * (1.0 / math.sqrt(2.0))))


def _ln(v, g, b):
    u = jnp.mean(v, axis=-1, keepdims=True)
    d = v - u
    var = jnp.mean(d * d, axis=-1, keepdims=True)
    return d * jax.lax.rsqrt(var + LN_EPS) * g + b


def _bands(xpad, a_ref, sh_ref, *, relu):
    """conv3x3(pad=1)+BN row-band accumulation: out[y] = sum_kh (xpad@A_kh)[y+kh]."""
    hout = xpad.shape[0] - 2
    xb = xpad.astype(jnp.bfloat16)
    acc = None
    for kh in range(3):
        y = jnp.dot(xb, a_ref[kh], preferred_element_type=jnp.float32)
        y = y[kh:kh + hout, :]
        acc = y if acc is None else acc + y
    acc = acc + sh_ref[...]
    if relu:
        acc = jnp.maximum(acc, 0.0)
    return acc


# ------------------------------ fused kernel -------------------------------
def _setr_kernel(x_ref, pos_ref,
                 w_in_ref, b_in_ref, g_in_ref, bt_in_ref,
                 g_emb_ref, bt_emb_ref,
                 wqkv_ref, bqkv_ref, wao_ref, bao_ref,
                 ln1g_ref, ln1b_ref, ln2g_ref, ln2b_ref,
                 wi_ref, bi_ref, wo_ref, bo_ref,
                 wf_ref, bf_ref,
                 a1_ref, sh1_ref,
                 hup2_ref, wa2_ref, sh2_ref,
                 hup3_ref, wa3_ref, sh3_ref,
                 hup4_ref, wa4_ref, sh4_ref,
                 hup5_ref, wa5_ref, sh5_ref,
                 o_ref, *, hh, ww):
    f32 = jnp.float32
    bf16 = jnp.bfloat16

    def mmw(a, w):  # bf16 x bf16 MXU matmul with f32 accumulation
        return jnp.dot(a.astype(bf16), w, preferred_element_type=f32)

    # ---------------- transformer encoder (one image, seq = hh*ww) ----------
    xp = x_ref[...]                                              # (S, 192) f32
    t = mmw(xp, w_in_ref[...]) + b_in_ref[...]
    t = _gelu(t)
    t = _ln(t, g_in_ref[...], bt_in_ref[...])
    # TODO(synk): dropout layers treated as identity (inference semantics).
    h = _ln(t + pos_ref[...], g_emb_ref[...], bt_emb_ref[...])   # (S, HID)

    scale = 1.0 / math.sqrt(HD)
    for l in range(NUM_LAYERS):
        qkv = mmw(h, wqkv_ref[l]) + bqkv_ref[l]                  # (S, 3*HID)
        ctxs = []
        for n in range(NH):
            q = qkv[:, n * HD:(n + 1) * HD]
            k = qkv[:, HID + n * HD:HID + (n + 1) * HD]
            v = qkv[:, 2 * HID + n * HD:2 * HID + (n + 1) * HD]
            s = jax.lax.dot_general(q, k, (((1,), (1,)), ((), ())),
                                    preferred_element_type=f32) * scale
            s = s - jnp.max(s, axis=-1, keepdims=True)
            p = jnp.exp(s)
            p = p * pl.reciprocal(jnp.sum(p, axis=-1, keepdims=True),
                                  approx=True)
            ctxs.append(jnp.dot(p, v, preferred_element_type=f32))  # (S, HD)
        ctx = jnp.concatenate(ctxs, axis=-1)                     # (S, HID)
        ao = mmw(ctx, wao_ref[l]) + bao_ref[l]
        ha = _ln(ao + h, ln1g_ref[l], ln1b_ref[l])
        inter = _gelu(mmw(ha, wi_ref[l]) + bi_ref[l])
        mlp = mmw(inter, wo_ref[l]) + bo_ref[l]
        h = _ln(mlp + ha, ln2g_ref[l], ln2b_ref[l])

    fd = mmw(h, wf_ref[...]) + bf_ref[...]                       # (S, 128)

    # -------- rearrange 'b (h w)(p1 p2 c) -> b c (h p1)(w p2)' + zero pad ----
    # built in-register as the padded NHWC row layout of the first conv stage
    seg = WW_S * HID
    zc = jnp.zeros((1, HID), f32)
    zrow = jnp.zeros((1, (ww * WW_S + 2) * HID), f32)
    rows = [zrow]
    for y in range(hh * HH_S):
        hi, p1i = divmod(y, HH_S)
        c0 = p1i * seg
        pieces = [zc]
        for w_i in range(ww):
            r = hi * ww + w_i
            pieces.append(fd[r:r + 1, c0:c0 + seg])
        pieces.append(zc)
        rows.append(jnp.concatenate(pieces, axis=1))
    rows.append(zrow)
    pmap = jnp.concatenate(rows, axis=0)        # (H0+2, (W0+2)*HID)

    # ---------------- decoder: 4x (conv+BN+ReLU+2x up) + final conv ---------
    acc = _bands(pmap, a1_ref, sh1_ref, relu=True)
    for hup_ref, wa_ref, sh_ref, relu in (
            (hup2_ref, wa2_ref, sh2_ref, True),
            (hup3_ref, wa3_ref, sh3_ref, True),
            (hup4_ref, wa4_ref, sh4_ref, True),
            (hup5_ref, wa5_ref, sh5_ref, False)):
        # height 2x bilinear upsample (zero pad rows baked in)
        xup = jnp.dot(hup_ref[...], acc.astype(bf16),
                      preferred_element_type=f32)
        # width 2x upsample is host-folded into the band matrices (wa)
        acc = _bands(xup, wa_ref, sh_ref, relu=relu)
    o_ref[...] = acc


# --------------------- host-side decoder operator precompute ----------------
def _interp_matrix_np(n_out, n_in):
    """align_corners=True bilinear 1-D resize matrix (n_out, n_in)."""
    m = np.zeros((n_out, n_in), np.float32)
    if n_in == 1 or n_out == 1:
        m[:, 0] = 1.0
        return m
    src = np.arange(n_out, dtype=np.float64) * (n_in - 1) / (n_out - 1)
    r0 = np.floor(src).astype(np.int64)
    r1 = np.minimum(r0 + 1, n_in - 1)
    frac = (src - r0).astype(np.float32)
    for o in range(n_out):
        m[o, r0[o]] += 1.0 - frac[o]
        m[o, r1[o]] += frac[o]
    return m


def _band_matrices_np(w, scale, W):
    """A[kh]: ((W+2)*Cin, W*Cout) mapping padded NHWC rows to conv output rows."""
    cout, cin = w.shape[0], w.shape[1]
    A = np.zeros((3, (W + 2) * cin, W * cout), np.float32)
    for kh in range(3):
        for wc in range(W):
            for kw in range(3):
                wp = wc + kw
                A[kh, wp * cin:(wp + 1) * cin, wc * cout:(wc + 1) * cout] = (
                    w[:, :, kh, kw].T * scale[None, :])
    return A


def _wup_np(W, c):
    """Width 2x bilinear upsample + left/right zero pad: (W*c, (2W+2)*c)."""
    Wo = 2 * W
    uw = _interp_matrix_np(Wo, W)
    m = np.zeros((W * c, (Wo + 2) * c), np.float32)
    eye = np.eye(c, dtype=np.float32)
    for wo in range(Wo):
        for wc in range(W):
            v = uw[wo, wc]
            if v != 0.0:
                m[wc * c:(wc + 1) * c, (wo + 1) * c:(wo + 2) * c] += v * eye
    return m


def _hup_np(H):
    """Height 2x bilinear upsample + top/bottom zero pad rows: (2H+2, H)."""
    Ho = 2 * H
    m = np.zeros((Ho + 2, H), np.float32)
    m[1:1 + Ho, :] = _interp_matrix_np(Ho, H)
    return m


def _build_decoder(nrm, H0):
    """Band / upsample operator matrices for the 5 conv stages (square maps)."""
    sizes = []
    Hc, cin = H0, HID
    for cout in DECODE_FEATURES:
        sizes.append((Hc, cin, cout))
        cin = cout
        Hc *= 2
    WF = Hc
    cpad = max(NUM_CLASSES, max(1, 128 // WF))   # pad final classes -> 128 lanes

    stages_np = []
    for (Hi, ci, co) in sizes:
        w = np.asarray(nrm((co, ci, 3, 3)), np.float32)
        b = np.zeros((co,), np.float32)
        # TODO(synk): BatchNorm2d folded in inference mode (gamma=1, beta=0,
        #             running_mean=0, running_var=1); dropout = identity.
        scale = np.ones((co,), np.float32) / np.sqrt(1.0 + BN_EPS)
        shift = scale * b
        stages_np.append((Hi, co, _band_matrices_np(w, scale, Hi),
                          np.tile(shift, Hi)[None, :]))
    # final conv (no BN / ReLU), classes padded to cpad
    wfin = np.zeros((cpad, DECODE_FEATURES[-1], 3, 3), np.float32)
    wfin[:NUM_CLASSES] = np.asarray(nrm((NUM_CLASSES, DECODE_FEATURES[-1], 3, 3)),
                                    np.float32)
    bfin = np.zeros((cpad,), np.float32)
    stages_np.append((WF, cpad,
                      _band_matrices_np(wfin, np.ones((cpad,), np.float32), WF),
                      np.tile(bfin, WF)[None, :]))

    dec = {"a1": jnp.asarray(stages_np[0][2], jnp.bfloat16),
           "sh1": jnp.asarray(stages_np[0][3], jnp.float32),
           "chain": []}
    prevH, prevC = stages_np[0][0], stages_np[0][1]
    for (Hn, cn, An, shn) in stages_np[1:]:
        wup = _wup_np(prevH, prevC)
        hup = _hup_np(prevH)
        wa = np.einsum("ab,kbc->kac", wup, An).astype(np.float32)  # exact fold
        dec["chain"].append({"hup": jnp.asarray(hup, jnp.bfloat16),
                             "wa": jnp.asarray(wa, jnp.bfloat16),
                             "sh": jnp.asarray(shn, jnp.float32)})
        prevH, prevC = Hn, cn
    return dec


# ------------------------------ parameters ---------------------------------
def init_params(key, img_hw):
    keys = iter(jax.random.split(key, 32))

    def nrm(shape):
        return (0.02 * jax.random.normal(next(keys), shape)).astype(jnp.float32)

    p1, p2 = PATCH
    patch_dim = p1 * p2 * IN_CH
    final_dim = p1 * p2 * HID // (SAMPLE_V ** 2)
    hh, ww = img_hw[0] // p1, img_hw[1] // p2
    S = hh * ww
    H0 = hh * HH_S

    wq, wk, wv = nrm((NUM_LAYERS, HID, HID)), nrm((NUM_LAYERS, HID, HID)), nrm((NUM_LAYERS, HID, HID))
    params = {
        "pos_seq": nrm((MAX_POS, HID))[:S],
        "w_in": nrm((patch_dim, HID)).astype(jnp.bfloat16),
        "b_in": jnp.zeros((1, HID), jnp.float32),
        "g_in": jnp.ones((1, HID), jnp.float32),
        "bt_in": jnp.zeros((1, HID), jnp.float32),
        "g_emb": jnp.ones((1, HID), jnp.float32),
        "bt_emb": jnp.zeros((1, HID), jnp.float32),
        # packed QKV (lane-dense 96-wide matmul per layer)
        "wqkv": jnp.concatenate([wq, wk, wv], axis=2).astype(jnp.bfloat16),
        "bqkv": jnp.zeros((NUM_LAYERS, 1, 3 * HID), jnp.float32),
        "wao": nrm((NUM_LAYERS, HID, HID)).astype(jnp.bfloat16),
        "bao": jnp.zeros((NUM_LAYERS, 1, HID), jnp.float32),
        "ln1g": jnp.ones((NUM_LAYERS, 1, HID), jnp.float32),
        "ln1b": jnp.zeros((NUM_LAYERS, 1, HID), jnp.float32),
        "ln2g": jnp.ones((NUM_LAYERS, 1, HID), jnp.float32),
        "ln2b": jnp.zeros((NUM_LAYERS, 1, HID), jnp.float32),
        "wi": nrm((NUM_LAYERS, HID, INTER)).astype(jnp.bfloat16),
        "bi": jnp.zeros((NUM_LAYERS, 1, INTER), jnp.float32),
        "wo": nrm((NUM_LAYERS, INTER, HID)).astype(jnp.bfloat16),
        "bo": jnp.zeros((NUM_LAYERS, 1, HID), jnp.float32),
        "wf": nrm((HID, final_dim)).astype(jnp.bfloat16),
        "bf": jnp.zeros((1, final_dim), jnp.float32),
        "dec": _build_decoder(nrm, H0),
    }
    return params


# ------------------------------ SETR forward --------------------------------
def _const_spec(a):
    nd = a.ndim
    return pl.BlockSpec(tuple(a.shape), lambda b, _nd=nd: (0,) * _nd)


def setr_forward(x, params):
    B, C, H, W = x.shape
    p1, p2 = PATCH
    hh, ww = H // p1, W // p2
    S = hh * ww

    # rearrange 'b c (h p1) (w p2) -> b (h w) (p1 p2 c)'  (tiny, kept in XLA)
    t = x.reshape(B, C, hh, p1, ww, p2).transpose(0, 2, 4, 3, 5, 1)
    t = t.reshape(B, S, p1 * p2 * C)

    dec = params["dec"]
    chain = dec["chain"]
    HF = chain[-1]["hup"].shape[0] - 2          # final map height (= width)
    WF = HF
    CP = chain[-1]["wa"].shape[2] // WF         # padded class count

    inputs = [t, params["pos_seq"],
              params["w_in"], params["b_in"], params["g_in"], params["bt_in"],
              params["g_emb"], params["bt_emb"],
              params["wqkv"], params["bqkv"], params["wao"], params["bao"],
              params["ln1g"], params["ln1b"], params["ln2g"], params["ln2b"],
              params["wi"], params["bi"], params["wo"], params["bo"],
              params["wf"], params["bf"],
              dec["a1"], dec["sh1"]]
    for st in chain:
        inputs += [st["hup"], st["wa"], st["sh"]]

    in_specs = [pl.BlockSpec((None, S, p1 * p2 * C), lambda b: (b, 0, 0))]
    in_specs += [_const_spec(a) for a in inputs[1:]]

    out = pl.pallas_call(
        functools.partial(_setr_kernel, hh=hh, ww=ww),
        grid=(B,),
        in_specs=in_specs,
        out_specs=pl.BlockSpec((None, HF, WF * CP), lambda b: (b, 0, 0)),
        out_shape=jax.ShapeDtypeStruct((B, HF, WF * CP), jnp.float32),
        compiler_params=pltpu.CompilerParams(
            dimension_semantics=("parallel",),
            vmem_limit_bytes=32 * 1024 * 1024),
    )(*inputs)

    out = out.reshape(B, HF, WF, CP)[..., :NUM_CLASSES]
    return out.transpose(0, 3, 1, 2)


# --------------------------------- main -------------------------------------
if __name__ == "__main__":
    key = jax.random.PRNGKey(0)
    pkey, xkey = jax.random.split(key)
    x = jax.random.normal(xkey, (2, IN_CH, 16, 16), dtype=jnp.float32)
    params = init_params(pkey, img_hw=(x.shape[2], x.shape[3]))

    fwd = jax.jit(setr_forward)
    y = jax.block_until_ready(fwd(x, params))

    assert y.shape == (2, NUM_CLASSES, 64, 64), y.shape
    assert bool(jnp.all(jnp.isfinite(y)))
    print("KERNEL_OK")
</pallas_src>

<mosaic_0001>
module attributes {stable_mosaic.version = 11 : i64} {
  func.func @_setr_kernel(%arg0: i32, %arg1: memref<1x4x192xf32, #tpu.memory_space<vmem>>, %arg2: memref<4x32xf32, #tpu.memory_space<vmem>>, %arg3: memref<192x32xbf16, #tpu.memory_space<vmem>>, %arg4: memref<1x32xf32, #tpu.memory_space<vmem>>, %arg5: memref<1x32xf32, #tpu.memory_space<vmem>>, %arg6: memref<1x32xf32, #tpu.memory_space<vmem>>, %arg7: memref<1x32xf32, #tpu.memory_space<vmem>>, %arg8: memref<1x32xf32, #tpu.memory_space<vmem>>, %arg9: memref<2x32x96xbf16, #tpu.memory_space<vmem>>, %arg10: memref<2x1x96xf32, #tpu.memory_space<vmem>>, %arg11: memref<2x32x32xbf16, #tpu.memory_space<vmem>>, %arg12: memref<2x1x32xf32, #tpu.memory_space<vmem>>, %arg13: memref<2x1x32xf32, #tpu.memory_space<vmem>>, %arg14: memref<2x1x32xf32, #tpu.memory_space<vmem>>, %arg15: memref<2x1x32xf32, #tpu.memory_space<vmem>>, %arg16: memref<2x1x32xf32, #tpu.memory_space<vmem>>, %arg17: memref<2x32x64xbf16, #tpu.memory_space<vmem>>, %arg18: memref<2x1x64xf32, #tpu.memory_space<vmem>>, %arg19: memref<2x64x32xbf16, #tpu.memory_space<vmem>>, %arg20: memref<2x1x32xf32, #tpu.memory_space<vmem>>, %arg21: memref<32x128xbf16, #tpu.memory_space<vmem>>, %arg22: memref<1x128xf32, #tpu.memory_space<vmem>>, %arg23: memref<3x192x128xbf16, #tpu.memory_space<vmem>>, %arg24: memref<1x128xf32, #tpu.memory_space<vmem>>, %arg25: memref<10x4xbf16, #tpu.memory_space<vmem>>, %arg26: memref<3x128x128xbf16, #tpu.memory_space<vmem>>, %arg27: memref<1x128xf32, #tpu.memory_space<vmem>>, %arg28: memref<18x8xbf16, #tpu.memory_space<vmem>>, %arg29: memref<3x128x256xbf16, #tpu.memory_space<vmem>>, %arg30: memref<1x256xf32, #tpu.memory_space<vmem>>, %arg31: memref<34x16xbf16, #tpu.memory_space<vmem>>, %arg32: memref<3x256x256xbf16, #tpu.memory_space<vmem>>, %arg33: memref<1x256xf32, #tpu.memory_space<vmem>>, %arg34: memref<66x32xbf16, #tpu.memory_space<vmem>>, %arg35: memref<3x256x128xbf16, #tpu.memory_space<vmem>>, %arg36: memref<1x128xf32, #tpu.memory_space<vmem>>, %arg37: memref<1x64x128xf32, #tpu.memory_space<vmem>>) attributes {dimension_semantics = [#tpu.dimension_semantics<parallel>], iteration_bounds = array<i64: 2>, scalar_prefetch = 0 : i64, scratch_operands = 0 : i64, tpu.core_type = #tpu.core_type<tc>, window_params = [{transform_indices = @transform_0, window_bounds = array<i64: 1, 4, 192>}, {pipeline_mode = #tpu.pipeline_mode<synchronous>, transform_indices = @transform_1, window_bounds = array<i64: 4, 32>}, {pipeline_mode = #tpu.pipeline_mode<synchronous>, transform_indices = @transform_2, window_bounds = array<i64: 192, 32>}, {pipeline_mode = #tpu.pipeline_mode<synchronous>, transform_indices = @transform_3, window_bounds = array<i64: 1, 32>}, {pipeline_mode = #tpu.pipeline_mode<synchronous>, transform_indices = @transform_4, window_bounds = array<i64: 1, 32>}, {pipeline_mode = #tpu.pipeline_mode<synchronous>, transform_indices = @transform_5, window_bounds = array<i64: 1, 32>}, {pipeline_mode = #tpu.pipeline_mode<synchronous>, transform_indices = @transform_6, window_bounds = array<i64: 1, 32>}, {pipeline_mode = #tpu.pipeline_mode<synchronous>, transform_indices = @transform_7, window_bounds = array<i64: 1, 32>}, {pipeline_mode = #tpu.pipeline_mode<synchronous>, transform_indices = @transform_8, window_bounds = array<i64: 2, 32, 96>}, {pipeline_mode = #tpu.pipeline_mode<synchronous>, transform_indices = @transform_9, window_bounds = array<i64: 2, 1, 96>}, {pipeline_mode = #tpu.pipeline_mode<synchronous>, transform_indices = @transform_10, window_bounds = array<i64: 2, 32, 32>}, {pipeline_mode = #tpu.pipeline_mode<synchronous>, transform_indices = @transform_11, window_bounds = array<i64: 2, 1, 32>}, {pipeline_mode = #tpu.pipeline_mode<synchronous>, transform_indices = @transform_12, window_bounds = array<i64: 2, 1, 32>}, {pipeline_mode = #tpu.pipeline_mode<synchronous>, transform_indices = @transform_13, window_bounds = array<i64: 2, 1, 32>}, {pipeline_mode = #tpu.pipeline_mode<synchronous>, transform_indices = @transform_14, window_bounds = array<i64: 2, 1, 32>}, {pipeline_mode = #tpu.pipeline_mode<synchronous>, transform_indices = @transform_15, window_bounds = array<i64: 2, 1, 32>}, {pipeline_mode = #tpu.pipeline_mode<synchronous>, transform_indices = @transform_16, window_bounds = array<i64: 2, 32, 64>}, {pipeline_mode = #tpu.pipeline_mode<synchronous>, transform_indices = @transform_17, window_bounds = array<i64: 2, 1, 64>}, {pipeline_mode = #tpu.pipeline_mode<synchronous>, transform_indices = @transform_18, window_bounds = array<i64: 2, 64, 32>}, {pipeline_mode = #tpu.pipeline_mode<synchronous>, transform_indices = @transform_19, window_bounds = array<i64: 2, 1, 32>}, {pipeline_mode = #tpu.pipeline_mode<synchronous>, transform_indices = @transform_20, window_bounds = array<i64: 32, 128>}, {pipeline_mode = #tpu.pipeline_mode<synchronous>, transform_indices = @transform_21, window_bounds = array<i64: 1, 128>}, {pipeline_mode = #tpu.pipeline_mode<synchronous>, transform_indices = @transform_22, window_bounds = array<i64: 3, 192, 128>}, {pipeline_mode = #tpu.pipeline_mode<synchronous>, transform_indices = @transform_23, window_bounds = array<i64: 1, 128>}, {pipeline_mode = #tpu.pipeline_mode<synchronous>, transform_indices = @transform_24, window_bounds = array<i64: 10, 4>}, {pipeline_mode = #tpu.pipeline_mode<synchronous>, transform_indices = @transform_25, window_bounds = array<i64: 3, 128, 128>}, {pipeline_mode = #tpu.pipeline_mode<synchronous>, transform_indices = @transform_26, window_bounds = array<i64: 1, 128>}, {pipeline_mode = #tpu.pipeline_mode<synchronous>, transform_indices = @transform_27, window_bounds = array<i64: 18, 8>}, {pipeline_mode = #tpu.pipeline_mode<synchronous>, transform_indices = @transform_28, window_bounds = array<i64: 3, 128, 256>}, {pipeline_mode = #tpu.pipeline_mode<synchronous>, transform_indices = @transform_29, window_bounds = array<i64: 1, 256>}, {pipeline_mode = #tpu.pipeline_mode<synchronous>, transform_indices = @transform_30, window_bounds = array<i64: 34, 16>}, {pipeline_mode = #tpu.pipeline_mode<synchronous>, transform_indices = @transform_31, window_bounds = array<i64: 3, 256, 256>}, {pipeline_mode = #tpu.pipeline_mode<synchronous>, transform_indices = @transform_32, window_bounds = array<i64: 1, 256>}, {pipeline_mode = #tpu.pipeline_mode<synchronous>, transform_indices = @transform_33, window_bounds = array<i64: 66, 32>}, {pipeline_mode = #tpu.pipeline_mode<synchronous>, transform_indices = @transform_34, window_bounds = array<i64: 3, 256, 128>}, {pipeline_mode = #tpu.pipeline_mode<synchronous>, transform_indices = @transform_35, window_bounds = array<i64: 1, 128>}, {transform_indices = @transform_36, window_bounds = array<i64: 1, 64, 128>}]} {
    %c0 = arith.constant 0 : index
    %c0_0 = arith.constant 0 : index
    %c0_1 = arith.constant 0 : index
    %0 = vector.load %arg1[%c0, %c0_0, %c0_1] : memref<1x4x192xf32, #tpu.memory_space<vmem>>, vector<1x4x192xf32>
    %1 = vector.shape_cast %0 : vector<1x4x192xf32> to vector<4x192xf32>
    %c0_2 = arith.constant 0 : index
    %c0_3 = arith.constant 0 : index
    %2 = vector.load %arg3[%c0_2, %c0_3] : memref<192x32xbf16, #tpu.memory_space<vmem>>, vector<192x32xbf16>
    %3 = arith.truncf %1 : vector<4x192xf32> to vector<4x192xbf16>
    %cst = arith.constant dense<0.000000e+00> : vector<4x32xf32>
    %4 = tpu.matmul %3, %2, %cst {dimension_numbers = #tpu.dot_dimension_numbers<[1], [0], [0], [1], [0, 0, 1, 1], [], []>} : vector<4x192xbf16>, vector<192x32xbf16>, vector<4x32xf32> -> vector<4x32xf32>
    %c0_4 = arith.constant 0 : index
    %c0_5 = arith.constant 0 : index
    %5 = vector.load %arg4[%c0_4, %c0_5] : memref<1x32xf32, #tpu.memory_space<vmem>>, vector<1x32xf32>
    %6 = vector.broadcast %5 : vector<1x32xf32> to vector<4x32xf32>
    %7 = arith.addf %4, %6 : vector<4x32xf32>
    %cst_6 = arith.constant 5.000000e-01 : f32
    %8 = vector.broadcast %cst_6 : f32 to vector<4x32xf32>
    %9 = arith.mulf %7, %8 : vector<4x32xf32>
    %cst_7 = arith.constant 0.707106769 : f32
    %10 = vector.broadcast %cst_7 : f32 to vector<4x32xf32>
    %11 = arith.mulf %7, %10 : vector<4x32xf32>
    %12 = math.absf %11 : vector<4x32xf32>
    %cst_8 = arith.constant 0.327591091 : f32
    %13 = vector.broadcast %cst_8 : f32 to vector<4x32xf32>
    %14 = arith.mulf %13, %12 : vector<4x32xf32>
    %cst_9 = arith.constant 1.000000e+00 : f32
    %15 = vector.broadcast %cst_9 : f32 to vector<4x32xf32>
    %16 = arith.addf %15, %14 : vector<4x32xf32>
    %cst_10 = arith.constant 1.000000e+00 : f32
    %17 = vector.broadcast %cst_10 : f32 to vector<4x32xf32>
    %18 = arith.divf %17, %16 : vector<4x32xf32>
    %cst_11 = arith.constant 1.06140542 : f32
    %19 = vector.broadcast %cst_11 : f32 to vector<4x32xf32>
    %20 = arith.mulf %18, %19 : vector<4x32xf32>
    %cst_12 = arith.constant -1.45315206 : f32
    %21 = vector.broadcast %cst_12 : f32 to vector<4x32xf32>
    %22 = arith.addf %21, %20 : vector<4x32xf32>
    %23 = arith.mulf %18, %22 : vector<4x32xf32>
    %cst_13 = arith.constant 1.42141378 : f32
    %24 = vector.broadcast %cst_13 : f32 to vector<4x32xf32>
    %25 = arith.addf %24, %23 : vector<4x32xf32>
    %26 = arith.mulf %18, %25 : vector<4x32xf32>
    %cst_14 = arith.constant -0.284496725 : f32
    %27 = vector.broadcast %cst_14 : f32 to vector<4x32xf32>
    %28 = arith.addf %27, %26 : vector<4x32xf32>
    %29 = arith.mulf %18, %28 : vector<4x32xf32>
    %cst_15 = arith.constant 0.254829586 : f32
    %30 = vector.broadcast %cst_15 : f32 to vector<4x32xf32>
    %31 = arith.addf %30, %29 : vector<4x32xf32>
    %32 = arith.mulf %18, %31 : vector<4x32xf32>
    %33 = arith.mulf %12, %12 : vector<4x32xf32>
    %cst_16 = arith.constant 0.000000e+00 : f32
    %34 = vector.broadcast %cst_16 : f32 to vector<4x32xf32>
    %35 = arith.subf %34, %33 : vector<4x32xf32>
    %36 = math.exp %35 : vector<4x32xf32>
    %37 = arith.mulf %32, %36 : vector<4x32xf32>
    %cst_17 = arith.constant 1.000000e+00 : f32
    %38 = vector.broadcast %cst_17 : f32 to vector<4x32xf32>
    %39 = arith.subf %38, %37 : vector<4x32xf32>
    %cst_18 = arith.constant 0.000000e+00 : f32
    %40 = vector.broadcast %cst_18 : f32 to vector<4x32xf32>
    %41 = arith.cmpf olt, %11, %40 : vector<4x32xf32>
    %cst_19 = arith.constant 0.000000e+00 : f32
    %42 = vector.broadcast %cst_19 : f32 to vector<4x32xf32>
    %43 = arith.subf %42, %39 : vector<4x32xf32>
    %44 = arith.select %41, %43, %39 : vector<4x32xi1>, vector<4x32xf32>
    %cst_20 = arith.constant 1.000000e+00 : f32
    %45 = vector.broadcast %cst_20 : f32 to vector<4x32xf32>
    %46 = arith.addf %45, %44 : vector<4x32xf32>
    %47 = arith.mulf %9, %46 : vector<4x32xf32>
    %c0_21 = arith.constant 0 : index
    %c0_22 = arith.constant 0 : index
    %48 = vector.load %arg5[%c0_21, %c0_22] : memref<1x32xf32, #tpu.memory_space<vmem>>, vector<1x32xf32>
    %c0_23 = arith.constant 0 : index
    %c0_24 = arith.constant 0 : index
    %49 = vector.load %arg6[%c0_23, %c0_24] : memref<1x32xf32, #tpu.memory_space<vmem>>, vector<1x32xf32>
    %cst_25 = arith.constant dense<0.000000e+00> : vector<4xf32>
    %50 = vector.multi_reduction <add>, %47, %cst_25 [1] : vector<4x32xf32> to vector<4xf32>
    %51 = vector.shape_cast %50 : vector<4xf32> to vector<4x1xf32>
    %cst_26 = arith.constant 3.200000e+01 : f32
    %52 = vector.broadcast %cst_26 : f32 to vector<4x1xf32>
    %53 = arith.divf %51, %52 : vector<4x1xf32>
    %54 = vector.broadcast %53 : vector<4x1xf32> to vector<4x32xf32>
    %55 = arith.subf %47, %54 : vector<4x32xf32>
    %56 = arith.mulf %55, %55 : vector<4x32xf32>
    %cst_27 = arith.constant dense<0.000000e+00> : vector<4xf32>
    %57 = vector.multi_reduction <add>, %56, %cst_27 [1] : vector<4x32xf32> to vector<4xf32>
    %58 = vector.shape_cast %57 : vector<4xf32> to vector<4x1xf32>
    %cst_28 = arith.constant 3.200000e+01 : f32
    %59 = vector.broadcast %cst_28 : f32 to vector<4x1xf32>
    %60 = arith.divf %58, %59 : vector<4x1xf32>
    %cst_29 = arith.constant 9.99999996E-13 : f32
    %61 = vector.broadcast %cst_29 : f32 to vector<4x1xf32>
    %62 = arith.addf %60, %61 : vector<4x1xf32>
    %63 = math.rsqrt %62 : vector<4x1xf32>
    %64 = vector.broadcast %63 : vector<4x1xf32> to vector<4x32xf32>
    %65 = arith.mulf %55, %64 : vector<4x32xf32>
    %66 = vector.broadcast %48 : vector<1x32xf32> to vector<4x32xf32>
    %67 = arith.mulf %65, %66 : vector<4x32xf32>
    %68 = vector.broadcast %49 : vector<1x32xf32> to vector<4x32xf32>
    %69 = arith.addf %67, %68 : vector<4x32xf32>
    %c0_30 = arith.constant 0 : index
    %c0_31 = arith.constant 0 : index
    %70 = vector.load %arg2[%c0_30, %c0_31] : memref<4x32xf32, #tpu.memory_space<vmem>>, vector<4x32xf32>
    %71 = arith.addf %69, %70 : vector<4x32xf32>
    %c0_32 = arith.constant 0 : index
    %c0_33 = arith.constant 0 : index
    %72 = vector.load %arg7[%c0_32, %c0_33] : memref<1x32xf32, #tpu.memory_space<vmem>>, vector<1x32xf32>
    %c0_34 = arith.constant 0 : index
    %c0_35 = arith.constant 0 : index
    %73 = vector.load %arg8[%c0_34, %c0_35] : memref<1x32xf32, #tpu.memory_space<vmem>>, vector<1x32xf32>
    %cst_36 = arith.constant dense<0.000000e+00> : vector<4xf32>
    %74 = vector.multi_reduction <add>, %71, %cst_36 [1] : vector<4x32xf32> to vector<4xf32>
    %75 = vector.shape_cast %74 : vector<4xf32> to vector<4x1xf32>
    %cst_37 = arith.constant 3.200000e+01 : f32
    %76 = vector.broadcast %cst_37 : f32 to vector<4x1xf32>
    %77 = arith.divf %75, %76 : vector<4x1xf32>
    %78 = vector.broadcast %77 : vector<4x1xf32> to vector<4x32xf32>
    %79 = arith.subf %71, %78 : vector<4x32xf32>
    %80 = arith.mulf %79, %79 : vector<4x32xf32>
    %cst_38 = arith.constant dense<0.000000e+00> : vector<4xf32>
    %81 = vector.multi_reduction <add>, %80, %cst_38 [1] : vector<4x32xf32> to vector<4xf32>
    %82 = vector.shape_cast %81 : vector<4xf32> to vector<4x1xf32>
    %cst_39 = arith.constant 3.200000e+01 : f32
    %83 = vector.broadcast %cst_39 : f32 to vector<4x1xf32>
    %84 = arith.divf %82, %83 : vector<4x1xf32>
    %cst_40 = arith.constant 9.99999996E-13 : f32
    %85 = vector.broadcast %cst_40 : f32 to vector<4x1xf32>
    %86 = arith.addf %84, %85 : vector<4x1xf32>
    %87 = math.rsqrt %86 : vector<4x1xf32>
    %88 = vector.broadcast %87 : vector<4x1xf32> to vector<4x32xf32>
    %89 = arith.mulf %79, %88 : vector<4x32xf32>
    %90 = vector.broadcast %72 : vector<1x32xf32> to vector<4x32xf32>
    %91 = arith.mulf %89, %90 : vector<4x32xf32>
    %92 = vector.broadcast %73 : vector<1x32xf32> to vector<4x32xf32>
    %93 = arith.addf %91, %92 : vector<4x32xf32>
    %c0_41 = arith.constant 0 : index
    %c0_42 = arith.constant 0 : index
    %c0_43 = arith.constant 0 : index
    %94 = vector.load %arg9[%c0_41, %c0_42, %c0_43] : memref<2x32x96xbf16, #tpu.memory_space<vmem>>, vector<1x32x96xbf16>
    %95 = vector.shape_cast %94 : vector<1x32x96xbf16> to vector<32x96xbf16>
    %96 = arith.truncf %93 : vector<4x32xf32> to vector<4x32xbf16>
    %cst_44 = arith.constant dense<0.000000e+00> : vector<4x96xf32>
    %97 = tpu.matmul %96, %95, %cst_44 {dimension_numbers = #tpu.dot_dimension_numbers<[1], [0], [0], [1], [0, 0, 1, 1], [], []>} : vector<4x32xbf16>, vector<32x96xbf16>, vector<4x96xf32> -> vector<4x96xf32>
    %c0_45 = arith.constant 0 : index
    %c0_46 = arith.constant 0 : index
    %c0_47 = arith.constant 0 : index
    %98 = vector.load %arg10[%c0_45, %c0_46, %c0_47] : memref<2x1x96xf32, #tpu.memory_space<vmem>>, vector<1x1x96xf32>
    %99 = vector.shape_cast %98 : vector<1x1x96xf32> to vector<1x96xf32>
    %100 = vector.broadcast %99 : vector<1x96xf32> to vector<4x96xf32>
    %101 = arith.addf %97, %100 : vector<4x96xf32>
    %102 = vector.extract_strided_slice %101 {offsets = [0, 0], sizes = [4, 8], strides = [1, 1]} : vector<4x96xf32> to vector<4x8xf32>
    %103 = vector.extract_strided_slice %101 {offsets = [0, 32], sizes = [4, 8], strides = [1, 1]} : vector<4x96xf32> to vector<4x8xf32>
    %104 = vector.extract_strided_slice %101 {offsets = [0, 64], sizes = [4, 8], strides = [1, 1]} : vector<4x96xf32> to vector<4x8xf32>
    %cst_48 = arith.constant dense<0.000000e+00> : vector<4x4xf32>
    %105 = tpu.matmul %102, %103, %cst_48 {dimension_numbers = #tpu.dot_dimension_numbers<[1], [1], [0], [0], [0, 0, 1, 0], [], []>} : vector<4x8xf32>, vector<4x8xf32>, vector<4x4xf32> -> vector<4x4xf32>
    %cst_49 = arith.constant 0.353553385 : f32
    %106 = vector.broadcast %cst_49 : f32 to vector<4x4xf32>
    %107 = arith.mulf %105, %106 : vector<4x4xf32>
    %cst_50 = arith.constant dense<0xFF800000> : vector<4xf32>
    %108 = vector.multi_reduction <maximumf>, %107, %cst_50 [1] : vector<4x4xf32> to vector<4xf32>
    %109 = vector.shape_cast %108 : vector<4xf32> to vector<4x1xf32>
    %110 = vector.broadcast %109 : vector<4x1xf32> to vector<4x4xf32>
    %111 = arith.subf %107, %110 : vector<4x4xf32>
    %112 = math.exp %111 : vector<4x4xf32>
    %cst_51 = arith.constant dense<0.000000e+00> : vector<4xf32>
    %113 = vector.multi_reduction <add>, %112, %cst_51 [1] : vector<4x4xf32> to vector<4xf32>
    %114 = vector.shape_cast %113 : vector<4xf32> to vector<4x1xf32>
    %115 = tpu.reciprocal %114 {approx = true} : vector<4x1xf32> -> vector<4x1xf32>
    %116 = vector.broadcast %115 : vector<4x1xf32> to vector<4x4xf32>
    %117 = arith.mulf %112, %116 : vector<4x4xf32>
    %cst_52 = arith.constant dense<0.000000e+00> : vector<4x8xf32>
    %118 = tpu.matmul %117, %104, %cst_52 {dimension_numbers = #tpu.dot_dimension_numbers<[1], [0], [0], [1], [0, 0, 1, 1], [], []>} : vector<4x4xf32>, vector<4x8xf32>, vector<4x8xf32> -> vector<4x8xf32>
    %119 = vector.extract_strided_slice %101 {offsets = [0, 8], sizes = [4, 8], strides = [1, 1]} : vector<4x96xf32> to vector<4x8xf32>
    %120 = vector.extract_strided_slice %101 {offsets = [0, 40], sizes = [4, 8], strides = [1, 1]} : vector<4x96xf32> to vector<4x8xf32>
    %121 = vector.extract_strided_slice %101 {offsets = [0, 72], sizes = [4, 8], strides = [1, 1]} : vector<4x96xf32> to vector<4x8xf32>
    %cst_53 = arith.constant dense<0.000000e+00> : vector<4x4xf32>
    %122 = tpu.matmul %119, %120, %cst_53 {dimension_numbers = #tpu.dot_dimension_numbers<[1], [1], [0], [0], [0, 0, 1, 0], [], []>} : vector<4x8xf32>, vector<4x8xf32>, vector<4x4xf32> -> vector<4x4xf32>
    %cst_54 = arith.constant 0.353553385 : f32
    %123 = vector.broadcast %cst_54 : f32 to vector<4x4xf32>
    %124 = arith.mulf %122, %123 : vector<4x4xf32>
    %cst_55 = arith.constant dense<0xFF800000> : vector<4xf32>
    %125 = vector.multi_reduction <maximumf>, %124, %cst_55 [1] : vector<4x4xf32> to vector<4xf32>
    %126 = vector.shape_cast %125 : vector<4xf32> to vector<4x1xf32>
    %127 = vector.broadcast %126 : vector<4x1xf32> to vector<4x4xf32>
    %128 = arith.subf %124, %127 : vector<4x4xf32>
    %129 = math.exp %128 : vector<4x4xf32>
    %cst_56 = arith.constant dense<0.000000e+00> : vector<4xf32>
    %130 = vector.multi_reduction <add>, %129, %cst_56 [1] : vector<4x4xf32> to vector<4xf32>
    %131 = vector.shape_cast %130 : vector<4xf32> to vector<4x1xf32>
    %132 = tpu.reciprocal %131 {approx = true} : vector<4x1xf32> -> vector<4x1xf32>
    %133 = vector.broadcast %132 : vector<4x1xf32> to vector<4x4xf32>
    %134 = arith.mulf %129, %133 : vector<4x4xf32>
    %cst_57 = arith.constant dense<0.000000e+00> : vector<4x8xf32>
    %135 = tpu.matmul %134, %121, %cst_57 {dimension_numbers = #tpu.dot_dimension_numbers<[1], [0], [0], [1], [0, 0, 1, 1], [], []>} : vector<4x4xf32>, vector<4x8xf32>, vector<4x8xf32> -> vector<4x8xf32>
    %136 = vector.extract_strided_slice %101 {offsets = [0, 16], sizes = [4, 8], strides = [1, 1]} : vector<4x96xf32> to vector<4x8xf32>
    %137 = vector.extract_strided_slice %101 {offsets = [0, 48], sizes = [4, 8], strides = [1, 1]} : vector<4x96xf32> to vector<4x8xf32>
    %138 = vector.extract_strided_slice %101 {offsets = [0, 80], sizes = [4, 8], strides = [1, 1]} : vector<4x96xf32> to vector<4x8xf32>
    %cst_58 = arith.constant dense<0.000000e+00> : vector<4x4xf32>
    %139 = tpu.matmul %136, %137, %cst_58 {dimension_numbers = #tpu.dot_dimension_numbers<[1], [1], [0], [0], [0, 0, 1, 0], [], []>} : vector<4x8xf32>, vector<4x8xf32>, vector<4x4xf32> -> vector<4x4xf32>
    %cst_59 = arith.constant 0.353553385 : f32
    %140 = vector.broadcast %cst_59 : f32 to vector<4x4xf32>
    %141 = arith.mulf %139, %140 : vector<4x4xf32>
    %cst_60 = arith.constant dense<0xFF800000> : vector<4xf32>
    %142 = vector.multi_reduction <maximumf>, %141, %cst_60 [1] : vector<4x4xf32> to vector<4xf32>
    %143 = vector.shape_cast %142 : vector<4xf32> to vector<4x1xf32>
    %144 = vector.broadcast %143 : vector<4x1xf32> to vector<4x4xf32>
    %145 = arith.subf %141, %144 : vector<4x4xf32>
    %146 = math.exp %145 : vector<4x4xf32>
    %cst_61 = arith.constant dense<0.000000e+00> : vector<4xf32>
    %147 = vector.multi_reduction <add>, %146, %cst_61 [1] : vector<4x4xf32> to vector<4xf32>
    %148 = vector.shape_cast %147 : vector<4xf32> to vector<4x1xf32>
    %149 = tpu.reciprocal %148 {approx = true} : vector<4x1xf32> -> vector<4x1xf32>
    %150 = vector.broadcast %149 : vector<4x1xf32> to vector<4x4xf32>
    %151 = arith.mulf %146, %150 : vector<4x4xf32>
    %cst_62 = arith.constant dense<0.000000e+00> : vector<4x8xf32>
    %152 = tpu.matmul %151, %138, %cst_62 {dimension_numbers = #tpu.dot_dimension_numbers<[1], [0], [0], [1], [0, 0, 1, 1], [], []>} : vector<4x4xf32>, vector<4x8xf32>, vector<4x8xf32> -> vector<4x8xf32>
    %153 = vector.extract_strided_slice %101 {offsets = [0, 24], sizes = [4, 8], strides = [1, 1]} : vector<4x96xf32> to vector<4x8xf32>
    %154 = vector.extract_strided_slice %101 {offsets = [0, 56], sizes = [4, 8], strides = [1, 1]} : vector<4x96xf32> to vector<4x8xf32>
    %155 = vector.extract_strided_slice %101 {offsets = [0, 88], sizes = [4, 8], strides = [1, 1]} : vector<4x96xf32> to vector<4x8xf32>
    %cst_63 = arith.constant dense<0.000000e+00> : vector<4x4xf32>
    %156 = tpu.matmul %153, %154, %cst_63 {dimension_numbers = #tpu.dot_dimension_numbers<[1], [1], [0], [0], [0, 0, 1, 0], [], []>} : vector<4x8xf32>, vector<4x8xf32>, vector<4x4xf32> -> vector<4x4xf32>
    %cst_64 = arith.constant 0.353553385 : f32
    %157 = vector.broadcast %cst_64 : f32 to vector<4x4xf32>
    %158 = arith.mulf %156, %157 : vector<4x4xf32>
    %cst_65 = arith.constant dense<0xFF800000> : vector<4xf32>
    %159 = vector.multi_reduction <maximumf>, %158, %cst_65 [1] : vector<4x4xf32> to vector<4xf32>
    %160 = vector.shape_cast %159 : vector<4xf32> to vector<4x1xf32>
    %161 = vector.broadcast %160 : vector<4x1xf32> to vector<4x4xf32>
    %162 = arith.subf %158, %161 : vector<4x4xf32>
    %163 = math.exp %162 : vector<4x4xf32>
    %cst_66 = arith.constant dense<0.000000e+00> : vector<4xf32>
    %164 = vector.multi_reduction <add>, %163, %cst_66 [1] : vector<4x4xf32> to vector<4xf32>
    %165 = vector.shape_cast %164 : vector<4xf32> to vector<4x1xf32>
    %166 = tpu.reciprocal %165 {approx = true} : vector<4x1xf32> -> vector<4x1xf32>
    %167 = vector.broadcast %166 : vector<4x1xf32> to vector<4x4xf32>
    %168 = arith.mulf %163, %167 : vector<4x4xf32>
    %cst_67 = arith.constant dense<0.000000e+00> : vector<4x8xf32>
    %169 = tpu.matmul %168, %155, %cst_67 {dimension_numbers = #tpu.dot_dimension_numbers<[1], [0], [0], [1], [0, 0, 1, 1], [], []>} : vector<4x4xf32>, vector<4x8xf32>, vector<4x8xf32> -> vector<4x8xf32>
    %170 = tpu.concatenate %118, %135, %152, %169 in 1 : vector<4x8xf32>, vector<4x8xf32>, vector<4x8xf32>, vector<4x8xf32> -> vector<4x32xf32>
    %c0_68 = arith.constant 0 : index
    %c0_69 = arith.constant 0 : index
    %c0_70 = arith.constant 0 : index
    %171 = vector.load %arg11[%c0_68, %c0_69, %c0_70] : memref<2x32x32xbf16, #tpu.memory_space<vmem>>, vector<1x32x32xbf16>
    %172 = vector.shape_cast %171 : vector<1x32x32xbf16> to vector<32x32xbf16>
    %173 = arith.truncf %170 : vector<4x32xf32> to vector<4x32xbf16>
    %cst_71 = arith.constant dense<0.000000e+00> : vector<4x32xf32>
    %174 = tpu.matmul %173, %172, %cst_71 {dimension_numbers = #tpu.dot_dimension_numbers<[1], [0], [0], [1], [0, 0, 1, 1], [], []>} : vector<4x32xbf16>, vector<32x32xbf16>, vector<4x32xf32> -> vector<4x32xf32>
    %c0_72 = arith.constant 0 : index
    %c0_73 = arith.constant 0 : index
    %c0_74 = arith.constant 0 : index
    %175 = vector.load %arg12[%c0_72, %c0_73, %c0_74] : memref<2x1x32xf32, #tpu.memory_space<vmem>>, vector<1x1x32xf32>
    %176 = vector.shape_cast %175 : vector<1x1x32xf32> to vector<1x32xf32>
    %177 = vector.broadcast %176 : vector<1x32xf32> to vector<4x32xf32>
    %178 = arith.addf %174, %177 : vector<4x32xf32>
    %179 = arith.addf %178, %93 : vector<4x32xf32>
    %c0_75 = arith.constant 0 : index
    %c0_76 = arith.constant 0 : index
    %c0_77 = arith.constant 0 : index
    %180 = vector.load %arg13[%c0_75, %c0_76, %c0_77] : memref<2x1x32xf32, #tpu.memory_space<vmem>>, vector<1x1x32xf32>
    %181 = vector.shape_cast %180 : vector<1x1x32xf32> to vector<1x32xf32>
    %c0_78 = arith.constant 0 : index
    %c0_79 = arith.constant 0 : index
    %c0_80 = arith.constant 0 : index
    %182 = vector.load %arg14[%c0_78, %c0_79, %c0_80] : memref<2x1x32xf32, #tpu.memory_space<vmem>>, vector<1x1x32xf32>
    %183 = vector.shape_cast %182 : vector<1x1x32xf32> to vector<1x32xf32>
    %cst_81 = arith.constant dense<0.000000e+00> : vector<4xf32>
    %184 = vector.multi_reduction <add>, %179, %cst_81 [1] : vector<4x32xf32> to vector<4xf32>
    %185 = vector.shape_cast %184 : vector<4xf32> to vector<4x1xf32>
    %cst_82 = arith.constant 3.200000e+01 : f32
    %186 = vector.broadcast %cst_82 : f32 to vector<4x1xf32>
    %187 = arith.divf %185, %186 : vector<4x1xf32>
    %188 = vector.broadcast %187 : vector<4x1xf32> to vector<4x32xf32>
    %189 = arith.subf %179, %188 : vector<4x32xf32>
    %190 = arith.mulf %189, %189 : vector<4x32xf32>
    %cst_83 = arith.constant dense<0.000000e+00> : vector<4xf32>
    %191 = vector.multi_reduction <add>, %190, %cst_83 [1] : vector<4x32xf32> to vector<4xf32>
    %192 = vector.shape_cast %191 : vector<4xf32> to vector<4x1xf32>
    %cst_84 = arith.constant 3.200000e+01 : f32
    %193 = vector.broadcast %cst_84 : f32 to vector<4x1xf32>
    %194 = arith.divf %192, %193 : vector<4x1xf32>
    %cst_85 = arith.constant 9.99999996E-13 : f32
    %195 = vector.broadcast %cst_85 : f32 to vector<4x1xf32>
    %196 = arith.addf %194, %195 : vector<4x1xf32>
    %197 = math.rsqrt %196 : vector<4x1xf32>
    %198 = vector.broadcast %197 : vector<4x1xf32> to vector<4x32xf32>
    %199 = arith.mulf %189, %198 : vector<4x32xf32>
    %200 = vector.broadcast %181 : vector<1x32xf32> to vector<4x32xf32>
    %201 = arith.mulf %199, %200 : vector<4x32xf32>
    %202 = vector.broadcast %183 : vector<1x32xf32> to vector<4x32xf32>
    %203 = arith.addf %201, %202 : vector<4x32xf32>
    %c0_86 = arith.constant 0 : index
    %c0_87 = arith.constant 0 : index
    %c0_88 = arith.constant 0 : index
    %204 = vector.load %arg17[%c0_86, %c0_87, %c0_88] : memref<2x32x64xbf16, #tpu.memory_space<vmem>>, vector<1x32x64xbf16>
    %205 = vector.shape_cast %204 : vector<1x32x64xbf16> to vector<32x64xbf16>
    %206 = arith.truncf %203 : vector<4x32xf32> to vector<4x32xbf16>
    %cst_89 = arith.constant dense<0.000000e+00> : vector<4x64xf32>
    %207 = tpu.matmul %206, %205, %cst_89 {dimension_numbers = #tpu.dot_dimension_numbers<[1], [0], [0], [1], [0, 0, 1, 1], [], []>} : vector<4x32xbf16>, vector<32x64xbf16>, vector<4x64xf32> -> vector<4x64xf32>
    %c0_90 = arith.constant 0 : index
    %c0_91 = arith.constant 0 : index
    %c0_92 = arith.constant 0 : index
    %208 = vector.load %arg18[%c0_90, %c0_91, %c0_92] : memref<2x1x64xf32, #tpu.memory_space<vmem>>, vector<1x1x64xf32>
    %209 = vector.shape_cast %208 : vector<1x1x64xf32> to vector<1x64xf32>
    %210 = vector.broadcast %209 : vector<1x64xf32> to vector<4x64xf32>
    %211 = arith.addf %207, %210 : vector<4x64xf32>
    %cst_93 = arith.constant 5.000000e-01 : f32
    %212 = vector.broadcast %cst_93 : f32 to vector<4x64xf32>
    %213 = arith.mulf %211, %212 : vector<4x64xf32>
    %cst_94 = arith.constant 0.707106769 : f32
    %214 = vector.broadcast %cst_94 : f32 to vector<4x64xf32>
    %215 = arith.mulf %211, %214 : vector<4x64xf32>
    %216 = math.absf %215 : vector<4x64xf32>
    %cst_95 = arith.constant 0.327591091 : f32
    %217 = vector.broadcast %cst_95 : f32 to vector<4x64xf32>
    %218 = arith.mulf %217, %216 : vector<4x64xf32>
    %cst_96 = arith.constant 1.000000e+00 : f32
    %219 = vector.broadcast %cst_96 : f32 to vector<4x64xf32>
    %220 = arith.addf %219, %218 : vector<4x64xf32>
    %cst_97 = arith.constant 1.000000e+00 : f32
    %221 = vector.broadcast %cst_97 : f32 to vector<4x64xf32>
    %222 = arith.divf %221, %220 : vector<4x64xf32>
    %cst_98 = arith.constant 1.06140542 : f32
    %223 = vector.broadcast %cst_98 : f32 to vector<4x64xf32>
    %224 = arith.mulf %222, %223 : vector<4x64xf32>
    %cst_99 = arith.constant -1.45315206 : f32
    %225 = vector.broadcast %cst_99 : f32 to vector<4x64xf32>
    %226 = arith.addf %225, %224 : vector<4x64xf32>
    %227 = arith.mulf %222, %226 : vector<4x64xf32>
    %cst_100 = arith.constant 1.42141378 : f32
    %228 = vector.broadcast %cst_100 : f32 to vector<4x64xf32>
    %229 = arith.addf %228, %227 : vector<4x64xf32>
    %230 = arith.mulf %222, %229 : vector<4x64xf32>
    %cst_101 = arith.constant -0.284496725 : f32
    %231 = vector.broadcast %cst_101 : f32 to vector<4x64xf32>
    %232 = arith.addf %231, %230 : vector<4x64xf32>
    %233 = arith.mulf %222, %232 : vector<4x64xf32>
    %cst_102 = arith.constant 0.254829586 : f32
    %234 = vector.broadcast %cst_102 : f32 to vector<4x64xf32>
    %235 = arith.addf %234, %233 : vector<4x64xf32>
    %236 = arith.mulf %222, %235 : vector<4x64xf32>
    %237 = arith.mulf %216, %216 : vector<4x64xf32>
    %cst_103 = arith.constant 0.000000e+00 : f32
    %238 = vector.broadcast %cst_103 : f32 to vector<4x64xf32>
    %239 = arith.subf %238, %237 : vector<4x64xf32>
    %240 = math.exp %239 : vector<4x64xf32>
    %241 = arith.mulf %236, %240 : vector<4x64xf32>
    %cst_104 = arith.constant 1.000000e+00 : f32
    %242 = vector.broadcast %cst_104 : f32 to vector<4x64xf32>
    %243 = arith.subf %242, %241 : vector<4x64xf32>
    %cst_105 = arith.constant 0.000000e+00 : f32
    %244 = vector.broadcast %cst_105 : f32 to vector<4x64xf32>
    %245 = arith.cmpf olt, %215, %244 : vector<4x64xf32>
    %cst_106 = arith.constant 0.000000e+00 : f32
    %246 = vector.broadcast %cst_106 : f32 to vector<4x64xf32>
    %247 = arith.subf %246, %243 : vector<4x64xf32>
    %248 = arith.select %245, %247, %243 : vector<4x64xi1>, vector<4x64xf32>
    %cst_107 = arith.constant 1.000000e+00 : f32
    %249 = vector.broadcast %cst_107 : f32 to vector<4x64xf32>
    %250 = arith.addf %249, %248 : vector<4x64xf32>
    %251 = arith.mulf %213, %250 : vector<4x64xf32>
    %c0_108 = arith.constant 0 : index
    %c0_109 = arith.constant 0 : index
    %c0_110 = arith.constant 0 : index
    %252 = vector.load %arg19[%c0_108, %c0_109, %c0_110] : memref<2x64x32xbf16, #tpu.memory_space<vmem>>, vector<1x64x32xbf16>
    %253 = vector.shape_cast %252 : vector<1x64x32xbf16> to vector<64x32xbf16>
    %254 = arith.truncf %251 : vector<4x64xf32> to vector<4x64xbf16>
    %cst_111 = arith.constant dense<0.000000e+00> : vector<4x32xf32>
    %255 = tpu.matmul %254, %253, %cst_111 {dimension_numbers = #tpu.dot_dimension_numbers<[1], [0], [0], [1], [0, 0, 1, 1], [], []>} : vector<4x64xbf16>, vector<64x32xbf16>, vector<4x32xf32> -> vector<4x32xf32>
    %c0_112 = arith.constant 0 : index
    %c0_113 = arith.constant 0 : index
    %c0_114 = arith.constant 0 : index
    %256 = vector.load %arg20[%c0_112, %c0_113, %c0_114] : memref<2x1x32xf32, #tpu.memory_space<vmem>>, vector<1x1x32xf32>
    %257 = vector.shape_cast %256 : vector<1x1x32xf32> to vector<1x32xf32>
    %258 = vector.broadcast %257 : vector<1x32xf32> to vector<4x32xf32>
    %259 = arith.addf %255, %258 : vector<4x32xf32>
    %260 = arith.addf %259, %203 : vector<4x32xf32>
    %c0_115 = arith.constant 0 : index
    %c0_116 = arith.constant 0 : index
    %c0_117 = arith.constant 0 : index
    %261 = vector.load %arg15[%c0_115, %c0_116, %c0_117] : memref<2x1x32xf32, #tpu.memory_space<vmem>>, vector<1x1x32xf32>
    %262 = vector.shape_cast %261 : vector<1x1x32xf32> to vector<1x32xf32>
    %c0_118 = arith.constant 0 : index
    %c0_119 = arith.constant 0 : index
    %c0_120 = arith.constant 0 : index
    %263 = vector.load %arg16[%c0_118, %c0_119, %c0_120] : memref<2x1x32xf32, #tpu.memory_space<vmem>>, vector<1x1x32xf32>
    %264 = vector.shape_cast %263 : vector<1x1x32xf32> to vector<1x32xf32>
    %cst_121 = arith.constant dense<0.000000e+00> : vector<4xf32>
    %265 = vector.multi_reduction <add>, %260, %cst_121 [1] : vector<4x32xf32> to vector<4xf32>
    %266 = vector.shape_cast %265 : vector<4xf32> to vector<4x1xf32>
    %cst_122 = arith.constant 3.200000e+01 : f32
    %267 = vector.broadcast %cst_122 : f32 to vector<4x1xf32>
    %268 = arith.divf %266, %267 : vector<4x1xf32>
    %269 = vector.broadcast %268 : vector<4x1xf32> to vector<4x32xf32>
    %270 = arith.subf %260, %269 : vector<4x32xf32>
    %271 = arith.mulf %270, %270 : vector<4x32xf32>
    %cst_123 = arith.constant dense<0.000000e+00> : vector<4xf32>
    %272 = vector.multi_reduction <add>, %271, %cst_123 [1] : vector<4x32xf32> to vector<4xf32>
    %273 = vector.shape_cast %272 : vector<4xf32> to vector<4x1xf32>
    %cst_124 = arith.constant 3.200000e+01 : f32
    %274 = vector.broadcast %cst_124 : f32 to vector<4x1xf32>
    %275 = arith.divf %273, %274 : vector<4x1xf32>
    %cst_125 = arith.constant 9.99999996E-13 : f32
    %276 = vector.broadcast %cst_125 : f32 to vector<4x1xf32>
    %277 = arith.addf %275, %276 : vector<4x1xf32>
    %278 = math.rsqrt %277 : vector<4x1xf32>
    %279 = vector.broadcast %278 : vector<4x1xf32> to vector<4x32xf32>
    %280 = arith.mulf %270, %279 : vector<4x32xf32>
    %281 = vector.broadcast %262 : vector<1x32xf32> to vector<4x32xf32>
    %282 = arith.mulf %280, %281 : vector<4x32xf32>
    %283 = vector.broadcast %264 : vector<1x32xf32> to vector<4x32xf32>
    %284 = arith.addf %282, %283 : vector<4x32xf32>
    %c1 = arith.constant 1 : index
    %c0_126 = arith.constant 0 : index
    %c0_127 = arith.constant 0 : index
    %285 = vector.load %arg9[%c1, %c0_126, %c0_127] : memref<2x32x96xbf16, #tpu.memory_space<vmem>>, vector<1x32x96xbf16>
    %286 = vector.shape_cast %285 : vector<1x32x96xbf16> to vector<32x96xbf16>
    %287 = arith.truncf %284 : vector<4x32xf32> to vector<4x32xbf16>
    %cst_128 = arith.constant dense<0.000000e+00> : vector<4x96xf32>
    %288 = tpu.matmul %287, %286, %cst_128 {dimension_numbers = #tpu.dot_dimension_numbers<[1], [0], [0], [1], [0, 0, 1, 1], [], []>} : vector<4x32xbf16>, vector<32x96xbf16>, vector<4x96xf32> -> vector<4x96xf32>
    %c1_129 = arith.constant 1 : index
    %c0_130 = arith.constant 0 : index
    %c0_131 = arith.constant 0 : index
    %289 = vector.load %arg10[%c1_129, %c0_130, %c0_131] : memref<2x1x96xf32, #tpu.memory_space<vmem>>, vector<1x1x96xf32>
    %290 = vector.shape_cast %289 : vector<1x1x96xf32> to vector<1x96xf32>
    %291 = vector.broadcast %290 : vector<1x96xf32> to vector<4x96xf32>
    %292 = arith.addf %288, %291 : vector<4x96xf32>
    %293 = vector.extract_strided_slice %292 {offsets = [0, 0], sizes = [4, 8], strides = [1, 1]} : vector<4x96xf32> to vector<4x8xf32>
    %294 = vector.extract_strided_slice %292 {offsets = [0, 32], sizes = [4, 8], strides = [1, 1]} : vector<4x96xf32> to vector<4x8xf32>
    %295 = vector.extract_strided_slice %292 {offsets = [0, 64], sizes = [4, 8], strides = [1, 1]} : vector<4x96xf32> to vector<4x8xf32>
    %cst_132 = arith.constant dense<0.000000e+00> : vector<4x4xf32>
    %296 = tpu.matmul %293, %294, %cst_132 {dimension_numbers = #tpu.dot_dimension_numbers<[1], [1], [0], [0], [0, 0, 1, 0], [], []>} : vector<4x8xf32>, vector<4x8xf32>, vector<4x4xf32> -> vector<4x4xf32>
    %cst_133 = arith.constant 0.353553385 : f32
    %297 = vector.broadcast %cst_133 : f32 to vector<4x4xf32>
    %298 = arith.mulf %296, %297 : vector<4x4xf32>
    %cst_134 = arith.constant dense<0xFF800000> : vector<4xf32>
    %299 = vector.multi_reduction <maximumf>, %298, %cst_134 [1] : vector<4x4xf32> to vector<4xf32>
    %300 = vector.shape_cast %299 : vector<4xf32> to vector<4x1xf32>
    %301 = vector.broadcast %300 : vector<4x1xf32> to vector<4x4xf32>
    %302 = arith.subf %298, %301 : vector<4x4xf32>
    %303 = math.exp %302 : vector<4x4xf32>
    %cst_135 = arith.constant dense<0.000000e+00> : vector<4xf32>
    %304 = vector.multi_reduction <add>, %303, %cst_135 [1] : vector<4x4xf32> to vector<4xf32>
    %305 = vector.shape_cast %304 : vector<4xf32> to vector<4x1xf32>
    %306 = tpu.reciprocal %305 {approx = true} : vector<4x1xf32> -> vector<4x1xf32>
    %307 = vector.broadcast %306 : vector<4x1xf32> to vector<4x4xf32>
    %308 = arith.mulf %303, %307 : vector<4x4xf32>
    %cst_136 = arith.constant dense<0.000000e+00> : vector<4x8xf32>
    %309 = tpu.matmul %308, %295, %cst_136 {dimension_numbers = #tpu.dot_dimension_numbers<[1], [0], [0], [1], [0, 0, 1, 1], [], []>} : vector<4x4xf32>, vector<4x8xf32>, vector<4x8xf32> -> vector<4x8xf32>
    %310 = vector.extract_strided_slice %292 {offsets = [0, 8], sizes = [4, 8], strides = [1, 1]} : vector<4x96xf32> to vector<4x8xf32>
    %311 = vector.extract_strided_slice %292 {offsets = [0, 40], sizes = [4, 8], strides = [1, 1]} : vector<4x96xf32> to vector<4x8xf32>
    %312 = vector.extract_strided_slice %292 {offsets = [0, 72], sizes = [4, 8], strides = [1, 1]} : vector<4x96xf32> to vector<4x8xf32>
    %cst_137 = arith.constant dense<0.000000e+00> : vector<4x4xf32>
    %313 = tpu.matmul %310, %311, %cst_137 {dimension_numbers = #tpu.dot_dimension_numbers<[1], [1], [0], [0], [0, 0, 1, 0], [], []>} : vector<4x8xf32>, vector<4x8xf32>, vector<4x4xf32> -> vector<4x4xf32>
    %cst_138 = arith.constant 0.353553385 : f32
    %314 = vector.broadcast %cst_138 : f32 to vector<4x4xf32>
    %315 = arith.mulf %313, %314 : vector<4x4xf32>
    %cst_139 = arith.constant dense<0xFF800000> : vector<4xf32>
    %316 = vector.multi_reduction <maximumf>, %315, %cst_139 [1] : vector<4x4xf32> to vector<4xf32>
    %317 = vector.shape_cast %316 : vector<4xf32> to vector<4x1xf32>
    %318 = vector.broadcast %317 : vector<4x1xf32> to vector<4x4xf32>
    %319 = arith.subf %315, %318 : vector<4x4xf32>
    %320 = math.exp %319 : vector<4x4xf32>
    %cst_140 = arith.constant dense<0.000000e+00> : vector<4xf32>
    %321 = vector.multi_reduction <add>, %320, %cst_140 [1] : vector<4x4xf32> to vector<4xf32>
    %322 = vector.shape_cast %321 : vector<4xf32> to vector<4x1xf32>
    %323 = tpu.reciprocal %322 {approx = true} : vector<4x1xf32> -> vector<4x1xf32>
    %324 = vector.broadcast %323 : vector<4x1xf32> to vector<4x4xf32>
    %325 = arith.mulf %320, %324 : vector<4x4xf32>
    %cst_141 = arith.constant dense<0.000000e+00> : vector<4x8xf32>
    %326 = tpu.matmul %325, %312, %cst_141 {dimension_numbers = #tpu.dot_dimension_numbers<[1], [0], [0], [1], [0, 0, 1, 1], [], []>} : vector<4x4xf32>, vector<4x8xf32>, vector<4x8xf32> -> vector<4x8xf32>
    %327 = vector.extract_strided_slice %292 {offsets = [0, 16], sizes = [4, 8], strides = [1, 1]} : vector<4x96xf32> to vector<4x8xf32>
    %328 = vector.extract_strided_slice %292 {offsets = [0, 48], sizes = [4, 8], strides = [1, 1]} : vector<4x96xf32> to vector<4x8xf32>
    %329 = vector.extract_strided_slice %292 {offsets = [0, 80], sizes = [4, 8], strides = [1, 1]} : vector<4x96xf32> to vector<4x8xf32>
    %cst_142 = arith.constant dense<0.000000e+00> : vector<4x4xf32>
    %330 = tpu.matmul %327, %328, %cst_142 {dimension_numbers = #tpu.dot_dimension_numbers<[1], [1], [0], [0], [0, 0, 1, 0], [], []>} : vector<4x8xf32>, vector<4x8xf32>, vector<4x4xf32> -> vector<4x4xf32>
    %cst_143 = arith.constant 0.353553385 : f32
    %331 = vector.broadcast %cst_143 : f32 to vector<4x4xf32>
    %332 = arith.mulf %330, %331 : vector<4x4xf32>
    %cst_144 = arith.constant dense<0xFF800000> : vector<4xf32>
    %333 = vector.multi_reduction <maximumf>, %332, %cst_144 [1] : vector<4x4xf32> to vector<4xf32>
    %334 = vector.shape_cast %333 : vector<4xf32> to vector<4x1xf32>
    %335 = vector.broadcast %334 : vector<4x1xf32> to vector<4x4xf32>
    %336 = arith.subf %332, %335 : vector<4x4xf32>
    %337 = math.exp %336 : vector<4x4xf32>
    %cst_145 = arith.constant dense<0.000000e+00> : vector<4xf32>
    %338 = vector.multi_reduction <add>, %337, %cst_145 [1] : vector<4x4xf32> to vector<4xf32>
    %339 = vector.shape_cast %338 : vector<4xf32> to vector<4x1xf32>
    %340 = tpu.reciprocal %339 {approx = true} : vector<4x1xf32> -> vector<4x1xf32>
    %341 = vector.broadcast %340 : vector<4x1xf32> to vector<4x4xf32>
    %342 = arith.mulf %337, %341 : vector<4x4xf32>
    %cst_146 = arith.constant dense<0.000000e+00> : vector<4x8xf32>
    %343 = tpu.matmul %342, %329, %cst_146 {dimension_numbers = #tpu.dot_dimension_numbers<[1], [0], [0], [1], [0, 0, 1, 1], [], []>} : vector<4x4xf32>, vector<4x8xf32>, vector<4x8xf32> -> vector<4x8xf32>
    %344 = vector.extract_strided_slice %292 {offsets = [0, 24], sizes = [4, 8], strides = [1, 1]} : vector<4x96xf32> to vector<4x8xf32>
    %345 = vector.extract_strided_slice %292 {offsets = [0, 56], sizes = [4, 8], strides = [1, 1]} : vector<4x96xf32> to vector<4x8xf32>
    %346 = vector.extract_strided_slice %292 {offsets = [0, 88], sizes = [4, 8], strides = [1, 1]} : vector<4x96xf32> to vector<4x8xf32>
    %cst_147 = arith.constant dense<0.000000e+00> : vector<4x4xf32>
    %347 = tpu.matmul %344, %345, %cst_147 {dimension_numbers = #tpu.dot_dimension_numbers<[1], [1], [0], [0], [0, 0, 1, 0], [], []>} : vector<4x8xf32>, vector<4x8xf32>, vector<4x4xf32> -> vector<4x4xf32>
    %cst_148 = arith.constant 0.353553385 : f32
    %348 = vector.broadcast %cst_148 : f32 to vector<4x4xf32>
    %349 = arith.mulf %347, %348 : vector<4x4xf32>
    %cst_149 = arith.constant dense<0xFF800000> : vector<4xf32>
    %350 = vector.multi_reduction <maximumf>, %349, %cst_149 [1] : vector<4x4xf32> to vector<4xf32>
    %351 = vector.shape_cast %350 : vector<4xf32> to vector<4x1xf32>
    %352 = vector.broadcast %351 : vector<4x1xf32> to vector<4x4xf32>
    %353 = arith.subf %349, %352 : vector<4x4xf32>
    %354 = math.exp %353 : vector<4x4xf32>
    %cst_150 = arith.constant dense<0.000000e+00> : vector<4xf32>
    %355 = vector.multi_reduction <add>, %354, %cst_150 [1] : vector<4x4xf32> to vector<4xf32>
    %356 = vector.shape_cast %355 : vector<4xf32> to vector<4x1xf32>
    %357 = tpu.reciprocal %356 {approx = true} : vector<4x1xf32> -> vector<4x1xf32>
    %358 = vector.broadcast %357 : vector<4x1xf32> to vector<4x4xf32>
    %359 = arith.mulf %354, %358 : vector<4x4xf32>
    %cst_151 = arith.constant dense<0.000000e+00> : vector<4x8xf32>
    %360 = tpu.matmul %359, %346, %cst_151 {dimension_numbers = #tpu.dot_dimension_numbers<[1], [0], [0], [1], [0, 0, 1, 1], [], []>} : vector<4x4xf32>, vector<4x8xf32>, vector<4x8xf32> -> vector<4x8xf32>
    %361 = tpu.concatenate %309, %326, %343, %360 in 1 : vector<4x8xf32>, vector<4x8xf32>, vector<4x8xf32>, vector<4x8xf32> -> vector<4x32xf32>
    %c1_152 = arith.constant 1 : index
    %c0_153 = arith.constant 0 : index
    %c0_154 = arith.constant 0 : index
    %362 = vector.load %arg11[%c1_152, %c0_153, %c0_154] : memref<2x32x32xbf16, #tpu.memory_space<vmem>>, vector<1x32x32xbf16>
    %363 = vector.shape_cast %362 : vector<1x32x32xbf16> to vector<32x32xbf16>
    %364 = arith.truncf %361 : vector<4x32xf32> to vector<4x32xbf16>
    %cst_155 = arith.constant dense<0.000000e+00> : vector<4x32xf32>
    %365 = tpu.matmul %364, %363, %cst_155 {dimension_numbers = #tpu.dot_dimension_numbers<[1], [0], [0], [1], [0, 0, 1, 1], [], []>} : vector<4x32xbf16>, vector<32x32xbf16>, vector<4x32xf32> -> vector<4x32xf32>
    %c1_156 = arith.constant 1 : index
    %c0_157 = arith.constant 0 : index
    %c0_158 = arith.constant 0 : index
    %366 = vector.load %arg12[%c1_156, %c0_157, %c0_158] : memref<2x1x32xf32, #tpu.memory_space<vmem>>, vector<1x1x32xf32>
    %367 = vector.shape_cast %366 : vector<1x1x32xf32> to vector<1x32xf32>
    %368 = vector.broadcast %367 : vector<1x32xf32> to vector<4x32xf32>
    %369 = arith.addf %365, %368 : vector<4x32xf32>
    %370 = arith.addf %369, %284 : vector<4x32xf32>
    %c1_159 = arith.constant 1 : index
    %c0_160 = arith.constant 0 : index
    %c0_161 = arith.constant 0 : index
    %371 = vector.load %arg13[%c1_159, %c0_160, %c0_161] : memref<2x1x32xf32, #tpu.memory_space<vmem>>, vector<1x1x32xf32>
    %372 = vector.shape_cast %371 : vector<1x1x32xf32> to vector<1x32xf32>
    %c1_162 = arith.constant 1 : index
    %c0_163 = arith.constant 0 : index
    %c0_164 = arith.constant 0 : index
    %373 = vector.load %arg14[%c1_162, %c0_163, %c0_164] : memref<2x1x32xf32, #tpu.memory_space<vmem>>, vector<1x1x32xf32>
    %374 = vector.shape_cast %373 : vector<1x1x32xf32> to vector<1x32xf32>
    %cst_165 = arith.constant dense<0.000000e+00> : vector<4xf32>
    %375 = vector.multi_reduction <add>, %370, %cst_165 [1] : vector<4x32xf32> to vector<4xf32>
    %376 = vector.shape_cast %375 : vector<4xf32> to vector<4x1xf32>
    %cst_166 = arith.constant 3.200000e+01 : f32
    %377 = vector.broadcast %cst_166 : f32 to vector<4x1xf32>
    %378 = arith.divf %376, %377 : vector<4x1xf32>
    %379 = vector.broadcast %378 : vector<4x1xf32> to vector<4x32xf32>
    %380 = arith.subf %370, %379 : vector<4x32xf32>
    %381 = arith.mulf %380, %380 : vector<4x32xf32>
    %cst_167 = arith.constant dense<0.000000e+00> : vector<4xf32>
    %382 = vector.multi_reduction <add>, %381, %cst_167 [1] : vector<4x32xf32> to vector<4xf32>
    %383 = vector.shape_cast %382 : vector<4xf32> to vector<4x1xf32>
    %cst_168 = arith.constant 3.200000e+01 : f32
    %384 = vector.broadcast %cst_168 : f32 to vector<4x1xf32>
    %385 = arith.divf %383, %384 : vector<4x1xf32>
    %cst_169 = arith.constant 9.99999996E-13 : f32
    %386 = vector.broadcast %cst_169 : f32 to vector<4x1xf32>
    %387 = arith.addf %385, %386 : vector<4x1xf32>
    %388 = math.rsqrt %387 : vector<4x1xf32>
    %389 = vector.broadcast %388 : vector<4x1xf32> to vector<4x32xf32>
    %390 = arith.mulf %380, %389 : vector<4x32xf32>
    %391 = vector.broadcast %372 : vector<1x32xf32> to vector<4x32xf32>
    %392 = arith.mulf %390, %391 : vector<4x32xf32>
    %393 = vector.broadcast %374 : vector<1x32xf32> to vector<4x32xf32>
    %394 = arith.addf %392, %393 : vector<4x32xf32>
    %c1_170 = arith.constant 1 : index
    %c0_171 = arith.constant 0 : index
    %c0_172 = arith.constant 0 : index
    %395 = vector.load %arg17[%c1_170, %c0_171, %c0_172] : memref<2x32x64xbf16, #tpu.memory_space<vmem>>, vector<1x32x64xbf16>
    %396 = vector.shape_cast %395 : vector<1x32x64xbf16> to vector<32x64xbf16>
    %397 = arith.truncf %394 : vector<4x32xf32> to vector<4x32xbf16>
    %cst_173 = arith.constant dense<0.000000e+00> : vector<4x64xf32>
    %398 = tpu.matmul %397, %396, %cst_173 {dimension_numbers = #tpu.dot_dimension_numbers<[1], [0], [0], [1], [0, 0, 1, 1], [], []>} : vector<4x32xbf16>, vector<32x64xbf16>, vector<4x64xf32> -> vector<4x64xf32>
    %c1_174 = arith.constant 1 : index
    %c0_175 = arith.constant 0 : index
    %c0_176 = arith.constant 0 : index
    %399 = vector.load %arg18[%c1_174, %c0_175, %c0_176] : memref<2x1x64xf32, #tpu.memory_space<vmem>>, vector<1x1x64xf32>
    %400 = vector.shape_cast %399 : vector<1x1x64xf32> to vector<1x64xf32>
    %401 = vector.broadcast %400 : vector<1x64xf32> to vector<4x64xf32>
    %402 = arith.addf %398, %401 : vector<4x64xf32>
    %cst_177 = arith.constant 5.000000e-01 : f32
    %403 = vector.broadcast %cst_177 : f32 to vector<4x64xf32>
    %404 = arith.mulf %402, %403 : vector<4x64xf32>
    %cst_178 = arith.constant 0.707106769 : f32
    %405 = vector.broadcast %cst_178 : f32 to vector<4x64xf32>
    %406 = arith.mulf %402, %405 : vector<4x64xf32>
    %407 = math.absf %406 : vector<4x64xf32>
    %cst_179 = arith.constant 0.327591091 : f32
    %408 = vector.broadcast %cst_179 : f32 to vector<4x64xf32>
    %409 = arith.mulf %408, %407 : vector<4x64xf32>
    %cst_180 = arith.constant 1.000000e+00 : f32
    %410 = vector.broadcast %cst_180 : f32 to vector<4x64xf32>
    %411 = arith.addf %410, %409 : vector<4x64xf32>
    %cst_181 = arith.constant 1.000000e+00 : f32
    %412 = vector.broadcast %cst_181 : f32 to vector<4x64xf32>
    %413 = arith.divf %412, %411 : vector<4x64xf32>
    %cst_182 = arith.constant 1.06140542 : f32
    %414 = vector.broadcast %cst_182 : f32 to vector<4x64xf32>
    %415 = arith.mulf %413, %414 : vector<4x64xf32>
    %cst_183 = arith.constant -1.45315206 : f32
    %416 = vector.broadcast %cst_183 : f32 to vector<4x64xf32>
    %417 = arith.addf %416, %415 : vector<4x64xf32>
    %418 = arith.mulf %413, %417 : vector<4x64xf32>
    %cst_184 = arith.constant 1.42141378 : f32
    %419 = vector.broadcast %cst_184 : f32 to vector<4x64xf32>
    %420 = arith.addf %419, %418 : vector<4x64xf32>
    %421 = arith.mulf %413, %420 : vector<4x64xf32>
    %cst_185 = arith.constant -0.284496725 : f32
    %422 = vector.broadcast %cst_185 : f32 to vector<4x64xf32>
    %423 = arith.addf %422, %421 : vector<4x64xf32>
    %424 = arith.mulf %413, %423 : vector<4x64xf32>
    %cst_186 = arith.constant 0.254829586 : f32
    %425 = vector.broadcast %cst_186 : f32 to vector<4x64xf32>
    %426 = arith.addf %425, %424 : vector<4x64xf32>
    %427 = arith.mulf %413, %426 : vector<4x64xf32>
    %428 = arith.mulf %407, %407 : vector<4x64xf32>
    %cst_187 = arith.constant 0.000000e+00 : f32
    %429 = vector.broadcast %cst_187 : f32 to vector<4x64xf32>
    %430 = arith.subf %429, %428 : vector<4x64xf32>
    %431 = math.exp %430 : vector<4x64xf32>
    %432 = arith.mulf %427, %431 : vector<4x64xf32>
    %cst_188 = arith.constant 1.000000e+00 : f32
    %433 = vector.broadcast %cst_188 : f32 to vector<4x64xf32>
    %434 = arith.subf %433, %432 : vector<4x64xf32>
    %cst_189 = arith.constant 0.000000e+00 : f32
    %435 = vector.broadcast %cst_189 : f32 to vector<4x64xf32>
    %436 = arith.cmpf olt, %406, %435 : vector<4x64xf32>
    %cst_190 = arith.constant 0.000000e+00 : f32
    %437 = vector.broadcast %cst_190 : f32 to vector<4x64xf32>
    %438 = arith.subf %437, %434 : vector<4x64xf32>
    %439 = arith.select %436, %438, %434 : vector<4x64xi1>, vector<4x64xf32>
    %cst_191 = arith.constant 1.000000e+00 : f32
    %440 = vector.broadcast %cst_191 : f32 to vector<4x64xf32>
    %441 = arith.addf %440, %439 : vector<4x64xf32>
    %442 = arith.mulf %404, %441 : vector<4x64xf32>
    %c1_192 = arith.constant 1 : index
    %c0_193 = arith.constant 0 : index
    %c0_194 = arith.constant 0 : index
    %443 = vector.load %arg19[%c1_192, %c0_193, %c0_194] : memref<2x64x32xbf16, #tpu.memory_space<vmem>>, vector<1x64x32xbf16>
    %444 = vector.shape_cast %443 : vector<1x64x32xbf16> to vector<64x32xbf16>
    %445 = arith.truncf %442 : vector<4x64xf32> to vector<4x64xbf16>
    %cst_195 = arith.constant dense<0.000000e+00> : vector<4x32xf32>
    %446 = tpu.matmul %445, %444, %cst_195 {dimension_numbers = #tpu.dot_dimension_numbers<[1], [0], [0], [1], [0, 0, 1, 1], [], []>} : vector<4x64xbf16>, vector<64x32xbf16>, vector<4x32xf32> -> vector<4x32xf32>
    %c1_196 = arith.constant 1 : index
    %c0_197 = arith.constant 0 : index
    %c0_198 = arith.constant 0 : index
    %447 = vector.load %arg20[%c1_196, %c0_197, %c0_198] : memref<2x1x32xf32, #tpu.memory_space<vmem>>, vector<1x1x32xf32>
    %448 = vector.shape_cast %447 : vector<1x1x32xf32> to vector<1x32xf32>
    %449 = vector.broadcast %448 : vector<1x32xf32> to vector<4x32xf32>
    %450 = arith.addf %446, %449 : vector<4x32xf32>
    %451 = arith.addf %450, %394 : vector<4x32xf32>
    %c1_199 = arith.constant 1 : index
    %c0_200 = arith.constant 0 : index
    %c0_201 = arith.constant 0 : index
    %452 = vector.load %arg15[%c1_199, %c0_200, %c0_201] : memref<2x1x32xf32, #tpu.memory_space<vmem>>, vector<1x1x32xf32>
    %453 = vector.shape_cast %452 : vector<1x1x32xf32> to vector<1x32xf32>
    %c1_202 = arith.constant 1 : index
    %c0_203 = arith.constant 0 : index
    %c0_204 = arith.constant 0 : index
    %454 = vector.load %arg16[%c1_202, %c0_203, %c0_204] : memref<2x1x32xf32, #tpu.memory_space<vmem>>, vector<1x1x32xf32>
    %455 = vector.shape_cast %454 : vector<1x1x32xf32> to vector<1x32xf32>
    %cst_205 = arith.constant dense<0.000000e+00> : vector<4xf32>
    %456 = vector.multi_reduction <add>, %451, %cst_205 [1] : vector<4x32xf32> to vector<4xf32>
    %457 = vector.shape_cast %456 : vector<4xf32> to vector<4x1xf32>
    %cst_206 = arith.constant 3.200000e+01 : f32
    %458 = vector.broadcast %cst_206 : f32 to vector<4x1xf32>
    %459 = arith.divf %457, %458 : vector<4x1xf32>
    %460 = vector.broadcast %459 : vector<4x1xf32> to vector<4x32xf32>
    %461 = arith.subf %451, %460 : vector<4x32xf32>
    %462 = arith.mulf %461, %461 : vector<4x32xf32>
    %cst_207 = arith.constant dense<0.000000e+00> : vector<4xf32>
    %463 = vector.multi_reduction <add>, %462, %cst_207 [1] : vector<4x32xf32> to vector<4xf32>
    %464 = vector.shape_cast %463 : vector<4xf32> to vector<4x1xf32>
    %cst_208 = arith.constant 3.200000e+01 : f32
    %465 = vector.broadcast %cst_208 : f32 to vector<4x1xf32>
    %466 = arith.divf %464, %465 : vector<4x1xf32>
    %cst_209 = arith.constant 9.99999996E-13 : f32
    %467 = vector.broadcast %cst_209 : f32 to vector<4x1xf32>
    %468 = arith.addf %466, %467 : vector<4x1xf32>
    %469 = math.rsqrt %468 : vector<4x1xf32>
    %470 = vector.broadcast %469 : vector<4x1xf32> to vector<4x32xf32>
    %471 = arith.mulf %461, %470 : vector<4x32xf32>
    %472 = vector.broadcast %453 : vector<1x32xf32> to vector<4x32xf32>
    %473 = arith.mulf %471, %472 : vector<4x32xf32>
    %474 = vector.broadcast %455 : vector<1x32xf32> to vector<4x32xf32>
    %475 = arith.addf %473, %474 : vector<4x32xf32>
    %c0_210 = arith.constant 0 : index
    %c0_211 = arith.constant 0 : index
    %476 = vector.load %arg21[%c0_210, %c0_211] : memref<32x128xbf16, #tpu.memory_space<vmem>>, vector<32x128xbf16>
    %477 = arith.truncf %475 : vector<4x32xf32> to vector<4x32xbf16>
    %cst_212 = arith.constant dense<0.000000e+00> : vector<4x128xf32>
    %478 = tpu.matmul %477, %476, %cst_212 {dimension_numbers = #tpu.dot_dimension_numbers<[1], [0], [0], [1], [0, 0, 1, 1], [], []>} : vector<4x32xbf16>, vector<32x128xbf16>, vector<4x128xf32> -> vector<4x128xf32>
    %c0_213 = arith.constant 0 : index
    %c0_214 = arith.constant 0 : index
    %479 = vector.load %arg22[%c0_213, %c0_214] : memref<1x128xf32, #tpu.memory_space<vmem>>, vector<1x128xf32>
    %480 = vector.broadcast %479 : vector<1x128xf32> to vector<4x128xf32>
    %481 = arith.addf %478, %480 : vector<4x128xf32>
    %cst_215 = arith.constant 0.000000e+00 : f32
    %482 = vector.broadcast %cst_215 : f32 to vector<1x32xf32>
    %cst_216 = arith.constant 0.000000e+00 : f32
    %483 = vector.broadcast %cst_216 : f32 to vector<1x192xf32>
    %484 = vector.extract_strided_slice %481 {offsets = [0, 0], sizes = [1, 64], strides = [1, 1]} : vector<4x128xf32> to vector<1x64xf32>
    %485 = vector.extract_strided_slice %481 {offsets = [1, 0], sizes = [1, 64], strides = [1, 1]} : vector<4x128xf32> to vector<1x64xf32>
    %486 = tpu.concatenate %482, %484, %485, %482 in 1 : vector<1x32xf32>, vector<1x64xf32>, vector<1x64xf32>, vector<1x32xf32> -> vector<1x192xf32>
    %487 = vector.extract_strided_slice %481 {offsets = [0, 64], sizes = [1, 64], strides = [1, 1]} : vector<4x128xf32> to vector<1x64xf32>
    %488 = vector.extract_strided_slice %481 {offsets = [1, 64], sizes = [1, 64], strides = [1, 1]} : vector<4x128xf32> to vector<1x64xf32>
    %489 = tpu.concatenate %482, %487, %488, %482 in 1 : vector<1x32xf32>, vector<1x64xf32>, vector<1x64xf32>, vector<1x32xf32> -> vector<1x192xf32>
    %490 = vector.extract_strided_slice %481 {offsets = [2, 0], sizes = [1, 64], strides = [1, 1]} : vector<4x128xf32> to vector<1x64xf32>
    %491 = vector.extract_strided_slice %481 {offsets = [3, 0], sizes = [1, 64], strides = [1, 1]} : vector<4x128xf32> to vector<1x64xf32>
    %492 = tpu.concatenate %482, %490, %491, %482 in 1 : vector<1x32xf32>, vector<1x64xf32>, vector<1x64xf32>, vector<1x32xf32> -> vector<1x192xf32>
    %493 = vector.extract_strided_slice %481 {offsets = [2, 64], sizes = [1, 64], strides = [1, 1]} : vector<4x128xf32> to vector<1x64xf32>
    %494 = vector.extract_strided_slice %481 {offsets = [3, 64], sizes = [1, 64], strides = [1, 1]} : vector<4x128xf32> to vector<1x64xf32>
    %495 = tpu.concatenate %482, %493, %494, %482 in 1 : vector<1x32xf32>, vector<1x64xf32>, vector<1x64xf32>, vector<1x32xf32> -> vector<1x192xf32>
    %496 = tpu.concatenate %483, %486, %489, %492, %495, %483 in 0 : vector<1x192xf32>, vector<1x192xf32>, vector<1x192xf32>, vector<1x192xf32>, vector<1x192xf32>, vector<1x192xf32> -> vector<6x192xf32>
    %497 = arith.truncf %496 : vector<6x192xf32> to vector<6x192xbf16>
    %c0_217 = arith.constant 0 : index
    %c0_218 = arith.constant 0 : index
    %c0_219 = arith.constant 0 : index
    %498 = vector.load %arg23[%c0_217, %c0_218, %c0_219] : memref<3x192x128xbf16, #tpu.memory_space<vmem>>, vector<1x192x128xbf16>
    %499 = vector.shape_cast %498 : vector<1x192x128xbf16> to vector<192x128xbf16>
    %cst_220 = arith.constant dense<0.000000e+00> : vector<6x128xf32>
    %500 = tpu.matmul %497, %499, %cst_220 {dimension_numbers = #tpu.dot_dimension_numbers<[1], [0], [0], [1], [0, 0, 1, 1], [], []>} : vector<6x192xbf16>, vector<192x128xbf16>, vector<6x128xf32> -> vector<6x128xf32>
    %501 = vector.extract_strided_slice %500 {offsets = [0, 0], sizes = [4, 128], strides = [1, 1]} : vector<6x128xf32> to vector<4x128xf32>
    %c1_221 = arith.constant 1 : index
    %c0_222 = arith.constant 0 : index
    %c0_223 = arith.constant 0 : index
    %502 = vector.load %arg23[%c1_221, %c0_222, %c0_223] : memref<3x192x128xbf16, #tpu.memory_space<vmem>>, vector<1x192x128xbf16>
    %503 = vector.shape_cast %502 : vector<1x192x128xbf16> to vector<192x128xbf16>
    %cst_224 = arith.constant dense<0.000000e+00> : vector<6x128xf32>
    %504 = tpu.matmul %497, %503, %cst_224 {dimension_numbers = #tpu.dot_dimension_numbers<[1], [0], [0], [1], [0, 0, 1, 1], [], []>} : vector<6x192xbf16>, vector<192x128xbf16>, vector<6x128xf32> -> vector<6x128xf32>
    %505 = vector.extract_strided_slice %504 {offsets = [1, 0], sizes = [4, 128], strides = [1, 1]} : vector<6x128xf32> to vector<4x128xf32>
    %506 = arith.addf %501, %505 : vector<4x128xf32>
    %c2 = arith.constant 2 : index
    %c0_225 = arith.constant 0 : index
    %c0_226 = arith.constant 0 : index
    %507 = vector.load %arg23[%c2, %c0_225, %c0_226] : memref<3x192x128xbf16, #tpu.memory_space<vmem>>, vector<1x192x128xbf16>
    %508 = vector.shape_cast %507 : vector<1x192x128xbf16> to vector<192x128xbf16>
    %cst_227 = arith.constant dense<0.000000e+00> : vector<6x128xf32>
    %509 = tpu.matmul %497, %508, %cst_227 {dimension_numbers = #tpu.dot_dimension_numbers<[1], [0], [0], [1], [0, 0, 1, 1], [], []>} : vector<6x192xbf16>, vector<192x128xbf16>, vector<6x128xf32> -> vector<6x128xf32>
    %510 = vector.extract_strided_slice %509 {offsets = [2, 0], sizes = [4, 128], strides = [1, 1]} : vector<6x128xf32> to vector<4x128xf32>
    %511 = arith.addf %506, %510 : vector<4x128xf32>
    %c0_228 = arith.constant 0 : index
    %c0_229 = arith.constant 0 : index
    %512 = vector.load %arg24[%c0_228, %c0_229] : memref<1x128xf32, #tpu.memory_space<vmem>>, vector<1x128xf32>
    %513 = vector.broadcast %512 : vector<1x128xf32> to vector<4x128xf32>
    %514 = arith.addf %511, %513 : vector<4x128xf32>
    %cst_230 = arith.constant 0.000000e+00 : f32
    %515 = vector.broadcast %cst_230 : f32 to vector<4x128xf32>
    %516 = arith.maximumf %514, %515 : vector<4x128xf32>
    %c0_231 = arith.constant 0 : index
    %c0_232 = arith.constant 0 : index
    %517 = vector.load %arg25[%c0_231, %c0_232] : memref<10x4xbf16, #tpu.memory_space<vmem>>, vector<10x4xbf16>
    %518 = arith.truncf %516 : vector<4x128xf32> to vector<4x128xbf16>
    %cst_233 = arith.constant dense<0.000000e+00> : vector<10x128xf32>
    %519 = tpu.matmul %517, %518, %cst_233 {dimension_numbers = #tpu.dot_dimension_numbers<[1], [0], [0], [1], [0, 0, 1, 1], [], []>} : vector<10x4xbf16>, vector<4x128xbf16>, vector<10x128xf32> -> vector<10x128xf32>
    %520 = arith.truncf %519 : vector<10x128xf32> to vector<10x128xbf16>
    %c0_234 = arith.constant 0 : index
    %c0_235 = arith.constant 0 : index
    %c0_236 = arith.constant 0 : index
    %521 = vector.load %arg26[%c0_234, %c0_235, %c0_236] : memref<3x128x128xbf16, #tpu.memory_space<vmem>>, vector<1x128x128xbf16>
    %522 = vector.shape_cast %521 : vector<1x128x128xbf16> to vector<128x128xbf16>
    %cst_237 = arith.constant dense<0.000000e+00> : vector<10x128xf32>
    %523 = tpu.matmul %520, %522, %cst_237 {dimension_numbers = #tpu.dot_dimension_numbers<[1], [0], [0], [1], [0, 0, 1, 1], [], []>} : vector<10x128xbf16>, vector<128x128xbf16>, vector<10x128xf32> -> vector<10x128xf32>
    %524 = vector.extract_strided_slice %523 {offsets = [0, 0], sizes = [8, 128], strides = [1, 1]} : vector<10x128xf32> to vector<8x128xf32>
    %c1_238 = arith.constant 1 : index
    %c0_239 = arith.constant 0 : index
    %c0_240 = arith.constant 0 : index
    %525 = vector.load %arg26[%c1_238, %c0_239, %c0_240] : memref<3x128x128xbf16, #tpu.memory_space<vmem>>, vector<1x128x128xbf16>
    %526 = vector.shape_cast %525 : vector<1x128x128xbf16> to vector<128x128xbf16>
    %cst_241 = arith.constant dense<0.000000e+00> : vector<10x128xf32>
    %527 = tpu.matmul %520, %526, %cst_241 {dimension_numbers = #tpu.dot_dimension_numbers<[1], [0], [0], [1], [0, 0, 1, 1], [], []>} : vector<10x128xbf16>, vector<128x128xbf16>, vector<10x128xf32> -> vector<10x128xf32>
    %528 = vector.extract_strided_slice %527 {offsets = [1, 0], sizes = [8, 128], strides = [1, 1]} : vector<10x128xf32> to vector<8x128xf32>
    %529 = arith.addf %524, %528 : vector<8x128xf32>
    %c2_242 = arith.constant 2 : index
    %c0_243 = arith.constant 0 : index
    %c0_244 = arith.constant 0 : index
    %530 = vector.load %arg26[%c2_242, %c0_243, %c0_244] : memref<3x128x128xbf16, #tpu.memory_space<vmem>>, vector<1x128x128xbf16>
    %531 = vector.shape_cast %530 : vector<1x128x128xbf16> to vector<128x128xbf16>
    %cst_245 = arith.constant dense<0.000000e+00> : vector<10x128xf32>
    %532 = tpu.matmul %520, %531, %cst_245 {dimension_numbers = #tpu.dot_dimension_numbers<[1], [0], [0], [1], [0, 0, 1, 1], [], []>} : vector<10x128xbf16>, vector<128x128xbf16>, vector<10x128xf32> -> vector<10x128xf32>
    %533 = vector.extract_strided_slice %532 {offsets = [2, 0], sizes = [8, 128], strides = [1, 1]} : vector<10x128xf32> to vector<8x128xf32>
    %534 = arith.addf %529, %533 : vector<8x128xf32>
    %c0_246 = arith.constant 0 : index
    %c0_247 = arith.constant 0 : index
    %535 = vector.load %arg27[%c0_246, %c0_247] : memref<1x128xf32, #tpu.memory_space<vmem>>, vector<1x128xf32>
    %536 = vector.broadcast %535 : vector<1x128xf32> to vector<8x128xf32>
    %537 = arith.addf %534, %536 : vector<8x128xf32>
    %cst_248 = arith.constant 0.000000e+00 : f32
    %538 = vector.broadcast %cst_248 : f32 to vector<8x128xf32>
    %539 = arith.maximumf %537, %538 : vector<8x128xf32>
    %c0_249 = arith.constant 0 : index
    %c0_250 = arith.constant 0 : index
    %540 = vector.load %arg28[%c0_249, %c0_250] : memref<18x8xbf16, #tpu.memory_space<vmem>>, vector<18x8xbf16>
    %541 = arith.truncf %539 : vector<8x128xf32> to vector<8x128xbf16>
    %cst_251 = arith.constant dense<0.000000e+00> : vector<18x128xf32>
    %542 = tpu.matmul %540, %541, %cst_251 {dimension_numbers = #tpu.dot_dimension_numbers<[1], [0], [0], [1], [0, 0, 1, 1], [], []>} : vector<18x8xbf16>, vector<8x128xbf16>, vector<18x128xf32> -> vector<18x128xf32>
    %543 = arith.truncf %542 : vector<18x128xf32> to vector<18x128xbf16>
    %c0_252 = arith.constant 0 : index
    %c0_253 = arith.constant 0 : index
    %c0_254 = arith.constant 0 : index
    %544 = vector.load %arg29[%c0_252, %c0_253, %c0_254] : memref<3x128x256xbf16, #tpu.memory_space<vmem>>, vector<1x128x256xbf16>
    %545 = vector.shape_cast %544 : vector<1x128x256xbf16> to vector<128x256xbf16>
    %cst_255 = arith.constant dense<0.000000e+00> : vector<18x256xf32>
    %546 = tpu.matmul %543, %545, %cst_255 {dimension_numbers = #tpu.dot_dimension_numbers<[1], [0], [0], [1], [0, 0, 1, 1], [], []>} : vector<18x128xbf16>, vector<128x256xbf16>, vector<18x256xf32> -> vector<18x256xf32>
    %547 = vector.extract_strided_slice %546 {offsets = [0, 0], sizes = [16, 256], strides = [1, 1]} : vector<18x256xf32> to vector<16x256xf32>
    %c1_256 = arith.constant 1 : index
    %c0_257 = arith.constant 0 : index
    %c0_258 = arith.constant 0 : index
    %548 = vector.load %arg29[%c1_256, %c0_257, %c0_258] : memref<3x128x256xbf16, #tpu.memory_space<vmem>>, vector<1x128x256xbf16>
    %549 = vector.shape_cast %548 : vector<1x128x256xbf16> to vector<128x256xbf16>
    %cst_259 = arith.constant dense<0.000000e+00> : vector<18x256xf32>
    %550 = tpu.matmul %543, %549, %cst_259 {dimension_numbers = #tpu.dot_dimension_numbers<[1], [0], [0], [1], [0, 0, 1, 1], [], []>} : vector<18x128xbf16>, vector<128x256xbf16>, vector<18x256xf32> -> vector<18x256xf32>
    %551 = vector.extract_strided_slice %550 {offsets = [1, 0], sizes = [16, 256], strides = [1, 1]} : vector<18x256xf32> to vector<16x256xf32>
    %552 = arith.addf %547, %551 : vector<16x256xf32>
    %c2_260 = arith.constant 2 : index
    %c0_261 = arith.constant 0 : index
    %c0_262 = arith.constant 0 : index
    %553 = vector.load %arg29[%c2_260, %c0_261, %c0_262] : memref<3x128x256xbf16, #tpu.memory_space<vmem>>, vector<1x128x256xbf16>
    %554 = vector.shape_cast %553 : vector<1x128x256xbf16> to vector<128x256xbf16>
    %cst_263 = arith.constant dense<0.000000e+00> : vector<18x256xf32>
    %555 = tpu.matmul %543, %554, %cst_263 {dimension_numbers = #tpu.dot_dimension_numbers<[1], [0], [0], [1], [0, 0, 1, 1], [], []>} : vector<18x128xbf16>, vector<128x256xbf16>, vector<18x256xf32> -> vector<18x256xf32>
    %556 = vector.extract_strided_slice %555 {offsets = [2, 0], sizes = [16, 256], strides = [1, 1]} : vector<18x256xf32> to vector<16x256xf32>
    %557 = arith.addf %552, %556 : vector<16x256xf32>
    %c0_264 = arith.constant 0 : index
    %c0_265 = arith.constant 0 : index
    %558 = vector.load %arg30[%c0_264, %c0_265] : memref<1x256xf32, #tpu.memory_space<vmem>>, vector<1x256xf32>
    %559 = vector.broadcast %558 : vector<1x256xf32> to vector<16x256xf32>
    %560 = arith.addf %557, %559 : vector<16x256xf32>
    %cst_266 = arith.constant 0.000000e+00 : f32
    %561 = vector.broadcast %cst_266 : f32 to vector<16x256xf32>
    %562 = arith.maximumf %560, %561 : vector<16x256xf32>
    %c0_267 = arith.constant 0 : index
    %c0_268 = arith.constant 0 : index
    %563 = vector.load %arg31[%c0_267, %c0_268] : memref<34x16xbf16, #tpu.memory_space<vmem>>, vector<34x16xbf16>
    %564 = arith.truncf %562 : vector<16x256xf32> to vector<16x256xbf16>
    %cst_269 = arith.constant dense<0.000000e+00> : vector<34x256xf32>
    %565 = tpu.matmul %563, %564, %cst_269 {dimension_numbers = #tpu.dot_dimension_numbers<[1], [0], [0], [1], [0, 0, 1, 1], [], []>} : vector<34x16xbf16>, vector<16x256xbf16>, vector<34x256xf32> -> vector<34x256xf32>
    %566 = arith.truncf %565 : vector<34x256xf32> to vector<34x256xbf16>
    %c0_270 = arith.constant 0 : index
    %c0_271 = arith.constant 0 : index
    %c0_272 = arith.constant 0 : index
    %567 = vector.load %arg32[%c0_270, %c0_271, %c0_272] : memref<3x256x256xbf16, #tpu.memory_space<vmem>>, vector<1x256x256xbf16>
    %568 = vector.shape_cast %567 : vector<1x256x256xbf16> to vector<256x256xbf16>
    %cst_273 = arith.constant dense<0.000000e+00> : vector<34x256xf32>
    %569 = tpu.matmul %566, %568, %cst_273 {dimension_numbers = #tpu.dot_dimension_numbers<[1], [0], [0], [1], [0, 0, 1, 1], [], []>} : vector<34x256xbf16>, vector<256x256xbf16>, vector<34x256xf32> -> vector<34x256xf32>
    %570 = vector.extract_strided_slice %569 {offsets = [0, 0], sizes = [32, 256], strides = [1, 1]} : vector<34x256xf32> to vector<32x256xf32>
    %c1_274 = arith.constant 1 : index
    %c0_275 = arith.constant 0 : index
    %c0_276 = arith.constant 0 : index
    %571 = vector.load %arg32[%c1_274, %c0_275, %c0_276] : memref<3x256x256xbf16, #tpu.memory_space<vmem>>, vector<1x256x256xbf16>
    %572 = vector.shape_cast %571 : vector<1x256x256xbf16> to vector<256x256xbf16>
    %cst_277 = arith.constant dense<0.000000e+00> : vector<34x256xf32>
    %573 = tpu.matmul %566, %572, %cst_277 {dimension_numbers = #tpu.dot_dimension_numbers<[1], [0], [0], [1], [0, 0, 1, 1], [], []>} : vector<34x256xbf16>, vector<256x256xbf16>, vector<34x256xf32> -> vector<34x256xf32>
    %574 = vector.extract_strided_slice %573 {offsets = [1, 0], sizes = [32, 256], strides = [1, 1]} : vector<34x256xf32> to vector<32x256xf32>
    %575 = arith.addf %570, %574 : vector<32x256xf32>
    %c2_278 = arith.constant 2 : index
    %c0_279 = arith.constant 0 : index
    %c0_280 = arith.constant 0 : index
    %576 = vector.load %arg32[%c2_278, %c0_279, %c0_280] : memref<3x256x256xbf16, #tpu.memory_space<vmem>>, vector<1x256x256xbf16>
    %577 = vector.shape_cast %576 : vector<1x256x256xbf16> to vector<256x256xbf16>
    %cst_281 = arith.constant dense<0.000000e+00> : vector<34x256xf32>
    %578 = tpu.matmul %566, %577, %cst_281 {dimension_numbers = #tpu.dot_dimension_numbers<[1], [0], [0], [1], [0, 0, 1, 1], [], []>} : vector<34x256xbf16>, vector<256x256xbf16>, vector<34x256xf32> -> vector<34x256xf32>
    %579 = vector.extract_strided_slice %578 {offsets = [2, 0], sizes = [32, 256], strides = [1, 1]} : vector<34x256xf32> to vector<32x256xf32>
    %580 = arith.addf %575, %579 : vector<32x256xf32>
    %c0_282 = arith.constant 0 : index
    %c0_283 = arith.constant 0 : index
    %581 = vector.load %arg33[%c0_282, %c0_283] : memref<1x256xf32, #tpu.memory_space<vmem>>, vector<1x256xf32>
    %582 = vector.broadcast %581 : vector<1x256xf32> to vector<32x256xf32>
    %583 = arith.addf %580, %582 : vector<32x256xf32>
    %cst_284 = arith.constant 0.000000e+00 : f32
    %584 = vector.broadcast %cst_284 : f32 to vector<32x256xf32>
    %585 = arith.maximumf %583, %584 : vector<32x256xf32>
    %c0_285 = arith.constant 0 : index
    %c0_286 = arith.constant 0 : index
    %586 = vector.load %arg34[%c0_285, %c0_286] : memref<66x32xbf16, #tpu.memory_space<vmem>>, vector<66x32xbf16>
    %587 = arith.truncf %585 : vector<32x256xf32> to vector<32x256xbf16>
    %cst_287 = arith.constant dense<0.000000e+00> : vector<66x256xf32>
    %588 = tpu.matmul %586, %587, %cst_287 {dimension_numbers = #tpu.dot_dimension_numbers<[1], [0], [0], [1], [0, 0, 1, 1], [], []>} : vector<66x32xbf16>, vector<32x256xbf16>, vector<66x256xf32> -> vector<66x256xf32>
    %589 = arith.truncf %588 : vector<66x256xf32> to vector<66x256xbf16>
    %c0_288 = arith.constant 0 : index
    %c0_289 = arith.constant 0 : index
    %c0_290 = arith.constant 0 : index
    %590 = vector.load %arg35[%c0_288, %c0_289, %c0_290] : memref<3x256x128xbf16, #tpu.memory_space<vmem>>, vector<1x256x128xbf16>
    %591 = vector.shape_cast %590 : vector<1x256x128xbf16> to vector<256x128xbf16>
    %cst_291 = arith.constant dense<0.000000e+00> : vector<66x128xf32>
    %592 = tpu.matmul %589, %591, %cst_291 {dimension_numbers = #tpu.dot_dimension_numbers<[1], [0], [0], [1], [0, 0, 1, 1], [], []>} : vector<66x256xbf16>, vector<256x128xbf16>, vector<66x128xf32> -> vector<66x128xf32>
    %593 = vector.extract_strided_slice %592 {offsets = [0, 0], sizes = [64, 128], strides = [1, 1]} : vector<66x128xf32> to vector<64x128xf32>
    %c1_292 = arith.constant 1 : index
    %c0_293 = arith.constant 0 : index
    %c0_294 = arith.constant 0 : index
    %594 = vector.load %arg35[%c1_292, %c0_293, %c0_294] : memref<3x256x128xbf16, #tpu.memory_space<vmem>>, vector<1x256x128xbf16>
    %595 = vector.shape_cast %594 : vector<1x256x128xbf16> to vector<256x128xbf16>
    %cst_295 = arith.constant dense<0.000000e+00> : vector<66x128xf32>
    %596 = tpu.matmul %589, %595, %cst_295 {dimension_numbers = #tpu.dot_dimension_numbers<[1], [0], [0], [1], [0, 0, 1, 1], [], []>} : vector<66x256xbf16>, vector<256x128xbf16>, vector<66x128xf32> -> vector<66x128xf32>
    %597 = vector.extract_strided_slice %596 {offsets = [1, 0], sizes = [64, 128], strides = [1, 1]} : vector<66x128xf32> to vector<64x128xf32>
    %598 = arith.addf %593, %597 : vector<64x128xf32>
    %c2_296 = arith.constant 2 : index
    %c0_297 = arith.constant 0 : index
    %c0_298 = arith.constant 0 : index
    %599 = vector.load %arg35[%c2_296, %c0_297, %c0_298] : memref<3x256x128xbf16, #tpu.memory_space<vmem>>, vector<1x256x128xbf16>
    %600 = vector.shape_cast %599 : vector<1x256x128xbf16> to vector<256x128xbf16>
    %cst_299 = arith.constant dense<0.000000e+00> : vector<66x128xf32>
    %601 = tpu.matmul %589, %600, %cst_299 {dimension_numbers = #tpu.dot_dimension_numbers<[1], [0], [0], [1], [0, 0, 1, 1], [], []>} : vector<66x256xbf16>, vector<256x128xbf16>, vector<66x128xf32> -> vector<66x128xf32>
    %602 = vector.extract_strided_slice %601 {offsets = [2, 0], sizes = [64, 128], strides = [1, 1]} : vector<66x128xf32> to vector<64x128xf32>
    %603 = arith.addf %598, %602 : vector<64x128xf32>
    %c0_300 = arith.constant 0 : index
    %c0_301 = arith.constant 0 : index
    %604 = vector.load %arg36[%c0_300, %c0_301] : memref<1x128xf32, #tpu.memory_space<vmem>>, vector<1x128xf32>
    %605 = vector.broadcast %604 : vector<1x128xf32> to vector<64x128xf32>
    %606 = arith.addf %603, %605 : vector<64x128xf32>
    %c0_302 = arith.constant 0 : index
    %c0_303 = arith.constant 0 : index
    %c0_304 = arith.constant 0 : index
    %607 = vector.load %arg37[%c0_302, %c0_303, %c0_304] : memref<1x64x128xf32, #tpu.memory_space<vmem>>, vector<1x64x128xf32>
    %608 = vector.shape_cast %607 : vector<1x64x128xf32> to vector<64x128xf32>
    %609 = vector.shape_cast %606 : vector<64x128xf32> to vector<1x64x128xf32>
    tpu.vector_store %arg37[%c0_302, %c0_303, %c0_304], %609 {strides = array<i32>} : memref<1x64x128xf32, #tpu.memory_space<vmem>>, vector<1x64x128xf32>,
    return
  }
  func.func @transform_0(%arg0: i32) -> (i32, i32, i32) {
    %c0_i32 = arith.constant 0 : i32
    %c0_i32_0 = arith.constant 0 : i32
    %c0_i32_1 = arith.constant 0 : i32
    return %arg0, %c0_i32, %c0_i32_0 : i32, i32, i32
  }
  func.func @transform_1(%arg0: i32) -> (i32, i32) {
    %c0_i32 = arith.constant 0 : i32
    %c0_i32_0 = arith.constant 0 : i32
    %c0_i32_1 = arith.constant 0 : i32
    return %c0_i32, %c0_i32_0 : i32, i32
  }
  func.func @transform_2(%arg0: i32) -> (i32, i32) {
    %c0_i32 = arith.constant 0 : i32
    %c0_i32_0 = arith.constant 0 : i32
    %c0_i32_1 = arith.constant 0 : i32
    return %c0_i32, %c0_i32_0 : i32, i32
  }
  func.func @transform_3(%arg0: i32) -> (i32, i32) {
    %c0_i32 = arith.constant 0 : i32
    %c0_i32_0 = arith.constant 0 : i32
    %c0_i32_1 = arith.constant 0 : i32
    return %c0_i32, %c0_i32_0 : i32, i32
  }
  func.func @transform_4(%arg0: i32) -> (i32, i32) {
    %c0_i32 = arith.constant 0 : i32
    %c0_i32_0 = arith.constant 0 : i32
    %c0_i32_1 = arith.constant 0 : i32
    return %c0_i32, %c0_i32_0 : i32, i32
  }
  func.func @transform_5(%arg0: i32) -> (i32, i32) {
    %c0_i32 = arith.constant 0 : i32
    %c0_i32_0 = arith.constant 0 : i32
    %c0_i32_1 = arith.constant 0 : i32
    return %c0_i32, %c0_i32_0 : i32, i32
  }
  func.func @transform_6(%arg0: i32) -> (i32, i32) {
    %c0_i32 = arith.constant 0 : i32
    %c0_i32_0 = arith.constant 0 : i32
    %c0_i32_1 = arith.constant 0 : i32
    return %c0_i32, %c0_i32_0 : i32, i32
  }
  func.func @transform_7(%arg0: i32) -> (i32, i32) {
    %c0_i32 = arith.constant 0 : i32
    %c0_i32_0 = arith.constant 0 : i32
    %c0_i32_1 = arith.constant 0 : i32
    return %c0_i32, %c0_i32_0 : i32, i32
  }
  func.func @transform_8(%arg0: i32) -> (i32, i32, i32) {
    %c0_i32 = arith.constant 0 : i32
    %c0_i32_0 = arith.constant 0 : i32
    %c0_i32_1 = arith.constant 0 : i32
    %c0_i32_2 = arith.constant 0 : i32
    return %c0_i32, %c0_i32_0, %c0_i32_1 : i32, i32, i32
  }
  func.func @transform_9(%arg0: i32) -> (i32, i32, i32) {
    %c0_i32 = arith.constant 0 : i32
    %c0_i32_0 = arith.constant 0 : i32
    %c0_i32_1 = arith.constant 0 : i32
    %c0_i32_2 = arith.constant 0 : i32
    return %c0_i32, %c0_i32_0, %c0_i32_1 : i32, i32, i32
  }
  func.func @transform_10(%arg0: i32) -> (i32, i32, i32) {
    %c0_i32 = arith.constant 0 : i32
    %c0_i32_0 = arith.constant 0 : i32
    %c0_i32_1 = arith.constant 0 : i32
    %c0_i32_2 = arith.constant 0 : i32
    return %c0_i32, %c0_i32_0, %c0_i32_1 : i32, i32, i32
  }
  func.func @transform_11(%arg0: i32) -> (i32, i32, i32) {
    %c0_i32 = arith.constant 0 : i32
    %c0_i32_0 = arith.constant 0 : i32
    %c0_i32_1 = arith.constant 0 : i32
    %c0_i32_2 = arith.constant 0 : i32
    return %c0_i32, %c0_i32_0, %c0_i32_1 : i32, i32, i32
  }
  func.func @transform_12(%arg0: i32) -> (i32, i32, i32) {
    %c0_i32 = arith.constant 0 : i32
    %c0_i32_0 = arith.constant 0 : i32
    %c0_i32_1 = arith.constant 0 : i32
    %c0_i32_2 = arith.constant 0 : i32
    return %c0_i32, %c0_i32_0, %c0_i32_1 : i32, i32, i32
  }
  func.func @transform_13(%arg0: i32) -> (i32, i32, i32) {
    %c0_i32 = arith.constant 0 : i32
    %c0_i32_0 = arith.constant 0 : i32
    %c0_i32_1 = arith.constant 0 : i32
    %c0_i32_2 = arith.constant 0 : i32
    return %c0_i32, %c0_i32_0, %c0_i32_1 : i32, i32, i32
  }
  func.func @transform_14(%arg0: i32) -> (i32, i32, i32) {
    %c0_i32 = arith.constant 0 : i32
    %c0_i32_0 = arith.constant 0 : i32
    %c0_i32_1 = arith.constant 0 : i32
    %c0_i32_2 = arith.constant 0 : i32
    return %c0_i32, %c0_i32_0, %c0_i32_1 : i32, i32, i32
  }
  func.func @transform_15(%arg0: i32) -> (i32, i32, i32) {
    %c0_i32 = arith.constant 0 : i32
    %c0_i32_0 = arith.constant 0 : i32
    %c0_i32_1 = arith.constant 0 : i32
    %c0_i32_2 = arith.constant 0 : i32
    return %c0_i32, %c0_i32_0, %c0_i32_1 : i32, i32, i32
  }
  func.func @transform_16(%arg0: i32) -> (i32, i32, i32) {
    %c0_i32 = arith.constant 0 : i32
    %c0_i32_0 = arith.constant 0 : i32
    %c0_i32_1 = arith.constant 0 : i32
    %c0_i32_2 = arith.constant 0 : i32
    return %c0_i32, %c0_i32_0, %c0_i32_1 : i32, i32, i32
  }
  func.func @transform_17(%arg0: i32) -> (i32, i32, i32) {
    %c0_i32 = arith.constant 0 : i32
    %c0_i32_0 = arith.constant 0 : i32
    %c0_i32_1 = arith.constant 0 : i32
    %c0_i32_2 = arith.constant 0 : i32
    return %c0_i32, %c0_i32_0, %c0_i32_1 : i32, i32, i32
  }
  func.func @transform_18(%arg0: i32) -> (i32, i32, i32) {
    %c0_i32 = arith.constant 0 : i32
    %c0_i32_0 = arith.constant 0 : i32
    %c0_i32_1 = arith.constant 0 : i32
    %c0_i32_2 = arith.constant 0 : i32
    return %c0_i32, %c0_i32_0, %c0_i32_1 : i32, i32, i32
  }
  func.func @transform_19(%arg0: i32) -> (i32, i32, i32) {
    %c0_i32 = arith.constant 0 : i32
    %c0_i32_0 = arith.constant 0 : i32
    %c0_i32_1 = arith.constant 0 : i32
    %c0_i32_2 = arith.constant 0 : i32
    return %c0_i32, %c0_i32_0, %c0_i32_1 : i32, i32, i32
  }
  func.func @transform_20(%arg0: i32) -> (i32, i32) {
    %c0_i32 = arith.constant 0 : i32
    %c0_i32_0 = arith.constant 0 : i32
    %c0_i32_1 = arith.constant 0 : i32
    return %c0_i32, %c0_i32_0 : i32, i32
  }
  func.func @transform_21(%arg0: i32) -> (i32, i32) {
    %c0_i32 = arith.constant 0 : i32
    %c0_i32_0 = arith.constant 0 : i32
    %c0_i32_1 = arith.constant 0 : i32
    return %c0_i32, %c0_i32_0 : i32, i32
  }
  func.func @transform_22(%arg0: i32) -> (i32, i32, i32) {
    %c0_i32 = arith.constant 0 : i32
    %c0_i32_0 = arith.constant 0 : i32
    %c0_i32_1 = arith.constant 0 : i32
    %c0_i32_2 = arith.constant 0 : i32
    return %c0_i32, %c0_i32_0, %c0_i32_1 : i32, i32, i32
  }
  func.func @transform_23(%arg0: i32) -> (i32, i32) {
    %c0_i32 = arith.constant 0 : i32
    %c0_i32_0 = arith.constant 0 : i32
    %c0_i32_1 = arith.constant 0 : i32
    return %c0_i32, %c0_i32_0 : i32, i32
  }
  func.func @transform_24(%arg0: i32) -> (i32, i32) {
    %c0_i32 = arith.constant 0 : i32
    %c0_i32_0 = arith.constant 0 : i32
    %c0_i32_1 = arith.constant 0 : i32
    return %c0_i32, %c0_i32_0 : i32, i32
  }
  func.func @transform_25(%arg0: i32) -> (i32, i32, i32) {
    %c0_i32 = arith.constant 0 : i32
    %c0_i32_0 = arith.constant 0 : i32
    %c0_i32_1 = arith.constant 0 : i32
    %c0_i32_2 = arith.constant 0 : i32
    return %c0_i32, %c0_i32_0, %c0_i32_1 : i32, i32, i32
  }
  func.func @transform_26(%arg0: i32) -> (i32, i32) {
    %c0_i32 = arith.constant 0 : i32
    %c0_i32_0 = arith.constant 0 : i32
    %c0_i32_1 = arith.constant 0 : i32
    return %c0_i32, %c0_i32_0 : i32, i32
  }
  func.func @transform_27(%arg0: i32) -> (i32, i32) {
    %c0_i32 = arith.constant 0 : i32
    %c0_i32_0 = arith.constant 0 : i32
    %c0_i32_1 = arith.constant 0 : i32
    return %c0_i32, %c0_i32_0 : i32, i32
  }
  func.func @transform_28(%arg0: i32) -> (i32, i32, i32) {
    %c0_i32 = arith.constant 0 : i32
    %c0_i32_0 = arith.constant 0 : i32
    %c0_i32_1 = arith.constant 0 : i32
    %c0_i32_2 = arith.constant 0 : i32
    return %c0_i32, %c0_i32_0, %c0_i32_1 : i32, i32, i32
  }
  func.func @transform_29(%arg0: i32) -> (i32, i32) {
    %c0_i32 = arith.constant 0 : i32
    %c0_i32_0 = arith.constant 0 : i32
    %c0_i32_1 = arith.constant 0 : i32
    return %c0_i32, %c0_i32_0 : i32, i32
  }
  func.func @transform_30(%arg0: i32) -> (i32, i32) {
    %c0_i32 = arith.constant 0 : i32
    %c0_i32_0 = arith.constant 0 : i32
    %c0_i32_1 = arith.constant 0 : i32
    return %c0_i32, %c0_i32_0 : i32, i32
  }
  func.func @transform_31(%arg0: i32) -> (i32, i32, i32) {
    %c0_i32 = arith.constant 0 : i32
    %c0_i32_0 = arith.constant 0 : i32
    %c0_i32_1 = arith.constant 0 : i32
    %c0_i32_2 = arith.constant 0 : i32
    return %c0_i32, %c0_i32_0, %c0_i32_1 : i32, i32, i32
  }
  func.func @transform_32(%arg0: i32) -> (i32, i32) {
    %c0_i32 = arith.constant 0 : i32
    %c0_i32_0 = arith.constant 0 : i32
    %c0_i32_1 = arith.constant 0 : i32
    return %c0_i32, %c0_i32_0 : i32, i32
  }
  func.func @transform_33(%arg0: i32) -> (i32, i32) {
    %c0_i32 = arith.constant 0 : i32
    %c0_i32_0 = arith.constant 0 : i32
    %c0_i32_1 = arith.constant 0 : i32
    return %c0_i32, %c0_i32_0 : i32, i32
  }
  func.func @transform_34(%arg0: i32) -> (i32, i32, i32) {
    %c0_i32 = arith.constant 0 : i32
    %c0_i32_0 = arith.constant 0 : i32
    %c0_i32_1 = arith.constant 0 : i32
    %c0_i32_2 = arith.constant 0 : i32
    return %c0_i32, %c0_i32_0, %c0_i32_1 : i32, i32, i32
  }
  func.func @transform_35(%arg0: i32) -> (i32, i32) {
    %c0_i32 = arith.constant 0 : i32
    %c0_i32_0 = arith.constant 0 : i32
    %c0_i32_1 = arith.constant 0 : i32
    return %c0_i32, %c0_i32_0 : i32, i32
  }
  func.func @transform_36(%arg0: i32) -> (i32, i32, i32) {
    %c0_i32 = arith.constant 0 : i32
    %c0_i32_0 = arith.constant 0 : i32
    %c0_i32_1 = arith.constant 0 : i32
    return %arg0, %c0_i32, %c0_i32_0 : i32, i32, i32
  }
}

</mosaic_0001>

<llo_original>
// kernel: setr_forward.1
$region0: #{setr_forward.1}
  #allocation0 [shape = 'u32[]', space=smem, size = 0x4, offset = 0x4, fixed_abs, tag = 'smem constant byte address 0x4 - core index']
  #allocation1 [shape = 'u32[72,128]{1,0:T(1,128)}', space=vmem, size = 0x9000, scoped, tag = 'internal scratch']
  %s0 = inlined_call_operand.smem [shape: u32[37], index: -1, kind: input, shape index: {}]
  %s1 = sld [smem:[%s0]]
  %s2 = scalar_lea.smem %s0, 1
  %s3 = sld [smem:[%s2]]
  %s4 = scalar_lea.smem %s0, 2
  %s5 = sld [smem:[%s4]]
  %s6 = scalar_lea.smem %s0, 3
  %s7 = sld [smem:[%s6]]
  %s8 = scalar_lea.smem %s0, 4
  %s9 = sld [smem:[%s8]]
  %s10 = scalar_lea.smem %s0, 5
  %s11 = sld [smem:[%s10]]
  %s12 = scalar_lea.smem %s0, 6
  %s13 = sld [smem:[%s12]]
  %s14 = scalar_lea.smem %s0, 7
  %s15 = sld [smem:[%s14]]
  %s16 = scalar_lea.smem %s0, 8
  %s17 = sld [smem:[%s16]]
  %s18 = scalar_lea.smem %s0, 9
  %s19 = sld [smem:[%s18]]
  %s20 = scalar_lea.smem %s0, 10
  %s21 = sld [smem:[%s20]]
  %s22 = scalar_lea.smem %s0, 11
  %s23 = sld [smem:[%s22]]
  %s24 = scalar_lea.smem %s0, 12
  %s25 = sld [smem:[%s24]]
  %s26 = scalar_lea.smem %s0, 13
  %s27 = sld [smem:[%s26]]
  %s28 = scalar_lea.smem %s0, 14
  %s29 = sld [smem:[%s28]]
  %s30 = scalar_lea.smem %s0, 15
  %s31 = sld [smem:[%s30]]
  %s32 = scalar_lea.smem %s0, 16
  %s33 = sld [smem:[%s32]]
  %s34 = scalar_lea.smem %s0, 17
  %s35 = sld [smem:[%s34]]
  %s36 = scalar_lea.smem %s0, 18
  %s37 = sld [smem:[%s36]]
  %s38 = scalar_lea.smem %s0, 19
  %s39 = sld [smem:[%s38]]
  %s40 = scalar_lea.smem %s0, 20
  %s41 = sld [smem:[%s40]]
  %s42 = scalar_lea.smem %s0, 21
  %s43 = sld [smem:[%s42]]
  %s44 = scalar_lea.smem %s0, 22
  %s45 = sld [smem:[%s44]]
  %s46 = scalar_lea.smem %s0, 23
  %s47 = sld [smem:[%s46]]
  %s48 = scalar_lea.smem %s0, 24
  %s49 = sld [smem:[%s48]]
  %s50 = scalar_lea.smem %s0, 25
  %s51 = sld [smem:[%s50]]
  %s52 = scalar_lea.smem %s0, 26
  %s53 = sld [smem:[%s52]]
  %s54 = scalar_lea.smem %s0, 27
  %s55 = sld [smem:[%s54]]
  %s56 = scalar_lea.smem %s0, 28
  %s57 = sld [smem:[%s56]]
  %s58 = scalar_lea.smem %s0, 29
  %s59 = sld [smem:[%s58]]
  %s60 = scalar_lea.smem %s0, 30
  %s61 = sld [smem:[%s60]]
  %s62 = scalar_lea.smem %s0, 31
  %s63 = sld [smem:[%s62]]
  %s64 = scalar_lea.smem %s0, 32
  %s65 = sld [smem:[%s64]]
  %s66 = scalar_lea.smem %s0, 33
  %s67 = sld [smem:[%s66]]
  %s68 = scalar_lea.smem %s0, 34
  %s69 = sld [smem:[%s68]]
  %s70 = scalar_lea.smem %s0, 35
  %s71 = sld [smem:[%s70]]
  %s72 = scalar_lea.smem %s0, 36
  %s73 = sld [smem:[%s72]]
  %s74 = sld [smem:[#allocation0]]
  $region185: #{setr_forward.1} parent=0
    _
  %s76 = ssub.s32 1, %s74
  %s77 = scalar_select 0, %s76, %s74
  $region1: #{setr_forward.1} parent=0
    #allocation2 [shape = 'u8[147456]{0}', space=vmem, size = 0x24000, scoped, tag = 'input window, operand 22, single buffered']
    #allocation3 [shape = 's32[2]{0}', space=sflag, size = 0x8, scoped, tag = 'scoped memory for setr_forward.1']
    #allocation4 [shape = 'u8[98304]{0}', space=vmem, size = 0x18000, scoped, tag = 'input window, operand 25, single buffered']
    #allocation5 [shape = 's32[1]{0}', space=sflag, size = 0x4, scoped, tag = 'scoped memory for setr_forward.1']
    %78 = vsyncpa [#allocation3], 0
    %79 = vsyncpa [#allocation5], 0
    loop: start=0, step=1, limit=4
    $region2: #{setr_forward.1} parent=1 // loop_pre_header
      _
    $region3: #{setr_forward.1} parent=1 // loop_header
      %s81 = sphi 0, %s85
      %p82 = scmp.ge.s32.totalorder %s81, 4
      %s91 = sphi 0, %s93
      %s94 = sphi 0, %s91
      %s95 = sphi 0, %s94
      %s111 = sphi 0, %s95
      %s115 = sphi 0, %s115
      %s117 = sphi 0, %s115
      %s118 = sphi 0, %s117
      %s132 = sphi 0, %s118
      %s136 = sphi 0, %s136
      %s138 = sphi 0, %s136
      %s139 = sphi 0, %s138
      %s153 = sphi 0, %s139
      %s157 = sphi 0, %s157
      %s159 = sphi 0, %s157
      %s160 = sphi 0, %s159
      %s174 = sphi 0, %s160
      %s178 = sphi 0, %s178
      %s180 = sphi 0, %s178
      %s181 = sphi 0, %s180
      %s195 = sphi 0, %s181
      %s199 = sphi 0, %s199
      %s201 = sphi 0, %s199
      %s202 = sphi 0, %s201
      %s216 = sphi 0, %s202
      %s220 = sphi 0, %s220
      %s222 = sphi 0, %s220
      %s223 = sphi 0, %s222
      %s237 = sphi 0, %s223
      %s241 = sphi 0, %s241
      %s243 = sphi 0, %s241
      %s244 = sphi 0, %s243
      %s258 = sphi 0, %s244
      %s262 = sphi 0, %s262
      %s264 = sphi 0, %s262
      %s265 = sphi 0, %s264
      %s279 = sphi 0, %s265
      %s283 = sphi 0, %s283
      %s285 = sphi 0, %s283
      %s286 = sphi 0, %s285
      %s300 = sphi 0, %s286
      %s304 = sphi 0, %s304
      %s306 = sphi 0, %s304
      %s307 = sphi 0, %s306
      %s321 = sphi 0, %s307
      %s325 = sphi 0, %s325
      %s327 = sphi 0, %s325
      %s328 = sphi 0, %s327
      %s342 = sphi 0, %s328
      %s346 = sphi 0, %s346
      %s348 = sphi 0, %s346
      %s349 = sphi 0, %s348
      %s363 = sphi 0, %s349
      %s367 = sphi 0, %s367
      %s369 = sphi 0, %s367
      %s370 = sphi 0, %s369
      %s384 = sphi 0, %s370
      %s388 = sphi 0, %s388
      %s390 = sphi 0, %s388
      %s391 = sphi 0, %s390
      %s405 = sphi 0, %s391
      %s409 = sphi 0, %s409
      %s411 = sphi 0, %s409
      %s412 = sphi 0, %s411
      %s426 = sphi 0, %s412
      %s430 = sphi 0, %s430
      %s432 = sphi 0, %s430
      %s433 = sphi 0, %s432
      %s447 = sphi 0, %s433
      %s451 = sphi 0, %s451
      %s453 = sphi 0, %s451
      %s454 = sphi 0, %s453
      %s468 = sphi 0, %s454
      %s472 = sphi 0, %s472
      %s474 = sphi 0, %s472
      %s475 = sphi 0, %s474
      %s489 = sphi 0, %s475
      %s493 = sphi 0, %s493
      %s495 = sphi 0, %s493
      %s496 = sphi 0, %s495
      %s510 = sphi 0, %s496
      %s514 = sphi 0, %s514
      %s516 = sphi 0, %s514
      %s517 = sphi 0, %s516
      %s531 = sphi 0, %s517
      %s535 = sphi 0, %s535
      %s537 = sphi 0, %s535
      %s538 = sphi 0, %s537
      %s552 = sphi 0, %s538
      %s556 = sphi 0, %s556
      %s558 = sphi 0, %s556
      %s559 = sphi 0, %s558
      %s573 = sphi 0, %s559
      %s577 = sphi 0, %s577
      %s579 = sphi 0, %s577
      %s580 = sphi 0, %s579
      %s594 = sphi 0, %s580
      %s598 = sphi 0, %s598
      %s600 = sphi 0, %s598
      %s601 = sphi 0, %s600
      %s615 = sphi 0, %s601
      %s619 = sphi 0, %s619
      %s621 = sphi 0, %s619
      %s622 = sphi 0, %s621
      %s636 = sphi 0, %s622
      %s640 = sphi 0, %s640
      %s642 = sphi 0, %s640
      %s643 = sphi 0, %s642
      %s657 = sphi 0, %s643
      %s661 = sphi 0, %s661
      %s663 = sphi 0, %s661
      %s664 = sphi 0, %s663
      %s678 = sphi 0, %s664
      %s682 = sphi 0, %s682
      %s684 = sphi 0, %s682
      %s685 = sphi 0, %s684
      %s699 = sphi 0, %s685
      %s703 = sphi 0, %s703
      %s705 = sphi 0, %s703
      %s706 = sphi 0, %s705
      %s720 = sphi 0, %s706
      %s724 = sphi 0, %s724
      %s726 = sphi 0, %s724
      %s727 = sphi 0, %s726
      %s741 = sphi 0, %s727
      %s745 = sphi 0, %s745
      %s747 = sphi 0, %s745
      %s748 = sphi 0, %s747
      %s762 = sphi 0, %s748
      %s766 = sphi 0, %s766
      %s768 = sphi 0, %s766
      %s769 = sphi 0, %s768
      %s783 = sphi 0, %s769
      %s787 = sphi 0, %s787
      %s789 = sphi 0, %s787
      %s790 = sphi 0, %s789
      %s804 = sphi 0, %s790
      %s808 = sphi 0, %s808
      %s810 = sphi 0, %s808
      %s811 = sphi 0, %s810
      %s825 = sphi 0, %s811
      %s829 = sphi 0, %s829
      %s831 = sphi 0, %s829
      %s832 = sphi 0, %s831
      %s846 = sphi 0, %s832
      %s852 = sphi 0, %s854
      %s855 = sphi 0, %s852
      %s856 = sphi 0, %s855
      %s872 = sphi 0, %s856
    $region4: #{setr_forward.1} parent=1 // loop_header_branch
      %84 = sbr.rel (%p82) target = $region8
    $region5: #{setr_forward.1} parent=1 // loop_body
      %s86 = ssub.s32 %s81, 1
      %s87 = ssub.s32 %s81, 2
      %s88 = sadd.s32 %s81, 1
      %s89 = ssub.s32 %s81, %s88
      %p90 = scmp.eq.s32.totalorder %s89, 0
      %s92 = sadd.s32 %s91, 1
      %s93 = scalar_select %p90, %s91, %s92
      %p96 = pneg %p90
      %p97 = scmp.eq.s32.totalorder %s81, 1
      %p98 = por %p96, %p97
      %p99 = scmp.ne.s32.totalorder %s91, %s94
      %p100 = scmp.eq.s32.totalorder %s81, 0
      %p101 = por %p99, %p100
      %p102 = scmp.ne.s32.totalorder %s91, %s94
      %p103 = scmp.eq.s32.totalorder %s86, 1
      %p104 = por %p102, %p103
      %p105 = scmp.ne.s32.totalorder %s94, %s95
      %p106 = scmp.eq.s32.totalorder %s86, 0
      %p107 = por %p105, %p106
      %p108 = scmp.ne.s32.totalorder %s94, %s95
      %p109 = scmp.eq.s32.totalorder %s87, 1
      %p110 = por %p108, %p109
      %p112 = scmp.ne.s32.totalorder %s95, %s111
      %p113 = scmp.eq.s32.totalorder %s87, 0
      %p114 = por %p112, %p113
      %s116 = sadd.s32 %s115, 1
      %p119 = scmp.eq.s32.totalorder %s81, 1
      %p120 = scmp.ne.s32.totalorder %s115, %s117
      %p121 = scmp.eq.s32.totalorder %s81, 0
      %p122 = por %p120, %p121
      %p123 = scmp.ne.s32.totalorder %s115, %s117
      %p124 = scmp.eq.s32.totalorder %s86, 1
      %p125 = por %p123, %p124
      %p126 = scmp.ne.s32.totalorder %s117, %s118
      %p127 = scmp.eq.s32.totalorder %s86, 0
      %p128 = por %p126, %p127
      %p129 = scmp.ne.s32.totalorder %s117, %s118
      %p130 = scmp.eq.s32.totalorder %s87, 1
      %p131 = por %p129, %p130
      %p133 = scmp.ne.s32.totalorder %s118, %s132
      %p134 = scmp.eq.s32.totalorder %s87, 0
      %p135 = por %p133, %p134
      %s137 = sadd.s32 %s136, 1
      %p140 = scmp.eq.s32.totalorder %s81, 1
      %p141 = scmp.ne.s32.totalorder %s136, %s138
      %p142 = scmp.eq.s32.totalorder %s81, 0
      %p143 = por %p141, %p142
      %p144 = scmp.ne.s32.totalorder %s136, %s138
      %p145 = scmp.eq.s32.totalorder %s86, 1
      %p146 = por %p144, %p145
      %p147 = scmp.ne.s32.totalorder %s138, %s139
      %p148 = scmp.eq.s32.totalorder %s86, 0
      %p149 = por %p147, %p148
      %p150 = scmp.ne.s32.totalorder %s138, %s139
      %p151 = scmp.eq.s32.totalorder %s87, 1
      %p152 = por %p150, %p151
      %p154 = scmp.ne.s32.totalorder %s139, %s153
      %p155 = scmp.eq.s32.totalorder %s87, 0
      %p156 = por %p154, %p155
      %s158 = sadd.s32 %s157, 1
      %p161 = scmp.eq.s32.totalorder %s81, 1
      %p162 = scmp.ne.s32.totalorder %s157, %s159
      %p163 = scmp.eq.s32.totalorder %s81, 0
      %p164 = por %p162, %p163
      %p165 = scmp.ne.s32.totalorder %s157, %s159
      %p166 = scmp.eq.s32.totalorder %s86, 1
      %p167 = por %p165, %p166
      %p168 = scmp.ne.s32.totalorder %s159, %s160
      %p169 = scmp.eq.s32.totalorder %s86, 0
      %p170 = por %p168, %p169
      %p171 = scmp.ne.s32.totalorder %s159, %s160
      %p172 = scmp.eq.s32.totalorder %s87, 1
      %p173 = por %p171, %p172
      %p175 = scmp.ne.s32.totalorder %s160, %s174
      %p176 = scmp.eq.s32.totalorder %s87, 0
      %p177 = por %p175, %p176
      %s179 = sadd.s32 %s178, 1
      %p182 = scmp.eq.s32.totalorder %s81, 1
      %p183 = scmp.ne.s32.totalorder %s178, %s180
      %p184 = scmp.eq.s32.totalorder %s81, 0
      %p185 = por %p183, %p184
      %p186 = scmp.ne.s32.totalorder %s178, %s180
      %p187 = scmp.eq.s32.totalorder %s86, 1
      %p188 = por %p186, %p187
      %p189 = scmp.ne.s32.totalorder %s180, %s181
      %p190 = scmp.eq.s32.totalorder %s86, 0
      %p191 = por %p189, %p190
      %p192 = scmp.ne.s32.totalorder %s180, %s181
      %p193 = scmp.eq.s32.totalorder %s87, 1
      %p194 = por %p192, %p193
      %p196 = scmp.ne.s32.totalorder %s181, %s195
      %p197 = scmp.eq.s32.totalorder %s87, 0
      %p198 = por %p196, %p197
      %s200 = sadd.s32 %s199, 1
      %p203 = scmp.eq.s32.totalorder %s81, 1
      %p204 = scmp.ne.s32.totalorder %s199, %s201
      %p205 = scmp.eq.s32.totalorder %s81, 0
      %p206 = por %p204, %p205
      %p207 = scmp.ne.s32.totalorder %s199, %s201
      %p208 = scmp.eq.s32.totalorder %s86, 1
      %p209 = por %p207, %p208
      %p210 = scmp.ne.s32.totalorder %s201, %s202
      %p211 = scmp.eq.s32.totalorder %s86, 0
      %p212 = por %p210, %p211
      %p213 = scmp.ne.s32.totalorder %s201, %s202
      %p214 = scmp.eq.s32.totalorder %s87, 1
      %p215 = por %p213, %p214
      %p217 = scmp.ne.s32.totalorder %s202, %s216
      %p218 = scmp.eq.s32.totalorder %s87, 0
      %p219 = por %p217, %p218
      %s221 = sadd.s32 %s220, 1
      %p224 = scmp.eq.s32.totalorder %s81, 1
      %p225 = scmp.ne.s32.totalorder %s220, %s222
      %p226 = scmp.eq.s32.totalorder %s81, 0
      %p227 = por %p225, %p226
      %p228 = scmp.ne.s32.totalorder %s220, %s222
      %p229 = scmp.eq.s32.totalorder %s86, 1
      %p230 = por %p228, %p229
      %p231 = scmp.ne.s32.totalorder %s222, %s223
      %p232 = scmp.eq.s32.totalorder %s86, 0
      %p233 = por %p231, %p232
      %p234 = scmp.ne.s32.totalorder %s222, %s223
      %p235 = scmp.eq.s32.totalorder %s87, 1
      %p236 = por %p234, %p235
      %p238 = scmp.ne.s32.totalorder %s223, %s237
      %p239 = scmp.eq.s32.totalorder %s87, 0
      %p240 = por %p238, %p239
      %s242 = sadd.s32 %s241, 1
      %p245 = scmp.eq.s32.totalorder %s81, 1
      %p246 = scmp.ne.s32.totalorder %s241, %s243
      %p247 = scmp.eq.s32.totalorder %s81, 0
      %p248 = por %p246, %p247
      %p249 = scmp.ne.s32.totalorder %s241, %s243
      %p250 = scmp.eq.s32.totalorder %s86, 1
      %p251 = por %p249, %p250
      %p252 = scmp.ne.s32.totalorder %s243, %s244
      %p253 = scmp.eq.s32.totalorder %s86, 0
      %p254 = por %p252, %p253
      %p255 = scmp.ne.s32.totalorder %s243, %s244
      %p256 = scmp.eq.s32.totalorder %s87, 1
      %p257 = por %p255, %p256
      %p259 = scmp.ne.s32.totalorder %s244, %s258
      %p260 = scmp.eq.s32.totalorder %s87, 0
      %p261 = por %p259, %p260
      %s263 = sadd.s32 %s262, 1
      %p266 = scmp.eq.s32.totalorder %s81, 1
      %p267 = scmp.ne.s32.totalorder %s262, %s264
      %p268 = scmp.eq.s32.totalorder %s81, 0
      %p269 = por %p267, %p268
      %p270 = scmp.ne.s32.totalorder %s262, %s264
      %p271 = scmp.eq.s32.totalorder %s86, 1
      %p272 = por %p270, %p271
      %p273 = scmp.ne.s32.totalorder %s264, %s265
      %p274 = scmp.eq.s32.totalorder %s86, 0
      %p275 = por %p273, %p274
      %p276 = scmp.ne.s32.totalorder %s264, %s265
      %p277 = scmp.eq.s32.totalorder %s87, 1
      %p278 = por %p276, %p277
      %p280 = scmp.ne.s32.totalorder %s265, %s279
      %p281 = scmp.eq.s32.totalorder %s87, 0
      %p282 = por %p280, %p281
      %s284 = sadd.s32 %s283, 1
      %p287 = scmp.eq.s32.totalorder %s81, 1
      %p288 = scmp.ne.s32.totalorder %s283, %s285
      %p289 = scmp.eq.s32.totalorder %s81, 0
      %p290 = por %p288, %p289
      %p291 = scmp.ne.s32.totalorder %s283, %s285
      %p292 = scmp.eq.s32.totalorder %s86, 1
      %p293 = por %p291, %p292
      %p294 = scmp.ne.s32.totalorder %s285, %s286
      %p295 = scmp.eq.s32.totalorder %s86, 0
      %p296 = por %p294, %p295
      %p297 = scmp.ne.s32.totalorder %s285, %s286
      %p298 = scmp.eq.s32.totalorder %s87, 1
      %p299 = por %p297, %p298
      %p301 = scmp.ne.s32.totalorder %s286, %s300
      %p302 = scmp.eq.s32.totalorder %s87, 0
      %p303 = por %p301, %p302
      %s305 = sadd.s32 %s304, 1
      %p308 = scmp.eq.s32.totalorder %s81, 1
      %p309 = scmp.ne.s32.totalorder %s304, %s306
      %p310 = scmp.eq.s32.totalorder %s81, 0
      %p311 = por %p309, %p310
      %p312 = scmp.ne.s32.totalorder %s304, %s306
      %p313 = scmp.eq.s32.totalorder %s86, 1
      %p314 = por %p312, %p313
      %p315 = scmp.ne.s32.totalorder %s306, %s307
      %p316 = scmp.eq.s32.totalorder %s86, 0
      %p317 = por %p315, %p316
      %p318 = scmp.ne.s32.totalorder %s306, %s307
      %p319 = scmp.eq.s32.totalorder %s87, 1
      %p320 = por %p318, %p319
      %p322 = scmp.ne.s32.totalorder %s307, %s321
      %p323 = scmp.eq.s32.totalorder %s87, 0
      %p324 = por %p322, %p323
      %s326 = sadd.s32 %s325, 1
      %p329 = scmp.eq.s32.totalorder %s81, 1
      %p330 = scmp.ne.s32.totalorder %s325, %s327
      %p331 = scmp.eq.s32.totalorder %s81, 0
      %p332 = por %p330, %p331
      %p333 = scmp.ne.s32.totalorder %s325, %s327
      %p334 = scmp.eq.s32.totalorder %s86, 1
      %p335 = por %p333, %p334
      %p336 = scmp.ne.s32.totalorder %s327, %s328
      %p337 = scmp.eq.s32.totalorder %s86, 0
      %p338 = por %p336, %p337
      %p339 = scmp.ne.s32.totalorder %s327, %s328
      %p340 = scmp.eq.s32.totalorder %s87, 1
      %p341 = por %p339, %p340
      %p343 = scmp.ne.s32.totalorder %s328, %s342
      %p344 = scmp.eq.s32.totalorder %s87, 0
      %p345 = por %p343, %p344
      %s347 = sadd.s32 %s346, 1
      %p350 = scmp.eq.s32.totalorder %s81, 1
      %p351 = scmp.ne.s32.totalorder %s346, %s348
      %p352 = scmp.eq.s32.totalorder %s81, 0
      %p353 = por %p351, %p352
      %p354 = scmp.ne.s32.totalorder %s346, %s348
      %p355 = scmp.eq.s32.totalorder %s86, 1
      %p356 = por %p354, %p355
      %p357 = scmp.ne.s32.totalorder %s348, %s349
      %p358 = scmp.eq.s32.totalorder %s86, 0
      %p359 = por %p357, %p358
      %p360 = scmp.ne.s32.totalorder %s348, %s349
      %p361 = scmp.eq.s32.totalorder %s87, 1
      %p362 = por %p360, %p361
      %p364 = scmp.ne.s32.totalorder %s349, %s363
      %p365 = scmp.eq.s32.totalorder %s87, 0
      %p366 = por %p364, %p365
      %s368 = sadd.s32 %s367, 1
      %p371 = scmp.eq.s32.totalorder %s81, 1
      %p372 = scmp.ne.s32.totalorder %s367, %s369
      %p373 = scmp.eq.s32.totalorder %s81, 0
      %p374 = por %p372, %p373
      %p375 = scmp.ne.s32.totalorder %s367, %s369
      %p376 = scmp.eq.s32.totalorder %s86, 1
      %p377 = por %p375, %p376
      %p378 = scmp.ne.s32.totalorder %s369, %s370
      %p379 = scmp.eq.s32.totalorder %s86, 0
      %p380 = por %p378, %p379
      %p381 = scmp.ne.s32.totalorder %s369, %s370
      %p382 = scmp.eq.s32.totalorder %s87, 1
      %p383 = por %p381, %p382
      %p385 = scmp.ne.s32.totalorder %s370, %s384
      %p386 = scmp.eq.s32.totalorder %s87, 0
      %p387 = por %p385, %p386
      %s389 = sadd.s32 %s388, 1
      %p392 = scmp.eq.s32.totalorder %s81, 1
      %p393 = scmp.ne.s32.totalorder %s388, %s390
      %p394 = scmp.eq.s32.totalorder %s81, 0
      %p395 = por %p393, %p394
      %p396 = scmp.ne.s32.totalorder %s388, %s390
      %p397 = scmp.eq.s32.totalorder %s86, 1
      %p398 = por %p396, %p397
      %p399 = scmp.ne.s32.totalorder %s390, %s391
      %p400 = scmp.eq.s32.totalorder %s86, 0
      %p401 = por %p399, %p400
      %p402 = scmp.ne.s32.totalorder %s390, %s391
      %p403 = scmp.eq.s32.totalorder %s87, 1
      %p404 = por %p402, %p403
      %p406 = scmp.ne.s32.totalorder %s391, %s405
      %p407 = scmp.eq.s32.totalorder %s87, 0
      %p408 = por %p406, %p407
      %s410 = sadd.s32 %s409, 1
      %p413 = scmp.eq.s32.totalorder %s81, 1
      %p414 = scmp.ne.s32.totalorder %s409, %s411
      %p415 = scmp.eq.s32.totalorder %s81, 0
      %p416 = por %p414, %p415
      %p417 = scmp.ne.s32.totalorder %s409, %s411
      %p418 = scmp.eq.s32.totalorder %s86, 1
      %p419 = por %p417, %p418
      %p420 = scmp.ne.s32.totalorder %s411, %s412
      %p421 = scmp.eq.s32.totalorder %s86, 0
      %p422 = por %p420, %p421
      %p423 = scmp.ne.s32.totalorder %s411, %s412
      %p424 = scmp.eq.s32.totalorder %s87, 1
      %p425 = por %p423, %p424
      %p427 = scmp.ne.s32.totalorder %s412, %s426
      %p428 = scmp.eq.s32.totalorder %s87, 0
      %p429 = por %p427, %p428
      %s431 = sadd.s32 %s430, 1
      %p434 = scmp.eq.s32.totalorder %s81, 1
      %p435 = scmp.ne.s32.totalorder %s430, %s432
      %p436 = scmp.eq.s32.totalorder %s81, 0
      %p437 = por %p435, %p436
      %p438 = scmp.ne.s32.totalorder %s430, %s432
      %p439 = scmp.eq.s32.totalorder %s86, 1
      %p440 = por %p438, %p439
      %p441 = scmp.ne.s32.totalorder %s432, %s433
      %p442 = scmp.eq.s32.totalorder %s86, 0
      %p443 = por %p441, %p442
      %p444 = scmp.ne.s32.totalorder %s432, %s433
      %p445 = scmp.eq.s32.totalorder %s87, 1
      %p446 = por %p444, %p445
      %p448 = scmp.ne.s32.totalorder %s433, %s447
      %p449 = scmp.eq.s32.totalorder %s87, 0
      %p450 = por %p448, %p449
      %s452 = sadd.s32 %s451, 1
      %p455 = scmp.eq.s32.totalorder %s81, 1
      %p456 = scmp.ne.s32.totalorder %s451, %s453
      %p457 = scmp.eq.s32.totalorder %s81, 0
      %p458 = por %p456, %p457
      %p459 = scmp.ne.s32.totalorder %s451, %s453
      %p460 = scmp.eq.s32.totalorder %s86, 1
      %p461 = por %p459, %p460
      %p462 = scmp.ne.s32.totalorder %s453, %s454
      %p463 = scmp.eq.s32.totalorder %s86, 0
      %p464 = por %p462, %p463
      %p465 = scmp.ne.s32.totalorder %s453, %s454
      %p466 = scmp.eq.s32.totalorder %s87, 1
      %p467 = por %p465, %p466
      %p469 = scmp.ne.s32.totalorder %s454, %s468
      %p470 = scmp.eq.s32.totalorder %s87, 0
      %p471 = por %p469, %p470
      %s473 = sadd.s32 %s472, 1
      %p476 = scmp.eq.s32.totalorder %s81, 1
      %p477 = scmp.ne.s32.totalorder %s472, %s474
      %p478 = scmp.eq.s32.totalorder %s81, 0
      %p479 = por %p477, %p478
      %p480 = scmp.ne.s32.totalorder %s472, %s474
      %p481 = scmp.eq.s32.totalorder %s86, 1
      %p482 = por %p480, %p481
      %p483 = scmp.ne.s32.totalorder %s474, %s475
      %p484 = scmp.eq.s32.totalorder %s86, 0
      %p485 = por %p483, %p484
      %p486 = scmp.ne.s32.totalorder %s474, %s475
      %p487 = scmp.eq.s32.totalorder %s87, 1
      %p488 = por %p486, %p487
      %p490 = scmp.ne.s32.totalorder %s475, %s489
      %p491 = scmp.eq.s32.totalorder %s87, 0
      %p492 = por %p490, %p491
      %s494 = sadd.s32 %s493, 1
      %p497 = scmp.eq.s32.totalorder %s81, 1
      %p498 = scmp.ne.s32.totalorder %s493, %s495
      %p499 = scmp.eq.s32.totalorder %s81, 0
      %p500 = por %p498, %p499
      %p501 = scmp.ne.s32.totalorder %s493, %s495
      %p502 = scmp.eq.s32.totalorder %s86, 1
      %p503 = por %p501, %p502
      %p504 = scmp.ne.s32.totalorder %s495, %s496
      %p505 = scmp.eq.s32.totalorder %s86, 0
      %p506 = por %p504, %p505
      %p507 = scmp.ne.s32.totalorder %s495, %s496
      %p508 = scmp.eq.s32.totalorder %s87, 1
      %p509 = por %p507, %p508
      %p511 = scmp.ne.s32.totalorder %s496, %s510
      %p512 = scmp.eq.s32.totalorder %s87, 0
      %p513 = por %p511, %p512
      %s515 = sadd.s32 %s514, 1
      %p518 = scmp.eq.s32.totalorder %s81, 1
      %p519 = scmp.ne.s32.totalorder %s514, %s516
      %p520 = scmp.eq.s32.totalorder %s81, 0
      %p521 = por %p519, %p520
      %p522 = scmp.ne.s32.totalorder %s514, %s516
      %p523 = scmp.eq.s32.totalorder %s86, 1
      %p524 = por %p522, %p523
      %p525 = scmp.ne.s32.totalorder %s516, %s517
      %p526 = scmp.eq.s32.totalorder %s86, 0
      %p527 = por %p525, %p526
      %p528 = scmp.ne.s32.totalorder %s516, %s517
      %p529 = scmp.eq.s32.totalorder %s87, 1
      %p530 = por %p528, %p529
      %p532 = scmp.ne.s32.totalorder %s517, %s531
      %p533 = scmp.eq.s32.totalorder %s87, 0
      %p534 = por %p532, %p533
      %s536 = sadd.s32 %s535, 1
      %p539 = scmp.eq.s32.totalorder %s81, 1
      %p540 = scmp.ne.s32.totalorder %s535, %s537
      %p541 = scmp.eq.s32.totalorder %s81, 0
      %p542 = por %p540, %p541
      %p543 = scmp.ne.s32.totalorder %s535, %s537
      %p544 = scmp.eq.s32.totalorder %s86, 1
      %p545 = por %p543, %p544
      %p546 = scmp.ne.s32.totalorder %s537, %s538
      %p547 = scmp.eq.s32.totalorder %s86, 0
      %p548 = por %p546, %p547
      %p549 = scmp.ne.s32.totalorder %s537, %s538
      %p550 = scmp.eq.s32.totalorder %s87, 1
      %p551 = por %p549, %p550
      %p553 = scmp.ne.s32.totalorder %s538, %s552
      %p554 = scmp.eq.s32.totalorder %s87, 0
      %p555 = por %p553, %p554
      %s557 = sadd.s32 %s556, 1
      %p560 = scmp.eq.s32.totalorder %s81, 1
      %p561 = scmp.ne.s32.totalorder %s556, %s558
      %p562 = scmp.eq.s32.totalorder %s81, 0
      %p563 = por %p561, %p562
      %p564 = scmp.ne.s32.totalorder %s556, %s558
      %p565 = scmp.eq.s32.totalorder %s86, 1
      %p566 = por %p564, %p565
      %p567 = scmp.ne.s32.totalorder %s558, %s559
      %p568 = scmp.eq.s32.totalorder %s86, 0
      %p569 = por %p567, %p568
      %p570 = scmp.ne.s32.totalorder %s558, %s559
      %p571 = scmp.eq.s32.totalorder %s87, 1
      %p572 = por %p570, %p571
      %p574 = scmp.ne.s32.totalorder %s559, %s573
      %p575 = scmp.eq.s32.totalorder %s87, 0
      %p576 = por %p574, %p575
      %s578 = sadd.s32 %s577, 1
      %p581 = scmp.eq.s32.totalorder %s81, 1
      %p582 = scmp.ne.s32.totalorder %s577, %s579
      %p583 = scmp.eq.s32.totalorder %s81, 0
      %p584 = por %p582, %p583
      %p585 = scmp.ne.s32.totalorder %s577, %s579
      %p586 = scmp.eq.s32.totalorder %s86, 1
      %p587 = por %p585, %p586
      %p588 = scmp.ne.s32.totalorder %s579, %s580
      %p589 = scmp.eq.s32.totalorder %s86, 0
      %p590 = por %p588, %p589
      %p591 = scmp.ne.s32.totalorder %s579, %s580
      %p592 = scmp.eq.s32.totalorder %s87, 1
      %p593 = por %p591, %p592
      %p595 = scmp.ne.s32.totalorder %s580, %s594
      %p596 = scmp.eq.s32.totalorder %s87, 0
      %p597 = por %p595, %p596
      %s599 = sadd.s32 %s598, 1
      %p602 = scmp.eq.s32.totalorder %s81, 1
      %p603 = scmp.ne.s32.totalorder %s598, %s600
      %p604 = scmp.eq.s32.totalorder %s81, 0
      %p605 = por %p603, %p604
      %p606 = scmp.ne.s32.totalorder %s598, %s600
      %p607 = scmp.eq.s32.totalorder %s86, 1
      %p608 = por %p606, %p607
      %p609 = scmp.ne.s32.totalorder %s600, %s601
      %p610 = scmp.eq.s32.totalorder %s86, 0
      %p611 = por %p609, %p610
      %p612 = scmp.ne.s32.totalorder %s600, %s601
      %p613 = scmp.eq.s32.totalorder %s87, 1
      %p614 = por %p612, %p613
      %p616 = scmp.ne.s32.totalorder %s601, %s615
      %p617 = scmp.eq.s32.totalorder %s87, 0
      %p618 = por %p616, %p617
      %s620 = sadd.s32 %s619, 1
      %p623 = scmp.eq.s32.totalorder %s81, 1
      %p624 = scmp.ne.s32.totalorder %s619, %s621
      %p625 = scmp.eq.s32.totalorder %s81, 0
      %p626 = por %p624, %p625
      %p627 = scmp.ne.s32.totalorder %s619, %s621
      %p628 = scmp.eq.s32.totalorder %s86, 1
      %p629 = por %p627, %p628
      %p630 = scmp.ne.s32.totalorder %s621, %s622
      %p631 = scmp.eq.s32.totalorder %s86, 0
      %p632 = por %p630, %p631
      %p633 = scmp.ne.s32.totalorder %s621, %s622
      %p634 = scmp.eq.s32.totalorder %s87, 1
      %p635 = por %p633, %p634
      %p637 = scmp.ne.s32.totalorder %s622, %s636
      %p638 = scmp.eq.s32.totalorder %s87, 0
      %p639 = por %p637, %p638
      %s641 = sadd.s32 %s640, 1
      %p644 = scmp.eq.s32.totalorder %s81, 1
      %p645 = scmp.ne.s32.totalorder %s640, %s642
      %p646 = scmp.eq.s32.totalorder %s81, 0
      %p647 = por %p645, %p646
      %p648 = scmp.ne.s32.totalorder %s640, %s642
      %p649 = scmp.eq.s32.totalorder %s86, 1
      %p650 = por %p648, %p649
      %p651 = scmp.ne.s32.totalorder %s642, %s643
      %p652 = scmp.eq.s32.totalorder %s86, 0
      %p653 = por %p651, %p652
      %p654 = scmp.ne.s32.totalorder %s642, %s643
      %p655 = scmp.eq.s32.totalorder %s87, 1
      %p656 = por %p654, %p655
      %p658 = scmp.ne.s32.totalorder %s643, %s657
      %p659 = scmp.eq.s32.totalorder %s87, 0
      %p660 = por %p658, %p659
      %s662 = sadd.s32 %s661, 1
      %p665 = scmp.eq.s32.totalorder %s81, 1
      %p666 = scmp.ne.s32.totalorder %s661, %s663
      %p667 = scmp.eq.s32.totalorder %s81, 0
      %p668 = por %p666, %p667
      %p669 = scmp.ne.s32.totalorder %s661, %s663
      %p670 = scmp.eq.s32.totalorder %s86, 1
      %p671 = por %p669, %p670
      %p672 = scmp.ne.s32.totalorder %s663, %s664
      %p673 = scmp.eq.s32.totalorder %s86, 0
      %p674 = por %p672, %p673
      %p675 = scmp.ne.s32.totalorder %s663, %s664
      %p676 = scmp.eq.s32.totalorder %s87, 1
      %p677 = por %p675, %p676
      %p679 = scmp.ne.s32.totalorder %s664, %s678
      %p680 = scmp.eq.s32.totalorder %s87, 0
      %p681 = por %p679, %p680
      %s683 = sadd.s32 %s682, 1
      %p686 = scmp.eq.s32.totalorder %s81, 1
      %p687 = scmp.ne.s32.totalorder %s682, %s684
      %p688 = scmp.eq.s32.totalorder %s81, 0
      %p689 = por %p687, %p688
      %p690 = scmp.ne.s32.totalorder %s682, %s684
      %p691 = scmp.eq.s32.totalorder %s86, 1
      %p692 = por %p690, %p691
      %p693 = scmp.ne.s32.totalorder %s684, %s685
      %p694 = scmp.eq.s32.totalorder %s86, 0
      %p695 = por %p693, %p694
      %p696 = scmp.ne.s32.totalorder %s684, %s685
      %p697 = scmp.eq.s32.totalorder %s87, 1
      %p698 = por %p696, %p697
      %p700 = scmp.ne.s32.totalorder %s685, %s699
      %p701 = scmp.eq.s32.totalorder %s87, 0
      %p702 = por %p700, %p701
      %s704 = sadd.s32 %s703, 1
      %p707 = scmp.eq.s32.totalorder %s81, 1
      %p708 = scmp.ne.s32.totalorder %s703, %s705
      %p709 = scmp.eq.s32.totalorder %s81, 0
      %p710 = por %p708, %p709
      %p711 = scmp.ne.s32.totalorder %s703, %s705
      %p712 = scmp.eq.s32.totalorder %s86, 1
      %p713 = por %p711, %p712
      %p714 = scmp.ne.s32.totalorder %s705, %s706
      %p715 = scmp.eq.s32.totalorder %s86, 0
      %p716 = por %p714, %p715
      %p717 = scmp.ne.s32.totalorder %s705, %s706
      %p718 = scmp.eq.s32.totalorder %s87, 1
      %p719 = por %p717, %p718
      %p721 = scmp.ne.s32.totalorder %s706, %s720
      %p722 = scmp.eq.s32.totalorder %s87, 0
      %p723 = por %p721, %p722
      %s725 = sadd.s32 %s724, 1
      %p728 = scmp.eq.s32.totalorder %s81, 1
      %p729 = scmp.ne.s32.totalorder %s724, %s726
      %p730 = scmp.eq.s32.totalorder %s81, 0
      %p731 = por %p729, %p730
      %p732 = scmp.ne.s32.totalorder %s724, %s726
      %p733 = scmp.eq.s32.totalorder %s86, 1
      %p734 = por %p732, %p733
      %p735 = scmp.ne.s32.totalorder %s726, %s727
      %p736 = scmp.eq.s32.totalorder %s86, 0
      %p737 = por %p735, %p736
      %p738 = scmp.ne.s32.totalorder %s726, %s727
      %p739 = scmp.eq.s32.totalorder %s87, 1
      %p740 = por %p738, %p739
      %p742 = scmp.ne.s32.totalorder %s727, %s741
      %p743 = scmp.eq.s32.totalorder %s87, 0
      %p744 = por %p742, %p743
      %s746 = sadd.s32 %s745, 1
      %p749 = scmp.eq.s32.totalorder %s81, 1
      %p750 = scmp.ne.s32.totalorder %s745, %s747
      %p751 = scmp.eq.s32.totalorder %s81, 0
      %p752 = por %p750, %p751
      %p753 = scmp.ne.s32.totalorder %s745, %s747
      %p754 = scmp.eq.s32.totalorder %s86, 1
      %p755 = por %p753, %p754
      %p756 = scmp.ne.s32.totalorder %s747, %s748
      %p757 = scmp.eq.s32.totalorder %s86, 0
      %p758 = por %p756, %p757
      %p759 = scmp.ne.s32.totalorder %s747, %s748
      %p760 = scmp.eq.s32.totalorder %s87, 1
      %p761 = por %p759, %p760
      %p763 = scmp.ne.s32.totalorder %s748, %s762
      %p764 = scmp.eq.s32.totalorder %s87, 0
      %p765 = por %p763, %p764
      %s767 = sadd.s32 %s766, 1
      %p770 = scmp.eq.s32.totalorder %s81, 1
      %p771 = scmp.ne.s32.totalorder %s766, %s768
      %p772 = scmp.eq.s32.totalorder %s81, 0
      %p773 = por %p771, %p772
      %p774 = scmp.ne.s32.totalorder %s766, %s768
      %p775 = scmp.eq.s32.totalorder %s86, 1
      %p776 = por %p774, %p775
      %p777 = scmp.ne.s32.totalorder %s768, %s769
      %p778 = scmp.eq.s32.totalorder %s86, 0
      %p779 = por %p777, %p778
      %p780 = scmp.ne.s32.totalorder %s768, %s769
      %p781 = scmp.eq.s32.totalorder %s87, 1
      %p782 = por %p780, %p781
      %p784 = scmp.ne.s32.totalorder %s769, %s783
      %p785 = scmp.eq.s32.totalorder %s87, 0
      %p786 = por %p784, %p785
      %s788 = sadd.s32 %s787, 1
      %p791 = scmp.eq.s32.totalorder %s81, 1
      %p792 = scmp.ne.s32.totalorder %s787, %s789
      %p793 = scmp.eq.s32.totalorder %s81, 0
      %p794 = por %p792, %p793
      %p795 = scmp.ne.s32.totalorder %s787, %s789
      %p796 = scmp.eq.s32.totalorder %s86, 1
      %p797 = por %p795, %p796
      %p798 = scmp.ne.s32.totalorder %s789, %s790
      %p799 = scmp.eq.s32.totalorder %s86, 0
      %p800 = por %p798, %p799
      %p801 = scmp.ne.s32.totalorder %s789, %s790
      %p802 = scmp.eq.s32.totalorder %s87, 1
      %p803 = por %p801, %p802
      %p805 = scmp.ne.s32.totalorder %s790, %s804
      %p806 = scmp.eq.s32.totalorder %s87, 0
      %p807 = por %p805, %p806
      %s809 = sadd.s32 %s808, 1
      %p812 = scmp.eq.s32.totalorder %s81, 1
      %p813 = scmp.ne.s32.totalorder %s808, %s810
      %p814 = scmp.eq.s32.totalorder %s81, 0
      %p815 = por %p813, %p814
      %p816 = scmp.ne.s32.totalorder %s808, %s810
      %p817 = scmp.eq.s32.totalorder %s86, 1
      %p818 = por %p816, %p817
      %p819 = scmp.ne.s32.totalorder %s810, %s811
      %p820 = scmp.eq.s32.totalorder %s86, 0
      %p821 = por %p819, %p820
      %p822 = scmp.ne.s32.totalorder %s810, %s811
      %p823 = scmp.eq.s32.totalorder %s87, 1
      %p824 = por %p822, %p823
      %p826 = scmp.ne.s32.totalorder %s811, %s825
      %p827 = scmp.eq.s32.totalorder %s87, 0
      %p828 = por %p826, %p827
      %s830 = sadd.s32 %s829, 1
      %p833 = scmp.eq.s32.totalorder %s81, 1
      %p834 = scmp.ne.s32.totalorder %s829, %s831
      %p835 = scmp.eq.s32.totalorder %s81, 0
      %p836 = por %p834, %p835
      %p837 = scmp.ne.s32.totalorder %s829, %s831
      %p838 = scmp.eq.s32.totalorder %s86, 1
      %p839 = por %p837, %p838
      %p840 = scmp.ne.s32.totalorder %s831, %s832
      %p841 = scmp.eq.s32.totalorder %s86, 0
      %p842 = por %p840, %p841
      %p843 = scmp.ne.s32.totalorder %s831, %s832
      %p844 = scmp.eq.s32.totalorder %s87, 1
      %p845 = por %p843, %p844
      %p847 = scmp.ne.s32.totalorder %s832, %s846
      %p848 = scmp.eq.s32.totalorder %s87, 0
      %p849 = por %p847, %p848
      %s850 = ssub.s32 %s81, %s88
      %p851 = scmp.eq.s32.totalorder %s850, 0
      %s853 = sadd.s32 %s852, 1
      %s854 = scalar_select %p851, %s852, %s853
      %p857 = pneg %p851
      %p858 = scmp.eq.s32.totalorder %s81, 1
      %p859 = por %p857, %p858
      %p860 = scmp.ne.s32.totalorder %s852, %s855
      %p861 = scmp.eq.s32.totalorder %s81, 0
      %p862 = por %p860, %p861
      %p863 = scmp.ne.s32.totalorder %s852, %s855
      %p864 = scmp.eq.s32.totalorder %s86, 1
      %p865 = por %p863, %p864
      %p866 = scmp.ne.s32.totalorder %s855, %s856
      %p867 = scmp.eq.s32.totalorder %s86, 0
      %p868 = por %p866, %p867
      %p869 = scmp.ne.s32.totalorder %s855, %s856
      %p870 = scmp.eq.s32.totalorder %s87, 1
      %p871 = por %p869, %p870
      %p873 = scmp.ne.s32.totalorder %s856, %s872
      %p874 = scmp.eq.s32.totalorder %s87, 0
      %p875 = por %p873, %p874
      %p876 = scmp.le.s32.totalorder 1, %s81
      %p877 = scmp.lt.s32.totalorder %s81, 3
      %p878 = pnand %p876, %p877
      %p879 = pneg %p878
      // Predicated region
      $region9: #{setr_forward.1} parent=5 // pred_check
        _
      $region10: #{setr_forward.1} parent=5 // pred_check_branch
        %881 = sbr.rel (%p878) target = $region12
      $region11: #{setr_forward.1} parent=5 // pred_region
        %s882 = ssub.s32 %s81, 1
        // Predicated region
        $region13: #{setr_forward.1} parent=11 // pred_check
          %p883 = pneg %p128
        $region14: #{setr_forward.1} parent=11 // pred_check_branch
          %885 = sbr.rel (%p883) target = $region16
        $region15: #{setr_forward.1} parent=11 // pred_region
          _
        $region16: #{setr_forward.1} parent=11 // pred_fallthru
          _
        // Predicated region
        $region17: #{setr_forward.1} parent=11 // pred_check
          %p886 = pneg %p149
        $region18: #{setr_forward.1} parent=11 // pred_check_branch
          %888 = sbr.rel (%p886) target = $region20
        $region19: #{setr_forward.1} parent=11 // pred_region
          _
        $region20: #{setr_forward.1} parent=11 // pred_fallthru
          _
        // Predicated region
        $region21: #{setr_forward.1} parent=11 // pred_check
          %p889 = pneg %p170
        $region22: #{setr_forward.1} parent=11 // pred_check_branch
          %891 = sbr.rel (%p889) target = $region24
        $region23: #{setr_forward.1} parent=11 // pred_region
          _
        $region24: #{setr_forward.1} parent=11 // pred_fallthru
          _
        // Predicated region
        $region25: #{setr_forward.1} parent=11 // pred_check
          %p892 = pneg %p191
        $region26: #{setr_forward.1} parent=11 // pred_check_branch
          %894 = sbr.rel (%p892) target = $region28
        $region27: #{setr_forward.1} parent=11 // pred_region
          _
        $region28: #{setr_forward.1} parent=11 // pred_fallthru
          _
        // Predicated region
        $region29: #{setr_forward.1} parent=11 // pred_check
          %p895 = pneg %p212
        $region30: #{setr_forward.1} parent=11 // pred_check_branch
          %897 = sbr.rel (%p895) target = $region32
        $region31: #{setr_forward.1} parent=11 // pred_region
          _
        $region32: #{setr_forward.1} parent=11 // pred_fallthru
          _
        // Predicated region
        $region33: #{setr_forward.1} parent=11 // pred_check
          %p898 = pneg %p233
        $region34: #{setr_forward.1} parent=11 // pred_check_branch
          %900 = sbr.rel (%p898) target = $region36
        $region35: #{setr_forward.1} parent=11 // pred_region
          _
        $region36: #{setr_forward.1} parent=11 // pred_fallthru
          _
        // Predicated region
        $region37: #{setr_forward.1} parent=11 // pred_check
          %p901 = pneg %p254
        $region38: #{setr_forward.1} parent=11 // pred_check_branch
          %903 = sbr.rel (%p901) target = $region40
        $region39: #{setr_forward.1} parent=11 // pred_region
          _
        $region40: #{setr_forward.1} parent=11 // pred_fallthru
          _
        // Predicated region
        $region41: #{setr_forward.1} parent=11 // pred_check
          %p904 = pneg %p275
        $region42: #{setr_forward.1} parent=11 // pred_check_branch
          %906 = sbr.rel (%p904) target = $region44
        $region43: #{setr_forward.1} parent=11 // pred_region
          _
        $region44: #{setr_forward.1} parent=11 // pred_fallthru
          _
        // Predicated region
        $region45: #{setr_forward.1} parent=11 // pred_check
          %p907 = pneg %p296
        $region46: #{setr_forward.1} parent=11 // pred_check_branch
          %909 = sbr.rel (%p907) target = $region48
        $region47: #{setr_forward.1} parent=11 // pred_region
          _
        $region48: #{setr_forward.1} parent=11 // pred_fallthru
          _
        // Predicated region
        $region49: #{setr_forward.1} parent=11 // pred_check
          %p910 = pneg %p317
        $region50: #{setr_forward.1} parent=11 // pred_check_branch
          %912 = sbr.rel (%p910) target = $region52
        $region51: #{setr_forward.1} parent=11 // pred_region
          _
        $region52: #{setr_forward.1} parent=11 // pred_fallthru
          _
        // Predicated region
        $region53: #{setr_forward.1} parent=11 // pred_check
          %p913 = pneg %p338
        $region54: #{setr_forward.1} parent=11 // pred_check_branch
          %915 = sbr.rel (%p913) target = $region56
        $region55: #{setr_forward.1} parent=11 // pred_region
          _
        $region56: #{setr_forward.1} parent=11 // pred_fallthru
          _
        // Predicated region
        $region57: #{setr_forward.1} parent=11 // pred_check
          %p916 = pneg %p359
        $region58: #{setr_forward.1} parent=11 // pred_check_branch
          %918 = sbr.rel (%p916) target = $region60
        $region59: #{setr_forward.1} parent=11 // pred_region
          _
        $region60: #{setr_forward.1} parent=11 // pred_fallthru
          _
        // Predicated region
        $region61: #{setr_forward.1} parent=11 // pred_check
          %p919 = pneg %p380
        $region62: #{setr_forward.1} parent=11 // pred_check_branch
          %921 = sbr.rel (%p919) target = $region64
        $region63: #{setr_forward.1} parent=11 // pred_region
          _
        $region64: #{setr_forward.1} parent=11 // pred_fallthru
          _
        // Predicated region
        $region65: #{setr_forward.1} parent=11 // pred_check
          %p922 = pneg %p401
        $region66: #{setr_forward.1} parent=11 // pred_check_branch
          %924 = sbr.rel (%p922) target = $region68
        $region67: #{setr_forward.1} parent=11 // pred_region
          _
        $region68: #{setr_forward.1} parent=11 // pred_fallthru
          _
        // Predicated region
        $region69: #{setr_forward.1} parent=11 // pred_check
          %p925 = pneg %p422
        $region70: #{setr_forward.1} parent=11 // pred_check_branch
          %927 = sbr.rel (%p925) target = $region72
        $region71: #{setr_forward.1} parent=11 // pred_region
          _
        $region72: #{setr_forward.1} parent=11 // pred_fallthru
          _
        // Predicated region
        $region73: #{setr_forward.1} parent=11 // pred_check
          %p928 = pneg %p443
        $region74: #{setr_forward.1} parent=11 // pred_check_branch
          %930 = sbr.rel (%p928) target = $region76
        $region75: #{setr_forward.1} parent=11 // pred_region
          _
        $region76: #{setr_forward.1} parent=11 // pred_fallthru
          _
        // Predicated region
        $region77: #{setr_forward.1} parent=11 // pred_check
          %p931 = pneg %p464
        $region78: #{setr_forward.1} parent=11 // pred_check_branch
          %933 = sbr.rel (%p931) target = $region80
        $region79: #{setr_forward.1} parent=11 // pred_region
          _
        $region80: #{setr_forward.1} parent=11 // pred_fallthru
          _
        // Predicated region
        $region81: #{setr_forward.1} parent=11 // pred_check
          %p934 = pneg %p485
        $region82: #{setr_forward.1} parent=11 // pred_check_branch
          %936 = sbr.rel (%p934) target = $region84
        $region83: #{setr_forward.1} parent=11 // pred_region
          _
        $region84: #{setr_forward.1} parent=11 // pred_fallthru
          _
        // Predicated region
        $region85: #{setr_forward.1} parent=11 // pred_check
          %p937 = pneg %p506
        $region86: #{setr_forward.1} parent=11 // pred_check_branch
          %939 = sbr.rel (%p937) target = $region88
        $region87: #{setr_forward.1} parent=11 // pred_region
          _
        $region88: #{setr_forward.1} parent=11 // pred_fallthru
          _
        // Predicated region
        $region89: #{setr_forward.1} parent=11 // pred_check
          %p940 = pneg %p527
        $region90: #{setr_forward.1} parent=11 // pred_check_branch
          %942 = sbr.rel (%p940) target = $region92
        $region91: #{setr_forward.1} parent=11 // pred_region
          _
        $region92: #{setr_forward.1} parent=11 // pred_fallthru
          _
        // Predicated region
        $region93: #{setr_forward.1} parent=11 // pred_check
          %p943 = pneg %p548
        $region94: #{setr_forward.1} parent=11 // pred_check_branch
          %945 = sbr.rel (%p943) target = $region96
        $region95: #{setr_forward.1} parent=11 // pred_region
          _
        $region96: #{setr_forward.1} parent=11 // pred_fallthru
          _
        // Predicated region
        $region97: #{setr_forward.1} parent=11 // pred_check
          %p946 = pneg %p569
        $region98: #{setr_forward.1} parent=11 // pred_check_branch
          %948 = sbr.rel (%p946) target = $region100
        $region99: #{setr_forward.1} parent=11 // pred_region
          %950 = vsyncadd [#allocation3], 0
          %s951 = sshll.u32 %s45, 4
          %s952 = int_to_ptr.hbm [resolvable:$true] %s951
          %s953 = sshll.u32 [#allocation2], 4
          %s954 = int_to_ptr.vmem [resolvable:$true] %s953
          %959 = dma.hbm_to_vmem [thread:$0]  %s952, 4608, %s954, [#allocation3], 64, 64, 4
        $region100: #{setr_forward.1} parent=11 // pred_fallthru
          _
        // Predicated region
        $region101: #{setr_forward.1} parent=11 // pred_check
          %p960 = pneg %p590
        $region102: #{setr_forward.1} parent=11 // pred_check_branch
          %962 = sbr.rel (%p960) target = $region104
        $region103: #{setr_forward.1} parent=11 // pred_region
          _
        $region104: #{setr_forward.1} parent=11 // pred_fallthru
          _
        // Predicated region
        $region105: #{setr_forward.1} parent=11 // pred_check
          %p963 = pneg %p611
        $region106: #{setr_forward.1} parent=11 // pred_check_branch
          %965 = sbr.rel (%p963) target = $region108
        $region107: #{setr_forward.1} parent=11 // pred_region
          _
        $region108: #{setr_forward.1} parent=11 // pred_fallthru
          _
        // Predicated region
        $region109: #{setr_forward.1} parent=11 // pred_check
          %p966 = pneg %p632
        $region110: #{setr_forward.1} parent=11 // pred_check_branch
          %968 = sbr.rel (%p966) target = $region112
        $region111: #{setr_forward.1} parent=11 // pred_region
          %970 = vsyncadd [#allocation5], 0
          %s971 = sshll.u32 %s51, 4
          %s972 = int_to_ptr.hbm [resolvable:$true] %s971
          %s973 = sshll.u32 [#allocation4], 4
          %s974 = int_to_ptr.vmem [resolvable:$true] %s973
          %979 = dma.hbm_to_vmem [thread:$0]  %s972, 3072, %s974, [#allocation5], 64, 64, 4
        $region112: #{setr_forward.1} parent=11 // pred_fallthru
          _
        // Predicated region
        $region113: #{setr_forward.1} parent=11 // pred_check
          %p980 = pneg %p653
        $region114: #{setr_forward.1} parent=11 // pred_check_branch
          %982 = sbr.rel (%p980) target = $region116
        $region115: #{setr_forward.1} parent=11 // pred_region
          _
        $region116: #{setr_forward.1} parent=11 // pred_fallthru
          _
        // Predicated region
        $region117: #{setr_forward.1} parent=11 // pred_check
          %p983 = pneg %p674
        $region118: #{setr_forward.1} parent=11 // pred_check_branch
          %985 = sbr.rel (%p983) target = $region120
        $region119: #{setr_forward.1} parent=11 // pred_region
          _
        $region120: #{setr_forward.1} parent=11 // pred_fallthru
          _
        // Predicated region
        $region121: #{setr_forward.1} parent=11 // pred_check
          %p986 = pneg %p695
        $region122: #{setr_forward.1} parent=11 // pred_check_branch
          %988 = sbr.rel (%p986) target = $region124
        $region123: #{setr_forward.1} parent=11 // pred_region
          _
        $region124: #{setr_forward.1} parent=11 // pred_fallthru
          _
        // Predicated region
        $region125: #{setr_forward.1} parent=11 // pred_check
          %p989 = pneg %p716
        $region126: #{setr_forward.1} parent=11 // pred_check_branch
          %991 = sbr.rel (%p989) target = $region128
        $region127: #{setr_forward.1} parent=11 // pred_region
          _
        $region128: #{setr_forward.1} parent=11 // pred_fallthru
          _
        // Predicated region
        $region129: #{setr_forward.1} parent=11 // pred_check
          %p992 = pneg %p737
        $region130: #{setr_forward.1} parent=11 // pred_check_branch
          %994 = sbr.rel (%p992) target = $region132
        $region131: #{setr_forward.1} parent=11 // pred_region
          _
        $region132: #{setr_forward.1} parent=11 // pred_fallthru
          _
        // Predicated region
        $region133: #{setr_forward.1} parent=11 // pred_check
          %p995 = pneg %p758
        $region134: #{setr_forward.1} parent=11 // pred_check_branch
          %997 = sbr.rel (%p995) target = $region136
        $region135: #{setr_forward.1} parent=11 // pred_region
          _
        $region136: #{setr_forward.1} parent=11 // pred_fallthru
          _
        // Predicated region
        $region137: #{setr_forward.1} parent=11 // pred_check
          %p998 = pneg %p779
        $region138: #{setr_forward.1} parent=11 // pred_check_branch
          %1000 = sbr.rel (%p998) target = $region140
        $region139: #{setr_forward.1} parent=11 // pred_region
          _
        $region140: #{setr_forward.1} parent=11 // pred_fallthru
          _
        // Predicated region
        $region141: #{setr_forward.1} parent=11 // pred_check
          %p1001 = pneg %p800
        $region142: #{setr_forward.1} parent=11 // pred_check_branch
          %1003 = sbr.rel (%p1001) target = $region144
        $region143: #{setr_forward.1} parent=11 // pred_region
          _
        $region144: #{setr_forward.1} parent=11 // pred_fallthru
          _
        // Predicated region
        $region145: #{setr_forward.1} parent=11 // pred_check
          %p1004 = pneg %p821
        $region146: #{setr_forward.1} parent=11 // pred_check_branch
          %1006 = sbr.rel (%p1004) target = $region148
        $region147: #{setr_forward.1} parent=11 // pred_region
          _
        $region148: #{setr_forward.1} parent=11 // pred_fallthru
          _
        // Predicated region
        $region149: #{setr_forward.1} parent=11 // pred_check
          %p1007 = pneg %p842
        $region150: #{setr_forward.1} parent=11 // pred_check_branch
          %1009 = sbr.rel (%p1007) target = $region152
        $region151: #{setr_forward.1} parent=11 // pred_region
          _
        $region152: #{setr_forward.1} parent=11 // pred_fallthru
          _
      $region12: #{setr_forward.1} parent=5 // pred_fallthru
        _
      %p1010 = scmp.lt.s32.totalorder %s81, 2
      // Predicated region
      $region153: #{setr_forward.1} parent=5 // pred_check
        %p1011 = pneg %p1010
      $region154: #{setr_forward.1} parent=5 // pred_check_branch
        %1013 = sbr.rel (%p1011) target = $region156
      $region155: #{setr_forward.1} parent=5 // pred_region
        // Predicated region
        $region157: #{setr_forward.1} parent=155 // pred_check
          %p1014 = pneg %p101
        $region158: #{setr_forward.1} parent=155 // pred_check_branch
          %1016 = sbr.rel (%p1014) target = $region160
        $region159: #{setr_forward.1} parent=155 // pred_region
          %p1017 = scmp.lt.s32.totalorder %s81, 1
          %s1018 = scalar_select %p1017, %s81, 1
          %s1019 = smul.addr %s1018, 2
          %s1020 = smul.addr %s1019, 4
          %s1021 = scalar_lea.vmem %s1, %s1020
        $region160: #{setr_forward.1} parent=155 // pred_fallthru
          _
      $region156: #{setr_forward.1} parent=5 // pred_fallthru
        _
      %p1022 = scmp.le.s32.totalorder 1, %s81
      %p1023 = scmp.lt.s32.totalorder %s81, 3
      %p1024 = pnand %p1022, %p1023
      %p1025 = pneg %p1024
      // Predicated region
      $region161: #{setr_forward.1} parent=5 // pred_check
        _
      $region162: #{setr_forward.1} parent=5 // pred_check_branch
        %1027 = sbr.rel (%p1024) target = $region164
      $region163: #{setr_forward.1} parent=5 // pred_region
        %s1028 = ssub.s32 %s81, 1
        // Predicated region
        $region165: #{setr_forward.1} parent=163 // pred_check
          %p1029 = pneg %p569
        $region166: #{setr_forward.1} parent=163 // pred_check_branch
          %1031 = sbr.rel (%p1029) target = $region168
        $region167: #{setr_forward.1} parent=163 // pred_region
          %1033 = dma.done [#allocation3], 4608
        $region168: #{setr_forward.1} parent=163 // pred_fallthru
          _
        // Predicated region
        $region169: #{setr_forward.1} parent=163 // pred_check
          %p1034 = pneg %p632
        $region170: #{setr_forward.1} parent=163 // pred_check_branch
          %1036 = sbr.rel (%p1034) target = $region172
        $region171: #{setr_forward.1} parent=163 // pred_region
          %1038 = dma.done [#allocation5], 3072
        $region172: #{setr_forward.1} parent=163 // pred_fallthru
          _
        %p1039 = scmp.lt.s32.totalorder %s86, 1
        %s1040 = scalar_select %p1039, %s86, 1
        %s1041 = smul.addr %s1040, 2
        %s1042 = smul.addr %s1041, 4
        %s1043 = scalar_lea.vmem %s1, %s1042
        %p1044 = pneg %p107
        %p1045 = pneg %p104
        %p1046 = pneg %p128
        %p1047 = pneg %p125
        %p1048 = pneg %p149
        %p1049 = pneg %p146
        %p1050 = pneg %p170
        %p1051 = pneg %p167
        %p1052 = pneg %p191
        %p1053 = pneg %p188
        %p1054 = pneg %p212
        %p1055 = pneg %p209
        %p1056 = pneg %p233
        %p1057 = pneg %p230
        %p1058 = pneg %p254
        %p1059 = pneg %p251
        %p1060 = pneg %p275
        %p1061 = pneg %p272
        %p1062 = pneg %p296
        %p1063 = pneg %p293
        %p1064 = pneg %p317
        %p1065 = pneg %p314
        %p1066 = pneg %p338
        %p1067 = pneg %p335
        %p1068 = pneg %p359
        %p1069 = pneg %p356
        %p1070 = pneg %p380
        %p1071 = pneg %p377
        %p1072 = pneg %p401
        %p1073 = pneg %p398
        %p1074 = pneg %p422
        %p1075 = pneg %p419
        %p1076 = pneg %p443
        %p1077 = pneg %p440
        %p1078 = pneg %p464
        %p1079 = pneg %p461
        %p1080 = pneg %p485
        %p1081 = pneg %p482
        %p1082 = pneg %p506
        %p1083 = pneg %p503
        %p1084 = pneg %p527
        %p1085 = pneg %p524
        %p1086 = pneg %p548
        %p1087 = pneg %p545
        %p1088 = pneg %p569
        %p1089 = pneg %p566
        %p1090 = pneg %p590
        %p1091 = pneg %p587
        %p1092 = pneg %p611
        %p1093 = pneg %p608
        %p1094 = pneg %p632
        %p1095 = pneg %p629
        %p1096 = pneg %p653
        %p1097 = pneg %p650
        %p1098 = pneg %p674
        %p1099 = pneg %p671
        %p1100 = pneg %p695
        %p1101 = pneg %p692
        %p1102 = pneg %p716
        %p1103 = pneg %p713
        %p1104 = pneg %p737
        %p1105 = pneg %p734
        %p1106 = pneg %p758
        %p1107 = pneg %p755
        %p1108 = pneg %p779
        %p1109 = pneg %p776
        %p1110 = pneg %p800
        %p1111 = pneg %p797
        %p1112 = pneg %p821
        %p1113 = pneg %p818
        %p1114 = pneg %p842
        %p1115 = pneg %p839
        %p1116 = pneg %p868
        %p1117 = pneg %p865
        %p1118 = scmp.lt.s32.totalorder %s86, 1
        %s1119 = scalar_select %p1118, %s86, 1
        %s1120 = smul.addr %s1119, 8
        %s1121 = smul.addr %s1120, 8
        %s1122 = scalar_lea.vmem %s73, %s1121
        %p1123 = scmp.lt.s32.totalorder %s86, 1
        %s1124 = scalar_select %p1123, %s86, 1
        %s1125 = smul.addr %s1124, 2
        %s1126 = smul.addr %s1125, 4
        %s1127 = scalar_lea.vmem %s1, %s1126
        %p1128 = scmp.lt.s32.totalorder %s86, 1
        %s1129 = scalar_select %p1128, %s86, 1
        %s1130 = smul.addr %s1129, 8
        %s1131 = smul.addr %s1130, 8
        %s1132 = scalar_lea.vmem %s73, %s1131
        %v1134 = vld [vmem:[%s1127] sm:$0xff]
        %v1135 = vld [vmem:[%s5] sm:$0xf]
        %v1136 = vld [vmem:[%s5 + $0x4] sm:$0xf]
        %v1137 = vld [vmem:[%s5 + $0x8] sm:$0xf]
        %v1138 = vld [vmem:[%s5 + $0xc] sm:$0xf]
        %v1139 = vld [vmem:[%s5 + $0x10] sm:$0xf]
        %v1140 = vld [vmem:[%s5 + $0x14] sm:$0xf]
        %v1141 = vld [vmem:[%s5 + $0x18] sm:$0xf]
        %v1142 = vld [vmem:[%s5 + $0x1c] sm:$0xf]
        %v1143 = vld [vmem:[%s5 + $0x20] sm:$0xf]
        %v1144 = vld [vmem:[%s5 + $0x24] sm:$0xf]
        %v1145 = vld [vmem:[%s5 + $0x28] sm:$0xf]
        %v1146 = vld [vmem:[%s5 + $0x2c] sm:$0xf]
        %v1147 = vld [vmem:[%s5 + $0x30] sm:$0xf]
        %v1148 = vld [vmem:[%s5 + $0x34] sm:$0xf]
        %v1149 = vld [vmem:[%s5 + $0x38] sm:$0xf]
        %v1150 = vld [vmem:[%s5 + $0x3c] sm:$0xf]
        %v1151 = vld [vmem:[%s5 + $0x40] sm:$0xf]
        %v1152 = vld [vmem:[%s5 + $0x44] sm:$0xf]
        %v1153 = vld [vmem:[%s5 + $0x48] sm:$0xf]
        %v1154 = vld [vmem:[%s5 + $0x4c] sm:$0xf]
        %v1155 = vld [vmem:[%s5 + $0x50] sm:$0xf]
        %v1156 = vld [vmem:[%s5 + $0x54] sm:$0xf]
        %v1157 = vld [vmem:[%s5 + $0x58] sm:$0xf]
        %v1158 = vld [vmem:[%s5 + $0x5c] sm:$0xf]
        %1160 = vst [vmem:[#allocation1] ss:$2 sm:$0xff] %v1134
        %v1161 = vld.sshfl [vmem:[#allocation1] sm:$0xff pattern:$0x75316420]
        %v1162 = vld.sshfl [vmem:[#allocation1 + $0x8] sm:$0xff pattern:$0x75316420]
        %v1165 = vpack.c.bf16 %v1161, %v1161
        %v1166 = vpack.c.bf16 %v1162, %v1162
        %v1167 = vld [vmem:[%s7] sm:$0x1]
        %v1169 = vperm.slane %v1167, 0
        %v1195 = vunpack.c.l.b16 %v1135
        %v1196 = vunpack.c.l.b16 %v1136
        %v1197 = vunpack.c.l.b16 %v1137
        %v1198 = vunpack.c.l.b16 %v1138
        %v1199 = vunpack.c.l.b16 %v1139
        %v1200 = vunpack.c.l.b16 %v1140
        %v1201 = vunpack.c.l.b16 %v1141
        %v1202 = vunpack.c.l.b16 %v1142
        %v1203 = vunpack.c.l.b16 %v1143
        %v1204 = vunpack.c.l.b16 %v1144
        %v1205 = vunpack.c.l.b16 %v1145
        %v1206 = vunpack.c.l.b16 %v1146
        %v1207 = vunpack.c.l.b16 %v1147
        %v1208 = vunpack.c.l.b16 %v1148
        %v1209 = vunpack.c.l.b16 %v1149
        %v1210 = vunpack.c.l.b16 %v1150
        %v1211 = vunpack.c.l.b16 %v1151
        %v1212 = vunpack.c.l.b16 %v1152
        %v1213 = vunpack.c.l.b16 %v1153
        %v1214 = vunpack.c.l.b16 %v1154
        %v1215 = vunpack.c.l.b16 %v1155
        %v1216 = vunpack.c.l.b16 %v1156
        %v1217 = vunpack.c.l.b16 %v1157
        %v1218 = vunpack.c.l.b16 %v1158
        %v1219 = vpack.c.b16 %v1196, %v1195
        %v1220 = vpack.c.b16 %v1198, %v1197
        %v1221 = vpack.c.b16 %v1200, %v1199
        %v1222 = vpack.c.b16 %v1202, %v1201
        %v1223 = vpack.c.b16 %v1204, %v1203
        %v1224 = vpack.c.b16 %v1206, %v1205
        %v1225 = vpack.c.b16 %v1208, %v1207
        %v1226 = vpack.c.b16 %v1210, %v1209
        %v1227 = vpack.c.b16 %v1212, %v1211
        %v1228 = vpack.c.b16 %v1214, %v1213
        %v1229 = vpack.c.b16 %v1216, %v1215
        %v1230 = vpack.c.b16 %v1218, %v1217
        %vm1243 = vcmask 523264
        %v1245 = vsel %vm1243, %v1166, 0
        %1247 = vmatpush.bf16.msra.mxu0 %v1226
        %1248 = vmatpush.bf16.msra.mxu0 %v1225
        %1249 = vmatpush.bf16.msra.mxu0 %v1224
        %1250 = vmatpush.bf16.msra.mxu0 %v1223
        %1251 = vmatpush.bf16.msra.mxu0 %v1222
        %1252 = vmatpush.bf16.msra.mxu0 %v1221
        %1253 = vmatpush.bf16.msra.mxu0 %v1220
        %1254 = vmatpush.bf16.msra.mxu0 %v1219
        %1255 = vmatmul.bf16.gmra.mxu0 %v1165
        %v1256 = vpop.f32.mrf.mxu0
        %v1257 = vadd.f32 %v1169, %v1256
        %v1258 = vpop.f32.mrf.mxu0
        %1259 = vdwg.mxu0
        %1260 = vmatpush.bf16.msra.mxu0 0
        %1261 = vmatpush.bf16.msra.mxu0 0
        %1262 = vmatpush.bf16.msra.mxu0 0
        %1263 = vmatpush.bf16.msra.mxu0 0
        %1264 = vmatpush.bf16.msra.mxu0 %v1230
        %1265 = vmatpush.bf16.msra.mxu0 %v1229
        %1266 = vmatpush.bf16.msra.mxu0 %v1228
        %1267 = vmatpush.bf16.msra.mxu0 %v1227
        %1268 = vmatmul.bf16.gmra.mxu0 %v1245
        %v1269 = vpop.f32.mrf.mxu0
        %v1270 = vadd.f32 %v1257, %v1269
        %v1271 = vpop.f32.mrf.mxu0
        %1272 = vdwg.mxu0
        %v1273 = vmul.f32 %v1270, 0.5
        %v1274 = vmul.f32 %v1270, 0.70710677
        %v1275 = vand.u32 2147483647, %v1274
        %v1276 = vmul.f32 %v1275, 0.3275911
        %v1277 = vadd.f32 %v1276, 1.0
        %v1278 = vrcp.pop %v1277
        %v1279 = vmul.f32 %v1277, %v1278
        %v1280 = vsub.f32 1.0, %v1279
        %v1281 = vmul.f32 %v1278, %v1280
        %v1282 = vadd.f32 %v1278, %v1281
        %vm1283 = vweird.f32 %v1277
        %vm1284 = vweird.f32 %v1278
        %vm1285 = vmor %vm1283, %vm1284
        %v1286 = vsel %vm1285, %v1278, %v1282
        %v1287 = vand.u32 2147483647, %v1277
        %vm1288 = vcmp.eq.f32.partialorder %v1287, 8.507059e+37
        %v1289 = vand.u32 %v1277, 2147483648
        %v1290 = vor.u32 1.1754944e-38, %v1289
        %v1291 = vsel %vm1288, %v1290, %v1286
        %v1292 = vmul.f32 1.0, %v1291
        %v1293 = vmul.f32 %v1292, 1.0614054
        %v1294 = vadd.f32 %v1293, -1.4531521
        %v1295 = vmul.f32 %v1292, %v1294
        %v1296 = vadd.f32 %v1295, 1.4214138
        %v1297 = vmul.f32 %v1292, %v1296
        %v1298 = vadd.f32 %v1297, -0.28449672
        %v1299 = vmul.f32 %v1292, %v1298
        %v1300 = vadd.f32 %v1299, 0.2548296
        %v1301 = vmul.f32 %v1292, %v1300
        %v1302 = vmul.f32 %v1275, %v1275
        %v1303 = vsub.f32 0.0, %v1302
        %v1304 = vmul.f32 %v1303, 1.442695
        %v1305 = vpow.pop %v1304
        %v1306 = vmul.f32 %v1301, %v1305
        %v1307 = vsub.f32 1.0, %v1306
        %vm1308 = vcmp.lt.f32.partialorder %v1274, 0.0
        %v1309 = vsub.f32 0.0, %v1307
        %v1310 = vsel %vm1308, %v1309, %v1307
        %v1311 = vadd.f32 %v1310, 1.0
        %v1312 = vmul.f32 %v1273, %v1311
        %v1313 = vld [vmem:[%s9] sm:$0x1]
        %v1314 = vld [vmem:[%s11] sm:$0x1]
        %vm1315 = vcmask 257024
        %v1316 = vsel %vm1315, %v1312, 0.0
        %1317 = vadd.xlane.f32.xlu0 %v1316
        %v1318 = vpop.xlane.xlu0 %1317
        %v1319 = vrcp.pop 32.0
        %v1320 = vmul.f32 32.0, %v1319
        %v1321 = vsub.f32 1.0, %v1320
        %v1322 = vmul.f32 %v1319, %v1321
        %v1323 = vadd.f32 %v1319, %v1322
        %vm1324 = vweird.f32 %v1319
        %v1325 = vsel %vm1324, %v1319, %v1323
        %v1326 = vmul.f32 %v1318, %v1325
        %v1327 = vsub.f32 %v1312, %v1326
        %v1328 = vmul.f32 %v1327, %v1327
        %v1329 = vsel %vm1315, %v1328, 0.0
        %1330 = vadd.xlane.f32.xlu0 %v1329
        %v1331 = vpop.xlane.xlu0 %1330
        %v1332 = vmul.f32 %v1331, %v1325
        %v1333 = vadd.f32 %v1332, 1e-12
        %v1334 = vrsqrt.pop %v1333
        %v1335 = vmul.f32 %v1334, %v1333
        %v1336 = vmul.f32 %v1335, %v1334
        %v1337 = vmul.f32 0.5, %v1336
        %v1338 = vsub.f32 1.5, %v1337
        %v1339 = vmul.f32 %v1334, %v1338
        %vm1340 = vweird.f32 %v1333
        %vm1341 = vweird.f32 %v1334
        %vm1342 = vmor %vm1340, %vm1341
        %v1343 = vsel %vm1342, %v1334, %v1339
        %v1344 = vmul.f32 %v1327, %v1343
        %v1346 = vperm.slane %v1313, 0
        %v1348 = vmul.f32 %v1344, %v1346
        %v1350 = vperm.slane %v1314, 0
        %v1352 = vadd.f32 %v1348, %v1350
        %v1353 = vld [vmem:[%s3] sm:$0xf]
        %v1354 = vadd.f32 %v1352, %v1353
        %v1355 = vld [vmem:[%s13] sm:$0x1]
        %v1356 = vld [vmem:[%s15] sm:$0x1]
        %v1357 = vsel %vm1315, %v1354, 0.0
        %1358 = vadd.xlane.f32.xlu0 %v1357
        %v1359 = vpop.xlane.xlu0 %1358
        %v1360 = vmul.f32 %v1359, %v1325
        %v1361 = vsub.f32 %v1354, %v1360
        %v1362 = vmul.f32 %v1361, %v1361
        %v1363 = vsel %vm1315, %v1362, 0.0
        %1364 = vadd.xlane.f32.xlu0 %v1363
        %v1365 = vpop.xlane.xlu0 %1364
        %v1366 = vmul.f32 %v1365, %v1325
        %v1367 = vadd.f32 %v1366, 1e-12
        %v1368 = vrsqrt.pop %v1367
        %v1369 = vmul.f32 %v1368, %v1367
        %v1370 = vmul.f32 %v1369, %v1368
        %v1371 = vmul.f32 0.5, %v1370
        %v1372 = vsub.f32 1.5, %v1371
        %v1373 = vmul.f32 %v1368, %v1372
        %vm1374 = vweird.f32 %v1367
        %vm1375 = vweird.f32 %v1368
        %vm1376 = vmor %vm1374, %vm1375
        %v1377 = vsel %vm1376, %v1368, %v1373
        %v1378 = vmul.f32 %v1361, %v1377
        %v1380 = vperm.slane %v1355, 0
        %v1382 = vmul.f32 %v1378, %v1380
        %v1384 = vperm.slane %v1356, 0
        %v1386 = vadd.f32 %v1382, %v1384
        %v1387 = vld [vmem:[%s17] sm:$0xf]
        %v1388 = vld [vmem:[%s17 + $0x4] sm:$0xf]
        %v1389 = vld [vmem:[%s17 + $0x8] sm:$0xf]
        %v1390 = vld [vmem:[%s17 + $0xc] sm:$0xf]
        %v1391 = vpack.c.bf16 %v1386, %v1386
        %v1392 = vld [vmem:[%s19] sm:$0x1]
        %v1394 = vperm.slane %v1392, 0
        %v1400 = vunpack.c.l.b16 %v1387
        %v1401 = vunpack.c.l.b16 %v1388
        %v1402 = vunpack.c.l.b16 %v1389
        %v1403 = vunpack.c.l.b16 %v1390
        %v1404 = vpack.c.b16 %v1401, %v1400
        %v1405 = vpack.c.b16 %v1403, %v1402
        %vm1408 = vcmask 261120
        %v1410 = vsel %vm1408, %v1391, 0
        %1412 = vmatpush.bf16.msra.mxu0 0
        %1413 = vmatpush.bf16.msra.mxu0 0
        %1414 = vmatpush.bf16.msra.mxu0 0
        %1415 = vmatpush.bf16.msra.mxu0 0
        %1416 = vmatpush.bf16.msra.mxu0 0
        %1417 = vmatpush.bf16.msra.mxu0 0
        %1418 = vmatpush.bf16.msra.mxu0 %v1405
        %1419 = vmatpush.bf16.msra.mxu0 %v1404
        %1420 = vmatmul.bf16.gmra.mxu0 %v1410
        %v1421 = vpop.f32.mrf.mxu0
        %v1422 = vadd.f32 %v1394, %v1421
        %v1423 = vpop.f32.mrf.mxu0
        %1424 = vdwg.mxu0
        %1426 = vrot.lane.b32.xlu0 %v1422, 96
        %v1427 = vpop.permute.xlu0 %1426
        %vm1428 = vcmask 64512
        %v1429 = vsel %vm1428, %v1422, 0
        %v1431 = vsel %vm1428, %v1427, 0
        %1433 = vmatpush.xpose.msra.mxu0 0.0
        %1434 = vmatpush.xpose.msra.mxu0 0.0
        %1435 = vmatpush.xpose.msra.mxu0 0.0
        %1436 = vmatpush.xpose.msra.mxu0 0.0
        %1437 = vmatpush.xpose.msra.mxu0 0.0
        %1438 = vmatpush.xpose.msra.mxu0 0.0
        %1439 = vmatpush.xpose.msra.mxu0 0.0
        %1440 = vmatpush.xpose.msra.mxu0 0.0
        %1441 = vmatpush.xpose.msra.mxu0 0.0
        %1442 = vmatpush.xpose.msra.mxu0 0.0
        %1443 = vmatpush.xpose.msra.mxu0 0.0
        %1444 = vmatpush.xpose.msra.mxu0 0.0
        %1445 = vmatpush.xpose.msra.mxu0 0.0
        %1446 = vmatpush.xpose.msra.mxu0 0.0
        %1447 = vmatpush.xpose.msra.mxu0 0.0
        %1448 = vmatpush.xpose.msra.mxu0 %v1431
        %1449 = vmatmul.f32.gmra.mxu0 %v1429
        %v1450 = vpop.f32.mrf.mxu0
        %v1451 = vadd.f32 0.0, %v1450
        %1452 = vdwg.mxu0
        %v1453 = vmul.f32 %v1451, 0.35355338
        %vm1454 = vcmask 27648
        %v1455 = vsel %vm1454, %v1453, -inf
        %1456 = vmax.xlane.f32.xlu0 %v1455
        %v1457 = vpop.xlane.xlu0 %1456
        %v1458 = vsub.f32 %v1453, %v1457
        %v1459 = vmul.f32 %v1458, 1.442695
        %v1460 = vpow.pop %v1459
        %v1461 = vsel %vm1454, %v1460, 0.0
        %1462 = vadd.xlane.f32.xlu0 %v1461
        %v1463 = vpop.xlane.xlu0 %1462
        %v1464 = vrcp.pop %v1463
        %v1465 = vmul.f32 %v1460, %v1464
        %1466 = vrot.lane.b32.xlu0 %v1422, 64
        %v1467 = vpop.permute.xlu0 %1466
        %vm1468 = vcmask 31744
        %v1470 = vsel %vm1468, %v1465, 0
        %vm1472 = vcmask 1043456
        %v1473 = vsel %vm1472, %v1467, 0
        %1475 = vmatpush.msra.mxu0 0.0
        %1476 = vmatpush.msra.mxu0 0.0
        %1477 = vmatpush.msra.mxu0 0.0
        %1478 = vmatpush.msra.mxu0 0.0
        %1479 = vmatpush.msra.mxu0 0.0
        %1480 = vmatpush.msra.mxu0 0.0
        %1481 = vmatpush.msra.mxu0 0.0
        %1482 = vmatpush.msra.mxu0 0.0
        %1483 = vmatpush.msra.mxu0 0.0
        %1484 = vmatpush.msra.mxu0 0.0
        %1485 = vmatpush.msra.mxu0 0.0
        %1486 = vmatpush.msra.mxu0 0.0
        %1487 = vmatpush.msra.mxu0 0.0
        %1488 = vmatpush.msra.mxu0 0.0
        %1489 = vmatpush.msra.mxu0 0.0
        %1490 = vmatpush.msra.mxu0 %v1473
        %1491 = vmatmul.f32.gmra.mxu0 %v1470
        %v1492 = vpop.f32.mrf.mxu0
        %v1493 = vadd.f32 0.0, %v1492
        %1494 = vdwg.mxu0
        %1495 = vrot.lane.b32.xlu0 %v1422, 120
        %v1496 = vpop.permute.xlu0 %1495
        %1497 = vrot.lane.b32.xlu0 %v1422, 88
        %v1498 = vpop.permute.xlu0 %1497
        %v1499 = vsel %vm1428, %v1496, 0
        %v1501 = vsel %vm1428, %v1498, 0
        %1503 = vmatpush.xpose.msra.mxu0 0.0
        %1504 = vmatpush.xpose.msra.mxu0 0.0
        %1505 = vmatpush.xpose.msra.mxu0 0.0
        %1506 = vmatpush.xpose.msra.mxu0 0.0
        %1507 = vmatpush.xpose.msra.mxu0 0.0
        %1508 = vmatpush.xpose.msra.mxu0 0.0
        %1509 = vmatpush.xpose.msra.mxu0 0.0
        %1510 = vmatpush.xpose.msra.mxu0 0.0
        %1511 = vmatpush.xpose.msra.mxu0 0.0
        %1512 = vmatpush.xpose.msra.mxu0 0.0
        %1513 = vmatpush.xpose.msra.mxu0 0.0
        %1514 = vmatpush.xpose.msra.mxu0 0.0
        %1515 = vmatpush.xpose.msra.mxu0 0.0
        %1516 = vmatpush.xpose.msra.mxu0 0.0
        %1517 = vmatpush.xpose.msra.mxu0 0.0
        %1518 = vmatpush.xpose.msra.mxu0 %v1501
        %1519 = vmatmul.f32.gmra.mxu0 %v1499
        %v1520 = vpop.f32.mrf.mxu0
        %v1521 = vadd.f32 0.0, %v1520
        %1522 = vdwg.mxu0
        %v1523 = vmul.f32 %v1521, 0.35355338
        %v1524 = vsel %vm1454, %v1523, -inf
        %1525 = vmax.xlane.f32.xlu0 %v1524
        %v1526 = vpop.xlane.xlu0 %1525
        %v1527 = vsub.f32 %v1523, %v1526
        %v1528 = vmul.f32 %v1527, 1.442695
        %v1529 = vpow.pop %v1528
        %v1530 = vsel %vm1454, %v1529, 0.0
        %1531 = vadd.xlane.f32.xlu0 %v1530
        %v1532 = vpop.xlane.xlu0 %1531
        %v1533 = vrcp.pop %v1532
        %v1534 = vmul.f32 %v1529, %v1533
        %1535 = vrot.lane.b32.xlu0 %v1422, 56
        %v1536 = vpop.permute.xlu0 %1535
        %v1538 = vsel %vm1468, %v1534, 0
        %v1540 = vsel %vm1472, %v1536, 0
        %1542 = vmatpush.msra.mxu0 0.0
        %1543 = vmatpush.msra.mxu0 0.0
        %1544 = vmatpush.msra.mxu0 0.0
        %1545 = vmatpush.msra.mxu0 0.0
        %1546 = vmatpush.msra.mxu0 0.0
        %1547 = vmatpush.msra.mxu0 0.0
        %1548 = vmatpush.msra.mxu0 0.0
        %1549 = vmatpush.msra.mxu0 0.0
        %1550 = vmatpush.msra.mxu0 0.0
        %1551 = vmatpush.msra.mxu0 0.0
        %1552 = vmatpush.msra.mxu0 0.0
        %1553 = vmatpush.msra.mxu0 0.0
        %1554 = vmatpush.msra.mxu0 0.0
        %1555 = vmatpush.msra.mxu0 0.0
        %1556 = vmatpush.msra.mxu0 0.0
        %1557 = vmatpush.msra.mxu0 %v1540
        %1558 = vmatmul.f32.gmra.mxu0 %v1538
        %v1559 = vpop.f32.mrf.mxu0
        %v1560 = vadd.f32 0.0, %v1559
        %1561 = vdwg.mxu0
        %1562 = vrot.lane.b32.xlu0 %v1422, 112
        %v1563 = vpop.permute.xlu0 %1562
        %1564 = vrot.lane.b32.xlu0 %v1422, 80
        %v1565 = vpop.permute.xlu0 %1564
        %v1566 = vsel %vm1428, %v1563, 0
        %v1568 = vsel %vm1428, %v1565, 0
        %1570 = vmatpush.xpose.msra.mxu0 0.0
        %1571 = vmatpush.xpose.msra.mxu0 0.0
        %1572 = vmatpush.xpose.msra.mxu0 0.0
        %1573 = vmatpush.xpose.msra.mxu0 0.0
        %1574 = vmatpush.xpose.msra.mxu0 0.0
        %1575 = vmatpush.xpose.msra.mxu0 0.0
        %1576 = vmatpush.xpose.msra.mxu0 0.0
        %1577 = vmatpush.xpose.msra.mxu0 0.0
        %1578 = vmatpush.xpose.msra.mxu0 0.0
        %1579 = vmatpush.xpose.msra.mxu0 0.0
        %1580 = vmatpush.xpose.msra.mxu0 0.0
        %1581 = vmatpush.xpose.msra.mxu0 0.0
        %1582 = vmatpush.xpose.msra.mxu0 0.0
        %1583 = vmatpush.xpose.msra.mxu0 0.0
        %1584 = vmatpush.xpose.msra.mxu0 0.0
        %1585 = vmatpush.xpose.msra.mxu0 %v1568
        %1586 = vmatmul.f32.gmra.mxu0 %v1566
        %v1587 = vpop.f32.mrf.mxu0
        %v1588 = vadd.f32 0.0, %v1587
        %1589 = vdwg.mxu0
        %v1590 = vmul.f32 %v1588, 0.35355338
        %v1591 = vsel %vm1454, %v1590, -inf
        %1592 = vmax.xlane.f32.xlu0 %v1591
        %v1593 = vpop.xlane.xlu0 %1592
        %v1594 = vsub.f32 %v1590, %v1593
        %v1595 = vmul.f32 %v1594, 1.442695
        %v1596 = vpow.pop %v1595
        %v1597 = vsel %vm1454, %v1596, 0.0
        %1598 = vadd.xlane.f32.xlu0 %v1597
        %v1599 = vpop.xlane.xlu0 %1598
        %v1600 = vrcp.pop %v1599
        %v1601 = vmul.f32 %v1596, %v1600
        %1602 = vrot.lane.b32.xlu0 %v1422, 48
        %v1603 = vpop.permute.xlu0 %1602
        %v1605 = vsel %vm1468, %v1601, 0
        %v1607 = vsel %vm1472, %v1603, 0
        %1609 = vmatpush.msra.mxu0 0.0
        %1610 = vmatpush.msra.mxu0 0.0
        %1611 = vmatpush.msra.mxu0 0.0
        %1612 = vmatpush.msra.mxu0 0.0
        %1613 = vmatpush.msra.mxu0 0.0
        %1614 = vmatpush.msra.mxu0 0.0
        %1615 = vmatpush.msra.mxu0 0.0
        %1616 = vmatpush.msra.mxu0 0.0
        %1617 = vmatpush.msra.mxu0 0.0
        %1618 = vmatpush.msra.mxu0 0.0
        %1619 = vmatpush.msra.mxu0 0.0
        %1620 = vmatpush.msra.mxu0 0.0
        %1621 = vmatpush.msra.mxu0 0.0
        %1622 = vmatpush.msra.mxu0 0.0
        %1623 = vmatpush.msra.mxu0 0.0
        %1624 = vmatpush.msra.mxu0 %v1607
        %1625 = vmatmul.f32.gmra.mxu0 %v1605
        %v1626 = vpop.f32.mrf.mxu0
        %v1627 = vadd.f32 0.0, %v1626
        %1628 = vdwg.mxu0
        %1629 = vrot.lane.b32.xlu0 %v1422, 104
        %v1630 = vpop.permute.xlu0 %1629
        %1631 = vrot.lane.b32.xlu0 %v1422, 72
        %v1632 = vpop.permute.xlu0 %1631
        %v1633 = vsel %vm1428, %v1630, 0
        %v1635 = vsel %vm1428, %v1632, 0
        %1637 = vmatpush.xpose.msra.mxu0 0.0
        %1638 = vmatpush.xpose.msra.mxu0 0.0
        %1639 = vmatpush.xpose.msra.mxu0 0.0
        %1640 = vmatpush.xpose.msra.mxu0 0.0
        %1641 = vmatpush.xpose.msra.mxu0 0.0
        %1642 = vmatpush.xpose.msra.mxu0 0.0
        %1643 = vmatpush.xpose.msra.mxu0 0.0
        %1644 = vmatpush.xpose.msra.mxu0 0.0
        %1645 = vmatpush.xpose.msra.mxu0 0.0
        %1646 = vmatpush.xpose.msra.mxu0 0.0
        %1647 = vmatpush.xpose.msra.mxu0 0.0
        %1648 = vmatpush.xpose.msra.mxu0 0.0
        %1649 = vmatpush.xpose.msra.mxu0 0.0
        %1650 = vmatpush.xpose.msra.mxu0 0.0
        %1651 = vmatpush.xpose.msra.mxu0 0.0
        %1652 = vmatpush.xpose.msra.mxu0 %v1635
        %1653 = vmatmul.f32.gmra.mxu0 %v1633
        %v1654 = vpop.f32.mrf.mxu0
        %v1655 = vadd.f32 0.0, %v1654
        %1656 = vdwg.mxu0
        %v1657 = vmul.f32 %v1655, 0.35355338
        %v1658 = vsel %vm1454, %v1657, -inf
        %1659 = vmax.xlane.f32.xlu0 %v1658
        %v1660 = vpop.xlane.xlu0 %1659
        %v1661 = vsub.f32 %v1657, %v1660
        %v1662 = vmul.f32 %v1661, 1.442695
        %v1663 = vpow.pop %v1662
        %v1664 = vsel %vm1454, %v1663, 0.0
        %1665 = vadd.xlane.f32.xlu0 %v1664
        %v1666 = vpop.xlane.xlu0 %1665
        %v1667 = vrcp.pop %v1666
        %v1668 = vmul.f32 %v1663, %v1667
        %1669 = vrot.lane.b32.xlu0 %v1422, 40
        %v1670 = vpop.permute.xlu0 %1669
        %v1672 = vsel %vm1468, %v1668, 0
        %v1674 = vsel %vm1472, %v1670, 0
        %1676 = vmatpush.msra.mxu0 0.0
        %1677 = vmatpush.msra.mxu0 0.0
        %1678 = vmatpush.msra.mxu0 0.0
        %1679 = vmatpush.msra.mxu0 0.0
        %1680 = vmatpush.msra.mxu0 0.0
        %1681 = vmatpush.msra.mxu0 0.0
        %1682 = vmatpush.msra.mxu0 0.0
        %1683 = vmatpush.msra.mxu0 0.0
        %1684 = vmatpush.msra.mxu0 0.0
        %1685 = vmatpush.msra.mxu0 0.0
        %1686 = vmatpush.msra.mxu0 0.0
        %1687 = vmatpush.msra.mxu0 0.0
        %1688 = vmatpush.msra.mxu0 0.0
        %1689 = vmatpush.msra.mxu0 0.0
        %1690 = vmatpush.msra.mxu0 0.0
        %1691 = vmatpush.msra.mxu0 %v1674
        %1692 = vmatmul.f32.gmra.mxu0 %v1672
        %v1693 = vpop.f32.mrf.mxu0
        %v1694 = vadd.f32 0.0, %v1693
        %1695 = vdwg.mxu0
        %1697 = vrot.lane.b32.xlu0 %v1560, 8
        %v1698 = vpop.permute.xlu0 %1697
        %1701 = vrot.lane.b32.xlu0 %v1627, 16
        %v1702 = vpop.permute.xlu0 %1701
        %1705 = vrot.lane.b32.xlu0 %v1694, 24
        %v1706 = vpop.permute.xlu0 %1705
        %v1708 = vsel %vm1428, %v1493, %v1698
        %vm1709 = vcmask 130048
        %v1710 = vsel %vm1709, %v1708, %v1702
        %vm1711 = vcmask 195584
        %v1712 = vsel %vm1711, %v1710, %v1706
        %v1713 = vld [vmem:[%s21] sm:$0xf]
        %v1714 = vld [vmem:[%s21 + $0x4] sm:$0xf]
        %v1715 = vld [vmem:[%s21 + $0x8] sm:$0xf]
        %v1716 = vld [vmem:[%s21 + $0xc] sm:$0xf]
        %v1717 = vpack.c.bf16 %v1712, %v1712
        %v1718 = vld [vmem:[%s23] sm:$0x1]
        %v1720 = vperm.slane %v1718, 0
        %v1726 = vunpack.c.l.b16 %v1713
        %v1727 = vunpack.c.l.b16 %v1714
        %v1728 = vunpack.c.l.b16 %v1715
        %v1729 = vunpack.c.l.b16 %v1716
        %v1730 = vpack.c.b16 %v1727, %v1726
        %v1731 = vpack.c.b16 %v1729, %v1728
        %v1735 = vsel %vm1408, %v1717, 0
        %1737 = vmatpush.bf16.msra.mxu0 0
        %1738 = vmatpush.bf16.msra.mxu0 0
        %1739 = vmatpush.bf16.msra.mxu0 0
        %1740 = vmatpush.bf16.msra.mxu0 0
        %1741 = vmatpush.bf16.msra.mxu0 0
        %1742 = vmatpush.bf16.msra.mxu0 0
        %1743 = vmatpush.bf16.msra.mxu0 %v1731
        %1744 = vmatpush.bf16.msra.mxu0 %v1730
        %1745 = vmatmul.bf16.gmra.mxu0 %v1735
        %v1746 = vpop.f32.mrf.mxu0
        %v1747 = vadd.f32 %v1720, %v1746
        %v1748 = vpop.f32.mrf.mxu0
        %1749 = vdwg.mxu0
        %v1750 = vadd.f32 %v1747, %v1386
        %v1751 = vld [vmem:[%s25] sm:$0x1]
        %v1752 = vld [vmem:[%s27] sm:$0x1]
        %v1753 = vsel %vm1315, %v1750, 0.0
        %1754 = vadd.xlane.f32.xlu0 %v1753
        %v1755 = vpop.xlane.xlu0 %1754
        %v1756 = vmul.f32 %v1755, %v1325
        %v1757 = vsub.f32 %v1750, %v1756
        %v1758 = vmul.f32 %v1757, %v1757
        %v1759 = vsel %vm1315, %v1758, 0.0
        %1760 = vadd.xlane.f32.xlu0 %v1759
        %v1761 = vpop.xlane.xlu0 %1760
        %v1762 = vmul.f32 %v1761, %v1325
        %v1763 = vadd.f32 %v1762, 1e-12
        %v1764 = vrsqrt.pop %v1763
        %v1765 = vmul.f32 %v1764, %v1763
        %v1766 = vmul.f32 %v1765, %v1764
        %v1767 = vmul.f32 0.5, %v1766
        %v1768 = vsub.f32 1.5, %v1767
        %v1769 = vmul.f32 %v1764, %v1768
        %vm1770 = vweird.f32 %v1763
        %vm1771 = vweird.f32 %v1764
        %vm1772 = vmor %vm1770, %vm1771
        %v1773 = vsel %vm1772, %v1764, %v1769
        %v1774 = vmul.f32 %v1757, %v1773
        %v1776 = vperm.slane %v1751, 0
        %v1778 = vmul.f32 %v1774, %v1776
        %v1780 = vperm.slane %v1752, 0
        %v1782 = vadd.f32 %v1778, %v1780
        %v1783 = vld [vmem:[%s33] sm:$0xf]
        %v1784 = vld [vmem:[%s33 + $0x4] sm:$0xf]
        %v1785 = vld [vmem:[%s33 + $0x8] sm:$0xf]
        %v1786 = vld [vmem:[%s33 + $0xc] sm:$0xf]
        %v1787 = vpack.c.bf16 %v1782, %v1782
        %v1788 = vld [vmem:[%s35] sm:$0x1]
        %v1790 = vperm.slane %v1788, 0
        %v1796 = vunpack.c.l.b16 %v1783
        %v1797 = vunpack.c.l.b16 %v1784
        %v1798 = vunpack.c.l.b16 %v1785
        %v1799 = vunpack.c.l.b16 %v1786
        %v1800 = vpack.c.b16 %v1797, %v1796
        %v1801 = vpack.c.b16 %v1799, %v1798
        %v1805 = vsel %vm1408, %v1787, 0
        %1807 = vmatpush.bf16.msra.mxu0 0
        %1808 = vmatpush.bf16.msra.mxu0 0
        %1809 = vmatpush.bf16.msra.mxu0 0
        %1810 = vmatpush.bf16.msra.mxu0 0
        %1811 = vmatpush.bf16.msra.mxu0 0
        %1812 = vmatpush.bf16.msra.mxu0 0
        %1813 = vmatpush.bf16.msra.mxu0 %v1801
        %1814 = vmatpush.bf16.msra.mxu0 %v1800
        %1815 = vmatmul.bf16.gmra.mxu0 %v1805
        %v1816 = vpop.f32.mrf.mxu0
        %v1817 = vadd.f32 %v1790, %v1816
        %v1818 = vpop.f32.mrf.mxu0
        %1819 = vdwg.mxu0
        %v1820 = vmul.f32 %v1817, 0.5
        %v1821 = vmul.f32 %v1817, 0.70710677
        %v1822 = vand.u32 2147483647, %v1821
        %v1823 = vmul.f32 %v1822, 0.3275911
        %v1824 = vadd.f32 %v1823, 1.0
        %v1825 = vrcp.pop %v1824
        %v1826 = vmul.f32 %v1824, %v1825
        %v1827 = vsub.f32 1.0, %v1826
        %v1828 = vmul.f32 %v1825, %v1827
        %v1829 = vadd.f32 %v1825, %v1828
        %vm1830 = vweird.f32 %v1824
        %vm1831 = vweird.f32 %v1825
        %vm1832 = vmor %vm1830, %vm1831
        %v1833 = vsel %vm1832, %v1825, %v1829
        %v1834 = vand.u32 2147483647, %v1824
        %vm1835 = vcmp.eq.f32.partialorder %v1834, 8.507059e+37
        %v1836 = vand.u32 %v1824, 2147483648
        %v1837 = vor.u32 1.1754944e-38, %v1836
        %v1838 = vsel %vm1835, %v1837, %v1833
        %v1839 = vmul.f32 1.0, %v1838
        %v1840 = vmul.f32 %v1839, 1.0614054
        %v1841 = vadd.f32 %v1840, -1.4531521
        %v1842 = vmul.f32 %v1839, %v1841
        %v1843 = vadd.f32 %v1842, 1.4214138
        %v1844 = vmul.f32 %v1839, %v1843
        %v1845 = vadd.f32 %v1844, -0.28449672
        %v1846 = vmul.f32 %v1839, %v1845
        %v1847 = vadd.f32 %v1846, 0.2548296
        %v1848 = vmul.f32 %v1839, %v1847
        %v1849 = vmul.f32 %v1822, %v1822
        %v1850 = vsub.f32 0.0, %v1849
        %v1851 = vmul.f32 %v1850, 1.442695
        %v1852 = vpow.pop %v1851
        %v1853 = vmul.f32 %v1848, %v1852
        %v1854 = vsub.f32 1.0, %v1853
        %vm1855 = vcmp.lt.f32.partialorder %v1821, 0.0
        %v1856 = vsub.f32 0.0, %v1854
        %v1857 = vsel %vm1855, %v1856, %v1854
        %v1858 = vadd.f32 %v1857, 1.0
        %v1859 = vmul.f32 %v1820, %v1858
        %v1860 = vld [vmem:[%s37] sm:$0xf]
        %v1861 = vld [vmem:[%s37 + $0x4] sm:$0xf]
        %v1862 = vld [vmem:[%s37 + $0x8] sm:$0xf]
        %v1863 = vld [vmem:[%s37 + $0xc] sm:$0xf]
        %v1864 = vld [vmem:[%s37 + $0x10] sm:$0xf]
        %v1865 = vld [vmem:[%s37 + $0x14] sm:$0xf]
        %v1866 = vld [vmem:[%s37 + $0x18] sm:$0xf]
        %v1867 = vld [vmem:[%s37 + $0x1c] sm:$0xf]
        %v1868 = vpack.c.bf16 %v1859, %v1859
        %v1869 = vld [vmem:[%s39] sm:$0x1]
        %v1871 = vperm.slane %v1869, 0
        %v1881 = vunpack.c.l.b16 %v1860
        %v1882 = vunpack.c.l.b16 %v1861
        %v1883 = vunpack.c.l.b16 %v1862
        %v1884 = vunpack.c.l.b16 %v1863
        %v1885 = vunpack.c.l.b16 %v1864
        %v1886 = vunpack.c.l.b16 %v1865
        %v1887 = vunpack.c.l.b16 %v1866
        %v1888 = vunpack.c.l.b16 %v1867
        %v1889 = vpack.c.b16 %v1882, %v1881
        %v1890 = vpack.c.b16 %v1884, %v1883
        %v1891 = vpack.c.b16 %v1886, %v1885
        %v1892 = vpack.c.b16 %v1888, %v1887
        %v1898 = vsel %vm1243, %v1868, 0
        %1900 = vmatpush.bf16.msra.mxu0 0
        %1901 = vmatpush.bf16.msra.mxu0 0
        %1902 = vmatpush.bf16.msra.mxu0 0
        %1903 = vmatpush.bf16.msra.mxu0 0
        %1904 = vmatpush.bf16.msra.mxu0 %v1892
        %1905 = vmatpush.bf16.msra.mxu0 %v1891
        %1906 = vmatpush.bf16.msra.mxu0 %v1890
        %1907 = vmatpush.bf16.msra.mxu0 %v1889
        %1908 = vmatmul.bf16.gmra.mxu0 %v1898
        %v1909 = vpop.f32.mrf.mxu0
        %v1910 = vadd.f32 %v1871, %v1909
        %v1911 = vpop.f32.mrf.mxu0
        %1912 = vdwg.mxu0
        %v1913 = vadd.f32 %v1910, %v1782
        %v1914 = vld [vmem:[%s29] sm:$0x1]
        %v1915 = vld [vmem:[%s31] sm:$0x1]
        %v1916 = vsel %vm1315, %v1913, 0.0
        %1917 = vadd.xlane.f32.xlu0 %v1916
        %v1918 = vpop.xlane.xlu0 %1917
        %v1919 = vmul.f32 %v1918, %v1325
        %v1920 = vsub.f32 %v1913, %v1919
        %v1921 = vmul.f32 %v1920, %v1920
        %v1922 = vsel %vm1315, %v1921, 0.0
        %1923 = vadd.xlane.f32.xlu0 %v1922
        %v1924 = vpop.xlane.xlu0 %1923
        %v1925 = vmul.f32 %v1924, %v1325
        %v1926 = vadd.f32 %v1925, 1e-12
        %v1927 = vrsqrt.pop %v1926
        %v1928 = vmul.f32 %v1927, %v1926
        %v1929 = vmul.f32 %v1928, %v1927
        %v1930 = vmul.f32 0.5, %v1929
        %v1931 = vsub.f32 1.5, %v1930
        %v1932 = vmul.f32 %v1927, %v1931
        %vm1933 = vweird.f32 %v1926
        %vm1934 = vweird.f32 %v1927
        %vm1935 = vmor %vm1933, %vm1934
        %v1936 = vsel %vm1935, %v1927, %v1932
        %v1937 = vmul.f32 %v1920, %v1936
        %v1939 = vperm.slane %v1914, 0
        %v1941 = vmul.f32 %v1937, %v1939
        %v1943 = vperm.slane %v1915, 0
        %v1945 = vadd.f32 %v1941, %v1943
        %s1946 = scalar_lea.vmem %s17, 16
        %v1947 = vld [vmem:[%s1946] sm:$0xf]
        %v1948 = vld [vmem:[%s1946 + $0x4] sm:$0xf]
        %v1949 = vld [vmem:[%s1946 + $0x8] sm:$0xf]
        %v1950 = vld [vmem:[%s1946 + $0xc] sm:$0xf]
        %v1951 = vpack.c.bf16 %v1945, %v1945
        %s1952 = scalar_lea.vmem %s19, 1
        %v1953 = vld [vmem:[%s1952] sm:$0x1]
        %v1955 = vperm.slane %v1953, 0
        %v1961 = vunpack.c.l.b16 %v1947
        %v1962 = vunpack.c.l.b16 %v1948
        %v1963 = vunpack.c.l.b16 %v1949
        %v1964 = vunpack.c.l.b16 %v1950
        %v1965 = vpack.c.b16 %v1962, %v1961
        %v1966 = vpack.c.b16 %v1964, %v1963
        %v1970 = vsel %vm1408, %v1951, 0
        %1972 = vmatpush.bf16.msra.mxu0 0
        %1973 = vmatpush.bf16.msra.mxu0 0
        %1974 = vmatpush.bf16.msra.mxu0 0
        %1975 = vmatpush.bf16.msra.mxu0 0
        %1976 = vmatpush.bf16.msra.mxu0 0
        %1977 = vmatpush.bf16.msra.mxu0 0
        %1978 = vmatpush.bf16.msra.mxu0 %v1966
        %1979 = vmatpush.bf16.msra.mxu0 %v1965
        %1980 = vmatmul.bf16.gmra.mxu0 %v1970
        %v1981 = vpop.f32.mrf.mxu0
        %v1982 = vadd.f32 %v1955, %v1981
        %v1983 = vpop.f32.mrf.mxu0
        %1984 = vdwg.mxu0
        %1986 = vrot.lane.b32.xlu0 %v1982, 96
        %v1987 = vpop.permute.xlu0 %1986
        %v1988 = vsel %vm1428, %v1982, 0
        %v1990 = vsel %vm1428, %v1987, 0
        %1992 = vmatpush.xpose.msra.mxu0 0.0
        %1993 = vmatpush.xpose.msra.mxu0 0.0
        %1994 = vmatpush.xpose.msra.mxu0 0.0
        %1995 = vmatpush.xpose.msra.mxu0 0.0
        %1996 = vmatpush.xpose.msra.mxu0 0.0
        %1997 = vmatpush.xpose.msra.mxu0 0.0
        %1998 = vmatpush.xpose.msra.mxu0 0.0
        %1999 = vmatpush.xpose.msra.mxu0 0.0
        %2000 = vmatpush.xpose.msra.mxu0 0.0
        %2001 = vmatpush.xpose.msra.mxu0 0.0
        %2002 = vmatpush.xpose.msra.mxu0 0.0
        %2003 = vmatpush.xpose.msra.mxu0 0.0
        %2004 = vmatpush.xpose.msra.mxu0 0.0
        %2005 = vmatpush.xpose.msra.mxu0 0.0
        %2006 = vmatpush.xpose.msra.mxu0 0.0
        %2007 = vmatpush.xpose.msra.mxu0 %v1990
        %2008 = vmatmul.f32.gmra.mxu0 %v1988
        %v2009 = vpop.f32.mrf.mxu0
        %v2010 = vadd.f32 0.0, %v2009
        %2011 = vdwg.mxu0
        %v2012 = vmul.f32 %v2010, 0.35355338
        %v2013 = vsel %vm1454, %v2012, -inf
        %2014 = vmax.xlane.f32.xlu0 %v2013
        %v2015 = vpop.xlane.xlu0 %2014
        %v2016 = vsub.f32 %v2012, %v2015
        %v2017 = vmul.f32 %v2016, 1.442695
        %v2018 = vpow.pop %v2017
        %v2019 = vsel %vm1454, %v2018, 0.0
        %2020 = vadd.xlane.f32.xlu0 %v2019
        %v2021 = vpop.xlane.xlu0 %2020
        %v2022 = vrcp.pop %v2021
        %v2023 = vmul.f32 %v2018, %v2022
        %2024 = vrot.lane.b32.xlu0 %v1982, 64
        %v2025 = vpop.permute.xlu0 %2024
        %v2027 = vsel %vm1468, %v2023, 0
        %v2029 = vsel %vm1472, %v2025, 0
        %2031 = vmatpush.msra.mxu0 0.0
        %2032 = vmatpush.msra.mxu0 0.0
        %2033 = vmatpush.msra.mxu0 0.0
        %2034 = vmatpush.msra.mxu0 0.0
        %2035 = vmatpush.msra.mxu0 0.0
        %2036 = vmatpush.msra.mxu0 0.0
        %2037 = vmatpush.msra.mxu0 0.0
        %2038 = vmatpush.msra.mxu0 0.0
        %2039 = vmatpush.msra.mxu0 0.0
        %2040 = vmatpush.msra.mxu0 0.0
        %2041 = vmatpush.msra.mxu0 0.0
        %2042 = vmatpush.msra.mxu0 0.0
        %2043 = vmatpush.msra.mxu0 0.0
        %2044 = vmatpush.msra.mxu0 0.0
        %2045 = vmatpush.msra.mxu0 0.0
        %2046 = vmatpush.msra.mxu0 %v2029
        %2047 = vmatmul.f32.gmra.mxu0 %v2027
        %v2048 = vpop.f32.mrf.mxu0
        %v2049 = vadd.f32 0.0, %v2048
        %2050 = vdwg.mxu0
        %2051 = vrot.lane.b32.xlu0 %v1982, 120
        %v2052 = vpop.permute.xlu0 %2051
        %2053 = vrot.lane.b32.xlu0 %v1982, 88
        %v2054 = vpop.permute.xlu0 %2053
        %v2055 = vsel %vm1428, %v2052, 0
        %v2057 = vsel %vm1428, %v2054, 0
        %2059 = vmatpush.xpose.msra.mxu0 0.0
        %2060 = vmatpush.xpose.msra.mxu0 0.0
        %2061 = vmatpush.xpose.msra.mxu0 0.0
        %2062 = vmatpush.xpose.msra.mxu0 0.0
        %2063 = vmatpush.xpose.msra.mxu0 0.0
        %2064 = vmatpush.xpose.msra.mxu0 0.0
        %2065 = vmatpush.xpose.msra.mxu0 0.0
        %2066 = vmatpush.xpose.msra.mxu0 0.0
        %2067 = vmatpush.xpose.msra.mxu0 0.0
        %2068 = vmatpush.xpose.msra.mxu0 0.0
        %2069 = vmatpush.xpose.msra.mxu0 0.0
        %2070 = vmatpush.xpose.msra.mxu0 0.0
        %2071 = vmatpush.xpose.msra.mxu0 0.0
        %2072 = vmatpush.xpose.msra.mxu0 0.0
        %2073 = vmatpush.xpose.msra.mxu0 0.0
        %2074 = vmatpush.xpose.msra.mxu0 %v2057
        %2075 = vmatmul.f32.gmra.mxu0 %v2055
        %v2076 = vpop.f32.mrf.mxu0
        %v2077 = vadd.f32 0.0, %v2076
        %2078 = vdwg.mxu0
        %v2079 = vmul.f32 %v2077, 0.35355338
        %v2080 = vsel %vm1454, %v2079, -inf
        %2081 = vmax.xlane.f32.xlu0 %v2080
        %v2082 = vpop.xlane.xlu0 %2081
        %v2083 = vsub.f32 %v2079, %v2082
        %v2084 = vmul.f32 %v2083, 1.442695
        %v2085 = vpow.pop %v2084
        %v2086 = vsel %vm1454, %v2085, 0.0
        %2087 = vadd.xlane.f32.xlu0 %v2086
        %v2088 = vpop.xlane.xlu0 %2087
        %v2089 = vrcp.pop %v2088
        %v2090 = vmul.f32 %v2085, %v2089
        %2091 = vrot.lane.b32.xlu0 %v1982, 56
        %v2092 = vpop.permute.xlu0 %2091
        %v2094 = vsel %vm1468, %v2090, 0
        %v2096 = vsel %vm1472, %v2092, 0
        %2098 = vmatpush.msra.mxu0 0.0
        %2099 = vmatpush.msra.mxu0 0.0
        %2100 = vmatpush.msra.mxu0 0.0
        %2101 = vmatpush.msra.mxu0 0.0
        %2102 = vmatpush.msra.mxu0 0.0
        %2103 = vmatpush.msra.mxu0 0.0
        %2104 = vmatpush.msra.mxu0 0.0
        %2105 = vmatpush.msra.mxu0 0.0
        %2106 = vmatpush.msra.mxu0 0.0
        %2107 = vmatpush.msra.mxu0 0.0
        %2108 = vmatpush.msra.mxu0 0.0
        %2109 = vmatpush.msra.mxu0 0.0
        %2110 = vmatpush.msra.mxu0 0.0
        %2111 = vmatpush.msra.mxu0 0.0
        %2112 = vmatpush.msra.mxu0 0.0
        %2113 = vmatpush.msra.mxu0 %v2096
        %2114 = vmatmul.f32.gmra.mxu0 %v2094
        %v2115 = vpop.f32.mrf.mxu0
        %v2116 = vadd.f32 0.0, %v2115
        %2117 = vdwg.mxu0
        %2118 = vrot.lane.b32.xlu0 %v1982, 112
        %v2119 = vpop.permute.xlu0 %2118
        %2120 = vrot.lane.b32.xlu0 %v1982, 80
        %v2121 = vpop.permute.xlu0 %2120
        %v2122 = vsel %vm1428, %v2119, 0
        %v2124 = vsel %vm1428, %v2121, 0
        %2126 = vmatpush.xpose.msra.mxu0 0.0
        %2127 = vmatpush.xpose.msra.mxu0 0.0
        %2128 = vmatpush.xpose.msra.mxu0 0.0
        %2129 = vmatpush.xpose.msra.mxu0 0.0
        %2130 = vmatpush.xpose.msra.mxu0 0.0
        %2131 = vmatpush.xpose.msra.mxu0 0.0
        %2132 = vmatpush.xpose.msra.mxu0 0.0
        %2133 = vmatpush.xpose.msra.mxu0 0.0
        %2134 = vmatpush.xpose.msra.mxu0 0.0
        %2135 = vmatpush.xpose.msra.mxu0 0.0
        %2136 = vmatpush.xpose.msra.mxu0 0.0
        %2137 = vmatpush.xpose.msra.mxu0 0.0
        %2138 = vmatpush.xpose.msra.mxu0 0.0
        %2139 = vmatpush.xpose.msra.mxu0 0.0
        %2140 = vmatpush.xpose.msra.mxu0 0.0
        %2141 = vmatpush.xpose.msra.mxu0 %v2124
        %2142 = vmatmul.f32.gmra.mxu0 %v2122
        %v2143 = vpop.f32.mrf.mxu0
        %v2144 = vadd.f32 0.0, %v2143
        %2145 = vdwg.mxu0
        %v2146 = vmul.f32 %v2144, 0.35355338
        %v2147 = vsel %vm1454, %v2146, -inf
        %2148 = vmax.xlane.f32.xlu0 %v2147
        %v2149 = vpop.xlane.xlu0 %2148
        %v2150 = vsub.f32 %v2146, %v2149
        %v2151 = vmul.f32 %v2150, 1.442695
        %v2152 = vpow.pop %v2151
        %v2153 = vsel %vm1454, %v2152, 0.0
        %2154 = vadd.xlane.f32.xlu0 %v2153
        %v2155 = vpop.xlane.xlu0 %2154
        %v2156 = vrcp.pop %v2155
        %v2157 = vmul.f32 %v2152, %v2156
        %2158 = vrot.lane.b32.xlu0 %v1982, 48
        %v2159 = vpop.permute.xlu0 %2158
        %v2161 = vsel %vm1468, %v2157, 0
        %v2163 = vsel %vm1472, %v2159, 0
        %2165 = vmatpush.msra.mxu0 0.0
        %2166 = vmatpush.msra.mxu0 0.0
        %2167 = vmatpush.msra.mxu0 0.0
        %2168 = vmatpush.msra.mxu0 0.0
        %2169 = vmatpush.msra.mxu0 0.0
        %2170 = vmatpush.msra.mxu0 0.0
        %2171 = vmatpush.msra.mxu0 0.0
        %2172 = vmatpush.msra.mxu0 0.0
        %2173 = vmatpush.msra.mxu0 0.0
        %2174 = vmatpush.msra.mxu0 0.0
        %2175 = vmatpush.msra.mxu0 0.0
        %2176 = vmatpush.msra.mxu0 0.0
        %2177 = vmatpush.msra.mxu0 0.0
        %2178 = vmatpush.msra.mxu0 0.0
        %2179 = vmatpush.msra.mxu0 0.0
        %2180 = vmatpush.msra.mxu0 %v2163
        %2181 = vmatmul.f32.gmra.mxu0 %v2161
        %v2182 = vpop.f32.mrf.mxu0
        %v2183 = vadd.f32 0.0, %v2182
        %2184 = vdwg.mxu0
        %2185 = vrot.lane.b32.xlu0 %v1982, 104
        %v2186 = vpop.permute.xlu0 %2185
        %2187 = vrot.lane.b32.xlu0 %v1982, 72
        %v2188 = vpop.permute.xlu0 %2187
        %v2189 = vsel %vm1428, %v2186, 0
        %v2191 = vsel %vm1428, %v2188, 0
        %2193 = vmatpush.xpose.msra.mxu0 0.0
        %2194 = vmatpush.xpose.msra.mxu0 0.0
        %2195 = vmatpush.xpose.msra.mxu0 0.0
        %2196 = vmatpush.xpose.msra.mxu0 0.0
        %2197 = vmatpush.xpose.msra.mxu0 0.0
        %2198 = vmatpush.xpose.msra.mxu0 0.0
        %2199 = vmatpush.xpose.msra.mxu0 0.0
        %2200 = vmatpush.xpose.msra.mxu0 0.0
        %2201 = vmatpush.xpose.msra.mxu0 0.0
        %2202 = vmatpush.xpose.msra.mxu0 0.0
        %2203 = vmatpush.xpose.msra.mxu0 0.0
        %2204 = vmatpush.xpose.msra.mxu0 0.0
        %2205 = vmatpush.xpose.msra.mxu0 0.0
        %2206 = vmatpush.xpose.msra.mxu0 0.0
        %2207 = vmatpush.xpose.msra.mxu0 0.0
        %2208 = vmatpush.xpose.msra.mxu0 %v2191
        %2209 = vmatmul.f32.gmra.mxu0 %v2189
        %v2210 = vpop.f32.mrf.mxu0
        %v2211 = vadd.f32 0.0, %v2210
        %2212 = vdwg.mxu0
        %v2213 = vmul.f32 %v2211, 0.35355338
        %v2214 = vsel %vm1454, %v2213, -inf
        %2215 = vmax.xlane.f32.xlu0 %v2214
        %v2216 = vpop.xlane.xlu0 %2215
        %v2217 = vsub.f32 %v2213, %v2216
        %v2218 = vmul.f32 %v2217, 1.442695
        %v2219 = vpow.pop %v2218
        %v2220 = vsel %vm1454, %v2219, 0.0
        %2221 = vadd.xlane.f32.xlu0 %v2220
        %v2222 = vpop.xlane.xlu0 %2221
        %v2223 = vrcp.pop %v2222
        %v2224 = vmul.f32 %v2219, %v2223
        %2225 = vrot.lane.b32.xlu0 %v1982, 40
        %v2226 = vpop.permute.xlu0 %2225
        %v2228 = vsel %vm1468, %v2224, 0
        %v2230 = vsel %vm1472, %v2226, 0
        %2232 = vmatpush.msra.mxu0 0.0
        %2233 = vmatpush.msra.mxu0 0.0
        %2234 = vmatpush.msra.mxu0 0.0
        %2235 = vmatpush.msra.mxu0 0.0
        %2236 = vmatpush.msra.mxu0 0.0
        %2237 = vmatpush.msra.mxu0 0.0
        %2238 = vmatpush.msra.mxu0 0.0
        %2239 = vmatpush.msra.mxu0 0.0
        %2240 = vmatpush.msra.mxu0 0.0
        %2241 = vmatpush.msra.mxu0 0.0
        %2242 = vmatpush.msra.mxu0 0.0
        %2243 = vmatpush.msra.mxu0 0.0
        %2244 = vmatpush.msra.mxu0 0.0
        %2245 = vmatpush.msra.mxu0 0.0
        %2246 = vmatpush.msra.mxu0 0.0
        %2247 = vmatpush.msra.mxu0 %v2230
        %2248 = vmatmul.f32.gmra.mxu0 %v2228
        %v2249 = vpop.f32.mrf.mxu0
        %v2250 = vadd.f32 0.0, %v2249
        %2251 = vdwg.mxu0
        %2253 = vrot.lane.b32.xlu0 %v2116, 8
        %v2254 = vpop.permute.xlu0 %2253
        %2257 = vrot.lane.b32.xlu0 %v2183, 16
        %v2258 = vpop.permute.xlu0 %2257
        %2261 = vrot.lane.b32.xlu0 %v2250, 24
        %v2262 = vpop.permute.xlu0 %2261
        %v2264 = vsel %vm1428, %v2049, %v2254
        %v2265 = vsel %vm1709, %v2264, %v2258
        %v2266 = vsel %vm1711, %v2265, %v2262
        %s2267 = scalar_lea.vmem %s21, 16
        %v2268 = vld [vmem:[%s2267] sm:$0xf]
        %v2269 = vld [vmem:[%s2267 + $0x4] sm:$0xf]
        %v2270 = vld [vmem:[%s2267 + $0x8] sm:$0xf]
        %v2271 = vld [vmem:[%s2267 + $0xc] sm:$0xf]
        %v2272 = vpack.c.bf16 %v2266, %v2266
        %s2273 = scalar_lea.vmem %s23, 1
        %v2274 = vld [vmem:[%s2273] sm:$0x1]
        %v2276 = vperm.slane %v2274, 0
        %v2282 = vunpack.c.l.b16 %v2268
        %v2283 = vunpack.c.l.b16 %v2269
        %v2284 = vunpack.c.l.b16 %v2270
        %v2285 = vunpack.c.l.b16 %v2271
        %v2286 = vpack.c.b16 %v2283, %v2282
        %v2287 = vpack.c.b16 %v2285, %v2284
        %v2291 = vsel %vm1408, %v2272, 0
        %2293 = vmatpush.bf16.msra.mxu0 0
        %2294 = vmatpush.bf16.msra.mxu0 0
        %2295 = vmatpush.bf16.msra.mxu0 0
        %2296 = vmatpush.bf16.msra.mxu0 0
        %2297 = vmatpush.bf16.msra.mxu0 0
        %2298 = vmatpush.bf16.msra.mxu0 0
        %2299 = vmatpush.bf16.msra.mxu0 %v2287
        %2300 = vmatpush.bf16.msra.mxu0 %v2286
        %2301 = vmatmul.bf16.gmra.mxu0 %v2291
        %v2302 = vpop.f32.mrf.mxu0
        %v2303 = vadd.f32 %v2276, %v2302
        %v2304 = vpop.f32.mrf.mxu0
        %2305 = vdwg.mxu0
        %v2306 = vadd.f32 %v2303, %v1945
        %s2307 = scalar_lea.vmem %s25, 1
        %v2308 = vld [vmem:[%s2307] sm:$0x1]
        %s2309 = scalar_lea.vmem %s27, 1
        %v2310 = vld [vmem:[%s2309] sm:$0x1]
        %v2311 = vsel %vm1315, %v2306, 0.0
        %2312 = vadd.xlane.f32.xlu0 %v2311
        %v2313 = vpop.xlane.xlu0 %2312
        %v2314 = vmul.f32 %v2313, %v1325
        %v2315 = vsub.f32 %v2306, %v2314
        %v2316 = vmul.f32 %v2315, %v2315
        %v2317 = vsel %vm1315, %v2316, 0.0
        %2318 = vadd.xlane.f32.xlu0 %v2317
        %v2319 = vpop.xlane.xlu0 %2318
        %v2320 = vmul.f32 %v2319, %v1325
        %v2321 = vadd.f32 %v2320, 1e-12
        %v2322 = vrsqrt.pop %v2321
        %v2323 = vmul.f32 %v2322, %v2321
        %v2324 = vmul.f32 %v2323, %v2322
        %v2325 = vmul.f32 0.5, %v2324
        %v2326 = vsub.f32 1.5, %v2325
        %v2327 = vmul.f32 %v2322, %v2326
        %vm2328 = vweird.f32 %v2321
        %vm2329 = vweird.f32 %v2322
        %vm2330 = vmor %vm2328, %vm2329
        %v2331 = vsel %vm2330, %v2322, %v2327
        %v2332 = vmul.f32 %v2315, %v2331
        %v2334 = vperm.slane %v2308, 0
        %v2336 = vmul.f32 %v2332, %v2334
        %v2338 = vperm.slane %v2310, 0
        %v2340 = vadd.f32 %v2336, %v2338
        %s2341 = scalar_lea.vmem %s33, 16
        %v2342 = vld [vmem:[%s2341] sm:$0xf]
        %v2343 = vld [vmem:[%s2341 + $0x4] sm:$0xf]
        %v2344 = vld [vmem:[%s2341 + $0x8] sm:$0xf]
        %v2345 = vld [vmem:[%s2341 + $0xc] sm:$0xf]
        %v2346 = vpack.c.bf16 %v2340, %v2340
        %s2347 = scalar_lea.vmem %s35, 1
        %v2348 = vld [vmem:[%s2347] sm:$0x1]
        %v2350 = vperm.slane %v2348, 0
        %v2356 = vunpack.c.l.b16 %v2342
        %v2357 = vunpack.c.l.b16 %v2343
        %v2358 = vunpack.c.l.b16 %v2344
        %v2359 = vunpack.c.l.b16 %v2345
        %v2360 = vpack.c.b16 %v2357, %v2356
        %v2361 = vpack.c.b16 %v2359, %v2358
        %v2365 = vsel %vm1408, %v2346, 0
        %2367 = vmatpush.bf16.msra.mxu0 0
        %2368 = vmatpush.bf16.msra.mxu0 0
        %2369 = vmatpush.bf16.msra.mxu0 0
        %2370 = vmatpush.bf16.msra.mxu0 0
        %2371 = vmatpush.bf16.msra.mxu0 0
        %2372 = vmatpush.bf16.msra.mxu0 0
        %2373 = vmatpush.bf16.msra.mxu0 %v2361
        %2374 = vmatpush.bf16.msra.mxu0 %v2360
        %2375 = vmatmul.bf16.gmra.mxu0 %v2365
        %v2376 = vpop.f32.mrf.mxu0
        %v2377 = vadd.f32 %v2350, %v2376
        %v2378 = vpop.f32.mrf.mxu0
        %2379 = vdwg.mxu0
        %v2380 = vmul.f32 %v2377, 0.5
        %v2381 = vmul.f32 %v2377, 0.70710677
        %v2382 = vand.u32 2147483647, %v2381
        %v2383 = vmul.f32 %v2382, 0.3275911
        %v2384 = vadd.f32 %v2383, 1.0
        %v2385 = vrcp.pop %v2384
        %v2386 = vmul.f32 %v2384, %v2385
        %v2387 = vsub.f32 1.0, %v2386
        %v2388 = vmul.f32 %v2385, %v2387
        %v2389 = vadd.f32 %v2385, %v2388
        %vm2390 = vweird.f32 %v2384
        %vm2391 = vweird.f32 %v2385
        %vm2392 = vmor %vm2390, %vm2391
        %v2393 = vsel %vm2392, %v2385, %v2389
        %v2394 = vand.u32 2147483647, %v2384
        %vm2395 = vcmp.eq.f32.partialorder %v2394, 8.507059e+37
        %v2396 = vand.u32 %v2384, 2147483648
        %v2397 = vor.u32 1.1754944e-38, %v2396
        %v2398 = vsel %vm2395, %v2397, %v2393
        %v2399 = vmul.f32 1.0, %v2398
        %v2400 = vmul.f32 %v2399, 1.0614054
        %v2401 = vadd.f32 %v2400, -1.4531521
        %v2402 = vmul.f32 %v2399, %v2401
        %v2403 = vadd.f32 %v2402, 1.4214138
        %v2404 = vmul.f32 %v2399, %v2403
        %v2405 = vadd.f32 %v2404, -0.28449672
        %v2406 = vmul.f32 %v2399, %v2405
        %v2407 = vadd.f32 %v2406, 0.2548296
        %v2408 = vmul.f32 %v2399, %v2407
        %v2409 = vmul.f32 %v2382, %v2382
        %v2410 = vsub.f32 0.0, %v2409
        %v2411 = vmul.f32 %v2410, 1.442695
        %v2412 = vpow.pop %v2411
        %v2413 = vmul.f32 %v2408, %v2412
        %v2414 = vsub.f32 1.0, %v2413
        %vm2415 = vcmp.lt.f32.partialorder %v2381, 0.0
        %v2416 = vsub.f32 0.0, %v2414
        %v2417 = vsel %vm2415, %v2416, %v2414
        %v2418 = vadd.f32 %v2417, 1.0
        %v2419 = vmul.f32 %v2380, %v2418
        %s2420 = scalar_lea.vmem %s37, 32
        %v2421 = vld [vmem:[%s2420] sm:$0xf]
        %v2422 = vld [vmem:[%s2420 + $0x4] sm:$0xf]
        %v2423 = vld [vmem:[%s2420 + $0x8] sm:$0xf]
        %v2424 = vld [vmem:[%s2420 + $0xc] sm:$0xf]
        %v2425 = vld [vmem:[%s2420 + $0x10] sm:$0xf]
        %v2426 = vld [vmem:[%s2420 + $0x14] sm:$0xf]
        %v2427 = vld [vmem:[%s2420 + $0x18] sm:$0xf]
        %v2428 = vld [vmem:[%s2420 + $0x1c] sm:$0xf]
        %v2429 = vpack.c.bf16 %v2419, %v2419
        %s2430 = scalar_lea.vmem %s39, 1
        %v2431 = vld [vmem:[%s2430] sm:$0x1]
        %v2433 = vperm.slane %v2431, 0
        %v2443 = vunpack.c.l.b16 %v2421
        %v2444 = vunpack.c.l.b16 %v2422
        %v2445 = vunpack.c.l.b16 %v2423
        %v2446 = vunpack.c.l.b16 %v2424
        %v2447 = vunpack.c.l.b16 %v2425
        %v2448 = vunpack.c.l.b16 %v2426
        %v2449 = vunpack.c.l.b16 %v2427
        %v2450 = vunpack.c.l.b16 %v2428
        %v2451 = vpack.c.b16 %v2444, %v2443
        %v2452 = vpack.c.b16 %v2446, %v2445
        %v2453 = vpack.c.b16 %v2448, %v2447
        %v2454 = vpack.c.b16 %v2450, %v2449
        %v2460 = vsel %vm1243, %v2429, 0
        %2462 = vmatpush.bf16.msra.mxu0 0
        %2463 = vmatpush.bf16.msra.mxu0 0
        %2464 = vmatpush.bf16.msra.mxu0 0
        %2465 = vmatpush.bf16.msra.mxu0 0
        %2466 = vmatpush.bf16.msra.mxu0 %v2454
        %2467 = vmatpush.bf16.msra.mxu0 %v2453
        %2468 = vmatpush.bf16.msra.mxu0 %v2452
        %2469 = vmatpush.bf16.msra.mxu0 %v2451
        %2470 = vmatmul.bf16.gmra.mxu0 %v2460
        %v2471 = vpop.f32.mrf.mxu0
        %v2472 = vadd.f32 %v2433, %v2471
        %v2473 = vpop.f32.mrf.mxu0
        %2474 = vdwg.mxu0
        %v2475 = vadd.f32 %v2472, %v2340
        %s2476 = scalar_lea.vmem %s29, 1
        %v2477 = vld [vmem:[%s2476] sm:$0x1]
        %s2478 = scalar_lea.vmem %s31, 1
        %v2479 = vld [vmem:[%s2478] sm:$0x1]
        %v2480 = vsel %vm1315, %v2475, 0.0
        %2481 = vadd.xlane.f32.xlu0 %v2480
        %v2482 = vpop.xlane.xlu0 %2481
        %v2483 = vmul.f32 %v2482, %v1325
        %v2484 = vsub.f32 %v2475, %v2483
        %v2485 = vmul.f32 %v2484, %v2484
        %v2486 = vsel %vm1315, %v2485, 0.0
        %2487 = vadd.xlane.f32.xlu0 %v2486
        %v2488 = vpop.xlane.xlu0 %2487
        %v2489 = vmul.f32 %v2488, %v1325
        %v2490 = vadd.f32 %v2489, 1e-12
        %v2491 = vrsqrt.pop %v2490
        %v2492 = vmul.f32 %v2491, %v2490
        %v2493 = vmul.f32 %v2492, %v2491
        %v2494 = vmul.f32 0.5, %v2493
        %v2495 = vsub.f32 1.5, %v2494
        %v2496 = vmul.f32 %v2491, %v2495
        %vm2497 = vweird.f32 %v2490
        %vm2498 = vweird.f32 %v2491
        %vm2499 = vmor %vm2497, %vm2498
        %v2500 = vsel %vm2499, %v2491, %v2496
        %v2501 = vmul.f32 %v2484, %v2500
        %v2503 = vperm.slane %v2477, 0
        %v2505 = vmul.f32 %v2501, %v2503
        %v2507 = vperm.slane %v2479, 0
        %v2509 = vadd.f32 %v2505, %v2507
        %v2510 = vld [vmem:[%s41] sm:$0xf]
        %v2511 = vld [vmem:[%s41 + $0x4] sm:$0xf]
        %v2512 = vld [vmem:[%s41 + $0x8] sm:$0xf]
        %v2513 = vld [vmem:[%s41 + $0xc] sm:$0xf]
        %v2514 = vpack.c.bf16 %v2509, %v2509
        %v2515 = vld [vmem:[%s43] sm:$0x1]
        %v2517 = vperm.slane %v2515, 0
        %v2523 = vunpack.c.l.b16 %v2510
        %v2524 = vunpack.c.l.b16 %v2511
        %v2525 = vunpack.c.l.b16 %v2512
        %v2526 = vunpack.c.l.b16 %v2513
        %v2527 = vpack.c.b16 %v2524, %v2523
        %v2528 = vpack.c.b16 %v2526, %v2525
        %v2532 = vsel %vm1408, %v2514, 0
        %2534 = vmatpush.bf16.msra.mxu0 0
        %2535 = vmatpush.bf16.msra.mxu0 0
        %2536 = vmatpush.bf16.msra.mxu0 0
        %2537 = vmatpush.bf16.msra.mxu0 0
        %2538 = vmatpush.bf16.msra.mxu0 0
        %2539 = vmatpush.bf16.msra.mxu0 0
        %2540 = vmatpush.bf16.msra.mxu0 %v2528
        %2541 = vmatpush.bf16.msra.mxu0 %v2527
        %2542 = vmatmul.bf16.gmra.mxu0 %v2532
        %v2543 = vpop.f32.mrf.mxu0
        %v2544 = vadd.f32 %v2517, %v2543
        %v2545 = vpop.f32.mrf.mxu0
        %2546 = vdwg.mxu0
        %2548 = vrot.lane.b32.xlu0 %v2544, 32
        %v2549 = vpop.permute.xlu0 %2548
        %v2551 = vrot.slane %v2544, 1
        %2552 = vrot.lane.b32.xlu0 %v2551, 96
        %v2553 = vpop.permute.xlu0 %2552
        %v2555 = vsel %vm1408, 0.0, %v2549
        %vm2556 = vcmask 785408
        %v2557 = vsel %vm2556, %v2555, %v2553
        %v2558 = vsel %vm1408, %v2553, 0.0
        %2559 = vrot.lane.b32.xlu0 %v2544, 96
        %v2560 = vpop.permute.xlu0 %2559
        %2562 = vrot.lane.b32.xlu0 %v2551, 32
        %v2563 = vpop.permute.xlu0 %2562
        %v2565 = vsel %vm1408, 0.0, %v2560
        %v2566 = vsel %vm2556, %v2565, %v2563
        %v2567 = vsel %vm1408, %v2563, 0.0
        %v2568 = vrot.slane %v2544, 2
        %2569 = vrot.lane.b32.xlu0 %v2568, 32
        %v2570 = vpop.permute.xlu0 %2569
        %v2572 = vrot.slane %v2544, 3
        %2573 = vrot.lane.b32.xlu0 %v2572, 96
        %v2574 = vpop.permute.xlu0 %2573
        %v2576 = vsel %vm1408, 0.0, %v2570
        %v2577 = vsel %vm2556, %v2576, %v2574
        %v2578 = vsel %vm1408, %v2574, 0.0
        %2579 = vrot.lane.b32.xlu0 %v2568, 96
        %v2580 = vpop.permute.xlu0 %2579
        %2582 = vrot.lane.b32.xlu0 %v2572, 32
        %v2583 = vpop.permute.xlu0 %2582
        %v2585 = vsel %vm1408, 0.0, %v2580
        %v2586 = vsel %vm2556, %v2585, %v2583
        %v2587 = vsel %vm1408, %v2583, 0.0
        %v2590 = vrot.slane %v2557, 7
        %v2591 = vrot.slane %v2558, 7
        %v2596 = vrot.slane %v2566, 6
        %v2597 = vrot.slane %v2567, 6
        %v2602 = vrot.slane %v2577, 5
        %v2603 = vrot.slane %v2578, 5
        %v2608 = vrot.slane %v2586, 4
        %v2609 = vrot.slane %v2587, 4
        %vm2612 = vcmask 1040384
        %v2613 = vsel %vm2612, 0.0, %v2590
        %v2614 = vsel %vm2612, 0.0, %v2591
        %vm2615 = vcmask 1041408
        %v2616 = vsel %vm2615, %v2613, %v2596
        %v2617 = vsel %vm2615, %v2614, %v2597
        %vm2618 = vcmask 1042432
        %v2619 = vsel %vm2618, %v2616, %v2602
        %v2620 = vsel %vm2618, %v2617, %v2603
        %v2621 = vsel %vm1472, %v2619, %v2608
        %v2622 = vsel %vm1472, %v2620, %v2609
        %vm2623 = vcmask 1044480
        %v2624 = vsel %vm2623, %v2621, 0.0
        %v2625 = vsel %vm2623, %v2622, 0.0
        %v2626 = vpack.c.bf16 %v2624, %v2624
        %v2627 = vpack.c.bf16 %v2625, %v2625
        %v2628 = vld [vmem:[#allocation2] sm:$0xf]
        %v2629 = vld [vmem:[#allocation2 + $0x4] sm:$0xf]
        %v2630 = vld [vmem:[#allocation2 + $0x8] sm:$0xf]
        %v2631 = vld [vmem:[#allocation2 + $0xc] sm:$0xf]
        %v2632 = vld [vmem:[#allocation2 + $0x10] sm:$0xf]
        %v2633 = vld [vmem:[#allocation2 + $0x14] sm:$0xf]
        %v2634 = vld [vmem:[#allocation2 + $0x18] sm:$0xf]
        %v2635 = vld [vmem:[#allocation2 + $0x1c] sm:$0xf]
        %v2636 = vld [vmem:[#allocation2 + $0x20] sm:$0xf]
        %v2637 = vld [vmem:[#allocation2 + $0x24] sm:$0xf]
        %v2638 = vld [vmem:[#allocation2 + $0x28] sm:$0xf]
        %v2639 = vld [vmem:[#allocation2 + $0x2c] sm:$0xf]
        %v2640 = vld [vmem:[#allocation2 + $0x30] sm:$0xf]
        %v2641 = vld [vmem:[#allocation2 + $0x34] sm:$0xf]
        %v2642 = vld [vmem:[#allocation2 + $0x38] sm:$0xf]
        %v2643 = vld [vmem:[#allocation2 + $0x3c] sm:$0xf]
        %v2644 = vld [vmem:[#allocation2 + $0x40] sm:$0xf]
        %v2645 = vld [vmem:[#allocation2 + $0x44] sm:$0xf]
        %v2646 = vld [vmem:[#allocation2 + $0x48] sm:$0xf]
        %v2647 = vld [vmem:[#allocation2 + $0x4c] sm:$0xf]
        %v2648 = vld [vmem:[#allocation2 + $0x50] sm:$0xf]
        %v2649 = vld [vmem:[#allocation2 + $0x54] sm:$0xf]
        %v2650 = vld [vmem:[#allocation2 + $0x58] sm:$0xf]
        %v2651 = vld [vmem:[#allocation2 + $0x5c] sm:$0xf]
        %v2676 = vunpack.c.l.b16 %v2628
        %v2677 = vunpack.c.l.b16 %v2629
        %v2678 = vunpack.c.l.b16 %v2630
        %v2679 = vunpack.c.l.b16 %v2631
        %v2680 = vunpack.c.l.b16 %v2632
        %v2681 = vunpack.c.l.b16 %v2633
        %v2682 = vunpack.c.l.b16 %v2634
        %v2683 = vunpack.c.l.b16 %v2635
        %v2684 = vunpack.c.l.b16 %v2636
        %v2685 = vunpack.c.l.b16 %v2637
        %v2686 = vunpack.c.l.b16 %v2638
        %v2687 = vunpack.c.l.b16 %v2639
        %v2688 = vunpack.c.l.b16 %v2640
        %v2689 = vunpack.c.l.b16 %v2641
        %v2690 = vunpack.c.l.b16 %v2642
        %v2691 = vunpack.c.l.b16 %v2643
        %v2692 = vunpack.c.l.b16 %v2644
        %v2693 = vunpack.c.l.b16 %v2645
        %v2694 = vunpack.c.l.b16 %v2646
        %v2695 = vunpack.c.l.b16 %v2647
        %v2696 = vunpack.c.l.b16 %v2648
        %v2697 = vunpack.c.l.b16 %v2649
        %v2698 = vunpack.c.l.b16 %v2650
        %v2699 = vunpack.c.l.b16 %v2651
        %v2700 = vpack.c.b16 %v2677, %v2676
        %v2701 = vpack.c.b16 %v2679, %v2678
        %v2702 = vpack.c.b16 %v2681, %v2680
        %v2703 = vpack.c.b16 %v2683, %v2682
        %v2704 = vpack.c.b16 %v2685, %v2684
        %v2705 = vpack.c.b16 %v2687, %v2686
        %v2706 = vpack.c.b16 %v2689, %v2688
        %v2707 = vpack.c.b16 %v2691, %v2690
        %v2708 = vpack.c.b16 %v2693, %v2692
        %v2709 = vpack.c.b16 %v2695, %v2694
        %v2710 = vpack.c.b16 %v2697, %v2696
        %v2711 = vpack.c.b16 %v2699, %v2698
        %v2725 = vsel %vm1243, %v2627, 0
        %2727 = vmatpush.bf16.msra.mxu0 %v2707
        %2728 = vmatpush.bf16.msra.mxu0 %v2706
        %2729 = vmatpush.bf16.msra.mxu0 %v2705
        %2730 = vmatpush.bf16.msra.mxu0 %v2704
        %2731 = vmatpush.bf16.msra.mxu0 %v2703
        %2732 = vmatpush.bf16.msra.mxu0 %v2702
        %2733 = vmatpush.bf16.msra.mxu0 %v2701
        %2734 = vmatpush.bf16.msra.mxu0 %v2700
        %2735 = vmatmul.bf16.gmra.mxu0 %v2626
        %v2736 = vpop.f32.mrf.mxu0
        %v2737 = vadd.f32 0.0, %v2736
        %v2738 = vpop.f32.mrf.mxu0
        %2739 = vdwg.mxu0
        %2740 = vmatpush.bf16.msra.mxu0 0
        %2741 = vmatpush.bf16.msra.mxu0 0
        %2742 = vmatpush.bf16.msra.mxu0 0
        %2743 = vmatpush.bf16.msra.mxu0 0
        %2744 = vmatpush.bf16.msra.mxu0 %v2711
        %2745 = vmatpush.bf16.msra.mxu0 %v2710
        %2746 = vmatpush.bf16.msra.mxu0 %v2709
        %2747 = vmatpush.bf16.msra.mxu0 %v2708
        %2748 = vmatmul.bf16.gmra.mxu0 %v2725
        %v2749 = vpop.f32.mrf.mxu0
        %v2750 = vadd.f32 %v2737, %v2749
        %v2751 = vpop.f32.mrf.mxu0
        %2752 = vdwg.mxu0
        %s2753 = scalar_lea.vmem [#allocation2], 96
        %v2754 = vld [vmem:[%s2753] sm:$0xf]
        %v2755 = vld [vmem:[%s2753 + $0x4] sm:$0xf]
        %v2756 = vld [vmem:[%s2753 + $0x8] sm:$0xf]
        %v2757 = vld [vmem:[%s2753 + $0xc] sm:$0xf]
        %v2758 = vld [vmem:[%s2753 + $0x10] sm:$0xf]
        %v2759 = vld [vmem:[%s2753 + $0x14] sm:$0xf]
        %v2760 = vld [vmem:[%s2753 + $0x18] sm:$0xf]
        %v2761 = vld [vmem:[%s2753 + $0x1c] sm:$0xf]
        %v2762 = vld [vmem:[%s2753 + $0x20] sm:$0xf]
        %v2763 = vld [vmem:[%s2753 + $0x24] sm:$0xf]
        %v2764 = vld [vmem:[%s2753 + $0x28] sm:$0xf]
        %v2765 = vld [vmem:[%s2753 + $0x2c] sm:$0xf]
        %v2766 = vld [vmem:[%s2753 + $0x30] sm:$0xf]
        %v2767 = vld [vmem:[%s2753 + $0x34] sm:$0xf]
        %v2768 = vld [vmem:[%s2753 + $0x38] sm:$0xf]
        %v2769 = vld [vmem:[%s2753 + $0x3c] sm:$0xf]
        %v2770 = vld [vmem:[%s2753 + $0x40] sm:$0xf]
        %v2771 = vld [vmem:[%s2753 + $0x44] sm:$0xf]
        %v2772 = vld [vmem:[%s2753 + $0x48] sm:$0xf]
        %v2773 = vld [vmem:[%s2753 + $0x4c] sm:$0xf]
        %v2774 = vld [vmem:[%s2753 + $0x50] sm:$0xf]
        %v2775 = vld [vmem:[%s2753 + $0x54] sm:$0xf]
        %v2776 = vld [vmem:[%s2753 + $0x58] sm:$0xf]
        %v2777 = vld [vmem:[%s2753 + $0x5c] sm:$0xf]
        %v2802 = vunpack.c.l.b16 %v2754
        %v2803 = vunpack.c.l.b16 %v2755
        %v2804 = vunpack.c.l.b16 %v2756
        %v2805 = vunpack.c.l.b16 %v2757
        %v2806 = vunpack.c.l.b16 %v2758
        %v2807 = vunpack.c.l.b16 %v2759
        %v2808 = vunpack.c.l.b16 %v2760
        %v2809 = vunpack.c.l.b16 %v2761
        %v2810 = vunpack.c.l.b16 %v2762
        %v2811 = vunpack.c.l.b16 %v2763
        %v2812 = vunpack.c.l.b16 %v2764
        %v2813 = vunpack.c.l.b16 %v2765
        %v2814 = vunpack.c.l.b16 %v2766
        %v2815 = vunpack.c.l.b16 %v2767
        %v2816 = vunpack.c.l.b16 %v2768
        %v2817 = vunpack.c.l.b16 %v2769
        %v2818 = vunpack.c.l.b16 %v2770
        %v2819 = vunpack.c.l.b16 %v2771
        %v2820 = vunpack.c.l.b16 %v2772
        %v2821 = vunpack.c.l.b16 %v2773
        %v2822 = vunpack.c.l.b16 %v2774
        %v2823 = vunpack.c.l.b16 %v2775
        %v2824 = vunpack.c.l.b16 %v2776
        %v2825 = vunpack.c.l.b16 %v2777
        %v2826 = vpack.c.b16 %v2803, %v2802
        %v2827 = vpack.c.b16 %v2805, %v2804
        %v2828 = vpack.c.b16 %v2807, %v2806
        %v2829 = vpack.c.b16 %v2809, %v2808
        %v2830 = vpack.c.b16 %v2811, %v2810
        %v2831 = vpack.c.b16 %v2813, %v2812
        %v2832 = vpack.c.b16 %v2815, %v2814
        %v2833 = vpack.c.b16 %v2817, %v2816
        %v2834 = vpack.c.b16 %v2819, %v2818
        %v2835 = vpack.c.b16 %v2821, %v2820
        %v2836 = vpack.c.b16 %v2823, %v2822
        %v2837 = vpack.c.b16 %v2825, %v2824
        %2850 = vmatpush.bf16.msra.mxu0 %v2833
        %2851 = vmatpush.bf16.msra.mxu0 %v2832
        %2852 = vmatpush.bf16.msra.mxu0 %v2831
        %2853 = vmatpush.bf16.msra.mxu0 %v2830
        %2854 = vmatpush.bf16.msra.mxu0 %v2829
        %2855 = vmatpush.bf16.msra.mxu0 %v2828
        %2856 = vmatpush.bf16.msra.mxu0 %v2827
        %2857 = vmatpush.bf16.msra.mxu0 %v2826
        %2858 = vmatmul.bf16.gmra.mxu0 %v2626
        %v2859 = vpop.f32.mrf.mxu0
        %v2860 = vadd.f32 0.0, %v2859
        %v2861 = vpop.f32.mrf.mxu0
        %2862 = vdwg.mxu0
        %2863 = vmatpush.bf16.msra.mxu0 0
        %2864 = vmatpush.bf16.msra.mxu0 0
        %2865 = vmatpush.bf16.msra.mxu0 0
        %2866 = vmatpush.bf16.msra.mxu0 0
        %2867 = vmatpush.bf16.msra.mxu0 %v2837
        %2868 = vmatpush.bf16.msra.mxu0 %v2836
        %2869 = vmatpush.bf16.msra.mxu0 %v2835
        %2870 = vmatpush.bf16.msra.mxu0 %v2834
        %2871 = vmatmul.bf16.gmra.mxu0 %v2725
        %v2872 = vpop.f32.mrf.mxu0
        %v2873 = vadd.f32 %v2860, %v2872
        %v2874 = vpop.f32.mrf.mxu0
        %2875 = vdwg.mxu0
        %v2877 = vrot.slane %v2873, 1
        %v2879 = vadd.f32 %v2750, %v2877
        %s2880 = scalar_lea.vmem [#allocation2], 192
        %v2881 = vld [vmem:[%s2880] sm:$0xf]
        %v2882 = vld [vmem:[%s2880 + $0x4] sm:$0xf]
        %v2883 = vld [vmem:[%s2880 + $0x8] sm:$0xf]
        %v2884 = vld [vmem:[%s2880 + $0xc] sm:$0xf]
        %v2885 = vld [vmem:[%s2880 + $0x10] sm:$0xf]
        %v2886 = vld [vmem:[%s2880 + $0x14] sm:$0xf]
        %v2887 = vld [vmem:[%s2880 + $0x18] sm:$0xf]
        %v2888 = vld [vmem:[%s2880 + $0x1c] sm:$0xf]
        %v2889 = vld [vmem:[%s2880 + $0x20] sm:$0xf]
        %v2890 = vld [vmem:[%s2880 + $0x24] sm:$0xf]
        %v2891 = vld [vmem:[%s2880 + $0x28] sm:$0xf]
        %v2892 = vld [vmem:[%s2880 + $0x2c] sm:$0xf]
        %v2893 = vld [vmem:[%s2880 + $0x30] sm:$0xf]
        %v2894 = vld [vmem:[%s2880 + $0x34] sm:$0xf]
        %v2895 = vld [vmem:[%s2880 + $0x38] sm:$0xf]
        %v2896 = vld [vmem:[%s2880 + $0x3c] sm:$0xf]
        %v2897 = vld [vmem:[%s2880 + $0x40] sm:$0xf]
        %v2898 = vld [vmem:[%s2880 + $0x44] sm:$0xf]
        %v2899 = vld [vmem:[%s2880 + $0x48] sm:$0xf]
        %v2900 = vld [vmem:[%s2880 + $0x4c] sm:$0xf]
        %v2901 = vld [vmem:[%s2880 + $0x50] sm:$0xf]
        %v2902 = vld [vmem:[%s2880 + $0x54] sm:$0xf]
        %v2903 = vld [vmem:[%s2880 + $0x58] sm:$0xf]
        %v2904 = vld [vmem:[%s2880 + $0x5c] sm:$0xf]
        %v2929 = vunpack.c.l.b16 %v2881
        %v2930 = vunpack.c.l.b16 %v2882
        %v2931 = vunpack.c.l.b16 %v2883
        %v2932 = vunpack.c.l.b16 %v2884
        %v2933 = vunpack.c.l.b16 %v2885
        %v2934 = vunpack.c.l.b16 %v2886
        %v2935 = vunpack.c.l.b16 %v2887
        %v2936 = vunpack.c.l.b16 %v2888
        %v2937 = vunpack.c.l.b16 %v2889
        %v2938 = vunpack.c.l.b16 %v2890
        %v2939 = vunpack.c.l.b16 %v2891
        %v2940 = vunpack.c.l.b16 %v2892
        %v2941 = vunpack.c.l.b16 %v2893
        %v2942 = vunpack.c.l.b16 %v2894
        %v2943 = vunpack.c.l.b16 %v2895
        %v2944 = vunpack.c.l.b16 %v2896
        %v2945 = vunpack.c.l.b16 %v2897
        %v2946 = vunpack.c.l.b16 %v2898
        %v2947 = vunpack.c.l.b16 %v2899
        %v2948 = vunpack.c.l.b16 %v2900
        %v2949 = vunpack.c.l.b16 %v2901
        %v2950 = vunpack.c.l.b16 %v2902
        %v2951 = vunpack.c.l.b16 %v2903
        %v2952 = vunpack.c.l.b16 %v2904
        %v2953 = vpack.c.b16 %v2930, %v2929
        %v2954 = vpack.c.b16 %v2932, %v2931
        %v2955 = vpack.c.b16 %v2934, %v2933
        %v2956 = vpack.c.b16 %v2936, %v2935
        %v2957 = vpack.c.b16 %v2938, %v2937
        %v2958 = vpack.c.b16 %v2940, %v2939
        %v2959 = vpack.c.b16 %v2942, %v2941
        %v2960 = vpack.c.b16 %v2944, %v2943
        %v2961 = vpack.c.b16 %v2946, %v2945
        %v2962 = vpack.c.b16 %v2948, %v2947
        %v2963 = vpack.c.b16 %v2950, %v2949
        %v2964 = vpack.c.b16 %v2952, %v2951
        %2977 = vmatpush.bf16.msra.mxu0 %v2960
        %2978 = vmatpush.bf16.msra.mxu0 %v2959
        %2979 = vmatpush.bf16.msra.mxu0 %v2958
        %2980 = vmatpush.bf16.msra.mxu0 %v2957
        %2981 = vmatpush.bf16.msra.mxu0 %v2956
        %2982 = vmatpush.bf16.msra.mxu0 %v2955
        %2983 = vmatpush.bf16.msra.mxu0 %v2954
        %2984 = vmatpush.bf16.msra.mxu0 %v2953
        %2985 = vmatmul.bf16.gmra.mxu0 %v2626
        %v2986 = vpop.f32.mrf.mxu0
        %v2987 = vadd.f32 0.0, %v2986
        %v2988 = vpop.f32.mrf.mxu0
        %2989 = vdwg.mxu0
        %2990 = vmatpush.bf16.msra.mxu0 0
        %2991 = vmatpush.bf16.msra.mxu0 0
        %2992 = vmatpush.bf16.msra.mxu0 0
        %2993 = vmatpush.bf16.msra.mxu0 0
        %2994 = vmatpush.bf16.msra.mxu0 %v2964
        %2995 = vmatpush.bf16.msra.mxu0 %v2963
        %2996 = vmatpush.bf16.msra.mxu0 %v2962
        %2997 = vmatpush.bf16.msra.mxu0 %v2961
        %2998 = vmatmul.bf16.gmra.mxu0 %v2725
        %v2999 = vpop.f32.mrf.mxu0
        %v3000 = vadd.f32 %v2987, %v2999
        %v3001 = vpop.f32.mrf.mxu0
        %3002 = vdwg.mxu0
        %v3004 = vrot.slane %v3000, 2
        %v3006 = vadd.f32 %v2879, %v3004
        %v3007 = vld [vmem:[%s47] sm:$0x1]
        %v3009 = vperm.slane %v3007, 0
        %v3011 = vadd.f32 %v3006, %v3009
        %v3012 = vmax.f32 %v3011, 0.0
        %v3013 = vld [vmem:[%s49] sm:$0xf]
        %v3014 = vld [vmem:[%s49 + $0x4] sm:$0x1]
        %v3015 = vpack.c.bf16 %v3012, %v3012
        %v3018 = vunpack.c.l.b16 %v3013
        %v3019 = vunpack.c.l.b16 %v3014
        %v3020 = vpack.c.b16 %v3019, %v3018
        %v3022 = vsel %vm1468, %v3020, 0
        %v3025 = vsel %vm2615, %v3015, 0
        %3027 = vmatpush.bf16.msra.mxu0 0
        %3028 = vmatpush.bf16.msra.mxu0 0
        %3029 = vmatpush.bf16.msra.mxu0 0
        %3030 = vmatpush.bf16.msra.mxu0 0
        %3031 = vmatpush.bf16.msra.mxu0 0
        %3032 = vmatpush.bf16.msra.mxu0 0
        %3033 = vmatpush.bf16.msra.mxu0 0
        %3034 = vmatpush.bf16.msra.mxu0 %v3025
        %3035 = vmatmul.bf16.gmra.mxu0 %v3022
        %v3036 = vpop.f32.mrf.mxu0
        %v3037 = vadd.f32 0.0, %v3036
        %v3038 = vpop.f32.mrf.mxu0
        %v3039 = vadd.f32 0.0, %v3038
        %3040 = vdwg.mxu0
        %v3041 = vpack.c.bf16 %v3039, %v3037
        %v3042 = vld [vmem:[#allocation4] sm:$0xf]
        %v3043 = vld [vmem:[#allocation4 + $0x4] sm:$0xf]
        %v3044 = vld [vmem:[#allocation4 + $0x8] sm:$0xf]
        %v3045 = vld [vmem:[#allocation4 + $0xc] sm:$0xf]
        %v3046 = vld [vmem:[#allocation4 + $0x10] sm:$0xf]
        %v3047 = vld [vmem:[#allocation4 + $0x14] sm:$0xf]
        %v3048 = vld [vmem:[#allocation4 + $0x18] sm:$0xf]
        %v3049 = vld [vmem:[#allocation4 + $0x1c] sm:$0xf]
        %v3050 = vld [vmem:[#allocation4 + $0x20] sm:$0xf]
        %v3051 = vld [vmem:[#allocation4 + $0x24] sm:$0xf]
        %v3052 = vld [vmem:[#allocation4 + $0x28] sm:$0xf]
        %v3053 = vld [vmem:[#allocation4 + $0x2c] sm:$0xf]
        %v3054 = vld [vmem:[#allocation4 + $0x30] sm:$0xf]
        %v3055 = vld [vmem:[#allocation4 + $0x34] sm:$0xf]
        %v3056 = vld [vmem:[#allocation4 + $0x38] sm:$0xf]
        %v3057 = vld [vmem:[#allocation4 + $0x3c] sm:$0xf]
        %v3074 = vunpack.c.l.b16 %v3042
        %v3075 = vunpack.c.l.b16 %v3043
        %v3076 = vunpack.c.l.b16 %v3044
        %v3077 = vunpack.c.l.b16 %v3045
        %v3078 = vunpack.c.l.b16 %v3046
        %v3079 = vunpack.c.l.b16 %v3047
        %v3080 = vunpack.c.l.b16 %v3048
        %v3081 = vunpack.c.l.b16 %v3049
        %v3082 = vunpack.c.l.b16 %v3050
        %v3083 = vunpack.c.l.b16 %v3051
        %v3084 = vunpack.c.l.b16 %v3052
        %v3085 = vunpack.c.l.b16 %v3053
        %v3086 = vunpack.c.l.b16 %v3054
        %v3087 = vunpack.c.l.b16 %v3055
        %v3088 = vunpack.c.l.b16 %v3056
        %v3089 = vunpack.c.l.b16 %v3057
        %v3090 = vpack.c.b16 %v3075, %v3074
        %v3091 = vpack.c.b16 %v3077, %v3076
        %v3092 = vpack.c.b16 %v3079, %v3078
        %v3093 = vpack.c.b16 %v3081, %v3080
        %v3094 = vpack.c.b16 %v3083, %v3082
        %v3095 = vpack.c.b16 %v3085, %v3084
        %v3096 = vpack.c.b16 %v3087, %v3086
        %v3097 = vpack.c.b16 %v3089, %v3088
        %3106 = vmatpush.bf16.msra.mxu0 %v3097
        %3107 = vmatpush.bf16.msra.mxu0 %v3096
        %3108 = vmatpush.bf16.msra.mxu0 %v3095
        %3109 = vmatpush.bf16.msra.mxu0 %v3094
        %3110 = vmatpush.bf16.msra.mxu0 %v3093
        %3111 = vmatpush.bf16.msra.mxu0 %v3092
        %3112 = vmatpush.bf16.msra.mxu0 %v3091
        %3113 = vmatpush.bf16.msra.mxu0 %v3090
        %3114 = vmatmul.bf16.gmra.mxu0 %v3041
        %v3115 = vpop.f32.mrf.mxu0
        %v3116 = vadd.f32 0.0, %v3115
        %v3117 = vpop.f32.mrf.mxu0
        %3118 = vdwg.mxu0
        %s3119 = scalar_lea.vmem [#allocation4], 64
        %v3120 = vld [vmem:[%s3119] sm:$0xf]
        %v3121 = vld [vmem:[%s3119 + $0x4] sm:$0xf]
        %v3122 = vld [vmem:[%s3119 + $0x8] sm:$0xf]
        %v3123 = vld [vmem:[%s3119 + $0xc] sm:$0xf]
        %v3124 = vld [vmem:[%s3119 + $0x10] sm:$0xf]
        %v3125 = vld [vmem:[%s3119 + $0x14] sm:$0xf]
        %v3126 = vld [vmem:[%s3119 + $0x18] sm:$0xf]
        %v3127 = vld [vmem:[%s3119 + $0x1c] sm:$0xf]
        %v3128 = vld [vmem:[%s3119 + $0x20] sm:$0xf]
        %v3129 = vld [vmem:[%s3119 + $0x24] sm:$0xf]
        %v3130 = vld [vmem:[%s3119 + $0x28] sm:$0xf]
        %v3131 = vld [vmem:[%s3119 + $0x2c] sm:$0xf]
        %v3132 = vld [vmem:[%s3119 + $0x30] sm:$0xf]
        %v3133 = vld [vmem:[%s3119 + $0x34] sm:$0xf]
        %v3134 = vld [vmem:[%s3119 + $0x38] sm:$0xf]
        %v3135 = vld [vmem:[%s3119 + $0x3c] sm:$0xf]
        %v3152 = vunpack.c.l.b16 %v3120
        %v3153 = vunpack.c.l.b16 %v3121
        %v3154 = vunpack.c.l.b16 %v3122
        %v3155 = vunpack.c.l.b16 %v3123
        %v3156 = vunpack.c.l.b16 %v3124
        %v3157 = vunpack.c.l.b16 %v3125
        %v3158 = vunpack.c.l.b16 %v3126
        %v3159 = vunpack.c.l.b16 %v3127
        %v3160 = vunpack.c.l.b16 %v3128
        %v3161 = vunpack.c.l.b16 %v3129
        %v3162 = vunpack.c.l.b16 %v3130
        %v3163 = vunpack.c.l.b16 %v3131
        %v3164 = vunpack.c.l.b16 %v3132
        %v3165 = vunpack.c.l.b16 %v3133
        %v3166 = vunpack.c.l.b16 %v3134
        %v3167 = vunpack.c.l.b16 %v3135
        %v3168 = vpack.c.b16 %v3153, %v3152
        %v3169 = vpack.c.b16 %v3155, %v3154
        %v3170 = vpack.c.b16 %v3157, %v3156
        %v3171 = vpack.c.b16 %v3159, %v3158
        %v3172 = vpack.c.b16 %v3161, %v3160
        %v3173 = vpack.c.b16 %v3163, %v3162
        %v3174 = vpack.c.b16 %v3165, %v3164
        %v3175 = vpack.c.b16 %v3167, %v3166
        %3184 = vmatpush.bf16.msra.mxu0 %v3175
        %3185 = vmatpush.bf16.msra.mxu0 %v3174
        %3186 = vmatpush.bf16.msra.mxu0 %v3173
        %3187 = vmatpush.bf16.msra.mxu0 %v3172
        %3188 = vmatpush.bf16.msra.mxu0 %v3171
        %3189 = vmatpush.bf16.msra.mxu0 %v3170
        %3190 = vmatpush.bf16.msra.mxu0 %v3169
        %3191 = vmatpush.bf16.msra.mxu0 %v3168
        %3192 = vmatmul.bf16.gmra.mxu0 %v3041
        %v3193 = vpop.f32.mrf.mxu0
        %v3194 = vadd.f32 0.0, %v3193
        %v3195 = vpop.f32.mrf.mxu0
        %v3196 = vadd.f32 0.0, %v3195
        %3197 = vdwg.mxu0
        %vm3200 = vcmask 1046528
        %v3201 = vrot.slane %v3194, 1
        %v3202 = vrot.slane %v3196, 1
        %v3203 = vsel %vm3200, %v3201, %v3202
        %v3205 = vadd.f32 %v3116, %v3203
        %s3206 = scalar_lea.vmem [#allocation4], 128
        %v3207 = vld [vmem:[%s3206] sm:$0xf]
        %v3208 = vld [vmem:[%s3206 + $0x4] sm:$0xf]
        %v3209 = vld [vmem:[%s3206 + $0x8] sm:$0xf]
        %v3210 = vld [vmem:[%s3206 + $0xc] sm:$0xf]
        %v3211 = vld [vmem:[%s3206 + $0x10] sm:$0xf]
        %v3212 = vld [vmem:[%s3206 + $0x14] sm:$0xf]
        %v3213 = vld [vmem:[%s3206 + $0x18] sm:$0xf]
        %v3214 = vld [vmem:[%s3206 + $0x1c] sm:$0xf]
        %v3215 = vld [vmem:[%s3206 + $0x20] sm:$0xf]
        %v3216 = vld [vmem:[%s3206 + $0x24] sm:$0xf]
        %v3217 = vld [vmem:[%s3206 + $0x28] sm:$0xf]
        %v3218 = vld [vmem:[%s3206 + $0x2c] sm:$0xf]
        %v3219 = vld [vmem:[%s3206 + $0x30] sm:$0xf]
        %v3220 = vld [vmem:[%s3206 + $0x34] sm:$0xf]
        %v3221 = vld [vmem:[%s3206 + $0x38] sm:$0xf]
        %v3222 = vld [vmem:[%s3206 + $0x3c] sm:$0xf]
        %v3239 = vunpack.c.l.b16 %v3207
        %v3240 = vunpack.c.l.b16 %v3208
        %v3241 = vunpack.c.l.b16 %v3209
        %v3242 = vunpack.c.l.b16 %v3210
        %v3243 = vunpack.c.l.b16 %v3211
        %v3244 = vunpack.c.l.b16 %v3212
        %v3245 = vunpack.c.l.b16 %v3213
        %v3246 = vunpack.c.l.b16 %v3214
        %v3247 = vunpack.c.l.b16 %v3215
        %v3248 = vunpack.c.l.b16 %v3216
        %v3249 = vunpack.c.l.b16 %v3217
        %v3250 = vunpack.c.l.b16 %v3218
        %v3251 = vunpack.c.l.b16 %v3219
        %v3252 = vunpack.c.l.b16 %v3220
        %v3253 = vunpack.c.l.b16 %v3221
        %v3254 = vunpack.c.l.b16 %v3222
        %v3255 = vpack.c.b16 %v3240, %v3239
        %v3256 = vpack.c.b16 %v3242, %v3241
        %v3257 = vpack.c.b16 %v3244, %v3243
        %v3258 = vpack.c.b16 %v3246, %v3245
        %v3259 = vpack.c.b16 %v3248, %v3247
        %v3260 = vpack.c.b16 %v3250, %v3249
        %v3261 = vpack.c.b16 %v3252, %v3251
        %v3262 = vpack.c.b16 %v3254, %v3253
        %3271 = vmatpush.bf16.msra.mxu0 %v3262
        %3272 = vmatpush.bf16.msra.mxu0 %v3261
        %3273 = vmatpush.bf16.msra.mxu0 %v3260
        %3274 = vmatpush.bf16.msra.mxu0 %v3259
        %3275 = vmatpush.bf16.msra.mxu0 %v3258
        %3276 = vmatpush.bf16.msra.mxu0 %v3257
        %3277 = vmatpush.bf16.msra.mxu0 %v3256
        %3278 = vmatpush.bf16.msra.mxu0 %v3255
        %3279 = vmatmul.bf16.gmra.mxu0 %v3041
        %v3280 = vpop.f32.mrf.mxu0
        %v3281 = vadd.f32 0.0, %v3280
        %v3282 = vpop.f32.mrf.mxu0
        %v3283 = vadd.f32 0.0, %v3282
        %3284 = vdwg.mxu0
        %vm3287 = vcmask 1045504
        %v3288 = vrot.slane %v3281, 2
        %v3289 = vrot.slane %v3283, 2
        %v3290 = vsel %vm3287, %v3288, %v3289
        %v3292 = vadd.f32 %v3205, %v3290
        %v3293 = vld [vmem:[%s53] sm:$0x1]
        %v3295 = vperm.slane %v3293, 0
        %v3297 = vadd.f32 %v3292, %v3295
        %v3298 = vmax.f32 %v3297, 0.0
        %v3299 = vld [vmem:[%s55] sm:$0xf]
        %v3300 = vld [vmem:[%s55 + $0x4] sm:$0xf]
        %v3301 = vld [vmem:[%s55 + $0x8] sm:$0x1]
        %v3302 = vpack.c.bf16 %v3298, %v3298
        %v3306 = vunpack.c.l.b16 %v3299
        %v3307 = vunpack.c.l.b16 %v3300
        %v3308 = vunpack.c.l.b16 %v3301
        %v3309 = vpack.c.b16 %v3307, %v3306
        %v3310 = vpack.c.b16 %v3308, %v3308
        %v3312 = vsel %vm1428, %v3309, 0
        %v3315 = vsel %vm1428, %v3310, 0
        %v3318 = vsel %vm1472, %v3302, 0
        %3320 = vmatpush.bf16.msra.mxu0 0
        %3321 = vmatpush.bf16.msra.mxu0 0
        %3322 = vmatpush.bf16.msra.mxu0 0
        %3323 = vmatpush.bf16.msra.mxu0 0
        %3324 = vmatpush.bf16.msra.mxu0 0
        %3325 = vmatpush.bf16.msra.mxu0 0
        %3326 = vmatpush.bf16.msra.mxu0 0
        %3327 = vmatpush.bf16.msra.mxu0 %v3318
        %3328 = vmatmul.bf16.gmra.mxu0 %v3312
        %v3329 = vpop.f32.mrf.mxu0
        %v3330 = vadd.f32 0.0, %v3329
        %v3331 = vpop.f32.mrf.mxu0
        %v3332 = vadd.f32 0.0, %v3331
        %3333 = vmatmul.bf16.gmra.mxu0 %v3315
        %v3334 = vpop.f32.mrf.mxu0
        %v3335 = vadd.f32 0.0, %v3334
        %v3336 = vpop.f32.mrf.mxu0
        %3337 = vdwg.mxu0
        %v3338 = vpack.c.bf16 %v3332, %v3330
        %v3339 = vpack.c.bf16 %v3335, %v3335
        %v3340 = vld [vmem:[%s57] sm:$0xff]
        %v3341 = vld [vmem:[%s57 + $0x8] sm:$0xff]
        %v3342 = vld [vmem:[%s57 + $0x10] sm:$0xff]
        %v3343 = vld [vmem:[%s57 + $0x18] sm:$0xff]
        %v3344 = vld [vmem:[%s57 + $0x20] sm:$0xff]
        %v3345 = vld [vmem:[%s57 + $0x28] sm:$0xff]
        %v3346 = vld [vmem:[%s57 + $0x30] sm:$0xff]
        %v3347 = vld [vmem:[%s57 + $0x38] sm:$0xff]
        %v3348 = vld [vmem:[%s57 + $0x40] sm:$0xff]
        %v3349 = vld [vmem:[%s57 + $0x48] sm:$0xff]
        %v3350 = vld [vmem:[%s57 + $0x50] sm:$0xff]
        %v3351 = vld [vmem:[%s57 + $0x58] sm:$0xff]
        %v3352 = vld [vmem:[%s57 + $0x60] sm:$0xff]
        %v3353 = vld [vmem:[%s57 + $0x68] sm:$0xff]
        %v3354 = vld [vmem:[%s57 + $0x70] sm:$0xff]
        %v3355 = vld [vmem:[%s57 + $0x78] sm:$0xff]
        %v3372 = vunpack.c.l.b16 %v3340
        %v3373 = vunpack.c.h.b16 %v3340
        %v3374 = vunpack.c.l.b16 %v3341
        %v3375 = vunpack.c.h.b16 %v3341
        %v3376 = vunpack.c.l.b16 %v3342
        %v3377 = vunpack.c.h.b16 %v3342
        %v3378 = vunpack.c.l.b16 %v3343
        %v3379 = vunpack.c.h.b16 %v3343
        %v3380 = vunpack.c.l.b16 %v3344
        %v3381 = vunpack.c.h.b16 %v3344
        %v3382 = vunpack.c.l.b16 %v3345
        %v3383 = vunpack.c.h.b16 %v3345
        %v3384 = vunpack.c.l.b16 %v3346
        %v3385 = vunpack.c.h.b16 %v3346
        %v3386 = vunpack.c.l.b16 %v3347
        %v3387 = vunpack.c.h.b16 %v3347
        %v3388 = vunpack.c.l.b16 %v3348
        %v3389 = vunpack.c.h.b16 %v3348
        %v3390 = vunpack.c.l.b16 %v3349
        %v3391 = vunpack.c.h.b16 %v3349
        %v3392 = vunpack.c.l.b16 %v3350
        %v3393 = vunpack.c.h.b16 %v3350
        %v3394 = vunpack.c.l.b16 %v3351
        %v3395 = vunpack.c.h.b16 %v3351
        %v3396 = vunpack.c.l.b16 %v3352
        %v3397 = vunpack.c.h.b16 %v3352
        %v3398 = vunpack.c.l.b16 %v3353
        %v3399 = vunpack.c.h.b16 %v3353
        %v3400 = vunpack.c.l.b16 %v3354
        %v3401 = vunpack.c.h.b16 %v3354
        %v3402 = vunpack.c.l.b16 %v3355
        %v3403 = vunpack.c.h.b16 %v3355
        %v3404 = vpack.c.b16 %v3374, %v3372
        %v3405 = vpack.c.b16 %v3375, %v3373
        %v3406 = vpack.c.b16 %v3378, %v3376
        %v3407 = vpack.c.b16 %v3379, %v3377
        %v3408 = vpack.c.b16 %v3382, %v3380
        %v3409 = vpack.c.b16 %v3383, %v3381
        %v3410 = vpack.c.b16 %v3386, %v3384
        %v3411 = vpack.c.b16 %v3387, %v3385
        %v3412 = vpack.c.b16 %v3390, %v3388
        %v3413 = vpack.c.b16 %v3391, %v3389
        %v3414 = vpack.c.b16 %v3394, %v3392
        %v3415 = vpack.c.b16 %v3395, %v3393
        %v3416 = vpack.c.b16 %v3398, %v3396
        %v3417 = vpack.c.b16 %v3399, %v3397
        %v3418 = vpack.c.b16 %v3402, %v3400
        %v3419 = vpack.c.b16 %v3403, %v3401
        %3436 = vmatpush.bf16.msra.mxu0 %v3418
        %3437 = vmatpush.bf16.msra.mxu0 %v3416
        %3438 = vmatpush.bf16.msra.mxu0 %v3414
        %3439 = vmatpush.bf16.msra.mxu0 %v3412
        %3440 = vmatpush.bf16.msra.mxu0 %v3410
        %3441 = vmatpush.bf16.msra.mxu0 %v3408
        %3442 = vmatpush.bf16.msra.mxu0 %v3406
        %3443 = vmatpush.bf16.msra.mxu0 %v3404
        %3444 = vmatmul.bf16.gmra.mxu0 %v3338
        %v3445 = vpop.f32.mrf.mxu0
        %v3446 = vadd.f32 0.0, %v3445
        %v3447 = vpop.f32.mrf.mxu0
        %v3448 = vadd.f32 0.0, %v3447
        %3449 = vmatmul.bf16.gmra.mxu0 %v3339
        %v3450 = vpop.f32.mrf.mxu0
        %v3451 = vpop.f32.mrf.mxu0
        %3452 = vdwg.mxu0
        %3453 = vmatpush.bf16.msra.mxu0 %v3419
        %3454 = vmatpush.bf16.msra.mxu0 %v3417
        %3455 = vmatpush.bf16.msra.mxu0 %v3415
        %3456 = vmatpush.bf16.msra.mxu0 %v3413
        %3457 = vmatpush.bf16.msra.mxu0 %v3411
        %3458 = vmatpush.bf16.msra.mxu0 %v3409
        %3459 = vmatpush.bf16.msra.mxu0 %v3407
        %3460 = vmatpush.bf16.msra.mxu0 %v3405
        %3461 = vmatmul.bf16.gmra.mxu0 %v3338
        %v3462 = vpop.f32.mrf.mxu0
        %v3463 = vadd.f32 0.0, %v3462
        %v3464 = vpop.f32.mrf.mxu0
        %v3465 = vadd.f32 0.0, %v3464
        %3466 = vmatmul.bf16.gmra.mxu0 %v3339
        %v3467 = vpop.f32.mrf.mxu0
        %v3468 = vpop.f32.mrf.mxu0
        %3469 = vdwg.mxu0
        %s3470 = scalar_lea.vmem %s57, 128
        %v3471 = vld [vmem:[%s3470] sm:$0xff]
        %v3472 = vld [vmem:[%s3470 + $0x8] sm:$0xff]
        %v3473 = vld [vmem:[%s3470 + $0x10] sm:$0xff]
        %v3474 = vld [vmem:[%s3470 + $0x18] sm:$0xff]
        %v3475 = vld [vmem:[%s3470 + $0x20] sm:$0xff]
        %v3476 = vld [vmem:[%s3470 + $0x28] sm:$0xff]
        %v3477 = vld [vmem:[%s3470 + $0x30] sm:$0xff]
        %v3478 = vld [vmem:[%s3470 + $0x38] sm:$0xff]
        %v3479 = vld [vmem:[%s3470 + $0x40] sm:$0xff]
        %v3480 = vld [vmem:[%s3470 + $0x48] sm:$0xff]
        %v3481 = vld [vmem:[%s3470 + $0x50] sm:$0xff]
        %v3482 = vld [vmem:[%s3470 + $0x58] sm:$0xff]
        %v3483 = vld [vmem:[%s3470 + $0x60] sm:$0xff]
        %v3484 = vld [vmem:[%s3470 + $0x68] sm:$0xff]
        %v3485 = vld [vmem:[%s3470 + $0x70] sm:$0xff]
        %v3486 = vld [vmem:[%s3470 + $0x78] sm:$0xff]
        %v3503 = vunpack.c.l.b16 %v3471
        %v3504 = vunpack.c.h.b16 %v3471
        %v3505 = vunpack.c.l.b16 %v3472
        %v3506 = vunpack.c.h.b16 %v3472
        %v3507 = vunpack.c.l.b16 %v3473
        %v3508 = vunpack.c.h.b16 %v3473
        %v3509 = vunpack.c.l.b16 %v3474
        %v3510 = vunpack.c.h.b16 %v3474
        %v3511 = vunpack.c.l.b16 %v3475
        %v3512 = vunpack.c.h.b16 %v3475
        %v3513 = vunpack.c.l.b16 %v3476
        %v3514 = vunpack.c.h.b16 %v3476
        %v3515 = vunpack.c.l.b16 %v3477
        %v3516 = vunpack.c.h.b16 %v3477
        %v3517 = vunpack.c.l.b16 %v3478
        %v3518 = vunpack.c.h.b16 %v3478
        %v3519 = vunpack.c.l.b16 %v3479
        %v3520 = vunpack.c.h.b16 %v3479
        %v3521 = vunpack.c.l.b16 %v3480
        %v3522 = vunpack.c.h.b16 %v3480
        %v3523 = vunpack.c.l.b16 %v3481
        %v3524 = vunpack.c.h.b16 %v3481
        %v3525 = vunpack.c.l.b16 %v3482
        %v3526 = vunpack.c.h.b16 %v3482
        %v3527 = vunpack.c.l.b16 %v3483
        %v3528 = vunpack.c.h.b16 %v3483
        %v3529 = vunpack.c.l.b16 %v3484
        %v3530 = vunpack.c.h.b16 %v3484
        %v3531 = vunpack.c.l.b16 %v3485
        %v3532 = vunpack.c.h.b16 %v3485
        %v3533 = vunpack.c.l.b16 %v3486
        %v3534 = vunpack.c.h.b16 %v3486
        %v3535 = vpack.c.b16 %v3505, %v3503
        %v3536 = vpack.c.b16 %v3506, %v3504
        %v3537 = vpack.c.b16 %v3509, %v3507
        %v3538 = vpack.c.b16 %v3510, %v3508
        %v3539 = vpack.c.b16 %v3513, %v3511
        %v3540 = vpack.c.b16 %v3514, %v3512
        %v3541 = vpack.c.b16 %v3517, %v3515
        %v3542 = vpack.c.b16 %v3518, %v3516
        %v3543 = vpack.c.b16 %v3521, %v3519
        %v3544 = vpack.c.b16 %v3522, %v3520
        %v3545 = vpack.c.b16 %v3525, %v3523
        %v3546 = vpack.c.b16 %v3526, %v3524
        %v3547 = vpack.c.b16 %v3529, %v3527
        %v3548 = vpack.c.b16 %v3530, %v3528
        %v3549 = vpack.c.b16 %v3533, %v3531
        %v3550 = vpack.c.b16 %v3534, %v3532
        %3567 = vmatpush.bf16.msra.mxu0 %v3549
        %3568 = vmatpush.bf16.msra.mxu0 %v3547
        %3569 = vmatpush.bf16.msra.mxu0 %v3545
        %3570 = vmatpush.bf16.msra.mxu0 %v3543
        %3571 = vmatpush.bf16.msra.mxu0 %v3541
        %3572 = vmatpush.bf16.msra.mxu0 %v3539
        %3573 = vmatpush.bf16.msra.mxu0 %v3537
        %3574 = vmatpush.bf16.msra.mxu0 %v3535
        %3575 = vmatmul.bf16.gmra.mxu0 %v3338
        %v3576 = vpop.f32.mrf.mxu0
        %v3577 = vadd.f32 0.0, %v3576
        %v3578 = vpop.f32.mrf.mxu0
        %v3579 = vadd.f32 0.0, %v3578
        %3580 = vmatmul.bf16.gmra.mxu0 %v3339
        %v3581 = vpop.f32.mrf.mxu0
        %v3582 = vadd.f32 0.0, %v3581
        %v3583 = vpop.f32.mrf.mxu0
        %3584 = vdwg.mxu0
        %3585 = vmatpush.bf16.msra.mxu0 %v3550
        %3586 = vmatpush.bf16.msra.mxu0 %v3548
        %3587 = vmatpush.bf16.msra.mxu0 %v3546
        %3588 = vmatpush.bf16.msra.mxu0 %v3544
        %3589 = vmatpush.bf16.msra.mxu0 %v3542
        %3590 = vmatpush.bf16.msra.mxu0 %v3540
        %3591 = vmatpush.bf16.msra.mxu0 %v3538
        %3592 = vmatpush.bf16.msra.mxu0 %v3536
        %3593 = vmatmul.bf16.gmra.mxu0 %v3338
        %v3594 = vpop.f32.mrf.mxu0
        %v3595 = vadd.f32 0.0, %v3594
        %v3596 = vpop.f32.mrf.mxu0
        %v3597 = vadd.f32 0.0, %v3596
        %3598 = vmatmul.bf16.gmra.mxu0 %v3339
        %v3599 = vpop.f32.mrf.mxu0
        %v3600 = vadd.f32 0.0, %v3599
        %v3601 = vpop.f32.mrf.mxu0
        %3602 = vdwg.mxu0
        %v3609 = vrot.slane %v3577, 1
        %v3610 = vrot.slane %v3579, 1
        %v3611 = vsel %vm3200, %v3609, %v3610
        %v3612 = vrot.slane %v3595, 1
        %v3613 = vrot.slane %v3597, 1
        %v3614 = vsel %vm3200, %v3612, %v3613
        %v3615 = vrot.slane %v3582, 1
        %v3616 = vsel %vm3200, %v3610, %v3615
        %v3617 = vrot.slane %v3600, 1
        %v3618 = vsel %vm3200, %v3613, %v3617
        %v3623 = vadd.f32 %v3446, %v3611
        %v3624 = vadd.f32 %v3463, %v3614
        %v3625 = vadd.f32 %v3448, %v3616
        %v3626 = vadd.f32 %v3465, %v3618
        %s3627 = scalar_lea.vmem %s57, 256
        %v3628 = vld [vmem:[%s3627] sm:$0xff]
        %v3629 = vld [vmem:[%s3627 + $0x8] sm:$0xff]
        %v3630 = vld [vmem:[%s3627 + $0x10] sm:$0xff]
        %v3631 = vld [vmem:[%s3627 + $0x18] sm:$0xff]
        %v3632 = vld [vmem:[%s3627 + $0x20] sm:$0xff]
        %v3633 = vld [vmem:[%s3627 + $0x28] sm:$0xff]
        %v3634 = vld [vmem:[%s3627 + $0x30] sm:$0xff]
        %v3635 = vld [vmem:[%s3627 + $0x38] sm:$0xff]
        %v3636 = vld [vmem:[%s3627 + $0x40] sm:$0xff]
        %v3637 = vld [vmem:[%s3627 + $0x48] sm:$0xff]
        %v3638 = vld [vmem:[%s3627 + $0x50] sm:$0xff]
        %v3639 = vld [vmem:[%s3627 + $0x58] sm:$0xff]
        %v3640 = vld [vmem:[%s3627 + $0x60] sm:$0xff]
        %v3641 = vld [vmem:[%s3627 + $0x68] sm:$0xff]
        %v3642 = vld [vmem:[%s3627 + $0x70] sm:$0xff]
        %v3643 = vld [vmem:[%s3627 + $0x78] sm:$0xff]
        %v3660 = vunpack.c.l.b16 %v3628
        %v3661 = vunpack.c.h.b16 %v3628
        %v3662 = vunpack.c.l.b16 %v3629
        %v3663 = vunpack.c.h.b16 %v3629
        %v3664 = vunpack.c.l.b16 %v3630
        %v3665 = vunpack.c.h.b16 %v3630
        %v3666 = vunpack.c.l.b16 %v3631
        %v3667 = vunpack.c.h.b16 %v3631
        %v3668 = vunpack.c.l.b16 %v3632
        %v3669 = vunpack.c.h.b16 %v3632
        %v3670 = vunpack.c.l.b16 %v3633
        %v3671 = vunpack.c.h.b16 %v3633
        %v3672 = vunpack.c.l.b16 %v3634
        %v3673 = vunpack.c.h.b16 %v3634
        %v3674 = vunpack.c.l.b16 %v3635
        %v3675 = vunpack.c.h.b16 %v3635
        %v3676 = vunpack.c.l.b16 %v3636
        %v3677 = vunpack.c.h.b16 %v3636
        %v3678 = vunpack.c.l.b16 %v3637
        %v3679 = vunpack.c.h.b16 %v3637
        %v3680 = vunpack.c.l.b16 %v3638
        %v3681 = vunpack.c.h.b16 %v3638
        %v3682 = vunpack.c.l.b16 %v3639
        %v3683 = vunpack.c.h.b16 %v3639
        %v3684 = vunpack.c.l.b16 %v3640
        %v3685 = vunpack.c.h.b16 %v3640
        %v3686 = vunpack.c.l.b16 %v3641
        %v3687 = vunpack.c.h.b16 %v3641
        %v3688 = vunpack.c.l.b16 %v3642
        %v3689 = vunpack.c.h.b16 %v3642
        %v3690 = vunpack.c.l.b16 %v3643
        %v3691 = vunpack.c.h.b16 %v3643
        %v3692 = vpack.c.b16 %v3662, %v3660
        %v3693 = vpack.c.b16 %v3663, %v3661
        %v3694 = vpack.c.b16 %v3666, %v3664
        %v3695 = vpack.c.b16 %v3667, %v3665
        %v3696 = vpack.c.b16 %v3670, %v3668
        %v3697 = vpack.c.b16 %v3671, %v3669
        %v3698 = vpack.c.b16 %v3674, %v3672
        %v3699 = vpack.c.b16 %v3675, %v3673
        %v3700 = vpack.c.b16 %v3678, %v3676
        %v3701 = vpack.c.b16 %v3679, %v3677
        %v3702 = vpack.c.b16 %v3682, %v3680
        %v3703 = vpack.c.b16 %v3683, %v3681
        %v3704 = vpack.c.b16 %v3686, %v3684
        %v3705 = vpack.c.b16 %v3687, %v3685
        %v3706 = vpack.c.b16 %v3690, %v3688
        %v3707 = vpack.c.b16 %v3691, %v3689
        %3724 = vmatpush.bf16.msra.mxu0 %v3706
        %3725 = vmatpush.bf16.msra.mxu0 %v3704
        %3726 = vmatpush.bf16.msra.mxu0 %v3702
        %3727 = vmatpush.bf16.msra.mxu0 %v3700
        %3728 = vmatpush.bf16.msra.mxu0 %v3698
        %3729 = vmatpush.bf16.msra.mxu0 %v3696
        %3730 = vmatpush.bf16.msra.mxu0 %v3694
        %3731 = vmatpush.bf16.msra.mxu0 %v3692
        %3732 = vmatmul.bf16.gmra.mxu0 %v3338
        %v3733 = vpop.f32.mrf.mxu0
        %v3734 = vadd.f32 0.0, %v3733
        %v3735 = vpop.f32.mrf.mxu0
        %v3736 = vadd.f32 0.0, %v3735
        %3737 = vmatmul.bf16.gmra.mxu0 %v3339
        %v3738 = vpop.f32.mrf.mxu0
        %v3739 = vadd.f32 0.0, %v3738
        %v3740 = vpop.f32.mrf.mxu0
        %3741 = vdwg.mxu0
        %3742 = vmatpush.bf16.msra.mxu0 %v3707
        %3743 = vmatpush.bf16.msra.mxu0 %v3705
        %3744 = vmatpush.bf16.msra.mxu0 %v3703
        %3745 = vmatpush.bf16.msra.mxu0 %v3701
        %3746 = vmatpush.bf16.msra.mxu0 %v3699
        %3747 = vmatpush.bf16.msra.mxu0 %v3697
        %3748 = vmatpush.bf16.msra.mxu0 %v3695
        %3749 = vmatpush.bf16.msra.mxu0 %v3693
        %3750 = vmatmul.bf16.gmra.mxu0 %v3338
        %v3751 = vpop.f32.mrf.mxu0
        %v3752 = vadd.f32 0.0, %v3751
        %v3753 = vpop.f32.mrf.mxu0
        %v3754 = vadd.f32 0.0, %v3753
        %3755 = vmatmul.bf16.gmra.mxu0 %v3339
        %v3756 = vpop.f32.mrf.mxu0
        %v3757 = vadd.f32 0.0, %v3756
        %v3758 = vpop.f32.mrf.mxu0
        %3759 = vdwg.mxu0
        %v3766 = vrot.slane %v3734, 2
        %v3767 = vrot.slane %v3736, 2
        %v3768 = vsel %vm3287, %v3766, %v3767
        %v3769 = vrot.slane %v3752, 2
        %v3770 = vrot.slane %v3754, 2
        %v3771 = vsel %vm3287, %v3769, %v3770
        %v3772 = vrot.slane %v3739, 2
        %v3773 = vsel %vm3287, %v3767, %v3772
        %v3774 = vrot.slane %v3757, 2
        %v3775 = vsel %vm3287, %v3770, %v3774
        %v3780 = vadd.f32 %v3623, %v3768
        %v3781 = vadd.f32 %v3624, %v3771
        %v3782 = vadd.f32 %v3625, %v3773
        %v3783 = vadd.f32 %v3626, %v3775
        %v3784 = vld [vmem:[%s59] sm:$0x3]
        %v3786 = vperm.slane %v3784, 0
        %v3787 = vperm.slane %v3784, 1
        %v3790 = vadd.f32 %v3780, %v3786
        %v3791 = vadd.f32 %v3781, %v3787
        %v3792 = vadd.f32 %v3782, %v3786
        %v3793 = vadd.f32 %v3783, %v3787
        %v3794 = vmax.f32 %v3790, 0.0
        %v3795 = vmax.f32 %v3791, 0.0
        %v3796 = vmax.f32 %v3792, 0.0
        %v3797 = vmax.f32 %v3793, 0.0
        %v3798 = vld [vmem:[%s61] sm:$0xf]
        %v3799 = vld [vmem:[%s61 + $0x4] sm:$0xf]
        %v3800 = vld [vmem:[%s61 + $0x8] sm:$0xf]
        %v3801 = vld [vmem:[%s61 + $0xc] sm:$0xf]
        %v3802 = vld [vmem:[%s61 + $0x10] sm:$0x1]
        %v3803 = vpack.c.bf16 %v3796, %v3794
        %v3804 = vpack.c.bf16 %v3797, %v3795
        %v3810 = vunpack.c.l.b16 %v3798
        %v3811 = vunpack.c.l.b16 %v3799
        %v3812 = vunpack.c.l.b16 %v3800
        %v3813 = vunpack.c.l.b16 %v3801
        %v3814 = vunpack.c.l.b16 %v3802
        %v3815 = vpack.c.b16 %v3811, %v3810
        %v3816 = vpack.c.b16 %v3813, %v3812
        %v3817 = vpack.c.b16 %v3814, %v3814
        %v3819 = vsel %vm1709, %v3815, 0
        %v3822 = vsel %vm1709, %v3816, 0
        %v3825 = vsel %vm1709, %v3817, 0
        %3827 = vmatpush.bf16.msra.mxu0 0
        %3828 = vmatpush.bf16.msra.mxu0 0
        %3829 = vmatpush.bf16.msra.mxu0 0
        %3830 = vmatpush.bf16.msra.mxu0 0
        %3831 = vmatpush.bf16.msra.mxu0 0
        %3832 = vmatpush.bf16.msra.mxu0 0
        %3833 = vmatpush.bf16.msra.mxu0 0
        %3834 = vmatpush.bf16.msra.mxu0 %v3803
        %3835 = vmatmul.bf16.gmra.mxu0 %v3819
        %v3836 = vpop.f32.mrf.mxu0
        %v3837 = vadd.f32 0.0, %v3836
        %v3838 = vpop.f32.mrf.mxu0
        %v3839 = vadd.f32 0.0, %v3838
        %3840 = vmatmul.bf16.gmra.mxu0 %v3822
        %v3841 = vpop.f32.mrf.mxu0
        %v3842 = vadd.f32 0.0, %v3841
        %v3843 = vpop.f32.mrf.mxu0
        %v3844 = vadd.f32 0.0, %v3843
        %3845 = vmatmul.bf16.gmra.mxu0 %v3825
        %v3846 = vpop.f32.mrf.mxu0
        %v3847 = vadd.f32 0.0, %v3846
        %v3848 = vpop.f32.mrf.mxu0
        %3849 = vdwg.mxu0
        %3850 = vmatpush.bf16.msra.mxu0 0
        %3851 = vmatpush.bf16.msra.mxu0 0
        %3852 = vmatpush.bf16.msra.mxu0 0
        %3853 = vmatpush.bf16.msra.mxu0 0
        %3854 = vmatpush.bf16.msra.mxu0 0
        %3855 = vmatpush.bf16.msra.mxu0 0
        %3856 = vmatpush.bf16.msra.mxu0 0
        %3857 = vmatpush.bf16.msra.mxu0 %v3804
        %3858 = vmatmul.bf16.gmra.mxu0 %v3819
        %v3859 = vpop.f32.mrf.mxu0
        %v3860 = vadd.f32 0.0, %v3859
        %v3861 = vpop.f32.mrf.mxu0
        %v3862 = vadd.f32 0.0, %v3861
        %3863 = vmatmul.bf16.gmra.mxu0 %v3822
        %v3864 = vpop.f32.mrf.mxu0
        %v3865 = vadd.f32 0.0, %v3864
        %v3866 = vpop.f32.mrf.mxu0
        %v3867 = vadd.f32 0.0, %v3866
        %3868 = vmatmul.bf16.gmra.mxu0 %v3825
        %v3869 = vpop.f32.mrf.mxu0
        %v3870 = vadd.f32 0.0, %v3869
        %v3871 = vpop.f32.mrf.mxu0
        %3872 = vdwg.mxu0
        %v3873 = vpack.c.bf16 %v3839, %v3837
        %v3874 = vpack.c.bf16 %v3862, %v3860
        %v3875 = vpack.c.bf16 %v3844, %v3842
        %v3876 = vpack.c.bf16 %v3867, %v3865
        %v3877 = vpack.c.bf16 %v3847, %v3847
        %v3878 = vpack.c.bf16 %v3870, %v3870
        %v3879 = vld [vmem:[%s63] sm:$0xff]
        %v3880 = vld [vmem:[%s63 + $0x8] sm:$0xff]
        %v3881 = vld [vmem:[%s63 + $0x10] sm:$0xff]
        %v3882 = vld [vmem:[%s63 + $0x18] sm:$0xff]
        %v3883 = vld [vmem:[%s63 + $0x20] sm:$0xff]
        %v3884 = vld [vmem:[%s63 + $0x28] sm:$0xff]
        %v3885 = vld [vmem:[%s63 + $0x30] sm:$0xff]
        %v3886 = vld [vmem:[%s63 + $0x38] sm:$0xff]
        %v3887 = vld [vmem:[%s63 + $0x40] sm:$0xff]
        %v3888 = vld [vmem:[%s63 + $0x48] sm:$0xff]
        %v3889 = vld [vmem:[%s63 + $0x50] sm:$0xff]
        %v3890 = vld [vmem:[%s63 + $0x58] sm:$0xff]
        %v3891 = vld [vmem:[%s63 + $0x60] sm:$0xff]
        %v3892 = vld [vmem:[%s63 + $0x68] sm:$0xff]
        %v3893 = vld [vmem:[%s63 + $0x70] sm:$0xff]
        %v3894 = vld [vmem:[%s63 + $0x78] sm:$0xff]
        %v3895 = vld [vmem:[%s63 + $0x80] sm:$0xff]
        %v3896 = vld [vmem:[%s63 + $0x88] sm:$0xff]
        %v3897 = vld [vmem:[%s63 + $0x90] sm:$0xff]
        %v3898 = vld [vmem:[%s63 + $0x98] sm:$0xff]
        %v3899 = vld [vmem:[%s63 + $0xa0] sm:$0xff]
        %v3900 = vld [vmem:[%s63 + $0xa8] sm:$0xff]
        %v3901 = vld [vmem:[%s63 + $0xb0] sm:$0xff]
        %v3902 = vld [vmem:[%s63 + $0xb8] sm:$0xff]
        %v3903 = vld [vmem:[%s63 + $0xc0] sm:$0xff]
        %v3904 = vld [vmem:[%s63 + $0xc8] sm:$0xff]
        %v3905 = vld [vmem:[%s63 + $0xd0] sm:$0xff]
        %v3906 = vld [vmem:[%s63 + $0xd8] sm:$0xff]
        %v3907 = vld [vmem:[%s63 + $0xe0] sm:$0xff]
        %v3908 = vld [vmem:[%s63 + $0xe8] sm:$0xff]
        %v3909 = vld [vmem:[%s63 + $0xf0] sm:$0xff]
        %v3910 = vld [vmem:[%s63 + $0xf8] sm:$0xff]
        %v3943 = vunpack.c.l.b16 %v3879
        %v3944 = vunpack.c.h.b16 %v3879
        %v3945 = vunpack.c.l.b16 %v3880
        %v3946 = vunpack.c.h.b16 %v3880
        %v3947 = vunpack.c.l.b16 %v3881
        %v3948 = vunpack.c.h.b16 %v3881
        %v3949 = vunpack.c.l.b16 %v3882
        %v3950 = vunpack.c.h.b16 %v3882
        %v3951 = vunpack.c.l.b16 %v3883
        %v3952 = vunpack.c.h.b16 %v3883
        %v3953 = vunpack.c.l.b16 %v3884
        %v3954 = vunpack.c.h.b16 %v3884
        %v3955 = vunpack.c.l.b16 %v3885
        %v3956 = vunpack.c.h.b16 %v3885
        %v3957 = vunpack.c.l.b16 %v3886
        %v3958 = vunpack.c.h.b16 %v3886
        %v3959 = vunpack.c.l.b16 %v3887
        %v3960 = vunpack.c.h.b16 %v3887
        %v3961 = vunpack.c.l.b16 %v3888
        %v3962 = vunpack.c.h.b16 %v3888
        %v3963 = vunpack.c.l.b16 %v3889
        %v3964 = vunpack.c.h.b16 %v3889
        %v3965 = vunpack.c.l.b16 %v3890
        %v3966 = vunpack.c.h.b16 %v3890
        %v3967 = vunpack.c.l.b16 %v3891
        %v3968 = vunpack.c.h.b16 %v3891
        %v3969 = vunpack.c.l.b16 %v3892
        %v3970 = vunpack.c.h.b16 %v3892
        %v3971 = vunpack.c.l.b16 %v3893
        %v3972 = vunpack.c.h.b16 %v3893
        %v3973 = vunpack.c.l.b16 %v3894
        %v3974 = vunpack.c.h.b16 %v3894
        %v3975 = vunpack.c.l.b16 %v3895
        %v3976 = vunpack.c.h.b16 %v3895
        %v3977 = vunpack.c.l.b16 %v3896
        %v3978 = vunpack.c.h.b16 %v3896
        %v3979 = vunpack.c.l.b16 %v3897
        %v3980 = vunpack.c.h.b16 %v3897
        %v3981 = vunpack.c.l.b16 %v3898
        %v3982 = vunpack.c.h.b16 %v3898
        %v3983 = vunpack.c.l.b16 %v3899
        %v3984 = vunpack.c.h.b16 %v3899
        %v3985 = vunpack.c.l.b16 %v3900
        %v3986 = vunpack.c.h.b16 %v3900
        %v3987 = vunpack.c.l.b16 %v3901
        %v3988 = vunpack.c.h.b16 %v3901
        %v3989 = vunpack.c.l.b16 %v3902
        %v3990 = vunpack.c.h.b16 %v3902
        %v3991 = vunpack.c.l.b16 %v3903
        %v3992 = vunpack.c.h.b16 %v3903
        %v3993 = vunpack.c.l.b16 %v3904
        %v3994 = vunpack.c.h.b16 %v3904
        %v3995 = vunpack.c.l.b16 %v3905
        %v3996 = vunpack.c.h.b16 %v3905
        %v3997 = vunpack.c.l.b16 %v3906
        %v3998 = vunpack.c.h.b16 %v3906
        %v3999 = vunpack.c.l.b16 %v3907
        %v4000 = vunpack.c.h.b16 %v3907
        %v4001 = vunpack.c.l.b16 %v3908
        %v4002 = vunpack.c.h.b16 %v3908
        %v4003 = vunpack.c.l.b16 %v3909
        %v4004 = vunpack.c.h.b16 %v3909
        %v4005 = vunpack.c.l.b16 %v3910
        %v4006 = vunpack.c.h.b16 %v3910
        %v4007 = vpack.c.b16 %v3945, %v3943
        %v4008 = vpack.c.b16 %v3946, %v3944
        %v4009 = vpack.c.b16 %v3949, %v3947
        %v4010 = vpack.c.b16 %v3950, %v3948
        %v4011 = vpack.c.b16 %v3953, %v3951
        %v4012 = vpack.c.b16 %v3954, %v3952
        %v4013 = vpack.c.b16 %v3957, %v3955
        %v4014 = vpack.c.b16 %v3958, %v3956
        %v4015 = vpack.c.b16 %v3961, %v3959
        %v4016 = vpack.c.b16 %v3962, %v3960
        %v4017 = vpack.c.b16 %v3965, %v3963
        %v4018 = vpack.c.b16 %v3966, %v3964
        %v4019 = vpack.c.b16 %v3969, %v3967
        %v4020 = vpack.c.b16 %v3970, %v3968
        %v4021 = vpack.c.b16 %v3973, %v3971
        %v4022 = vpack.c.b16 %v3974, %v3972
        %v4023 = vpack.c.b16 %v3977, %v3975
        %v4024 = vpack.c.b16 %v3978, %v3976
        %v4025 = vpack.c.b16 %v3981, %v3979
        %v4026 = vpack.c.b16 %v3982, %v3980
        %v4027 = vpack.c.b16 %v3985, %v3983
        %v4028 = vpack.c.b16 %v3986, %v3984
        %v4029 = vpack.c.b16 %v3989, %v3987
        %v4030 = vpack.c.b16 %v3990, %v3988
        %v4031 = vpack.c.b16 %v3993, %v3991
        %v4032 = vpack.c.b16 %v3994, %v3992
        %v4033 = vpack.c.b16 %v3997, %v3995
        %v4034 = vpack.c.b16 %v3998, %v3996
        %v4035 = vpack.c.b16 %v4001, %v3999
        %v4036 = vpack.c.b16 %v4002, %v4000
        %v4037 = vpack.c.b16 %v4005, %v4003
        %v4038 = vpack.c.b16 %v4006, %v4004
        %4071 = vmatpush.bf16.msra.mxu0 %v4021
        %4072 = vmatpush.bf16.msra.mxu0 %v4019
        %4073 = vmatpush.bf16.msra.mxu0 %v4017
        %4074 = vmatpush.bf16.msra.mxu0 %v4015
        %4075 = vmatpush.bf16.msra.mxu0 %v4013
        %4076 = vmatpush.bf16.msra.mxu0 %v4011
        %4077 = vmatpush.bf16.msra.mxu0 %v4009
        %4078 = vmatpush.bf16.msra.mxu0 %v4007
        %4079 = vmatmul.bf16.gmra.mxu0 %v3873
        %v4080 = vpop.f32.mrf.mxu0
        %v4081 = vadd.f32 0.0, %v4080
        %v4082 = vpop.f32.mrf.mxu0
        %v4083 = vadd.f32 0.0, %v4082
        %4084 = vmatmul.bf16.gmra.mxu0 %v3875
        %v4085 = vpop.f32.mrf.mxu0
        %v4086 = vadd.f32 0.0, %v4085
        %v4087 = vpop.f32.mrf.mxu0
        %v4088 = vadd.f32 0.0, %v4087
        %4089 = vmatmul.bf16.gmra.mxu0 %v3877
        %v4090 = vpop.f32.mrf.mxu0
        %v4091 = vpop.f32.mrf.mxu0
        %4092 = vdwg.mxu0
        %4093 = vmatpush.bf16.msra.mxu0 %v4037
        %4094 = vmatpush.bf16.msra.mxu0 %v4035
        %4095 = vmatpush.bf16.msra.mxu0 %v4033
        %4096 = vmatpush.bf16.msra.mxu0 %v4031
        %4097 = vmatpush.bf16.msra.mxu0 %v4029
        %4098 = vmatpush.bf16.msra.mxu0 %v4027
        %4099 = vmatpush.bf16.msra.mxu0 %v4025
        %4100 = vmatpush.bf16.msra.mxu0 %v4023
        %4101 = vmatmul.bf16.gmra.mxu0 %v3874
        %v4102 = vpop.f32.mrf.mxu0
        %v4103 = vadd.f32 %v4081, %v4102
        %v4104 = vpop.f32.mrf.mxu0
        %v4105 = vadd.f32 %v4083, %v4104
        %4106 = vmatmul.bf16.gmra.mxu0 %v3876
        %v4107 = vpop.f32.mrf.mxu0
        %v4108 = vadd.f32 %v4086, %v4107
        %v4109 = vpop.f32.mrf.mxu0
        %v4110 = vadd.f32 %v4088, %v4109
        %4111 = vmatmul.bf16.gmra.mxu0 %v3878
        %v4112 = vpop.f32.mrf.mxu0
        %v4113 = vpop.f32.mrf.mxu0
        %4114 = vdwg.mxu0
        %4115 = vmatpush.bf16.msra.mxu0 %v4022
        %4116 = vmatpush.bf16.msra.mxu0 %v4020
        %4117 = vmatpush.bf16.msra.mxu0 %v4018
        %4118 = vmatpush.bf16.msra.mxu0 %v4016
        %4119 = vmatpush.bf16.msra.mxu0 %v4014
        %4120 = vmatpush.bf16.msra.mxu0 %v4012
        %4121 = vmatpush.bf16.msra.mxu0 %v4010
        %4122 = vmatpush.bf16.msra.mxu0 %v4008
        %4123 = vmatmul.bf16.gmra.mxu0 %v3873
        %v4124 = vpop.f32.mrf.mxu0
        %v4125 = vadd.f32 0.0, %v4124
        %v4126 = vpop.f32.mrf.mxu0
        %v4127 = vadd.f32 0.0, %v4126
        %4128 = vmatmul.bf16.gmra.mxu0 %v3875
        %v4129 = vpop.f32.mrf.mxu0
        %v4130 = vadd.f32 0.0, %v4129
        %v4131 = vpop.f32.mrf.mxu0
        %v4132 = vadd.f32 0.0, %v4131
        %4133 = vmatmul.bf16.gmra.mxu0 %v3877
        %v4134 = vpop.f32.mrf.mxu0
        %v4135 = vpop.f32.mrf.mxu0
        %4136 = vdwg.mxu0
        %4137 = vmatpush.bf16.msra.mxu0 %v4038
        %4138 = vmatpush.bf16.msra.mxu0 %v4036
        %4139 = vmatpush.bf16.msra.mxu0 %v4034
        %4140 = vmatpush.bf16.msra.mxu0 %v4032
        %4141 = vmatpush.bf16.msra.mxu0 %v4030
        %4142 = vmatpush.bf16.msra.mxu0 %v4028
        %4143 = vmatpush.bf16.msra.mxu0 %v4026
        %4144 = vmatpush.bf16.msra.mxu0 %v4024
        %4145 = vmatmul.bf16.gmra.mxu0 %v3874
        %v4146 = vpop.f32.mrf.mxu0
        %v4147 = vadd.f32 %v4125, %v4146
        %v4148 = vpop.f32.mrf.mxu0
        %v4149 = vadd.f32 %v4127, %v4148
        %4150 = vmatmul.bf16.gmra.mxu0 %v3876
        %v4151 = vpop.f32.mrf.mxu0
        %v4152 = vadd.f32 %v4130, %v4151
        %v4153 = vpop.f32.mrf.mxu0
        %v4154 = vadd.f32 %v4132, %v4153
        %4155 = vmatmul.bf16.gmra.mxu0 %v3878
        %v4156 = vpop.f32.mrf.mxu0
        %v4157 = vpop.f32.mrf.mxu0
        %4158 = vdwg.mxu0
        %s4159 = scalar_lea.vmem %s63, 256
        %v4160 = vld [vmem:[%s4159] sm:$0xff]
        %v4161 = vld [vmem:[%s4159 + $0x8] sm:$0xff]
        %v4162 = vld [vmem:[%s4159 + $0x10] sm:$0xff]
        %v4163 = vld [vmem:[%s4159 + $0x18] sm:$0xff]
        %v4164 = vld [vmem:[%s4159 + $0x20] sm:$0xff]
        %v4165 = vld [vmem:[%s4159 + $0x28] sm:$0xff]
        %v4166 = vld [vmem:[%s4159 + $0x30] sm:$0xff]
        %v4167 = vld [vmem:[%s4159 + $0x38] sm:$0xff]
        %v4168 = vld [vmem:[%s4159 + $0x40] sm:$0xff]
        %v4169 = vld [vmem:[%s4159 + $0x48] sm:$0xff]
        %v4170 = vld [vmem:[%s4159 + $0x50] sm:$0xff]
        %v4171 = vld [vmem:[%s4159 + $0x58] sm:$0xff]
        %v4172 = vld [vmem:[%s4159 + $0x60] sm:$0xff]
        %v4173 = vld [vmem:[%s4159 + $0x68] sm:$0xff]
        %v4174 = vld [vmem:[%s4159 + $0x70] sm:$0xff]
        %v4175 = vld [vmem:[%s4159 + $0x78] sm:$0xff]
        %v4176 = vld [vmem:[%s4159 + $0x80] sm:$0xff]
        %v4177 = vld [vmem:[%s4159 + $0x88] sm:$0xff]
        %v4178 = vld [vmem:[%s4159 + $0x90] sm:$0xff]
        %v4179 = vld [vmem:[%s4159 + $0x98] sm:$0xff]
        %v4180 = vld [vmem:[%s4159 + $0xa0] sm:$0xff]
        %v4181 = vld [vmem:[%s4159 + $0xa8] sm:$0xff]
        %v4182 = vld [vmem:[%s4159 + $0xb0] sm:$0xff]
        %v4183 = vld [vmem:[%s4159 + $0xb8] sm:$0xff]
        %v4184 = vld [vmem:[%s4159 + $0xc0] sm:$0xff]
        %v4185 = vld [vmem:[%s4159 + $0xc8] sm:$0xff]
        %v4186 = vld [vmem:[%s4159 + $0xd0] sm:$0xff]
        %v4187 = vld [vmem:[%s4159 + $0xd8] sm:$0xff]
        %v4188 = vld [vmem:[%s4159 + $0xe0] sm:$0xff]
        %v4189 = vld [vmem:[%s4159 + $0xe8] sm:$0xff]
        %v4190 = vld [vmem:[%s4159 + $0xf0] sm:$0xff]
        %v4191 = vld [vmem:[%s4159 + $0xf8] sm:$0xff]
        %v4224 = vunpack.c.l.b16 %v4160
        %v4225 = vunpack.c.h.b16 %v4160
        %v4226 = vunpack.c.l.b16 %v4161
        %v4227 = vunpack.c.h.b16 %v4161
        %v4228 = vunpack.c.l.b16 %v4162
        %v4229 = vunpack.c.h.b16 %v4162
        %v4230 = vunpack.c.l.b16 %v4163
        %v4231 = vunpack.c.h.b16 %v4163
        %v4232 = vunpack.c.l.b16 %v4164
        %v4233 = vunpack.c.h.b16 %v4164
        %v4234 = vunpack.c.l.b16 %v4165
        %v4235 = vunpack.c.h.b16 %v4165
        %v4236 = vunpack.c.l.b16 %v4166
        %v4237 = vunpack.c.h.b16 %v4166
        %v4238 = vunpack.c.l.b16 %v4167
        %v4239 = vunpack.c.h.b16 %v4167
        %v4240 = vunpack.c.l.b16 %v4168
        %v4241 = vunpack.c.h.b16 %v4168
        %v4242 = vunpack.c.l.b16 %v4169
        %v4243 = vunpack.c.h.b16 %v4169
        %v4244 = vunpack.c.l.b16 %v4170
        %v4245 = vunpack.c.h.b16 %v4170
        %v4246 = vunpack.c.l.b16 %v4171
        %v4247 = vunpack.c.h.b16 %v4171
        %v4248 = vunpack.c.l.b16 %v4172
        %v4249 = vunpack.c.h.b16 %v4172
        %v4250 = vunpack.c.l.b16 %v4173
        %v4251 = vunpack.c.h.b16 %v4173
        %v4252 = vunpack.c.l.b16 %v4174
        %v4253 = vunpack.c.h.b16 %v4174
        %v4254 = vunpack.c.l.b16 %v4175
        %v4255 = vunpack.c.h.b16 %v4175
        %v4256 = vunpack.c.l.b16 %v4176
        %v4257 = vunpack.c.h.b16 %v4176
        %v4258 = vunpack.c.l.b16 %v4177
        %v4259 = vunpack.c.h.b16 %v4177
        %v4260 = vunpack.c.l.b16 %v4178
        %v4261 = vunpack.c.h.b16 %v4178
        %v4262 = vunpack.c.l.b16 %v4179
        %v4263 = vunpack.c.h.b16 %v4179
        %v4264 = vunpack.c.l.b16 %v4180
        %v4265 = vunpack.c.h.b16 %v4180
        %v4266 = vunpack.c.l.b16 %v4181
        %v4267 = vunpack.c.h.b16 %v4181
        %v4268 = vunpack.c.l.b16 %v4182
        %v4269 = vunpack.c.h.b16 %v4182
        %v4270 = vunpack.c.l.b16 %v4183
        %v4271 = vunpack.c.h.b16 %v4183
        %v4272 = vunpack.c.l.b16 %v4184
        %v4273 = vunpack.c.h.b16 %v4184
        %v4274 = vunpack.c.l.b16 %v4185
        %v4275 = vunpack.c.h.b16 %v4185
        %v4276 = vunpack.c.l.b16 %v4186
        %v4277 = vunpack.c.h.b16 %v4186
        %v4278 = vunpack.c.l.b16 %v4187
        %v4279 = vunpack.c.h.b16 %v4187
        %v4280 = vunpack.c.l.b16 %v4188
        %v4281 = vunpack.c.h.b16 %v4188
        %v4282 = vunpack.c.l.b16 %v4189
        %v4283 = vunpack.c.h.b16 %v4189
        %v4284 = vunpack.c.l.b16 %v4190
        %v4285 = vunpack.c.h.b16 %v4190
        %v4286 = vunpack.c.l.b16 %v4191
        %v4287 = vunpack.c.h.b16 %v4191
        %v4288 = vpack.c.b16 %v4226, %v4224
        %v4289 = vpack.c.b16 %v4227, %v4225
        %v4290 = vpack.c.b16 %v4230, %v4228
        %v4291 = vpack.c.b16 %v4231, %v4229
        %v4292 = vpack.c.b16 %v4234, %v4232
        %v4293 = vpack.c.b16 %v4235, %v4233
        %v4294 = vpack.c.b16 %v4238, %v4236
        %v4295 = vpack.c.b16 %v4239, %v4237
        %v4296 = vpack.c.b16 %v4242, %v4240
        %v4297 = vpack.c.b16 %v4243, %v4241
        %v4298 = vpack.c.b16 %v4246, %v4244
        %v4299 = vpack.c.b16 %v4247, %v4245
        %v4300 = vpack.c.b16 %v4250, %v4248
        %v4301 = vpack.c.b16 %v4251, %v4249
        %v4302 = vpack.c.b16 %v4254, %v4252
        %v4303 = vpack.c.b16 %v4255, %v4253
        %v4304 = vpack.c.b16 %v4258, %v4256
        %v4305 = vpack.c.b16 %v4259, %v4257
        %v4306 = vpack.c.b16 %v4262, %v4260
        %v4307 = vpack.c.b16 %v4263, %v4261
        %v4308 = vpack.c.b16 %v4266, %v4264
        %v4309 = vpack.c.b16 %v4267, %v4265
        %v4310 = vpack.c.b16 %v4270, %v4268
        %v4311 = vpack.c.b16 %v4271, %v4269
        %v4312 = vpack.c.b16 %v4274, %v4272
        %v4313 = vpack.c.b16 %v4275, %v4273
        %v4314 = vpack.c.b16 %v4278, %v4276
        %v4315 = vpack.c.b16 %v4279, %v4277
        %v4316 = vpack.c.b16 %v4282, %v4280
        %v4317 = vpack.c.b16 %v4283, %v4281
        %v4318 = vpack.c.b16 %v4286, %v4284
        %v4319 = vpack.c.b16 %v4287, %v4285
        %4352 = vmatpush.bf16.msra.mxu0 %v4302
        %4353 = vmatpush.bf16.msra.mxu0 %v4300
        %4354 = vmatpush.bf16.msra.mxu0 %v4298
        %4355 = vmatpush.bf16.msra.mxu0 %v4296
        %4356 = vmatpush.bf16.msra.mxu0 %v4294
        %4357 = vmatpush.bf16.msra.mxu0 %v4292
        %4358 = vmatpush.bf16.msra.mxu0 %v4290
        %4359 = vmatpush.bf16.msra.mxu0 %v4288
        %4360 = vmatmul.bf16.gmra.mxu0 %v3873
        %v4361 = vpop.f32.mrf.mxu0
        %v4362 = vadd.f32 0.0, %v4361
        %v4363 = vpop.f32.mrf.mxu0
        %v4364 = vadd.f32 0.0, %v4363
        %4365 = vmatmul.bf16.gmra.mxu0 %v3875
        %v4366 = vpop.f32.mrf.mxu0
        %v4367 = vadd.f32 0.0, %v4366
        %v4368 = vpop.f32.mrf.mxu0
        %v4369 = vadd.f32 0.0, %v4368
        %4370 = vmatmul.bf16.gmra.mxu0 %v3877
        %v4371 = vpop.f32.mrf.mxu0
        %v4372 = vadd.f32 0.0, %v4371
        %v4373 = vpop.f32.mrf.mxu0
        %4374 = vdwg.mxu0
        %4375 = vmatpush.bf16.msra.mxu0 %v4318
        %4376 = vmatpush.bf16.msra.mxu0 %v4316
        %4377 = vmatpush.bf16.msra.mxu0 %v4314
        %4378 = vmatpush.bf16.msra.mxu0 %v4312
        %4379 = vmatpush.bf16.msra.mxu0 %v4310
        %4380 = vmatpush.bf16.msra.mxu0 %v4308
        %4381 = vmatpush.bf16.msra.mxu0 %v4306
        %4382 = vmatpush.bf16.msra.mxu0 %v4304
        %4383 = vmatmul.bf16.gmra.mxu0 %v3874
        %v4384 = vpop.f32.mrf.mxu0
        %v4385 = vadd.f32 %v4362, %v4384
        %v4386 = vpop.f32.mrf.mxu0
        %v4387 = vadd.f32 %v4364, %v4386
        %4388 = vmatmul.bf16.gmra.mxu0 %v3876
        %v4389 = vpop.f32.mrf.mxu0
        %v4390 = vadd.f32 %v4367, %v4389
        %v4391 = vpop.f32.mrf.mxu0
        %v4392 = vadd.f32 %v4369, %v4391
        %4393 = vmatmul.bf16.gmra.mxu0 %v3878
        %v4394 = vpop.f32.mrf.mxu0
        %v4395 = vadd.f32 %v4372, %v4394
        %v4396 = vpop.f32.mrf.mxu0
        %4397 = vdwg.mxu0
        %4398 = vmatpush.bf16.msra.mxu0 %v4303
        %4399 = vmatpush.bf16.msra.mxu0 %v4301
        %4400 = vmatpush.bf16.msra.mxu0 %v4299
        %4401 = vmatpush.bf16.msra.mxu0 %v4297
        %4402 = vmatpush.bf16.msra.mxu0 %v4295
        %4403 = vmatpush.bf16.msra.mxu0 %v4293
        %4404 = vmatpush.bf16.msra.mxu0 %v4291
        %4405 = vmatpush.bf16.msra.mxu0 %v4289
        %4406 = vmatmul.bf16.gmra.mxu0 %v3873
        %v4407 = vpop.f32.mrf.mxu0
        %v4408 = vadd.f32 0.0, %v4407
        %v4409 = vpop.f32.mrf.mxu0
        %v4410 = vadd.f32 0.0, %v4409
        %4411 = vmatmul.bf16.gmra.mxu0 %v3875
        %v4412 = vpop.f32.mrf.mxu0
        %v4413 = vadd.f32 0.0, %v4412
        %v4414 = vpop.f32.mrf.mxu0
        %v4415 = vadd.f32 0.0, %v4414
        %4416 = vmatmul.bf16.gmra.mxu0 %v3877
        %v4417 = vpop.f32.mrf.mxu0
        %v4418 = vadd.f32 0.0, %v4417
        %v4419 = vpop.f32.mrf.mxu0
        %4420 = vdwg.mxu0
        %4421 = vmatpush.bf16.msra.mxu0 %v4319
        %4422 = vmatpush.bf16.msra.mxu0 %v4317
        %4423 = vmatpush.bf16.msra.mxu0 %v4315
        %4424 = vmatpush.bf16.msra.mxu0 %v4313
        %4425 = vmatpush.bf16.msra.mxu0 %v4311
        %4426 = vmatpush.bf16.msra.mxu0 %v4309
        %4427 = vmatpush.bf16.msra.mxu0 %v4307
        %4428 = vmatpush.bf16.msra.mxu0 %v4305
        %4429 = vmatmul.bf16.gmra.mxu0 %v3874
        %v4430 = vpop.f32.mrf.mxu0
        %v4431 = vadd.f32 %v4408, %v4430
        %v4432 = vpop.f32.mrf.mxu0
        %v4433 = vadd.f32 %v4410, %v4432
        %4434 = vmatmul.bf16.gmra.mxu0 %v3876
        %v4435 = vpop.f32.mrf.mxu0
        %v4436 = vadd.f32 %v4413, %v4435
        %v4437 = vpop.f32.mrf.mxu0
        %v4438 = vadd.f32 %v4415, %v4437
        %4439 = vmatmul.bf16.gmra.mxu0 %v3878
        %v4440 = vpop.f32.mrf.mxu0
        %v4441 = vadd.f32 %v4418, %v4440
        %v4442 = vpop.f32.mrf.mxu0
        %4443 = vdwg.mxu0
        %v4454 = vrot.slane %v4385, 1
        %v4455 = vrot.slane %v4387, 1
        %v4456 = vsel %vm3200, %v4454, %v4455
        %v4457 = vrot.slane %v4431, 1
        %v4458 = vrot.slane %v4433, 1
        %v4459 = vsel %vm3200, %v4457, %v4458
        %v4460 = vrot.slane %v4390, 1
        %v4461 = vsel %vm3200, %v4455, %v4460
        %v4462 = vrot.slane %v4436, 1
        %v4463 = vsel %vm3200, %v4458, %v4462
        %v4464 = vrot.slane %v4392, 1
        %v4465 = vsel %vm3200, %v4460, %v4464
        %v4466 = vrot.slane %v4438, 1
        %v4467 = vsel %vm3200, %v4462, %v4466
        %v4468 = vrot.slane %v4395, 1
        %v4469 = vsel %vm3200, %v4464, %v4468
        %v4470 = vrot.slane %v4441, 1
        %v4471 = vsel %vm3200, %v4466, %v4470
        %v4480 = vadd.f32 %v4103, %v4456
        %v4481 = vadd.f32 %v4147, %v4459
        %v4482 = vadd.f32 %v4105, %v4461
        %v4483 = vadd.f32 %v4149, %v4463
        %v4484 = vadd.f32 %v4108, %v4465
        %v4485 = vadd.f32 %v4152, %v4467
        %v4486 = vadd.f32 %v4110, %v4469
        %v4487 = vadd.f32 %v4154, %v4471
        %s4488 = scalar_lea.vmem %s63, 512
        %v4489 = vld [vmem:[%s4488] sm:$0xff]
        %v4490 = vld [vmem:[%s4488 + $0x8] sm:$0xff]
        %v4491 = vld [vmem:[%s4488 + $0x10] sm:$0xff]
        %v4492 = vld [vmem:[%s4488 + $0x18] sm:$0xff]
        %v4493 = vld [vmem:[%s4488 + $0x20] sm:$0xff]
        %v4494 = vld [vmem:[%s4488 + $0x28] sm:$0xff]
        %v4495 = vld [vmem:[%s4488 + $0x30] sm:$0xff]
        %v4496 = vld [vmem:[%s4488 + $0x38] sm:$0xff]
        %v4497 = vld [vmem:[%s4488 + $0x40] sm:$0xff]
        %v4498 = vld [vmem:[%s4488 + $0x48] sm:$0xff]
        %v4499 = vld [vmem:[%s4488 + $0x50] sm:$0xff]
        %v4500 = vld [vmem:[%s4488 + $0x58] sm:$0xff]
        %v4501 = vld [vmem:[%s4488 + $0x60] sm:$0xff]
        %v4502 = vld [vmem:[%s4488 + $0x68] sm:$0xff]
        %v4503 = vld [vmem:[%s4488 + $0x70] sm:$0xff]
        %v4504 = vld [vmem:[%s4488 + $0x78] sm:$0xff]
        %v4505 = vld [vmem:[%s4488 + $0x80] sm:$0xff]
        %v4506 = vld [vmem:[%s4488 + $0x88] sm:$0xff]
        %v4507 = vld [vmem:[%s4488 + $0x90] sm:$0xff]
        %v4508 = vld [vmem:[%s4488 + $0x98] sm:$0xff]
        %v4509 = vld [vmem:[%s4488 + $0xa0] sm:$0xff]
        %v4510 = vld [vmem:[%s4488 + $0xa8] sm:$0xff]
        %v4511 = vld [vmem:[%s4488 + $0xb0] sm:$0xff]
        %v4512 = vld [vmem:[%s4488 + $0xb8] sm:$0xff]
        %v4513 = vld [vmem:[%s4488 + $0xc0] sm:$0xff]
        %v4514 = vld [vmem:[%s4488 + $0xc8] sm:$0xff]
        %v4515 = vld [vmem:[%s4488 + $0xd0] sm:$0xff]
        %v4516 = vld [vmem:[%s4488 + $0xd8] sm:$0xff]
        %v4517 = vld [vmem:[%s4488 + $0xe0] sm:$0xff]
        %v4518 = vld [vmem:[%s4488 + $0xe8] sm:$0xff]
        %v4519 = vld [vmem:[%s4488 + $0xf0] sm:$0xff]
        %v4520 = vld [vmem:[%s4488 + $0xf8] sm:$0xff]
        %v4553 = vunpack.c.l.b16 %v4489
        %v4554 = vunpack.c.h.b16 %v4489
        %v4555 = vunpack.c.l.b16 %v4490
        %v4556 = vunpack.c.h.b16 %v4490
        %v4557 = vunpack.c.l.b16 %v4491
        %v4558 = vunpack.c.h.b16 %v4491
        %v4559 = vunpack.c.l.b16 %v4492
        %v4560 = vunpack.c.h.b16 %v4492
        %v4561 = vunpack.c.l.b16 %v4493
        %v4562 = vunpack.c.h.b16 %v4493
        %v4563 = vunpack.c.l.b16 %v4494
        %v4564 = vunpack.c.h.b16 %v4494
        %v4565 = vunpack.c.l.b16 %v4495
        %v4566 = vunpack.c.h.b16 %v4495
        %v4567 = vunpack.c.l.b16 %v4496
        %v4568 = vunpack.c.h.b16 %v4496
        %v4569 = vunpack.c.l.b16 %v4497
        %v4570 = vunpack.c.h.b16 %v4497
        %v4571 = vunpack.c.l.b16 %v4498
        %v4572 = vunpack.c.h.b16 %v4498
        %v4573 = vunpack.c.l.b16 %v4499
        %v4574 = vunpack.c.h.b16 %v4499
        %v4575 = vunpack.c.l.b16 %v4500
        %v4576 = vunpack.c.h.b16 %v4500
        %v4577 = vunpack.c.l.b16 %v4501
        %v4578 = vunpack.c.h.b16 %v4501
        %v4579 = vunpack.c.l.b16 %v4502
        %v4580 = vunpack.c.h.b16 %v4502
        %v4581 = vunpack.c.l.b16 %v4503
        %v4582 = vunpack.c.h.b16 %v4503
        %v4583 = vunpack.c.l.b16 %v4504
        %v4584 = vunpack.c.h.b16 %v4504
        %v4585 = vunpack.c.l.b16 %v4505
        %v4586 = vunpack.c.h.b16 %v4505
        %v4587 = vunpack.c.l.b16 %v4506
        %v4588 = vunpack.c.h.b16 %v4506
        %v4589 = vunpack.c.l.b16 %v4507
        %v4590 = vunpack.c.h.b16 %v4507
        %v4591 = vunpack.c.l.b16 %v4508
        %v4592 = vunpack.c.h.b16 %v4508
        %v4593 = vunpack.c.l.b16 %v4509
        %v4594 = vunpack.c.h.b16 %v4509
        %v4595 = vunpack.c.l.b16 %v4510
        %v4596 = vunpack.c.h.b16 %v4510
        %v4597 = vunpack.c.l.b16 %v4511
        %v4598 = vunpack.c.h.b16 %v4511
        %v4599 = vunpack.c.l.b16 %v4512
        %v4600 = vunpack.c.h.b16 %v4512
        %v4601 = vunpack.c.l.b16 %v4513
        %v4602 = vunpack.c.h.b16 %v4513
        %v4603 = vunpack.c.l.b16 %v4514
        %v4604 = vunpack.c.h.b16 %v4514
        %v4605 = vunpack.c.l.b16 %v4515
        %v4606 = vunpack.c.h.b16 %v4515
        %v4607 = vunpack.c.l.b16 %v4516
        %v4608 = vunpack.c.h.b16 %v4516
        %v4609 = vunpack.c.l.b16 %v4517
        %v4610 = vunpack.c.h.b16 %v4517
        %v4611 = vunpack.c.l.b16 %v4518
        %v4612 = vunpack.c.h.b16 %v4518
        %v4613 = vunpack.c.l.b16 %v4519
        %v4614 = vunpack.c.h.b16 %v4519
        %v4615 = vunpack.c.l.b16 %v4520
        %v4616 = vunpack.c.h.b16 %v4520
        %v4617 = vpack.c.b16 %v4555, %v4553
        %v4618 = vpack.c.b16 %v4556, %v4554
        %v4619 = vpack.c.b16 %v4559, %v4557
        %v4620 = vpack.c.b16 %v4560, %v4558
        %v4621 = vpack.c.b16 %v4563, %v4561
        %v4622 = vpack.c.b16 %v4564, %v4562
        %v4623 = vpack.c.b16 %v4567, %v4565
        %v4624 = vpack.c.b16 %v4568, %v4566
        %v4625 = vpack.c.b16 %v4571, %v4569
        %v4626 = vpack.c.b16 %v4572, %v4570
        %v4627 = vpack.c.b16 %v4575, %v4573
        %v4628 = vpack.c.b16 %v4576, %v4574
        %v4629 = vpack.c.b16 %v4579, %v4577
        %v4630 = vpack.c.b16 %v4580, %v4578
        %v4631 = vpack.c.b16 %v4583, %v4581
        %v4632 = vpack.c.b16 %v4584, %v4582
        %v4633 = vpack.c.b16 %v4587, %v4585
        %v4634 = vpack.c.b16 %v4588, %v4586
        %v4635 = vpack.c.b16 %v4591, %v4589
        %v4636 = vpack.c.b16 %v4592, %v4590
        %v4637 = vpack.c.b16 %v4595, %v4593
        %v4638 = vpack.c.b16 %v4596, %v4594
        %v4639 = vpack.c.b16 %v4599, %v4597
        %v4640 = vpack.c.b16 %v4600, %v4598
        %v4641 = vpack.c.b16 %v4603, %v4601
        %v4642 = vpack.c.b16 %v4604, %v4602
        %v4643 = vpack.c.b16 %v4607, %v4605
        %v4644 = vpack.c.b16 %v4608, %v4606
        %v4645 = vpack.c.b16 %v4611, %v4609
        %v4646 = vpack.c.b16 %v4612, %v4610
        %v4647 = vpack.c.b16 %v4615, %v4613
        %v4648 = vpack.c.b16 %v4616, %v4614
        %4681 = vmatpush.bf16.msra.mxu0 %v4631
        %4682 = vmatpush.bf16.msra.mxu0 %v4629
        %4683 = vmatpush.bf16.msra.mxu0 %v4627
        %4684 = vmatpush.bf16.msra.mxu0 %v4625
        %4685 = vmatpush.bf16.msra.mxu0 %v4623
        %4686 = vmatpush.bf16.msra.mxu0 %v4621
        %4687 = vmatpush.bf16.msra.mxu0 %v4619
        %4688 = vmatpush.bf16.msra.mxu0 %v4617
        %4689 = vmatmul.bf16.gmra.mxu0 %v3873
        %v4690 = vpop.f32.mrf.mxu0
        %v4691 = vadd.f32 0.0, %v4690
        %v4692 = vpop.f32.mrf.mxu0
        %v4693 = vadd.f32 0.0, %v4692
        %4694 = vmatmul.bf16.gmra.mxu0 %v3875
        %v4695 = vpop.f32.mrf.mxu0
        %v4696 = vadd.f32 0.0, %v4695
        %v4697 = vpop.f32.mrf.mxu0
        %v4698 = vadd.f32 0.0, %v4697
        %4699 = vmatmul.bf16.gmra.mxu0 %v3877
        %v4700 = vpop.f32.mrf.mxu0
        %v4701 = vadd.f32 0.0, %v4700
        %v4702 = vpop.f32.mrf.mxu0
        %4703 = vdwg.mxu0
        %4704 = vmatpush.bf16.msra.mxu0 %v4647
        %4705 = vmatpush.bf16.msra.mxu0 %v4645
        %4706 = vmatpush.bf16.msra.mxu0 %v4643
        %4707 = vmatpush.bf16.msra.mxu0 %v4641
        %4708 = vmatpush.bf16.msra.mxu0 %v4639
        %4709 = vmatpush.bf16.msra.mxu0 %v4637
        %4710 = vmatpush.bf16.msra.mxu0 %v4635
        %4711 = vmatpush.bf16.msra.mxu0 %v4633
        %4712 = vmatmul.bf16.gmra.mxu0 %v3874
        %v4713 = vpop.f32.mrf.mxu0
        %v4714 = vadd.f32 %v4691, %v4713
        %v4715 = vpop.f32.mrf.mxu0
        %v4716 = vadd.f32 %v4693, %v4715
        %4717 = vmatmul.bf16.gmra.mxu0 %v3876
        %v4718 = vpop.f32.mrf.mxu0
        %v4719 = vadd.f32 %v4696, %v4718
        %v4720 = vpop.f32.mrf.mxu0
        %v4721 = vadd.f32 %v4698, %v4720
        %4722 = vmatmul.bf16.gmra.mxu0 %v3878
        %v4723 = vpop.f32.mrf.mxu0
        %v4724 = vadd.f32 %v4701, %v4723
        %v4725 = vpop.f32.mrf.mxu0
        %4726 = vdwg.mxu0
        %4727 = vmatpush.bf16.msra.mxu0 %v4632
        %4728 = vmatpush.bf16.msra.mxu0 %v4630
        %4729 = vmatpush.bf16.msra.mxu0 %v4628
        %4730 = vmatpush.bf16.msra.mxu0 %v4626
        %4731 = vmatpush.bf16.msra.mxu0 %v4624
        %4732 = vmatpush.bf16.msra.mxu0 %v4622
        %4733 = vmatpush.bf16.msra.mxu0 %v4620
        %4734 = vmatpush.bf16.msra.mxu0 %v4618
        %4735 = vmatmul.bf16.gmra.mxu0 %v3873
        %v4736 = vpop.f32.mrf.mxu0
        %v4737 = vadd.f32 0.0, %v4736
        %v4738 = vpop.f32.mrf.mxu0
        %v4739 = vadd.f32 0.0, %v4738
        %4740 = vmatmul.bf16.gmra.mxu0 %v3875
        %v4741 = vpop.f32.mrf.mxu0
        %v4742 = vadd.f32 0.0, %v4741
        %v4743 = vpop.f32.mrf.mxu0
        %v4744 = vadd.f32 0.0, %v4743
        %4745 = vmatmul.bf16.gmra.mxu0 %v3877
        %v4746 = vpop.f32.mrf.mxu0
        %v4747 = vadd.f32 0.0, %v4746
        %v4748 = vpop.f32.mrf.mxu0
        %4749 = vdwg.mxu0
        %4750 = vmatpush.bf16.msra.mxu0 %v4648
        %4751 = vmatpush.bf16.msra.mxu0 %v4646
        %4752 = vmatpush.bf16.msra.mxu0 %v4644
        %4753 = vmatpush.bf16.msra.mxu0 %v4642
        %4754 = vmatpush.bf16.msra.mxu0 %v4640
        %4755 = vmatpush.bf16.msra.mxu0 %v4638
        %4756 = vmatpush.bf16.msra.mxu0 %v4636
        %4757 = vmatpush.bf16.msra.mxu0 %v4634
        %4758 = vmatmul.bf16.gmra.mxu0 %v3874
        %v4759 = vpop.f32.mrf.mxu0
        %v4760 = vadd.f32 %v4737, %v4759
        %v4761 = vpop.f32.mrf.mxu0
        %v4762 = vadd.f32 %v4739, %v4761
        %4763 = vmatmul.bf16.gmra.mxu0 %v3876
        %v4764 = vpop.f32.mrf.mxu0
        %v4765 = vadd.f32 %v4742, %v4764
        %v4766 = vpop.f32.mrf.mxu0
        %v4767 = vadd.f32 %v4744, %v4766
        %4768 = vmatmul.bf16.gmra.mxu0 %v3878
        %v4769 = vpop.f32.mrf.mxu0
        %v4770 = vadd.f32 %v4747, %v4769
        %v4771 = vpop.f32.mrf.mxu0
        %4772 = vdwg.mxu0
        %v4783 = vrot.slane %v4714, 2
        %v4784 = vrot.slane %v4716, 2
        %v4785 = vsel %vm3287, %v4783, %v4784
        %v4786 = vrot.slane %v4760, 2
        %v4787 = vrot.slane %v4762, 2
        %v4788 = vsel %vm3287, %v4786, %v4787
        %v4789 = vrot.slane %v4719, 2
        %v4790 = vsel %vm3287, %v4784, %v4789
        %v4791 = vrot.slane %v4765, 2
        %v4792 = vsel %vm3287, %v4787, %v4791
        %v4793 = vrot.slane %v4721, 2
        %v4794 = vsel %vm3287, %v4789, %v4793
        %v4795 = vrot.slane %v4767, 2
        %v4796 = vsel %vm3287, %v4791, %v4795
        %v4797 = vrot.slane %v4724, 2
        %v4798 = vsel %vm3287, %v4793, %v4797
        %v4799 = vrot.slane %v4770, 2
        %v4800 = vsel %vm3287, %v4795, %v4799
        %v4809 = vadd.f32 %v4480, %v4785
        %v4810 = vadd.f32 %v4481, %v4788
        %v4811 = vadd.f32 %v4482, %v4790
        %v4812 = vadd.f32 %v4483, %v4792
        %v4813 = vadd.f32 %v4484, %v4794
        %v4814 = vadd.f32 %v4485, %v4796
        %v4815 = vadd.f32 %v4486, %v4798
        %v4816 = vadd.f32 %v4487, %v4800
        %v4817 = vld [vmem:[%s65] sm:$0x3]
        %v4819 = vperm.slane %v4817, 0
        %v4820 = vperm.slane %v4817, 1
        %v4823 = vadd.f32 %v4809, %v4819
        %v4824 = vadd.f32 %v4810, %v4820
        %v4825 = vadd.f32 %v4811, %v4819
        %v4826 = vadd.f32 %v4812, %v4820
        %v4827 = vadd.f32 %v4813, %v4819
        %v4828 = vadd.f32 %v4814, %v4820
        %v4829 = vadd.f32 %v4815, %v4819
        %v4830 = vadd.f32 %v4816, %v4820
        %v4831 = vmax.f32 %v4823, 0.0
        %v4832 = vmax.f32 %v4824, 0.0
        %v4833 = vmax.f32 %v4825, 0.0
        %v4834 = vmax.f32 %v4826, 0.0
        %v4835 = vmax.f32 %v4827, 0.0
        %v4836 = vmax.f32 %v4828, 0.0
        %v4837 = vmax.f32 %v4829, 0.0
        %v4838 = vmax.f32 %v4830, 0.0
        %v4839 = vld [vmem:[%s67] sm:$0xf]
        %v4840 = vld [vmem:[%s67 + $0x4] sm:$0xf]
        %v4841 = vld [vmem:[%s67 + $0x8] sm:$0xf]
        %v4842 = vld [vmem:[%s67 + $0xc] sm:$0xf]
        %v4843 = vld [vmem:[%s67 + $0x10] sm:$0xf]
        %v4844 = vld [vmem:[%s67 + $0x14] sm:$0xf]
        %v4845 = vld [vmem:[%s67 + $0x18] sm:$0xf]
        %v4846 = vld [vmem:[%s67 + $0x1c] sm:$0xf]
        %v4847 = vld [vmem:[%s67 + $0x20] sm:$0x1]
        %v4848 = vpack.c.bf16 %v4833, %v4831
        %v4849 = vpack.c.bf16 %v4834, %v4832
        %v4850 = vpack.c.bf16 %v4837, %v4835
        %v4851 = vpack.c.bf16 %v4838, %v4836
        %v4861 = vunpack.c.l.b16 %v4839
        %v4862 = vunpack.c.l.b16 %v4840
        %v4863 = vunpack.c.l.b16 %v4841
        %v4864 = vunpack.c.l.b16 %v4842
        %v4865 = vunpack.c.l.b16 %v4843
        %v4866 = vunpack.c.l.b16 %v4844
        %v4867 = vunpack.c.l.b16 %v4845
        %v4868 = vunpack.c.l.b16 %v4846
        %v4869 = vunpack.c.l.b16 %v4847
        %v4870 = vpack.c.b16 %v4862, %v4861
        %v4871 = vpack.c.b16 %v4864, %v4863
        %v4872 = vpack.c.b16 %v4866, %v4865
        %v4873 = vpack.c.b16 %v4868, %v4867
        %v4874 = vpack.c.b16 %v4869, %v4869
        %v4876 = vsel %vm1408, %v4870, 0
        %v4879 = vsel %vm1408, %v4871, 0
        %v4882 = vsel %vm1408, %v4872, 0
        %v4885 = vsel %vm1408, %v4873, 0
        %v4888 = vsel %vm1408, %v4874, 0
        %4890 = vmatpush.bf16.msra.mxu0 0
        %4891 = vmatpush.bf16.msra.mxu0 0
        %4892 = vmatpush.bf16.msra.mxu0 0
        %4893 = vmatpush.bf16.msra.mxu0 0
        %4894 = vmatpush.bf16.msra.mxu0 0
        %4895 = vmatpush.bf16.msra.mxu0 0
        %4896 = vmatpush.bf16.msra.mxu0 %v4850
        %4897 = vmatpush.bf16.msra.mxu0 %v4848
        %4898 = vmatmul.bf16.gmra.mxu0 %v4876
        %v4899 = vpop.f32.mrf.mxu0
        %v4900 = vadd.f32 0.0, %v4899
        %v4901 = vpop.f32.mrf.mxu0
        %v4902 = vadd.f32 0.0, %v4901
        %4903 = vmatmul.bf16.gmra.mxu0 %v4879
        %v4904 = vpop.f32.mrf.mxu0
        %v4905 = vadd.f32 0.0, %v4904
        %v4906 = vpop.f32.mrf.mxu0
        %v4907 = vadd.f32 0.0, %v4906
        %4908 = vmatmul.bf16.gmra.mxu0 %v4882
        %v4909 = vpop.f32.mrf.mxu0
        %v4910 = vadd.f32 0.0, %v4909
        %v4911 = vpop.f32.mrf.mxu0
        %v4912 = vadd.f32 0.0, %v4911
        %4913 = vmatmul.bf16.gmra.mxu0 %v4885
        %v4914 = vpop.f32.mrf.mxu0
        %v4915 = vadd.f32 0.0, %v4914
        %v4916 = vpop.f32.mrf.mxu0
        %v4917 = vadd.f32 0.0, %v4916
        %4918 = vmatmul.bf16.gmra.mxu0 %v4888
        %v4919 = vpop.f32.mrf.mxu0
        %v4920 = vadd.f32 0.0, %v4919
        %v4921 = vpop.f32.mrf.mxu0
        %4922 = vdwg.mxu0
        %4923 = vmatpush.bf16.msra.mxu0 0
        %4924 = vmatpush.bf16.msra.mxu0 0
        %4925 = vmatpush.bf16.msra.mxu0 0
        %4926 = vmatpush.bf16.msra.mxu0 0
        %4927 = vmatpush.bf16.msra.mxu0 0
        %4928 = vmatpush.bf16.msra.mxu0 0
        %4929 = vmatpush.bf16.msra.mxu0 %v4851
        %4930 = vmatpush.bf16.msra.mxu0 %v4849
        %4931 = vmatmul.bf16.gmra.mxu0 %v4876
        %v4932 = vpop.f32.mrf.mxu0
        %v4933 = vadd.f32 0.0, %v4932
        %v4934 = vpop.f32.mrf.mxu0
        %v4935 = vadd.f32 0.0, %v4934
        %4936 = vmatmul.bf16.gmra.mxu0 %v4879
        %v4937 = vpop.f32.mrf.mxu0
        %v4938 = vadd.f32 0.0, %v4937
        %v4939 = vpop.f32.mrf.mxu0
        %v4940 = vadd.f32 0.0, %v4939
        %4941 = vmatmul.bf16.gmra.mxu0 %v4882
        %v4942 = vpop.f32.mrf.mxu0
        %v4943 = vadd.f32 0.0, %v4942
        %v4944 = vpop.f32.mrf.mxu0
        %v4945 = vadd.f32 0.0, %v4944
        %4946 = vmatmul.bf16.gmra.mxu0 %v4885
        %v4947 = vpop.f32.mrf.mxu0
        %v4948 = vadd.f32 0.0, %v4947
        %v4949 = vpop.f32.mrf.mxu0
        %v4950 = vadd.f32 0.0, %v4949
        %4951 = vmatmul.bf16.gmra.mxu0 %v4888
        %v4952 = vpop.f32.mrf.mxu0
        %v4953 = vadd.f32 0.0, %v4952
        %v4954 = vpop.f32.mrf.mxu0
        %4955 = vdwg.mxu0
        %v4956 = vpack.c.bf16 %v4902, %v4900
        %v4957 = vpack.c.bf16 %v4935, %v4933
        %v4958 = vpack.c.bf16 %v4907, %v4905
        %v4959 = vpack.c.bf16 %v4940, %v4938
        %v4960 = vpack.c.bf16 %v4912, %v4910
        %v4961 = vpack.c.bf16 %v4945, %v4943
        %v4962 = vpack.c.bf16 %v4917, %v4915
        %v4963 = vpack.c.bf16 %v4950, %v4948
        %v4964 = vpack.c.bf16 %v4920, %v4920
        %v4965 = vpack.c.bf16 %v4953, %v4953
        %v4966 = vld [vmem:[%s69] sm:$0xf]
        %v4967 = vld [vmem:[%s69 + $0x4] sm:$0xf]
        %v4968 = vld [vmem:[%s69 + $0x8] sm:$0xf]
        %v4969 = vld [vmem:[%s69 + $0xc] sm:$0xf]
        %v4970 = vld [vmem:[%s69 + $0x10] sm:$0xf]
        %v4971 = vld [vmem:[%s69 + $0x14] sm:$0xf]
        %v4972 = vld [vmem:[%s69 + $0x18] sm:$0xf]
        %v4973 = vld [vmem:[%s69 + $0x1c] sm:$0xf]
        %v4974 = vld [vmem:[%s69 + $0x20] sm:$0xf]
        %v4975 = vld [vmem:[%s69 + $0x24] sm:$0xf]
        %v4976 = vld [vmem:[%s69 + $0x28] sm:$0xf]
        %v4977 = vld [vmem:[%s69 + $0x2c] sm:$0xf]
        %v4978 = vld [vmem:[%s69 + $0x30] sm:$0xf]
        %v4979 = vld [vmem:[%s69 + $0x34] sm:$0xf]
        %v4980 = vld [vmem:[%s69 + $0x38] sm:$0xf]
        %v4981 = vld [vmem:[%s69 + $0x3c] sm:$0xf]
        %v4982 = vld [vmem:[%s69 + $0x40] sm:$0xf]
        %v4983 = vld [vmem:[%s69 + $0x44] sm:$0xf]
        %v4984 = vld [vmem:[%s69 + $0x48] sm:$0xf]
        %v4985 = vld [vmem:[%s69 + $0x4c] sm:$0xf]
        %v4986 = vld [vmem:[%s69 + $0x50] sm:$0xf]
        %v4987 = vld [vmem:[%s69 + $0x54] sm:$0xf]
        %v4988 = vld [vmem:[%s69 + $0x58] sm:$0xf]
        %v4989 = vld [vmem:[%s69 + $0x5c] sm:$0xf]
        %v4990 = vld [vmem:[%s69 + $0x60] sm:$0xf]
        %v4991 = vld [vmem:[%s69 + $0x64] sm:$0xf]
        %v4992 = vld [vmem:[%s69 + $0x68] sm:$0xf]
        %v4993 = vld [vmem:[%s69 + $0x6c] sm:$0xf]
        %v4994 = vld [vmem:[%s69 + $0x70] sm:$0xf]
        %v4995 = vld [vmem:[%s69 + $0x74] sm:$0xf]
        %v4996 = vld [vmem:[%s69 + $0x78] sm:$0xf]
        %v4997 = vld [vmem:[%s69 + $0x7c] sm:$0xf]
        %v5030 = vunpack.c.l.b16 %v4966
        %v5031 = vunpack.c.l.b16 %v4967
        %v5032 = vunpack.c.l.b16 %v4968
        %v5033 = vunpack.c.l.b16 %v4969
        %v5034 = vunpack.c.l.b16 %v4970
        %v5035 = vunpack.c.l.b16 %v4971
        %v5036 = vunpack.c.l.b16 %v4972
        %v5037 = vunpack.c.l.b16 %v4973
        %v5038 = vunpack.c.l.b16 %v4974
        %v5039 = vunpack.c.l.b16 %v4975
        %v5040 = vunpack.c.l.b16 %v4976
        %v5041 = vunpack.c.l.b16 %v4977
        %v5042 = vunpack.c.l.b16 %v4978
        %v5043 = vunpack.c.l.b16 %v4979
        %v5044 = vunpack.c.l.b16 %v4980
        %v5045 = vunpack.c.l.b16 %v4981
        %v5046 = vunpack.c.l.b16 %v4982
        %v5047 = vunpack.c.l.b16 %v4983
        %v5048 = vunpack.c.l.b16 %v4984
        %v5049 = vunpack.c.l.b16 %v4985
        %v5050 = vunpack.c.l.b16 %v4986
        %v5051 = vunpack.c.l.b16 %v4987
        %v5052 = vunpack.c.l.b16 %v4988
        %v5053 = vunpack.c.l.b16 %v4989
        %v5054 = vunpack.c.l.b16 %v4990
        %v5055 = vunpack.c.l.b16 %v4991
        %v5056 = vunpack.c.l.b16 %v4992
        %v5057 = vunpack.c.l.b16 %v4993
        %v5058 = vunpack.c.l.b16 %v4994
        %v5059 = vunpack.c.l.b16 %v4995
        %v5060 = vunpack.c.l.b16 %v4996
        %v5061 = vunpack.c.l.b16 %v4997
        %v5062 = vpack.c.b16 %v5031, %v5030
        %v5063 = vpack.c.b16 %v5033, %v5032
        %v5064 = vpack.c.b16 %v5035, %v5034
        %v5065 = vpack.c.b16 %v5037, %v5036
        %v5066 = vpack.c.b16 %v5039, %v5038
        %v5067 = vpack.c.b16 %v5041, %v5040
        %v5068 = vpack.c.b16 %v5043, %v5042
        %v5069 = vpack.c.b16 %v5045, %v5044
        %v5070 = vpack.c.b16 %v5047, %v5046
        %v5071 = vpack.c.b16 %v5049, %v5048
        %v5072 = vpack.c.b16 %v5051, %v5050
        %v5073 = vpack.c.b16 %v5053, %v5052
        %v5074 = vpack.c.b16 %v5055, %v5054
        %v5075 = vpack.c.b16 %v5057, %v5056
        %v5076 = vpack.c.b16 %v5059, %v5058
        %v5077 = vpack.c.b16 %v5061, %v5060
        %5094 = vmatpush.bf16.msra.mxu0 %v5069
        %5095 = vmatpush.bf16.msra.mxu0 %v5068
        %5096 = vmatpush.bf16.msra.mxu0 %v5067
        %5097 = vmatpush.bf16.msra.mxu0 %v5066
        %5098 = vmatpush.bf16.msra.mxu0 %v5065
        %5099 = vmatpush.bf16.msra.mxu0 %v5064
        %5100 = vmatpush.bf16.msra.mxu0 %v5063
        %5101 = vmatpush.bf16.msra.mxu0 %v5062
        %5102 = vmatmul.bf16.gmra.mxu0 %v4956
        %v5103 = vpop.f32.mrf.mxu0
        %v5104 = vadd.f32 0.0, %v5103
        %v5105 = vpop.f32.mrf.mxu0
        %v5106 = vadd.f32 0.0, %v5105
        %5107 = vmatmul.bf16.gmra.mxu0 %v4958
        %v5108 = vpop.f32.mrf.mxu0
        %v5109 = vadd.f32 0.0, %v5108
        %v5110 = vpop.f32.mrf.mxu0
        %v5111 = vadd.f32 0.0, %v5110
        %5112 = vmatmul.bf16.gmra.mxu0 %v4960
        %v5113 = vpop.f32.mrf.mxu0
        %v5114 = vadd.f32 0.0, %v5113
        %v5115 = vpop.f32.mrf.mxu0
        %v5116 = vadd.f32 0.0, %v5115
        %5117 = vmatmul.bf16.gmra.mxu0 %v4962
        %v5118 = vpop.f32.mrf.mxu0
        %v5119 = vadd.f32 0.0, %v5118
        %v5120 = vpop.f32.mrf.mxu0
        %v5121 = vadd.f32 0.0, %v5120
        %5122 = vmatmul.bf16.gmra.mxu0 %v4964
        %v5123 = vpop.f32.mrf.mxu0
        %v5124 = vpop.f32.mrf.mxu0
        %5125 = vdwg.mxu0
        %5126 = vmatpush.bf16.msra.mxu0 %v5077
        %5127 = vmatpush.bf16.msra.mxu0 %v5076
        %5128 = vmatpush.bf16.msra.mxu0 %v5075
        %5129 = vmatpush.bf16.msra.mxu0 %v5074
        %5130 = vmatpush.bf16.msra.mxu0 %v5073
        %5131 = vmatpush.bf16.msra.mxu0 %v5072
        %5132 = vmatpush.bf16.msra.mxu0 %v5071
        %5133 = vmatpush.bf16.msra.mxu0 %v5070
        %5134 = vmatmul.bf16.gmra.mxu0 %v4957
        %v5135 = vpop.f32.mrf.mxu0
        %v5136 = vadd.f32 %v5104, %v5135
        %v5137 = vpop.f32.mrf.mxu0
        %v5138 = vadd.f32 %v5106, %v5137
        %5139 = vmatmul.bf16.gmra.mxu0 %v4959
        %v5140 = vpop.f32.mrf.mxu0
        %v5141 = vadd.f32 %v5109, %v5140
        %v5142 = vpop.f32.mrf.mxu0
        %v5143 = vadd.f32 %v5111, %v5142
        %5144 = vmatmul.bf16.gmra.mxu0 %v4961
        %v5145 = vpop.f32.mrf.mxu0
        %v5146 = vadd.f32 %v5114, %v5145
        %v5147 = vpop.f32.mrf.mxu0
        %v5148 = vadd.f32 %v5116, %v5147
        %5149 = vmatmul.bf16.gmra.mxu0 %v4963
        %v5150 = vpop.f32.mrf.mxu0
        %v5151 = vadd.f32 %v5119, %v5150
        %v5152 = vpop.f32.mrf.mxu0
        %v5153 = vadd.f32 %v5121, %v5152
        %5154 = vmatmul.bf16.gmra.mxu0 %v4965
        %v5155 = vpop.f32.mrf.mxu0
        %v5156 = vpop.f32.mrf.mxu0
        %5157 = vdwg.mxu0
        %s5158 = scalar_lea.vmem %s69, 128
        %v5159 = vld [vmem:[%s5158] sm:$0xf]
        %v5160 = vld [vmem:[%s5158 + $0x4] sm:$0xf]
        %v5161 = vld [vmem:[%s5158 + $0x8] sm:$0xf]
        %v5162 = vld [vmem:[%s5158 + $0xc] sm:$0xf]
        %v5163 = vld [vmem:[%s5158 + $0x10] sm:$0xf]
        %v5164 = vld [vmem:[%s5158 + $0x14] sm:$0xf]
        %v5165 = vld [vmem:[%s5158 + $0x18] sm:$0xf]
        %v5166 = vld [vmem:[%s5158 + $0x1c] sm:$0xf]
        %v5167 = vld [vmem:[%s5158 + $0x20] sm:$0xf]
        %v5168 = vld [vmem:[%s5158 + $0x24] sm:$0xf]
        %v5169 = vld [vmem:[%s5158 + $0x28] sm:$0xf]
        %v5170 = vld [vmem:[%s5158 + $0x2c] sm:$0xf]
        %v5171 = vld [vmem:[%s5158 + $0x30] sm:$0xf]
        %v5172 = vld [vmem:[%s5158 + $0x34] sm:$0xf]
        %v5173 = vld [vmem:[%s5158 + $0x38] sm:$0xf]
        %v5174 = vld [vmem:[%s5158 + $0x3c] sm:$0xf]
        %v5175 = vld [vmem:[%s5158 + $0x40] sm:$0xf]
        %v5176 = vld [vmem:[%s5158 + $0x44] sm:$0xf]
        %v5177 = vld [vmem:[%s5158 + $0x48] sm:$0xf]
        %v5178 = vld [vmem:[%s5158 + $0x4c] sm:$0xf]
        %v5179 = vld [vmem:[%s5158 + $0x50] sm:$0xf]
        %v5180 = vld [vmem:[%s5158 + $0x54] sm:$0xf]
        %v5181 = vld [vmem:[%s5158 + $0x58] sm:$0xf]
        %v5182 = vld [vmem:[%s5158 + $0x5c] sm:$0xf]
        %v5183 = vld [vmem:[%s5158 + $0x60] sm:$0xf]
        %v5184 = vld [vmem:[%s5158 + $0x64] sm:$0xf]
        %v5185 = vld [vmem:[%s5158 + $0x68] sm:$0xf]
        %v5186 = vld [vmem:[%s5158 + $0x6c] sm:$0xf]
        %v5187 = vld [vmem:[%s5158 + $0x70] sm:$0xf]
        %v5188 = vld [vmem:[%s5158 + $0x74] sm:$0xf]
        %v5189 = vld [vmem:[%s5158 + $0x78] sm:$0xf]
        %v5190 = vld [vmem:[%s5158 + $0x7c] sm:$0xf]
        %v5223 = vunpack.c.l.b16 %v5159
        %v5224 = vunpack.c.l.b16 %v5160
        %v5225 = vunpack.c.l.b16 %v5161
        %v5226 = vunpack.c.l.b16 %v5162
        %v5227 = vunpack.c.l.b16 %v5163
        %v5228 = vunpack.c.l.b16 %v5164
        %v5229 = vunpack.c.l.b16 %v5165
        %v5230 = vunpack.c.l.b16 %v5166
        %v5231 = vunpack.c.l.b16 %v5167
        %v5232 = vunpack.c.l.b16 %v5168
        %v5233 = vunpack.c.l.b16 %v5169
        %v5234 = vunpack.c.l.b16 %v5170
        %v5235 = vunpack.c.l.b16 %v5171
        %v5236 = vunpack.c.l.b16 %v5172
        %v5237 = vunpack.c.l.b16 %v5173
        %v5238 = vunpack.c.l.b16 %v5174
        %v5239 = vunpack.c.l.b16 %v5175
        %v5240 = vunpack.c.l.b16 %v5176
        %v5241 = vunpack.c.l.b16 %v5177
        %v5242 = vunpack.c.l.b16 %v5178
        %v5243 = vunpack.c.l.b16 %v5179
        %v5244 = vunpack.c.l.b16 %v5180
        %v5245 = vunpack.c.l.b16 %v5181
        %v5246 = vunpack.c.l.b16 %v5182
        %v5247 = vunpack.c.l.b16 %v5183
        %v5248 = vunpack.c.l.b16 %v5184
        %v5249 = vunpack.c.l.b16 %v5185
        %v5250 = vunpack.c.l.b16 %v5186
        %v5251 = vunpack.c.l.b16 %v5187
        %v5252 = vunpack.c.l.b16 %v5188
        %v5253 = vunpack.c.l.b16 %v5189
        %v5254 = vunpack.c.l.b16 %v5190
        %v5255 = vpack.c.b16 %v5224, %v5223
        %v5256 = vpack.c.b16 %v5226, %v5225
        %v5257 = vpack.c.b16 %v5228, %v5227
        %v5258 = vpack.c.b16 %v5230, %v5229
        %v5259 = vpack.c.b16 %v5232, %v5231
        %v5260 = vpack.c.b16 %v5234, %v5233
        %v5261 = vpack.c.b16 %v5236, %v5235
        %v5262 = vpack.c.b16 %v5238, %v5237
        %v5263 = vpack.c.b16 %v5240, %v5239
        %v5264 = vpack.c.b16 %v5242, %v5241
        %v5265 = vpack.c.b16 %v5244, %v5243
        %v5266 = vpack.c.b16 %v5246, %v5245
        %v5267 = vpack.c.b16 %v5248, %v5247
        %v5268 = vpack.c.b16 %v5250, %v5249
        %v5269 = vpack.c.b16 %v5252, %v5251
        %v5270 = vpack.c.b16 %v5254, %v5253
        %5287 = vmatpush.bf16.msra.mxu0 %v5262
        %5288 = vmatpush.bf16.msra.mxu0 %v5261
        %5289 = vmatpush.bf16.msra.mxu0 %v5260
        %5290 = vmatpush.bf16.msra.mxu0 %v5259
        %5291 = vmatpush.bf16.msra.mxu0 %v5258
        %5292 = vmatpush.bf16.msra.mxu0 %v5257
        %5293 = vmatpush.bf16.msra.mxu0 %v5256
        %5294 = vmatpush.bf16.msra.mxu0 %v5255
        %5295 = vmatmul.bf16.gmra.mxu0 %v4956
        %v5296 = vpop.f32.mrf.mxu0
        %v5297 = vadd.f32 0.0, %v5296
        %v5298 = vpop.f32.mrf.mxu0
        %v5299 = vadd.f32 0.0, %v5298
        %5300 = vmatmul.bf16.gmra.mxu0 %v4958
        %v5301 = vpop.f32.mrf.mxu0
        %v5302 = vadd.f32 0.0, %v5301
        %v5303 = vpop.f32.mrf.mxu0
        %v5304 = vadd.f32 0.0, %v5303
        %5305 = vmatmul.bf16.gmra.mxu0 %v4960
        %v5306 = vpop.f32.mrf.mxu0
        %v5307 = vadd.f32 0.0, %v5306
        %v5308 = vpop.f32.mrf.mxu0
        %v5309 = vadd.f32 0.0, %v5308
        %5310 = vmatmul.bf16.gmra.mxu0 %v4962
        %v5311 = vpop.f32.mrf.mxu0
        %v5312 = vadd.f32 0.0, %v5311
        %v5313 = vpop.f32.mrf.mxu0
        %v5314 = vadd.f32 0.0, %v5313
        %5315 = vmatmul.bf16.gmra.mxu0 %v4964
        %v5316 = vpop.f32.mrf.mxu0
        %v5317 = vadd.f32 0.0, %v5316
        %v5318 = vpop.f32.mrf.mxu0
        %5319 = vdwg.mxu0
        %5320 = vmatpush.bf16.msra.mxu0 %v5270
        %5321 = vmatpush.bf16.msra.mxu0 %v5269
        %5322 = vmatpush.bf16.msra.mxu0 %v5268
        %5323 = vmatpush.bf16.msra.mxu0 %v5267
        %5324 = vmatpush.bf16.msra.mxu0 %v5266
        %5325 = vmatpush.bf16.msra.mxu0 %v5265
        %5326 = vmatpush.bf16.msra.mxu0 %v5264
        %5327 = vmatpush.bf16.msra.mxu0 %v5263
        %5328 = vmatmul.bf16.gmra.mxu0 %v4957
        %v5329 = vpop.f32.mrf.mxu0
        %v5330 = vadd.f32 %v5297, %v5329
        %v5331 = vpop.f32.mrf.mxu0
        %v5332 = vadd.f32 %v5299, %v5331
        %5333 = vmatmul.bf16.gmra.mxu0 %v4959
        %v5334 = vpop.f32.mrf.mxu0
        %v5335 = vadd.f32 %v5302, %v5334
        %v5336 = vpop.f32.mrf.mxu0
        %v5337 = vadd.f32 %v5304, %v5336
        %5338 = vmatmul.bf16.gmra.mxu0 %v4961
        %v5339 = vpop.f32.mrf.mxu0
        %v5340 = vadd.f32 %v5307, %v5339
        %v5341 = vpop.f32.mrf.mxu0
        %v5342 = vadd.f32 %v5309, %v5341
        %5343 = vmatmul.bf16.gmra.mxu0 %v4963
        %v5344 = vpop.f32.mrf.mxu0
        %v5345 = vadd.f32 %v5312, %v5344
        %v5346 = vpop.f32.mrf.mxu0
        %v5347 = vadd.f32 %v5314, %v5346
        %5348 = vmatmul.bf16.gmra.mxu0 %v4965
        %v5349 = vpop.f32.mrf.mxu0
        %v5350 = vadd.f32 %v5317, %v5349
        %v5351 = vpop.f32.mrf.mxu0
        %5352 = vdwg.mxu0
        %v5362 = vrot.slane %v5330, 1
        %v5363 = vrot.slane %v5332, 1
        %v5364 = vsel %vm3200, %v5362, %v5363
        %v5365 = vrot.slane %v5335, 1
        %v5366 = vsel %vm3200, %v5363, %v5365
        %v5367 = vrot.slane %v5337, 1
        %v5368 = vsel %vm3200, %v5365, %v5367
        %v5369 = vrot.slane %v5340, 1
        %v5370 = vsel %vm3200, %v5367, %v5369
        %v5371 = vrot.slane %v5342, 1
        %v5372 = vsel %vm3200, %v5369, %v5371
        %v5373 = vrot.slane %v5345, 1
        %v5374 = vsel %vm3200, %v5371, %v5373
        %v5375 = vrot.slane %v5347, 1
        %v5376 = vsel %vm3200, %v5373, %v5375
        %v5377 = vrot.slane %v5350, 1
        %v5378 = vsel %vm3200, %v5375, %v5377
        %v5387 = vadd.f32 %v5136, %v5364
        %v5388 = vadd.f32 %v5138, %v5366
        %v5389 = vadd.f32 %v5141, %v5368
        %v5390 = vadd.f32 %v5143, %v5370
        %v5391 = vadd.f32 %v5146, %v5372
        %v5392 = vadd.f32 %v5148, %v5374
        %v5393 = vadd.f32 %v5151, %v5376
        %v5394 = vadd.f32 %v5153, %v5378
        %s5395 = scalar_lea.vmem %s69, 256
        %v5396 = vld [vmem:[%s5395] sm:$0xf]
        %v5397 = vld [vmem:[%s5395 + $0x4] sm:$0xf]
        %v5398 = vld [vmem:[%s5395 + $0x8] sm:$0xf]
        %v5399 = vld [vmem:[%s5395 + $0xc] sm:$0xf]
        %v5400 = vld [vmem:[%s5395 + $0x10] sm:$0xf]
        %v5401 = vld [vmem:[%s5395 + $0x14] sm:$0xf]
        %v5402 = vld [vmem:[%s5395 + $0x18] sm:$0xf]
        %v5403 = vld [vmem:[%s5395 + $0x1c] sm:$0xf]
        %v5404 = vld [vmem:[%s5395 + $0x20] sm:$0xf]
        %v5405 = vld [vmem:[%s5395 + $0x24] sm:$0xf]
        %v5406 = vld [vmem:[%s5395 + $0x28] sm:$0xf]
        %v5407 = vld [vmem:[%s5395 + $0x2c] sm:$0xf]
        %v5408 = vld [vmem:[%s5395 + $0x30] sm:$0xf]
        %v5409 = vld [vmem:[%s5395 + $0x34] sm:$0xf]
        %v5410 = vld [vmem:[%s5395 + $0x38] sm:$0xf]
        %v5411 = vld [vmem:[%s5395 + $0x3c] sm:$0xf]
        %v5412 = vld [vmem:[%s5395 + $0x40] sm:$0xf]
        %v5413 = vld [vmem:[%s5395 + $0x44] sm:$0xf]
        %v5414 = vld [vmem:[%s5395 + $0x48] sm:$0xf]
        %v5415 = vld [vmem:[%s5395 + $0x4c] sm:$0xf]
        %v5416 = vld [vmem:[%s5395 + $0x50] sm:$0xf]
        %v5417 = vld [vmem:[%s5395 + $0x54] sm:$0xf]
        %v5418 = vld [vmem:[%s5395 + $0x58] sm:$0xf]
        %v5419 = vld [vmem:[%s5395 + $0x5c] sm:$0xf]
        %v5420 = vld [vmem:[%s5395 + $0x60] sm:$0xf]
        %v5421 = vld [vmem:[%s5395 + $0x64] sm:$0xf]
        %v5422 = vld [vmem:[%s5395 + $0x68] sm:$0xf]
        %v5423 = vld [vmem:[%s5395 + $0x6c] sm:$0xf]
        %v5424 = vld [vmem:[%s5395 + $0x70] sm:$0xf]
        %v5425 = vld [vmem:[%s5395 + $0x74] sm:$0xf]
        %v5426 = vld [vmem:[%s5395 + $0x78] sm:$0xf]
        %v5427 = vld [vmem:[%s5395 + $0x7c] sm:$0xf]
        %v5460 = vunpack.c.l.b16 %v5396
        %v5461 = vunpack.c.l.b16 %v5397
        %v5462 = vunpack.c.l.b16 %v5398
        %v5463 = vunpack.c.l.b16 %v5399
        %v5464 = vunpack.c.l.b16 %v5400
        %v5465 = vunpack.c.l.b16 %v5401
        %v5466 = vunpack.c.l.b16 %v5402
        %v5467 = vunpack.c.l.b16 %v5403
        %v5468 = vunpack.c.l.b16 %v5404
        %v5469 = vunpack.c.l.b16 %v5405
        %v5470 = vunpack.c.l.b16 %v5406
        %v5471 = vunpack.c.l.b16 %v5407
        %v5472 = vunpack.c.l.b16 %v5408
        %v5473 = vunpack.c.l.b16 %v5409
        %v5474 = vunpack.c.l.b16 %v5410
        %v5475 = vunpack.c.l.b16 %v5411
        %v5476 = vunpack.c.l.b16 %v5412
        %v5477 = vunpack.c.l.b16 %v5413
        %v5478 = vunpack.c.l.b16 %v5414
        %v5479 = vunpack.c.l.b16 %v5415
        %v5480 = vunpack.c.l.b16 %v5416
        %v5481 = vunpack.c.l.b16 %v5417
        %v5482 = vunpack.c.l.b16 %v5418
        %v5483 = vunpack.c.l.b16 %v5419
        %v5484 = vunpack.c.l.b16 %v5420
        %v5485 = vunpack.c.l.b16 %v5421
        %v5486 = vunpack.c.l.b16 %v5422
        %v5487 = vunpack.c.l.b16 %v5423
        %v5488 = vunpack.c.l.b16 %v5424
        %v5489 = vunpack.c.l.b16 %v5425
        %v5490 = vunpack.c.l.b16 %v5426
        %v5491 = vunpack.c.l.b16 %v5427
        %v5492 = vpack.c.b16 %v5461, %v5460
        %v5493 = vpack.c.b16 %v5463, %v5462
        %v5494 = vpack.c.b16 %v5465, %v5464
        %v5495 = vpack.c.b16 %v5467, %v5466
        %v5496 = vpack.c.b16 %v5469, %v5468
        %v5497 = vpack.c.b16 %v5471, %v5470
        %v5498 = vpack.c.b16 %v5473, %v5472
        %v5499 = vpack.c.b16 %v5475, %v5474
        %v5500 = vpack.c.b16 %v5477, %v5476
        %v5501 = vpack.c.b16 %v5479, %v5478
        %v5502 = vpack.c.b16 %v5481, %v5480
        %v5503 = vpack.c.b16 %v5483, %v5482
        %v5504 = vpack.c.b16 %v5485, %v5484
        %v5505 = vpack.c.b16 %v5487, %v5486
        %v5506 = vpack.c.b16 %v5489, %v5488
        %v5507 = vpack.c.b16 %v5491, %v5490
        %5524 = vmatpush.bf16.msra.mxu0 %v5499
        %5525 = vmatpush.bf16.msra.mxu0 %v5498
        %5526 = vmatpush.bf16.msra.mxu0 %v5497
        %5527 = vmatpush.bf16.msra.mxu0 %v5496
        %5528 = vmatpush.bf16.msra.mxu0 %v5495
        %5529 = vmatpush.bf16.msra.mxu0 %v5494
        %5530 = vmatpush.bf16.msra.mxu0 %v5493
        %5531 = vmatpush.bf16.msra.mxu0 %v5492
        %5532 = vmatmul.bf16.gmra.mxu0 %v4956
        %v5533 = vpop.f32.mrf.mxu0
        %v5534 = vadd.f32 0.0, %v5533
        %v5535 = vpop.f32.mrf.mxu0
        %v5536 = vadd.f32 0.0, %v5535
        %5537 = vmatmul.bf16.gmra.mxu0 %v4958
        %v5538 = vpop.f32.mrf.mxu0
        %v5539 = vadd.f32 0.0, %v5538
        %v5540 = vpop.f32.mrf.mxu0
        %v5541 = vadd.f32 0.0, %v5540
        %5542 = vmatmul.bf16.gmra.mxu0 %v4960
        %v5543 = vpop.f32.mrf.mxu0
        %v5544 = vadd.f32 0.0, %v5543
        %v5545 = vpop.f32.mrf.mxu0
        %v5546 = vadd.f32 0.0, %v5545
        %5547 = vmatmul.bf16.gmra.mxu0 %v4962
        %v5548 = vpop.f32.mrf.mxu0
        %v5549 = vadd.f32 0.0, %v5548
        %v5550 = vpop.f32.mrf.mxu0
        %v5551 = vadd.f32 0.0, %v5550
        %5552 = vmatmul.bf16.gmra.mxu0 %v4964
        %v5553 = vpop.f32.mrf.mxu0
        %v5554 = vadd.f32 0.0, %v5553
        %v5555 = vpop.f32.mrf.mxu0
        %5556 = vdwg.mxu0
        %5557 = vmatpush.bf16.msra.mxu0 %v5507
        %5558 = vmatpush.bf16.msra.mxu0 %v5506
        %5559 = vmatpush.bf16.msra.mxu0 %v5505
        %5560 = vmatpush.bf16.msra.mxu0 %v5504
        %5561 = vmatpush.bf16.msra.mxu0 %v5503
        %5562 = vmatpush.bf16.msra.mxu0 %v5502
        %5563 = vmatpush.bf16.msra.mxu0 %v5501
        %5564 = vmatpush.bf16.msra.mxu0 %v5500
        %5565 = vmatmul.bf16.gmra.mxu0 %v4957
        %v5566 = vpop.f32.mrf.mxu0
        %v5567 = vadd.f32 %v5534, %v5566
        %v5568 = vpop.f32.mrf.mxu0
        %v5569 = vadd.f32 %v5536, %v5568
        %5570 = vmatmul.bf16.gmra.mxu0 %v4959
        %v5571 = vpop.f32.mrf.mxu0
        %v5572 = vadd.f32 %v5539, %v5571
        %v5573 = vpop.f32.mrf.mxu0
        %v5574 = vadd.f32 %v5541, %v5573
        %5575 = vmatmul.bf16.gmra.mxu0 %v4961
        %v5576 = vpop.f32.mrf.mxu0
        %v5577 = vadd.f32 %v5544, %v5576
        %v5578 = vpop.f32.mrf.mxu0
        %v5579 = vadd.f32 %v5546, %v5578
        %5580 = vmatmul.bf16.gmra.mxu0 %v4963
        %v5581 = vpop.f32.mrf.mxu0
        %v5582 = vadd.f32 %v5549, %v5581
        %v5583 = vpop.f32.mrf.mxu0
        %v5584 = vadd.f32 %v5551, %v5583
        %5585 = vmatmul.bf16.gmra.mxu0 %v4965
        %v5586 = vpop.f32.mrf.mxu0
        %v5587 = vadd.f32 %v5554, %v5586
        %v5588 = vpop.f32.mrf.mxu0
        %5589 = vdwg.mxu0
        %v5599 = vrot.slane %v5567, 2
        %v5600 = vrot.slane %v5569, 2
        %v5601 = vsel %vm3287, %v5599, %v5600
        %v5602 = vrot.slane %v5572, 2
        %v5603 = vsel %vm3287, %v5600, %v5602
        %v5604 = vrot.slane %v5574, 2
        %v5605 = vsel %vm3287, %v5602, %v5604
        %v5606 = vrot.slane %v5577, 2
        %v5607 = vsel %vm3287, %v5604, %v5606
        %v5608 = vrot.slane %v5579, 2
        %v5609 = vsel %vm3287, %v5606, %v5608
        %v5610 = vrot.slane %v5582, 2
        %v5611 = vsel %vm3287, %v5608, %v5610
        %v5612 = vrot.slane %v5584, 2
        %v5613 = vsel %vm3287, %v5610, %v5612
        %v5614 = vrot.slane %v5587, 2
        %v5615 = vsel %vm3287, %v5612, %v5614
        %v5624 = vadd.f32 %v5387, %v5601
        %v5625 = vadd.f32 %v5388, %v5603
        %v5626 = vadd.f32 %v5389, %v5605
        %v5627 = vadd.f32 %v5390, %v5607
        %v5628 = vadd.f32 %v5391, %v5609
        %v5629 = vadd.f32 %v5392, %v5611
        %v5630 = vadd.f32 %v5393, %v5613
        %v5631 = vadd.f32 %v5394, %v5615
        %v5632 = vld [vmem:[%s71] sm:$0x1]
        %v5634 = vperm.slane %v5632, 0
        %v5636 = vadd.f32 %v5624, %v5634
        %v5637 = vadd.f32 %v5625, %v5634
        %v5638 = vadd.f32 %v5626, %v5634
        %v5639 = vadd.f32 %v5627, %v5634
        %v5640 = vadd.f32 %v5628, %v5634
        %v5641 = vadd.f32 %v5629, %v5634
        %v5642 = vadd.f32 %v5630, %v5634
        %v5643 = vadd.f32 %v5631, %v5634
        %5644 = vst [vmem:[%s1132] sm:$0xff] %v5636
        %5645 = vst [vmem:[%s1132 + $0x8] sm:$0xff] %v5637
        %5646 = vst [vmem:[%s1132 + $0x10] sm:$0xff] %v5638
        %5647 = vst [vmem:[%s1132 + $0x18] sm:$0xff] %v5639
        %5648 = vst [vmem:[%s1132 + $0x20] sm:$0xff] %v5640
        %5649 = vst [vmem:[%s1132 + $0x28] sm:$0xff] %v5641
        %5650 = vst [vmem:[%s1132 + $0x30] sm:$0xff] %v5642
        %5651 = vst [vmem:[%s1132 + $0x38] sm:$0xff] %v5643
        %p5652 = scmp.lt.s32.totalorder %s86, 1
        %s5653 = scalar_select %p5652, %s86, 1
        %s5654 = smul.addr %s5653, 8
        %s5655 = smul.addr %s5654, 8
        %s5656 = scalar_lea.vmem %s73, %s5655
        // Predicated region
        $region173: #{setr_forward.1} parent=163 // pred_check
          %p5657 = pneg %p865
        $region174: #{setr_forward.1} parent=163 // pred_check_branch
          %5659 = sbr.rel (%p5657) target = $region176
        $region175: #{setr_forward.1} parent=163 // pred_region
          _
        $region176: #{setr_forward.1} parent=163 // pred_fallthru
          _
      $region164: #{setr_forward.1} parent=5 // pred_fallthru
        _
      %p5660 = scmp.le.s32.totalorder 2, %s81
      // Predicated region
      $region177: #{setr_forward.1} parent=5 // pred_check
        %p5661 = pneg %p5660
      $region178: #{setr_forward.1} parent=5 // pred_check_branch
        %5663 = sbr.rel (%p5661) target = $region180
      $region179: #{setr_forward.1} parent=5 // pred_region
        %s5664 = ssub.s32 %s81, 2
        // Predicated region
        $region181: #{setr_forward.1} parent=179 // pred_check
          %p5665 = pneg %p871
        $region182: #{setr_forward.1} parent=179 // pred_check_branch
          %5667 = sbr.rel (%p5665) target = $region184
        $region183: #{setr_forward.1} parent=179 // pred_region
          %p5668 = scmp.lt.s32.totalorder %s87, 1
          %s5669 = scalar_select %p5668, %s87, 1
          %s5670 = smul.addr %s5669, 8
          %s5671 = smul.addr %s5670, 8
          %s5672 = scalar_lea.vmem %s73, %s5671
        $region184: #{setr_forward.1} parent=179 // pred_fallthru
          _
      $region180: #{setr_forward.1} parent=5 // pred_fallthru
        _
    $region6: #{setr_forward.1} parent=1 // loop_footer
      %s85 = sadd.s32 1, %s81
    $region7: #{setr_forward.1} parent=1 // loop_footer_branch
      %80 = sbr.rel target = $region3
    $region8: #{setr_forward.1} parent=1 // loop_exit
      _
    %5673 = vsyncpa [#allocation3], 1
    %s5674 = scalar_lea.sflag [#allocation3], 1
    %5675 = vsyncpa %s5674, 1
    %5676 = vsyncpa [#allocation5], 1

</llo_original>
